<compile_context>
chip_gen: v7x
topology: tpu7x:2x2x1
jax: 0.10.0
libtpu: 0.0.40
codegen_flags: <defaults>
</compile_context>

<pallas_src>
import jax
import jax.numpy as jnp
from jax import lax
from jax.experimental import pallas as pl
from jax.experimental.pallas import tpu as pltpu


def _pick_tile(total, cap, align):
    """Largest multiple of `align` that divides `total` and is <= min(cap, total)."""
    cap = min(cap, total)
    t = cap - cap % align
    while t >= align:
        if total % t == 0:
            return t
        t -= align
    # TODO(synk): non-divisible shapes (e.g. flattened 299*299*3) need padding or
    # masked/Element blocks; fall back to the full extent (always a legal block).
    return total


def _tpu_defaults():
    """Per-generation (vmem_limit_bytes, n_parts) — n_parts == TensorCores per chip."""
    try:
        kind = jax.devices()[0].device_kind.lower()
    except Exception:  # pragma: no cover - defensive
        kind = ""
    if "v7" in kind:                       # 64 MiB VMEM per TC, 2 TCs
        vmem_cap, n_parts = 64 * 1024 * 1024, 2
    elif "v2" in kind:
        vmem_cap, n_parts = 16 * 1024 * 1024, 1
    elif "v3" in kind:
        vmem_cap, n_parts = 32 * 1024 * 1024, 1
    else:                                  # v4/v5e/v5p/v6e: 128 MiB, 1 TC
        vmem_cap, n_parts = 128 * 1024 * 1024, 1
    return int(vmem_cap * 0.8), n_parts


# ----------------------------------------------------------------------------
# Kernel 1: fused feature extraction + per-row-tile column sums
#   feats[n_tile] = x_bf16[n_tile] @ W' + bias        (bf16 MXU, f32 accumulate)
#   psum[n_tile]  = sum over rows of feats[n_tile]    (-> mu, no extra HBM pass)
# Grid: (row tiles [parallel], K chunks [arbitrary, reduction]).
# f32 accumulation in a VMEM scratch; bf16 feats written to HBM at the last K step.
# ----------------------------------------------------------------------------
def _feat_kernel(x_ref, w_ref, bias_ref, feat_ref, psum_ref, acc_ref):
    k = pl.program_id(1)

    @pl.when(k == 0)
    def _():
        # Initialize with the folded (x-128)/128 bias -> no epilogue add/re-store.
        acc_ref[...] = jnp.broadcast_to(bias_ref[...], acc_ref.shape)

    acc_ref[...] += jnp.dot(x_ref[...], w_ref[...],
                            preferred_element_type=jnp.float32)

    @pl.when(k == pl.num_programs(1) - 1)
    def _():
        f = acc_ref[...]
        feat_ref[...] = f.astype(feat_ref.dtype)                  # bf16 to HBM
        psum_ref[...] = jnp.sum(f, axis=0, keepdims=True)         # f32 column sums


def extract_features(x_flat, w, *, tn_rows=512, tk=None, vmem_limit=None):
    """Returns (feats (N, D) bf16, mu (D,) f32)."""
    if vmem_limit is None:
        vmem_limit, _ = _tpu_defaults()
    N, F = x_flat.shape
    Fw, D = w.shape
    assert F == Fw

    # Fold preprocessing into the weights (once, outside the kernel).
    w_scaled = (w.astype(jnp.float32) * (1.0 / 128.0)).astype(jnp.bfloat16)
    # Bias derived from the *quantized* weights so the fold is exactly consistent
    # with what the MXU multiplies by:  (x-128)/128 @ (128*Wq) = x@Wq - 128*sum(Wq,0)
    bias = -128.0 * jnp.sum(w_scaled.astype(jnp.float32), axis=0, keepdims=True)
    x_bf16 = x_flat.astype(jnp.bfloat16)   # uint8-range values exact in bf16

    # Single K chunk when W fits comfortably in VMEM; otherwise chunk the reduction.
    if tk is None:
        tk = F if (F * D * 2) <= (8 << 20) else 512
    tn_rows = _pick_tile(N, tn_rows, 16)
    tk = _pick_tile(F, tk, 128)
    n_row_tiles = N // tn_rows
    n_k = F // tk

    feats, psums = pl.pallas_call(
        _feat_kernel,
        out_shape=(
            jax.ShapeDtypeStruct((N, D), jnp.bfloat16),
            jax.ShapeDtypeStruct((n_row_tiles, 1, D), jnp.float32),
        ),
        grid_spec=pltpu.PrefetchScalarGridSpec(
            num_scalar_prefetch=0,
            grid=(n_row_tiles, n_k),
            in_specs=[
                pl.BlockSpec((tn_rows, tk), lambda n, k: (n, k)),
                pl.BlockSpec((tk, D), lambda n, k: (k, 0)),
                pl.BlockSpec((1, D), lambda n, k: (0, 0)),
            ],
            out_specs=[
                pl.BlockSpec((tn_rows, D), lambda n, k: (n, 0)),
                pl.BlockSpec((None, 1, D), lambda n, k: (n, 0, 0)),
            ],
            scratch_shapes=[pltpu.VMEM((tn_rows, D), jnp.float32)],
        ),
        compiler_params=pltpu.CompilerParams(
            dimension_semantics=("parallel", "arbitrary"),
            vmem_limit_bytes=vmem_limit,
        ),
    )(x_bf16, w_scaled, bias)

    mu = jnp.sum(psums[:, 0, :], axis=0) / N
    return feats, mu


# ----------------------------------------------------------------------------
# Kernel 2: centered gram  G_p = sum_tiles (f - mu)^T (f - mu)
# Grid: (parts [parallel == TensorCores], row tiles within part [arbitrary]).
# Center in f32, cast the centered tile to bf16 for the MXU, accumulate in the
# resident f32 (D, D) output block; parts summed in JAX -> sigma.
# ----------------------------------------------------------------------------
def _gram_kernel(f_ref, mu_ref, gram_ref):
    r = pl.program_id(1)

    @pl.when(r == 0)
    def _():
        gram_ref[...] = jnp.zeros_like(gram_ref)

    c = f_ref[...].astype(jnp.float32) - mu_ref[...]      # centered (tn, D), f32
    c16 = c.astype(jnp.bfloat16)                          # bf16 MXU operands
    gram_ref[...] += lax.dot_general(
        c16, c16, dimension_numbers=(((0,), (0,)), ((), ())),
        preferred_element_type=jnp.float32)


def feature_covariance(feats, mu, *, tn=512, n_parts=None, vmem_limit=None):
    """sigma = cov(feats, rowvar=False) with ddof=1 (centered formulation)."""
    if vmem_limit is None or n_parts is None:
        vl, np_ = _tpu_defaults()
        vmem_limit = vl if vmem_limit is None else vmem_limit
        n_parts = np_ if n_parts is None else n_parts
    N, D = feats.shape
    if N % n_parts != 0 or (N // n_parts) < 16:
        n_parts = 1
    rows_per_part = N // n_parts
    tn = _pick_tile(rows_per_part, tn, 16)
    tiles_per_part = rows_per_part // tn

    gram_parts = pl.pallas_call(
        _gram_kernel,
        out_shape=jax.ShapeDtypeStruct((n_parts, D, D), jnp.float32),
        grid_spec=pltpu.PrefetchScalarGridSpec(
            num_scalar_prefetch=0,
            grid=(n_parts, tiles_per_part),
            in_specs=[
                pl.BlockSpec((tn, D), lambda p, r: (p * tiles_per_part + r, 0)),
                pl.BlockSpec((1, D), lambda p, r: (0, 0)),
            ],
            out_specs=pl.BlockSpec((None, D, D), lambda p, r: (p, 0, 0)),
        ),
        compiler_params=pltpu.CompilerParams(
            dimension_semantics=("parallel", "arbitrary"),
            vmem_limit_bytes=vmem_limit,
        ),
    )(feats, mu.reshape(1, D))

    sigma = jnp.sum(gram_parts, axis=0) / (N - 1)
    return sigma


# ----------------------------------------------------------------------------
# Frechet distance (plain JAX glue — small D x D linalg).
# TODO(synk): scipy.linalg.sqrtm (general matrix sqrt) has no Pallas equivalent;
# trace(sqrtm(S1 @ S2)) is computed via the symmetric form sqrtm(S1) S2 sqrtm(S1).
# ----------------------------------------------------------------------------
def frechet_distance_jax(mu1, sigma1, mu2, sigma2):
    diff = mu1 - mu2
    w1, v1 = jnp.linalg.eigh(sigma1)
    s1_half = (v1 * jnp.sqrt(jnp.clip(w1, 0.0))) @ v1.T
    m = s1_half @ sigma2 @ s1_half
    w = jnp.linalg.eigvalsh(0.5 * (m + m.T))
    tr_covmean = jnp.sum(jnp.sqrt(jnp.clip(w, 0.0)))
    return diff @ diff + jnp.trace(sigma1) + jnp.trace(sigma2) - 2.0 * tr_covmean


# ----------------------------------------------------------------------------
# End-to-end FID between two image batches with a linear stand-in backbone.
# ----------------------------------------------------------------------------
def fid_forward(x1_nchw, x2_nchw, w_backbone, *,
                tn_rows=512, tk=None, tn_stats=512, n_parts=None):
    vmem_limit, default_parts = _tpu_defaults()
    parts = default_parts if n_parts is None else n_parts

    def stats(x):
        x_flat = x.reshape(x.shape[0], -1)
        feats, mu = extract_features(x_flat, w_backbone, tn_rows=tn_rows, tk=tk,
                                     vmem_limit=vmem_limit)
        sigma = feature_covariance(feats, mu, tn=tn_stats, n_parts=parts,
                                   vmem_limit=vmem_limit)
        return mu, sigma

    mu1, sig1 = stats(x1_nchw)
    mu2, sig2 = stats(x2_nchw)
    return frechet_distance_jax(mu1, sig1, mu2, sig2)


if __name__ == "__main__":
    key = jax.random.PRNGKey(0)
    k1, k2, kw = jax.random.split(key, 3)

    N, C, H, W = 64, 3, 16, 16          # small stand-in for (B, 3, 299, 299)
    F = C * H * W                       # 768 flattened pixels
    D = 128                             # stand-in for 2048-d Inception features

    # synthetic uint8-valued images, NCHW (integer values: exact in bf16, like real data)
    x1 = jnp.round(jax.random.uniform(k1, (N, C, H, W), jnp.float32, 0.0, 255.0))
    x2 = jnp.round(jax.random.uniform(k2, (N, C, H, W), jnp.float32, 0.0, 255.0))
    # deterministic linear backbone weight
    w_backbone = jax.random.normal(kw, (F, D), jnp.float32) * 0.05

    # small tiles so the multi-tile / multi-K-chunk / multi-part paths are exercised
    fid_fn = jax.jit(lambda a, b, w: fid_forward(a, b, w, tn_rows=32, tk=256,
                                                 tn_stats=16))
    fid = jax.block_until_ready(fid_fn(x1, x2, w_backbone))

    # reference check of the Pallas portion (features + mu + sigma) in plain JAX f32
    x1_flat = x1.reshape(N, -1)
    f_ref = ((x1_flat - 128.0) / 128.0) @ w_backbone
    mu_ref = jnp.mean(f_ref, axis=0)
    sig_ref = jnp.cov(f_ref, rowvar=False)

    # default config (single K chunk, big row tiles)
    f_k, mu_k = extract_features(x1_flat, w_backbone)
    sig_k = feature_covariance(f_k, mu_k)
    # explicit small-tile config (multi K chunk, multi row tiles, 2 parts)
    f_k2, mu_k2 = extract_features(x1_flat, w_backbone, tn_rows=32, tk=256)
    sig_k2 = feature_covariance(f_k2, mu_k2, tn=16, n_parts=2)

    assert jnp.allclose(f_k.astype(jnp.float32), f_ref, atol=5e-2), "features mismatch"
    assert jnp.allclose(mu_k, mu_ref, atol=3e-2), "mu mismatch"
    assert jnp.allclose(sig_k, sig_ref, atol=5e-2), "sigma mismatch"
    assert jnp.allclose(f_k2.astype(jnp.float32), f_ref, atol=5e-2), "features mismatch (tiled)"
    assert jnp.allclose(mu_k2, mu_ref, atol=3e-2), "mu mismatch (tiled)"
    assert jnp.allclose(sig_k2, sig_ref, atol=5e-2), "sigma mismatch (tiled)"
    assert jnp.isfinite(fid), "non-finite FID"

    print("KERNEL_OK")
</pallas_src>

<mosaic_0001>
module attributes {stable_mosaic.version = 11 : i64} {
  func.func @_feat_kernel(%arg0: i32, %arg1: i32, %arg2: memref<32x256xbf16, #tpu.memory_space<vmem>>, %arg3: memref<256x128xbf16, #tpu.memory_space<vmem>>, %arg4: memref<1x128xf32, #tpu.memory_space<vmem>>, %arg5: memref<32x128xbf16, #tpu.memory_space<vmem>>, %arg6: memref<1x1x128xf32, #tpu.memory_space<vmem>>, %arg7: memref<32x128xf32, #tpu.memory_space<vmem>>) attributes {dimension_semantics = [#tpu.dimension_semantics<parallel>, #tpu.dimension_semantics<arbitrary>], iteration_bounds = array<i64: 2, 3>, scalar_prefetch = 0 : i64, scratch_operands = 1 : i64, tpu.core_type = #tpu.core_type<tc>, window_params = [{transform_indices = @transform_0, window_bounds = array<i64: 32, 256>}, {transform_indices = @transform_1, window_bounds = array<i64: 256, 128>}, {pipeline_mode = #tpu.pipeline_mode<synchronous>, transform_indices = @transform_2, window_bounds = array<i64: 1, 128>}, {transform_indices = @transform_3, window_bounds = array<i64: 32, 128>}, {transform_indices = @transform_4, window_bounds = array<i64: 1, 1, 128>}]} {
    %c0_i32 = arith.constant 0 : i32
    %0 = arith.cmpi eq, %arg1, %c0_i32 : i32
    %1 = arith.extui %0 : i1 to i32
    %c0_i32_0 = arith.constant 0 : i32
    %2 = arith.cmpi ne, %1, %c0_i32_0 : i32
    scf.if %2 {
      %c0_9 = arith.constant 0 : index
      %c0_10 = arith.constant 0 : index
      %12 = vector.load %arg4[%c0_9, %c0_10] : memref<1x128xf32, #tpu.memory_space<vmem>>, vector<1x128xf32>
      %13 = vector.shape_cast %12 : vector<1x128xf32> to vector<1x128xf32>
      %14 = vector.broadcast %13 : vector<1x128xf32> to vector<32x128xf32>
      %c0_11 = arith.constant 0 : index
      %c0_12 = arith.constant 0 : index
      %15 = vector.load %arg7[%c0_11, %c0_12] : memref<32x128xf32, #tpu.memory_space<vmem>>, vector<32x128xf32>
      tpu.vector_store %arg7[%c0_11, %c0_12], %14 {strides = array<i32>} : memref<32x128xf32, #tpu.memory_space<vmem>>, vector<32x128xf32>,
    } else {
    }
    %c0 = arith.constant 0 : index
    %c0_1 = arith.constant 0 : index
    %3 = vector.load %arg7[%c0, %c0_1] : memref<32x128xf32, #tpu.memory_space<vmem>>, vector<32x128xf32>
    %c0_2 = arith.constant 0 : index
    %c0_3 = arith.constant 0 : index
    %4 = vector.load %arg2[%c0_2, %c0_3] : memref<32x256xbf16, #tpu.memory_space<vmem>>, vector<32x256xbf16>
    %c0_4 = arith.constant 0 : index
    %c0_5 = arith.constant 0 : index
    %5 = vector.load %arg3[%c0_4, %c0_5] : memref<256x128xbf16, #tpu.memory_space<vmem>>, vector<256x128xbf16>
    %cst = arith.constant dense<0.000000e+00> : vector<32x128xf32>
    %6 = tpu.matmul %4, %5, %cst {dimension_numbers = #tpu.dot_dimension_numbers<[1], [0], [0], [1], [0, 0, 1, 1], [], []>} : vector<32x256xbf16>, vector<256x128xbf16>, vector<32x128xf32> -> vector<32x128xf32>
    %7 = arith.addf %3, %6 : vector<32x128xf32>
    %c0_6 = arith.constant 0 : index
    %c0_7 = arith.constant 0 : index
    %8 = vector.load %arg7[%c0_6, %c0_7] : memref<32x128xf32, #tpu.memory_space<vmem>>, vector<32x128xf32>
    tpu.vector_store %arg7[%c0_6, %c0_7], %7 {strides = array<i32>} : memref<32x128xf32, #tpu.memory_space<vmem>>, vector<32x128xf32>,
    %c2_i32 = arith.constant 2 : i32
    %9 = arith.cmpi eq, %arg1, %c2_i32 : i32
    %10 = arith.extui %9 : i1 to i32
    %c0_i32_8 = arith.constant 0 : i32
    %11 = arith.cmpi ne, %10, %c0_i32_8 : i32
    scf.if %11 {
      %c0_9 = arith.constant 0 : index
      %c0_10 = arith.constant 0 : index
      %12 = vector.load %arg7[%c0_9, %c0_10] : memref<32x128xf32, #tpu.memory_space<vmem>>, vector<32x128xf32>
      %13 = arith.truncf %12 : vector<32x128xf32> to vector<32x128xbf16>
      %c0_11 = arith.constant 0 : index
      %c0_12 = arith.constant 0 : index
      %14 = vector.load %arg5[%c0_11, %c0_12] : memref<32x128xbf16, #tpu.memory_space<vmem>>, vector<32x128xbf16>
      tpu.vector_store %arg5[%c0_11, %c0_12], %13 {strides = array<i32>} : memref<32x128xbf16, #tpu.memory_space<vmem>>, vector<32x128xbf16>,
      %cst_13 = arith.constant dense<0.000000e+00> : vector<128xf32>
      %15 = vector.multi_reduction <add>, %12, %cst_13 [0] : vector<32x128xf32> to vector<128xf32>
      %16 = vector.shape_cast %15 : vector<128xf32> to vector<1x128xf32>
      %c0_14 = arith.constant 0 : index
      %c0_15 = arith.constant 0 : index
      %c0_16 = arith.constant 0 : index
      %17 = vector.load %arg6[%c0_14, %c0_15, %c0_16] : memref<1x1x128xf32, #tpu.memory_space<vmem>>, vector<1x1x128xf32>
      %18 = vector.shape_cast %17 : vector<1x1x128xf32> to vector<1x128xf32>
      %19 = vector.shape_cast %16 : vector<1x128xf32> to vector<1x1x128xf32>
      tpu.vector_store %arg6[%c0_14, %c0_15, %c0_16], %19 {strides = array<i32>} : memref<1x1x128xf32, #tpu.memory_space<vmem>>, vector<1x1x128xf32>,
    } else {
    }
    return
  }
  func.func @transform_0(%arg0: i32, %arg1: i32) -> (i32, i32) {
    %c0_i32 = arith.constant 0 : i32
    return %arg0, %arg1 : i32, i32
  }
  func.func @transform_1(%arg0: i32, %arg1: i32) -> (i32, i32) {
    %c0_i32 = arith.constant 0 : i32
    %c0_i32_0 = arith.constant 0 : i32
    return %arg1, %c0_i32 : i32, i32
  }
  func.func @transform_2(%arg0: i32, %arg1: i32) -> (i32, i32) {
    %c0_i32 = arith.constant 0 : i32
    %c0_i32_0 = arith.constant 0 : i32
    %c0_i32_1 = arith.constant 0 : i32
    return %c0_i32, %c0_i32_0 : i32, i32
  }
  func.func @transform_3(%arg0: i32, %arg1: i32) -> (i32, i32) {
    %c0_i32 = arith.constant 0 : i32
    %c0_i32_0 = arith.constant 0 : i32
    return %arg0, %c0_i32 : i32, i32
  }
  func.func @transform_4(%arg0: i32, %arg1: i32) -> (i32, i32, i32) {
    %c0_i32 = arith.constant 0 : i32
    %c0_i32_0 = arith.constant 0 : i32
    %c0_i32_1 = arith.constant 0 : i32
    return %arg0, %c0_i32, %c0_i32_0 : i32, i32, i32
  }
}

module attributes {stable_mosaic.version = 11 : i64} {
  func.func @_gram_kernel(%arg0: i32, %arg1: i32, %arg2: memref<16x128xbf16, #tpu.memory_space<vmem>>, %arg3: memref<1x128xf32, #tpu.memory_space<vmem>>, %arg4: memref<1x128x128xf32, #tpu.memory_space<vmem>>) attributes {dimension_semantics = [#tpu.dimension_semantics<parallel>, #tpu.dimension_semantics<arbitrary>], iteration_bounds = array<i64: 1, 4>, scalar_prefetch = 0 : i64, scratch_operands = 0 : i64, tpu.core_type = #tpu.core_type<tc>, window_params = [{transform_indices = @transform_0, window_bounds = array<i64: 16, 128>}, {pipeline_mode = #tpu.pipeline_mode<synchronous>, transform_indices = @transform_1, window_bounds = array<i64: 1, 128>}, {transform_indices = @transform_2, window_bounds = array<i64: 1, 128, 128>}]} {
    %c0_i32 = arith.constant 0 : i32
    %0 = arith.cmpi eq, %arg1, %c0_i32 : i32
    %1 = arith.extui %0 : i1 to i32
    %c0_i32_0 = arith.constant 0 : i32
    %2 = arith.cmpi ne, %1, %c0_i32_0 : i32
    scf.if %2 {
      %cst_10 = arith.constant 0.000000e+00 : f32
      %16 = vector.broadcast %cst_10 : f32 to vector<128x128xf32>
      %c0_11 = arith.constant 0 : index
      %c0_12 = arith.constant 0 : index
      %c0_13 = arith.constant 0 : index
      %17 = vector.load %arg4[%c0_11, %c0_12, %c0_13] : memref<1x128x128xf32, #tpu.memory_space<vmem>>, vector<1x128x128xf32>
      %18 = vector.shape_cast %17 : vector<1x128x128xf32> to vector<128x128xf32>
      %19 = vector.shape_cast %16 : vector<128x128xf32> to vector<1x128x128xf32>
      tpu.vector_store %arg4[%c0_11, %c0_12, %c0_13], %19 {strides = array<i32>} : memref<1x128x128xf32, #tpu.memory_space<vmem>>, vector<1x128x128xf32>,
    } else {
    }
    %c0 = arith.constant 0 : index
    %c0_1 = arith.constant 0 : index
    %3 = vector.load %arg2[%c0, %c0_1] : memref<16x128xbf16, #tpu.memory_space<vmem>>, vector<16x128xbf16>
    %4 = arith.extf %3 : vector<16x128xbf16> to vector<16x128xf32>
    %c0_2 = arith.constant 0 : index
    %c0_3 = arith.constant 0 : index
    %5 = vector.load %arg3[%c0_2, %c0_3] : memref<1x128xf32, #tpu.memory_space<vmem>>, vector<1x128xf32>
    %6 = vector.broadcast %5 : vector<1x128xf32> to vector<16x128xf32>
    %7 = arith.subf %4, %6 : vector<16x128xf32>
    %8 = arith.truncf %7 : vector<16x128xf32> to vector<16x128xbf16>
    %c0_4 = arith.constant 0 : index
    %c0_5 = arith.constant 0 : index
    %c0_6 = arith.constant 0 : index
    %9 = vector.load %arg4[%c0_4, %c0_5, %c0_6] : memref<1x128x128xf32, #tpu.memory_space<vmem>>, vector<1x128x128xf32>
    %10 = vector.shape_cast %9 : vector<1x128x128xf32> to vector<128x128xf32>
    %cst = arith.constant dense<0.000000e+00> : vector<128x128xf32>
    %11 = tpu.matmul %8, %8, %cst {dimension_numbers = #tpu.dot_dimension_numbers<[0], [0], [1], [1], [0, 1, 1, 1], [], []>} : vector<16x128xbf16>, vector<16x128xbf16>, vector<128x128xf32> -> vector<128x128xf32>
    %12 = arith.addf %10, %11 : vector<128x128xf32>
    %c0_7 = arith.constant 0 : index
    %c0_8 = arith.constant 0 : index
    %c0_9 = arith.constant 0 : index
    %13 = vector.load %arg4[%c0_7, %c0_8, %c0_9] : memref<1x128x128xf32, #tpu.memory_space<vmem>>, vector<1x128x128xf32>
    %14 = vector.shape_cast %13 : vector<1x128x128xf32> to vector<128x128xf32>
    %15 = vector.shape_cast %12 : vector<128x128xf32> to vector<1x128x128xf32>
    tpu.vector_store %arg4[%c0_7, %c0_8, %c0_9], %15 {strides = array<i32>} : memref<1x128x128xf32, #tpu.memory_space<vmem>>, vector<1x128x128xf32>,
    return
  }
  func.func @transform_0(%arg0: i32, %arg1: i32) -> (i32, i32) {
    %c4_i32 = arith.constant 4 : i32
    %0 = arith.muli %arg0, %c4_i32 : i32
    %1 = arith.addi %0, %arg1 : i32
    %c0_i32 = arith.constant 0 : i32
    %c0_i32_0 = arith.constant 0 : i32
    return %1, %c0_i32 : i32, i32
  }
  func.func @transform_1(%arg0: i32, %arg1: i32) -> (i32, i32) {
    %c0_i32 = arith.constant 0 : i32
    %c0_i32_0 = arith.constant 0 : i32
    %c0_i32_1 = arith.constant 0 : i32
    return %c0_i32, %c0_i32_0 : i32, i32
  }
  func.func @transform_2(%arg0: i32, %arg1: i32) -> (i32, i32, i32) {
    %c0_i32 = arith.constant 0 : i32
    %c0_i32_0 = arith.constant 0 : i32
    %c0_i32_1 = arith.constant 0 : i32
    return %arg0, %c0_i32, %c0_i32_0 : i32, i32, i32
  }
}

</mosaic_0001>

<llo_original>
// kernel: custom-call.2
$region0: #{custom-call.2}
  %s0 = inlined_call_operand.vmem [shape: f32[64,64], index: 0, kind: input, shape index: {}]
  %s1 = inlined_call_operand.vmem [shape: f32[64,64], index: 1, kind: input, shape index: {}]
  %s2 = inlined_call_operand.vmem [shape: f32[64,64], index: 2, kind: input, shape index: {}]
  %s3 = inlined_call_operand.vmem [shape: f32[64,64], index: 3, kind: input, shape index: {}]
  %s4 = inlined_call_operand.vmem [shape: f32[64], index: 4, kind: output, shape index: {0}]
  %s5 = inlined_call_operand.vmem [shape: f32[64], index: 5, kind: output, shape index: {1}]
  %s6 = inlined_call_operand.vmem [shape: f32[64,64], index: 6, kind: output, shape index: {2}]
  %s7 = inlined_call_operand.vmem [shape: f32[64,64], index: 7, kind: output, shape index: {3}]
  %s8 = inlined_call_operand.vmem [shape: f32[64,64], index: 8, kind: output, shape index: {4}]
  %s9 = inlined_call_operand.vmem [shape: f32[64,64], index: 9, kind: output, shape index: {5}]
  %10 = xla_tuple %s4, %s5, %s6, %s7, %s8, %s9
  $region1: #{custom-call.2} parent=0
    #allocation0 [shape = 'u8[32768]{0}', space=vmem, size = 0x8000, scoped, tag = 'operand span for operand 0']
    #allocation1 [shape = 'u8[32768]{0}', space=vmem, size = 0x8000, scoped, tag = 'operand span for operand 1']
    #allocation2 [shape = 'u8[32768]{0}', space=vmem, size = 0x8000, scoped, tag = 'operand span for operand 2']
    #allocation3 [shape = 'u8[32768]{0}', space=vmem, size = 0x8000, scoped, tag = 'operand span for operand 3']
    #allocation4 [shape = 'u8[4096]{0}', space=vmem, size = 0x1000, scoped, tag = 'operand span for operand 4']
    #allocation5 [shape = 'u8[512]{0}', space=vmem, size = 0x400, scoped, tag = 'packed  for operand 4']
    #allocation6 [shape = 'u8[4096]{0}', space=vmem, size = 0x1000, scoped, tag = 'operand span for operand 5']
    #allocation7 [shape = 'u8[512]{0}', space=vmem, size = 0x400, scoped, tag = 'packed  for operand 5']
    #allocation8 [shape = 'u8[32768]{0}', space=vmem, size = 0x8000, scoped, tag = 'operand span for operand 6']
    #allocation9 [shape = 'u8[32768]{0}', space=vmem, size = 0x8000, scoped, tag = 'operand span for operand 7']
    #allocation10 [shape = 'u8[32768]{0}', space=vmem, size = 0x8000, scoped, tag = 'operand span for operand 8']
    #allocation11 [shape = 'u8[32768]{0}', space=vmem, size = 0x8000, scoped, tag = 'operand span for operand 9']
    #allocation12 [shape = 'f32[64,64]{1,0}', space=vmem, size = 0x8000, scoped, tag = 'a top-left matrix']
    #allocation13 [shape = 'f32[64,64]{1,0}', space=vmem, size = 0x8000, scoped, tag = 'a top-right matrix']
    #allocation14 [shape = 'f32[64,64]{1,0}', space=vmem, size = 0x8000, scoped, tag = 'a bottom-left matrix']
    #allocation15 [shape = 'f32[64,64]{1,0}', space=vmem, size = 0x8000, scoped, tag = 'a bottom-right matrix']
    %p12 = scmp.gt.s32.totalorder 64, 0
    // Predicated region
    $region2: #{custom-call.2} parent=1 // pred_check
      %p13 = pneg %p12
    $region3: #{custom-call.2} parent=1 // pred_check_branch
      %15 = sbr.rel (%p13) target = $region5
    $region4: #{custom-call.2} parent=1 // pred_region
      %s16 = sshra.s32 64, 3
      %p17 = scmp.gt.s32.totalorder %s16, 0
      // Predicated region
      $region6: #{custom-call.2} parent=4 // pred_check
        %p18 = pneg %p17
      $region7: #{custom-call.2} parent=4 // pred_check_branch
        %20 = sbr.rel (%p18) target = $region9
      $region8: #{custom-call.2} parent=4 // pred_region
        %s21 = ssub.s32 %s16, 1
        %s22 = smul.u32 %s21, 128
        %s23 = sshra.s32 %s22, 4
        %s24 = scalar_lea.vmem %s0, %s23
        %v25 = vld [vmem:[%s0] sm:$0xff]
        // While loop
        $region10: #{custom-call.2} parent=8 // loop_pre_header
          _
        $region11: #{custom-call.2} parent=8 // loop_header
          %s26 = sphi %s0, %s48
          %s27 = sphi [#allocation0], %s49
          %v28 = vphi %v25, %v50
          %s29 = ssub.s32 %s24, 64
          %p30 = scmp.gt.s32.totalorder %s26, %s29
        $region12: #{custom-call.2} parent=8 // loop_header_branch
          %32 = sbr.rel (%p30) target = $region16
        $region13: #{custom-call.2} parent=8 // loop_body
          %33 = vst [vmem:[%s27] sm:$0xff] %v28
          %v34 = vld [vmem:[%s26 + $0x8] sm:$0xff]
          %35 = vst [vmem:[%s27 + $0x8] sm:$0xff] %v34
          %v36 = vld [vmem:[%s26 + $0x10] sm:$0xff]
          %37 = vst [vmem:[%s27 + $0x10] sm:$0xff] %v36
          %v38 = vld [vmem:[%s26 + $0x18] sm:$0xff]
          %39 = vst [vmem:[%s27 + $0x18] sm:$0xff] %v38
          %v40 = vld [vmem:[%s26 + $0x20] sm:$0xff]
          %41 = vst [vmem:[%s27 + $0x20] sm:$0xff] %v40
          %v42 = vld [vmem:[%s26 + $0x28] sm:$0xff]
          %43 = vst [vmem:[%s27 + $0x28] sm:$0xff] %v42
          %v44 = vld [vmem:[%s26 + $0x30] sm:$0xff]
          %45 = vst [vmem:[%s27 + $0x30] sm:$0xff] %v44
          %v46 = vld [vmem:[%s26 + $0x38] sm:$0xff]
          %47 = vst [vmem:[%s27 + $0x38] sm:$0xff] %v46
        $region14: #{custom-call.2} parent=8 // loop_footer
          %s48 = scalar_lea.vmem %s26, 64
          %s49 = scalar_lea.vmem %s27, 64
          %v50 = vld [vmem:[%s26 + $0x40] sm:$0xff]
        $region15: #{custom-call.2} parent=8 // loop_footer_branch
          %51 = sbr.rel target = $region11
        $region16: #{custom-call.2} parent=8 // loop_exit
          _
        // While loop
        $region17: #{custom-call.2} parent=8 // loop_pre_header
          _
        $region18: #{custom-call.2} parent=8 // loop_header
          %s52 = sphi %s26, %s60
          %s53 = sphi %s27, %s61
          %v54 = vphi %v28, %v54
          %p55 = scmp.gt.s32.totalorder %s52, %s24
        $region19: #{custom-call.2} parent=8 // loop_header_branch
          %57 = sbr.rel (%p55) target = $region23
        $region20: #{custom-call.2} parent=8 // loop_body
          %v58 = vld [vmem:[%s52] sm:$0xff]
          %59 = vst [vmem:[%s53] sm:$0xff] %v58
        $region21: #{custom-call.2} parent=8 // loop_footer
          %s60 = scalar_lea.vmem %s52, 8
          %s61 = scalar_lea.vmem %s53, 8
        $region22: #{custom-call.2} parent=8 // loop_footer_branch
          %62 = sbr.rel target = $region18
        $region23: #{custom-call.2} parent=8 // loop_exit
          _
      $region9: #{custom-call.2} parent=4 // pred_fallthru
        _
      %s63 = sand.u32 64, 7
      %s64 = sshllo.u32 0, %s63
      %s65 = smul.u32 %s16, 128
      %s66 = sshra.s32 %s65, 4
      %s67 = scalar_lea.vmem [#allocation0], %s66
      %s68 = smul.u32 %s16, 128
      %s69 = sshra.s32 %s68, 4
      %s70 = scalar_lea.vmem %s0, %s69
      %v71 = vld [vmem:[%s70] sm:%s64]
      %72 = vst [vmem:[%s67] sm:%s64] %v71
    $region5: #{custom-call.2} parent=1 // pred_fallthru
      _
    %p74 = scmp.gt.s32.totalorder 64, 0
    // Predicated region
    $region24: #{custom-call.2} parent=1 // pred_check
      %p75 = pneg %p74
    $region25: #{custom-call.2} parent=1 // pred_check_branch
      %77 = sbr.rel (%p75) target = $region27
    $region26: #{custom-call.2} parent=1 // pred_region
      %s78 = sshra.s32 64, 3
      %p79 = scmp.gt.s32.totalorder %s78, 0
      // Predicated region
      $region28: #{custom-call.2} parent=26 // pred_check
        %p80 = pneg %p79
      $region29: #{custom-call.2} parent=26 // pred_check_branch
        %82 = sbr.rel (%p80) target = $region31
      $region30: #{custom-call.2} parent=26 // pred_region
        %s83 = ssub.s32 %s78, 1
        %s84 = smul.u32 %s83, 128
        %s85 = sshra.s32 %s84, 4
        %s86 = scalar_lea.vmem %s1, %s85
        %v87 = vld [vmem:[%s1] sm:$0xff]
        // While loop
        $region32: #{custom-call.2} parent=30 // loop_pre_header
          _
        $region33: #{custom-call.2} parent=30 // loop_header
          %s88 = sphi %s1, %s110
          %s89 = sphi [#allocation1], %s111
          %v90 = vphi %v87, %v112
          %s91 = ssub.s32 %s86, 64
          %p92 = scmp.gt.s32.totalorder %s88, %s91
        $region34: #{custom-call.2} parent=30 // loop_header_branch
          %94 = sbr.rel (%p92) target = $region38
        $region35: #{custom-call.2} parent=30 // loop_body
          %95 = vst [vmem:[%s89] sm:$0xff] %v90
          %v96 = vld [vmem:[%s88 + $0x8] sm:$0xff]
          %97 = vst [vmem:[%s89 + $0x8] sm:$0xff] %v96
          %v98 = vld [vmem:[%s88 + $0x10] sm:$0xff]
          %99 = vst [vmem:[%s89 + $0x10] sm:$0xff] %v98
          %v100 = vld [vmem:[%s88 + $0x18] sm:$0xff]
          %101 = vst [vmem:[%s89 + $0x18] sm:$0xff] %v100
          %v102 = vld [vmem:[%s88 + $0x20] sm:$0xff]
          %103 = vst [vmem:[%s89 + $0x20] sm:$0xff] %v102
          %v104 = vld [vmem:[%s88 + $0x28] sm:$0xff]
          %105 = vst [vmem:[%s89 + $0x28] sm:$0xff] %v104
          %v106 = vld [vmem:[%s88 + $0x30] sm:$0xff]
          %107 = vst [vmem:[%s89 + $0x30] sm:$0xff] %v106
          %v108 = vld [vmem:[%s88 + $0x38] sm:$0xff]
          %109 = vst [vmem:[%s89 + $0x38] sm:$0xff] %v108
        $region36: #{custom-call.2} parent=30 // loop_footer
          %s110 = scalar_lea.vmem %s88, 64
          %s111 = scalar_lea.vmem %s89, 64
          %v112 = vld [vmem:[%s88 + $0x40] sm:$0xff]
        $region37: #{custom-call.2} parent=30 // loop_footer_branch
          %113 = sbr.rel target = $region33
        $region38: #{custom-call.2} parent=30 // loop_exit
          _
        // While loop
        $region39: #{custom-call.2} parent=30 // loop_pre_header
          _
        $region40: #{custom-call.2} parent=30 // loop_header
          %s114 = sphi %s88, %s122
          %s115 = sphi %s89, %s123
          %v116 = vphi %v90, %v116
          %p117 = scmp.gt.s32.totalorder %s114, %s86
        $region41: #{custom-call.2} parent=30 // loop_header_branch
          %119 = sbr.rel (%p117) target = $region45
        $region42: #{custom-call.2} parent=30 // loop_body
          %v120 = vld [vmem:[%s114] sm:$0xff]
          %121 = vst [vmem:[%s115] sm:$0xff] %v120
        $region43: #{custom-call.2} parent=30 // loop_footer
          %s122 = scalar_lea.vmem %s114, 8
          %s123 = scalar_lea.vmem %s115, 8
        $region44: #{custom-call.2} parent=30 // loop_footer_branch
          %124 = sbr.rel target = $region40
        $region45: #{custom-call.2} parent=30 // loop_exit
          _
      $region31: #{custom-call.2} parent=26 // pred_fallthru
        _
      %s125 = sand.u32 64, 7
      %s126 = sshllo.u32 0, %s125
      %s127 = smul.u32 %s78, 128
      %s128 = sshra.s32 %s127, 4
      %s129 = scalar_lea.vmem [#allocation1], %s128
      %s130 = smul.u32 %s78, 128
      %s131 = sshra.s32 %s130, 4
      %s132 = scalar_lea.vmem %s1, %s131
      %v133 = vld [vmem:[%s132] sm:%s126]
      %134 = vst [vmem:[%s129] sm:%s126] %v133
    $region27: #{custom-call.2} parent=1 // pred_fallthru
      _
    %p136 = scmp.gt.s32.totalorder 64, 0
    // Predicated region
    $region46: #{custom-call.2} parent=1 // pred_check
      %p137 = pneg %p136
    $region47: #{custom-call.2} parent=1 // pred_check_branch
      %139 = sbr.rel (%p137) target = $region49
    $region48: #{custom-call.2} parent=1 // pred_region
      %s140 = sshra.s32 64, 3
      %p141 = scmp.gt.s32.totalorder %s140, 0
      // Predicated region
      $region50: #{custom-call.2} parent=48 // pred_check
        %p142 = pneg %p141
      $region51: #{custom-call.2} parent=48 // pred_check_branch
        %144 = sbr.rel (%p142) target = $region53
      $region52: #{custom-call.2} parent=48 // pred_region
        %s145 = ssub.s32 %s140, 1
        %s146 = smul.u32 %s145, 128
        %s147 = sshra.s32 %s146, 4
        %s148 = scalar_lea.vmem %s2, %s147
        %v149 = vld [vmem:[%s2] sm:$0xff]
        // While loop
        $region54: #{custom-call.2} parent=52 // loop_pre_header
          _
        $region55: #{custom-call.2} parent=52 // loop_header
          %s150 = sphi %s2, %s172
          %s151 = sphi [#allocation2], %s173
          %v152 = vphi %v149, %v174
          %s153 = ssub.s32 %s148, 64
          %p154 = scmp.gt.s32.totalorder %s150, %s153
        $region56: #{custom-call.2} parent=52 // loop_header_branch
          %156 = sbr.rel (%p154) target = $region60
        $region57: #{custom-call.2} parent=52 // loop_body
          %157 = vst [vmem:[%s151] sm:$0xff] %v152
          %v158 = vld [vmem:[%s150 + $0x8] sm:$0xff]
          %159 = vst [vmem:[%s151 + $0x8] sm:$0xff] %v158
          %v160 = vld [vmem:[%s150 + $0x10] sm:$0xff]
          %161 = vst [vmem:[%s151 + $0x10] sm:$0xff] %v160
          %v162 = vld [vmem:[%s150 + $0x18] sm:$0xff]
          %163 = vst [vmem:[%s151 + $0x18] sm:$0xff] %v162
          %v164 = vld [vmem:[%s150 + $0x20] sm:$0xff]
          %165 = vst [vmem:[%s151 + $0x20] sm:$0xff] %v164
          %v166 = vld [vmem:[%s150 + $0x28] sm:$0xff]
          %167 = vst [vmem:[%s151 + $0x28] sm:$0xff] %v166
          %v168 = vld [vmem:[%s150 + $0x30] sm:$0xff]
          %169 = vst [vmem:[%s151 + $0x30] sm:$0xff] %v168
          %v170 = vld [vmem:[%s150 + $0x38] sm:$0xff]
          %171 = vst [vmem:[%s151 + $0x38] sm:$0xff] %v170
        $region58: #{custom-call.2} parent=52 // loop_footer
          %s172 = scalar_lea.vmem %s150, 64
          %s173 = scalar_lea.vmem %s151, 64
          %v174 = vld [vmem:[%s150 + $0x40] sm:$0xff]
        $region59: #{custom-call.2} parent=52 // loop_footer_branch
          %175 = sbr.rel target = $region55
        $region60: #{custom-call.2} parent=52 // loop_exit
          _
        // While loop
        $region61: #{custom-call.2} parent=52 // loop_pre_header
          _
        $region62: #{custom-call.2} parent=52 // loop_header
          %s176 = sphi %s150, %s184
          %s177 = sphi %s151, %s185
          %v178 = vphi %v152, %v178
          %p179 = scmp.gt.s32.totalorder %s176, %s148
        $region63: #{custom-call.2} parent=52 // loop_header_branch
          %181 = sbr.rel (%p179) target = $region67
        $region64: #{custom-call.2} parent=52 // loop_body
          %v182 = vld [vmem:[%s176] sm:$0xff]
          %183 = vst [vmem:[%s177] sm:$0xff] %v182
        $region65: #{custom-call.2} parent=52 // loop_footer
          %s184 = scalar_lea.vmem %s176, 8
          %s185 = scalar_lea.vmem %s177, 8
        $region66: #{custom-call.2} parent=52 // loop_footer_branch
          %186 = sbr.rel target = $region62
        $region67: #{custom-call.2} parent=52 // loop_exit
          _
      $region53: #{custom-call.2} parent=48 // pred_fallthru
        _
      %s187 = sand.u32 64, 7
      %s188 = sshllo.u32 0, %s187
      %s189 = smul.u32 %s140, 128
      %s190 = sshra.s32 %s189, 4
      %s191 = scalar_lea.vmem [#allocation2], %s190
      %s192 = smul.u32 %s140, 128
      %s193 = sshra.s32 %s192, 4
      %s194 = scalar_lea.vmem %s2, %s193
      %v195 = vld [vmem:[%s194] sm:%s188]
      %196 = vst [vmem:[%s191] sm:%s188] %v195
    $region49: #{custom-call.2} parent=1 // pred_fallthru
      _
    %p198 = scmp.gt.s32.totalorder 64, 0
    // Predicated region
    $region68: #{custom-call.2} parent=1 // pred_check
      %p199 = pneg %p198
    $region69: #{custom-call.2} parent=1 // pred_check_branch
      %201 = sbr.rel (%p199) target = $region71
    $region70: #{custom-call.2} parent=1 // pred_region
      %s202 = sshra.s32 64, 3
      %p203 = scmp.gt.s32.totalorder %s202, 0
      // Predicated region
      $region72: #{custom-call.2} parent=70 // pred_check
        %p204 = pneg %p203
      $region73: #{custom-call.2} parent=70 // pred_check_branch
        %206 = sbr.rel (%p204) target = $region75
      $region74: #{custom-call.2} parent=70 // pred_region
        %s207 = ssub.s32 %s202, 1
        %s208 = smul.u32 %s207, 128
        %s209 = sshra.s32 %s208, 4
        %s210 = scalar_lea.vmem %s3, %s209
        %v211 = vld [vmem:[%s3] sm:$0xff]
        // While loop
        $region76: #{custom-call.2} parent=74 // loop_pre_header
          _
        $region77: #{custom-call.2} parent=74 // loop_header
          %s212 = sphi %s3, %s234
          %s213 = sphi [#allocation3], %s235
          %v214 = vphi %v211, %v236
          %s215 = ssub.s32 %s210, 64
          %p216 = scmp.gt.s32.totalorder %s212, %s215
        $region78: #{custom-call.2} parent=74 // loop_header_branch
          %218 = sbr.rel (%p216) target = $region82
        $region79: #{custom-call.2} parent=74 // loop_body
          %219 = vst [vmem:[%s213] sm:$0xff] %v214
          %v220 = vld [vmem:[%s212 + $0x8] sm:$0xff]
          %221 = vst [vmem:[%s213 + $0x8] sm:$0xff] %v220
          %v222 = vld [vmem:[%s212 + $0x10] sm:$0xff]
          %223 = vst [vmem:[%s213 + $0x10] sm:$0xff] %v222
          %v224 = vld [vmem:[%s212 + $0x18] sm:$0xff]
          %225 = vst [vmem:[%s213 + $0x18] sm:$0xff] %v224
          %v226 = vld [vmem:[%s212 + $0x20] sm:$0xff]
          %227 = vst [vmem:[%s213 + $0x20] sm:$0xff] %v226
          %v228 = vld [vmem:[%s212 + $0x28] sm:$0xff]
          %229 = vst [vmem:[%s213 + $0x28] sm:$0xff] %v228
          %v230 = vld [vmem:[%s212 + $0x30] sm:$0xff]
          %231 = vst [vmem:[%s213 + $0x30] sm:$0xff] %v230
          %v232 = vld [vmem:[%s212 + $0x38] sm:$0xff]
          %233 = vst [vmem:[%s213 + $0x38] sm:$0xff] %v232
        $region80: #{custom-call.2} parent=74 // loop_footer
          %s234 = scalar_lea.vmem %s212, 64
          %s235 = scalar_lea.vmem %s213, 64
          %v236 = vld [vmem:[%s212 + $0x40] sm:$0xff]
        $region81: #{custom-call.2} parent=74 // loop_footer_branch
          %237 = sbr.rel target = $region77
        $region82: #{custom-call.2} parent=74 // loop_exit
          _
        // While loop
        $region83: #{custom-call.2} parent=74 // loop_pre_header
          _
        $region84: #{custom-call.2} parent=74 // loop_header
          %s238 = sphi %s212, %s246
          %s239 = sphi %s213, %s247
          %v240 = vphi %v214, %v240
          %p241 = scmp.gt.s32.totalorder %s238, %s210
        $region85: #{custom-call.2} parent=74 // loop_header_branch
          %243 = sbr.rel (%p241) target = $region89
        $region86: #{custom-call.2} parent=74 // loop_body
          %v244 = vld [vmem:[%s238] sm:$0xff]
          %245 = vst [vmem:[%s239] sm:$0xff] %v244
        $region87: #{custom-call.2} parent=74 // loop_footer
          %s246 = scalar_lea.vmem %s238, 8
          %s247 = scalar_lea.vmem %s239, 8
        $region88: #{custom-call.2} parent=74 // loop_footer_branch
          %248 = sbr.rel target = $region84
        $region89: #{custom-call.2} parent=74 // loop_exit
          _
      $region75: #{custom-call.2} parent=70 // pred_fallthru
        _
      %s249 = sand.u32 64, 7
      %s250 = sshllo.u32 0, %s249
      %s251 = smul.u32 %s202, 128
      %s252 = sshra.s32 %s251, 4
      %s253 = scalar_lea.vmem [#allocation3], %s252
      %s254 = smul.u32 %s202, 128
      %s255 = sshra.s32 %s254, 4
      %s256 = scalar_lea.vmem %s3, %s255
      %v257 = vld [vmem:[%s256] sm:%s250]
      %258 = vst [vmem:[%s253] sm:%s250] %v257
    $region71: #{custom-call.2} parent=1 // pred_fallthru
      _
    %s259 = smov [#allocation12]
    %v260 = vld [vmem:[#allocation0] sm:$0xff]
    %261 = vst [vmem:[%s259] sm:$0xff] %v260
    %s262 = scalar_lea.vmem %s259, 8
    %s263 = scalar_lea.vmem [#allocation0], 8
    %v264 = vld [vmem:[%s263] sm:$0xff]
    %265 = vst [vmem:[%s262] sm:$0xff] %v264
    %s266 = scalar_lea.vmem %s259, 16
    %s267 = scalar_lea.vmem [#allocation0], 16
    %v268 = vld [vmem:[%s267] sm:$0xff]
    %269 = vst [vmem:[%s266] sm:$0xff] %v268
    %s270 = scalar_lea.vmem %s259, 24
    %s271 = scalar_lea.vmem [#allocation0], 24
    %v272 = vld [vmem:[%s271] sm:$0xff]
    %273 = vst [vmem:[%s270] sm:$0xff] %v272
    %s274 = scalar_lea.vmem %s259, 32
    %s275 = scalar_lea.vmem [#allocation0], 32
    %v276 = vld [vmem:[%s275] sm:$0xff]
    %277 = vst [vmem:[%s274] sm:$0xff] %v276
    %s278 = scalar_lea.vmem %s259, 40
    %s279 = scalar_lea.vmem [#allocation0], 40
    %v280 = vld [vmem:[%s279] sm:$0xff]
    %281 = vst [vmem:[%s278] sm:$0xff] %v280
    %s282 = scalar_lea.vmem %s259, 48
    %s283 = scalar_lea.vmem [#allocation0], 48
    %v284 = vld [vmem:[%s283] sm:$0xff]
    %285 = vst [vmem:[%s282] sm:$0xff] %v284
    %s286 = scalar_lea.vmem %s259, 56
    %s287 = scalar_lea.vmem [#allocation0], 56
    %v288 = vld [vmem:[%s287] sm:$0xff]
    %289 = vst [vmem:[%s286] sm:$0xff] %v288
    %s290 = smov [#allocation13]
    %v291 = vld [vmem:[#allocation1] sm:$0xff]
    %292 = vst [vmem:[%s290] sm:$0xff] %v291
    %s293 = scalar_lea.vmem %s290, 8
    %s294 = scalar_lea.vmem [#allocation1], 8
    %v295 = vld [vmem:[%s294] sm:$0xff]
    %296 = vst [vmem:[%s293] sm:$0xff] %v295
    %s297 = scalar_lea.vmem %s290, 16
    %s298 = scalar_lea.vmem [#allocation1], 16
    %v299 = vld [vmem:[%s298] sm:$0xff]
    %300 = vst [vmem:[%s297] sm:$0xff] %v299
    %s301 = scalar_lea.vmem %s290, 24
    %s302 = scalar_lea.vmem [#allocation1], 24
    %v303 = vld [vmem:[%s302] sm:$0xff]
    %304 = vst [vmem:[%s301] sm:$0xff] %v303
    %s305 = scalar_lea.vmem %s290, 32
    %s306 = scalar_lea.vmem [#allocation1], 32
    %v307 = vld [vmem:[%s306] sm:$0xff]
    %308 = vst [vmem:[%s305] sm:$0xff] %v307
    %s309 = scalar_lea.vmem %s290, 40
    %s310 = scalar_lea.vmem [#allocation1], 40
    %v311 = vld [vmem:[%s310] sm:$0xff]
    %312 = vst [vmem:[%s309] sm:$0xff] %v311
    %s313 = scalar_lea.vmem %s290, 48
    %s314 = scalar_lea.vmem [#allocation1], 48
    %v315 = vld [vmem:[%s314] sm:$0xff]
    %316 = vst [vmem:[%s313] sm:$0xff] %v315
    %s317 = scalar_lea.vmem %s290, 56
    %s318 = scalar_lea.vmem [#allocation1], 56
    %v319 = vld [vmem:[%s318] sm:$0xff]
    %320 = vst [vmem:[%s317] sm:$0xff] %v319
    %s321 = smov [#allocation14]
    %v322 = vld [vmem:[#allocation2] sm:$0xff]
    %323 = vst [vmem:[%s321] sm:$0xff] %v322
    %s324 = scalar_lea.vmem %s321, 8
    %s325 = scalar_lea.vmem [#allocation2], 8
    %v326 = vld [vmem:[%s325] sm:$0xff]
    %327 = vst [vmem:[%s324] sm:$0xff] %v326
    %s328 = scalar_lea.vmem %s321, 16
    %s329 = scalar_lea.vmem [#allocation2], 16
    %v330 = vld [vmem:[%s329] sm:$0xff]
    %331 = vst [vmem:[%s328] sm:$0xff] %v330
    %s332 = scalar_lea.vmem %s321, 24
    %s333 = scalar_lea.vmem [#allocation2], 24
    %v334 = vld [vmem:[%s333] sm:$0xff]
    %335 = vst [vmem:[%s332] sm:$0xff] %v334
    %s336 = scalar_lea.vmem %s321, 32
    %s337 = scalar_lea.vmem [#allocation2], 32
    %v338 = vld [vmem:[%s337] sm:$0xff]
    %339 = vst [vmem:[%s336] sm:$0xff] %v338
    %s340 = scalar_lea.vmem %s321, 40
    %s341 = scalar_lea.vmem [#allocation2], 40
    %v342 = vld [vmem:[%s341] sm:$0xff]
    %343 = vst [vmem:[%s340] sm:$0xff] %v342
    %s344 = scalar_lea.vmem %s321, 48
    %s345 = scalar_lea.vmem [#allocation2], 48
    %v346 = vld [vmem:[%s345] sm:$0xff]
    %347 = vst [vmem:[%s344] sm:$0xff] %v346
    %s348 = scalar_lea.vmem %s321, 56
    %s349 = scalar_lea.vmem [#allocation2], 56
    %v350 = vld [vmem:[%s349] sm:$0xff]
    %351 = vst [vmem:[%s348] sm:$0xff] %v350
    %s352 = smov [#allocation15]
    %v353 = vld [vmem:[#allocation3] sm:$0xff]
    %354 = vst [vmem:[%s352] sm:$0xff] %v353
    %s355 = scalar_lea.vmem %s352, 8
    %s356 = scalar_lea.vmem [#allocation3], 8
    %v357 = vld [vmem:[%s356] sm:$0xff]
    %358 = vst [vmem:[%s355] sm:$0xff] %v357
    %s359 = scalar_lea.vmem %s352, 16
    %s360 = scalar_lea.vmem [#allocation3], 16
    %v361 = vld [vmem:[%s360] sm:$0xff]
    %362 = vst [vmem:[%s359] sm:$0xff] %v361
    %s363 = scalar_lea.vmem %s352, 24
    %s364 = scalar_lea.vmem [#allocation3], 24
    %v365 = vld [vmem:[%s364] sm:$0xff]
    %366 = vst [vmem:[%s363] sm:$0xff] %v365
    %s367 = scalar_lea.vmem %s352, 32
    %s368 = scalar_lea.vmem [#allocation3], 32
    %v369 = vld [vmem:[%s368] sm:$0xff]
    %370 = vst [vmem:[%s367] sm:$0xff] %v369
    %s371 = scalar_lea.vmem %s352, 40
    %s372 = scalar_lea.vmem [#allocation3], 40
    %v373 = vld [vmem:[%s372] sm:$0xff]
    %374 = vst [vmem:[%s371] sm:$0xff] %v373
    %s375 = scalar_lea.vmem %s352, 48
    %s376 = scalar_lea.vmem [#allocation3], 48
    %v377 = vld [vmem:[%s376] sm:$0xff]
    %378 = vst [vmem:[%s375] sm:$0xff] %v377
    %s379 = scalar_lea.vmem %s352, 56
    %s380 = scalar_lea.vmem [#allocation3], 56
    %v381 = vld [vmem:[%s380] sm:$0xff]
    %382 = vst [vmem:[%s379] sm:$0xff] %v381
    %383 = vst [vmem:[#allocation8] sm:$0xff] 0.0
    %s384 = scalar_lea.vmem [#allocation8], 8
    %385 = vst [vmem:[%s384] sm:$0xff] 0.0
    %s386 = scalar_lea.vmem [#allocation8], 16
    %387 = vst [vmem:[%s386] sm:$0xff] 0.0
    %s388 = scalar_lea.vmem [#allocation8], 24
    %389 = vst [vmem:[%s388] sm:$0xff] 0.0
    %s390 = scalar_lea.vmem [#allocation8], 32
    %391 = vst [vmem:[%s390] sm:$0xff] 0.0
    %s392 = scalar_lea.vmem [#allocation8], 40
    %393 = vst [vmem:[%s392] sm:$0xff] 0.0
    %s394 = scalar_lea.vmem [#allocation8], 48
    %395 = vst [vmem:[%s394] sm:$0xff] 0.0
    %s396 = scalar_lea.vmem [#allocation8], 56
    %397 = vst [vmem:[%s396] sm:$0xff] 0.0
    %398 = vst [vmem:[#allocation9] sm:$0xff] 0.0
    %s399 = scalar_lea.vmem [#allocation9], 8
    %400 = vst [vmem:[%s399] sm:$0xff] 0.0
    %s401 = scalar_lea.vmem [#allocation9], 16
    %402 = vst [vmem:[%s401] sm:$0xff] 0.0
    %s403 = scalar_lea.vmem [#allocation9], 24
    %404 = vst [vmem:[%s403] sm:$0xff] 0.0
    %s405 = scalar_lea.vmem [#allocation9], 32
    %406 = vst [vmem:[%s405] sm:$0xff] 0.0
    %s407 = scalar_lea.vmem [#allocation9], 40
    %408 = vst [vmem:[%s407] sm:$0xff] 0.0
    %s409 = scalar_lea.vmem [#allocation9], 48
    %410 = vst [vmem:[%s409] sm:$0xff] 0.0
    %s411 = scalar_lea.vmem [#allocation9], 56
    %412 = vst [vmem:[%s411] sm:$0xff] 0.0
    %413 = vst [vmem:[#allocation10] sm:$0xff] 0.0
    %s414 = scalar_lea.vmem [#allocation10], 8
    %415 = vst [vmem:[%s414] sm:$0xff] 0.0
    %s416 = scalar_lea.vmem [#allocation10], 16
    %417 = vst [vmem:[%s416] sm:$0xff] 0.0
    %s418 = scalar_lea.vmem [#allocation10], 24
    %419 = vst [vmem:[%s418] sm:$0xff] 0.0
    %s420 = scalar_lea.vmem [#allocation10], 32
    %421 = vst [vmem:[%s420] sm:$0xff] 0.0
    %s422 = scalar_lea.vmem [#allocation10], 40
    %423 = vst [vmem:[%s422] sm:$0xff] 0.0
    %s424 = scalar_lea.vmem [#allocation10], 48
    %425 = vst [vmem:[%s424] sm:$0xff] 0.0
    %s426 = scalar_lea.vmem [#allocation10], 56
    %427 = vst [vmem:[%s426] sm:$0xff] 0.0
    %428 = vst [vmem:[#allocation11] sm:$0xff] 0.0
    %s429 = scalar_lea.vmem [#allocation11], 8
    %430 = vst [vmem:[%s429] sm:$0xff] 0.0
    %s431 = scalar_lea.vmem [#allocation11], 16
    %432 = vst [vmem:[%s431] sm:$0xff] 0.0
    %s433 = scalar_lea.vmem [#allocation11], 24
    %434 = vst [vmem:[%s433] sm:$0xff] 0.0
    %s435 = scalar_lea.vmem [#allocation11], 32
    %436 = vst [vmem:[%s435] sm:$0xff] 0.0
    %s437 = scalar_lea.vmem [#allocation11], 40
    %438 = vst [vmem:[%s437] sm:$0xff] 0.0
    %s439 = scalar_lea.vmem [#allocation11], 48
    %440 = vst [vmem:[%s439] sm:$0xff] 0.0
    %s441 = scalar_lea.vmem [#allocation11], 56
    %442 = vst [vmem:[%s441] sm:$0xff] 0.0
    %s443 = smov [#allocation8]
    %v444 = vlaneseq
    %v445 = vand.u32 %v444, 127
    %v446 = vmov %v445
    %v447 = vlaneseq
    %v448 = vshrl.u32 %v447, 7
    %v449 = vmov %v448
    %v450 = vld [vmem:[%s443] sm:$0xff]
    %vm453 = vcmp.eq.s32.totalorder %v449, %v446
    %v454 = vsel %vm453, 1.0, %v450
    %455 = vst [vmem:[%s443] sm:$0xff] %v454
    %s456 = scalar_lea.vmem %s443, 8
    %v457 = vld [vmem:[%s456] sm:$0xff]
    %v459 = vadd.s32 %v449, 8
    %vm460 = vcmp.eq.s32.totalorder %v459, %v446
    %v461 = vsel %vm460, 1.0, %v457
    %462 = vst [vmem:[%s456] sm:$0xff] %v461
    %s463 = scalar_lea.vmem %s443, 16
    %v464 = vld [vmem:[%s463] sm:$0xff]
    %v466 = vadd.s32 %v449, 16
    %vm467 = vcmp.eq.s32.totalorder %v466, %v446
    %v468 = vsel %vm467, 1.0, %v464
    %469 = vst [vmem:[%s463] sm:$0xff] %v468
    %s470 = scalar_lea.vmem %s443, 24
    %v471 = vld [vmem:[%s470] sm:$0xff]
    %v473 = vadd.s32 %v449, 24
    %vm474 = vcmp.eq.s32.totalorder %v473, %v446
    %v475 = vsel %vm474, 1.0, %v471
    %476 = vst [vmem:[%s470] sm:$0xff] %v475
    %s477 = scalar_lea.vmem %s443, 32
    %v478 = vld [vmem:[%s477] sm:$0xff]
    %v480 = vadd.s32 %v449, 32
    %vm481 = vcmp.eq.s32.totalorder %v480, %v446
    %v482 = vsel %vm481, 1.0, %v478
    %483 = vst [vmem:[%s477] sm:$0xff] %v482
    %s484 = scalar_lea.vmem %s443, 40
    %v485 = vld [vmem:[%s484] sm:$0xff]
    %v487 = vadd.s32 %v449, 40
    %vm488 = vcmp.eq.s32.totalorder %v487, %v446
    %v489 = vsel %vm488, 1.0, %v485
    %490 = vst [vmem:[%s484] sm:$0xff] %v489
    %s491 = scalar_lea.vmem %s443, 48
    %v492 = vld [vmem:[%s491] sm:$0xff]
    %v494 = vadd.s32 %v449, 48
    %vm495 = vcmp.eq.s32.totalorder %v494, %v446
    %v496 = vsel %vm495, 1.0, %v492
    %497 = vst [vmem:[%s491] sm:$0xff] %v496
    %s498 = scalar_lea.vmem %s443, 56
    %v499 = vld [vmem:[%s498] sm:$0xff]
    %v501 = vadd.s32 %v449, 56
    %vm502 = vcmp.eq.s32.totalorder %v501, %v446
    %v503 = vsel %vm502, 1.0, %v499
    %504 = vst [vmem:[%s498] sm:$0xff] %v503
    %s505 = smov [#allocation11]
    %v506 = vlaneseq
    %v507 = vand.u32 %v506, 127
    %v508 = vmov %v507
    %v509 = vlaneseq
    %v510 = vshrl.u32 %v509, 7
    %v511 = vmov %v510
    %v512 = vld [vmem:[%s505] sm:$0xff]
    %vm515 = vcmp.eq.s32.totalorder %v511, %v508
    %v516 = vsel %vm515, 1.0, %v512
    %517 = vst [vmem:[%s505] sm:$0xff] %v516
    %s518 = scalar_lea.vmem %s505, 8
    %v519 = vld [vmem:[%s518] sm:$0xff]
    %v521 = vadd.s32 %v511, 8
    %vm522 = vcmp.eq.s32.totalorder %v521, %v508
    %v523 = vsel %vm522, 1.0, %v519
    %524 = vst [vmem:[%s518] sm:$0xff] %v523
    %s525 = scalar_lea.vmem %s505, 16
    %v526 = vld [vmem:[%s525] sm:$0xff]
    %v528 = vadd.s32 %v511, 16
    %vm529 = vcmp.eq.s32.totalorder %v528, %v508
    %v530 = vsel %vm529, 1.0, %v526
    %531 = vst [vmem:[%s525] sm:$0xff] %v530
    %s532 = scalar_lea.vmem %s505, 24
    %v533 = vld [vmem:[%s532] sm:$0xff]
    %v535 = vadd.s32 %v511, 24
    %vm536 = vcmp.eq.s32.totalorder %v535, %v508
    %v537 = vsel %vm536, 1.0, %v533
    %538 = vst [vmem:[%s532] sm:$0xff] %v537
    %s539 = scalar_lea.vmem %s505, 32
    %v540 = vld [vmem:[%s539] sm:$0xff]
    %v542 = vadd.s32 %v511, 32
    %vm543 = vcmp.eq.s32.totalorder %v542, %v508
    %v544 = vsel %vm543, 1.0, %v540
    %545 = vst [vmem:[%s539] sm:$0xff] %v544
    %s546 = scalar_lea.vmem %s505, 40
    %v547 = vld [vmem:[%s546] sm:$0xff]
    %v549 = vadd.s32 %v511, 40
    %vm550 = vcmp.eq.s32.totalorder %v549, %v508
    %v551 = vsel %vm550, 1.0, %v547
    %552 = vst [vmem:[%s546] sm:$0xff] %v551
    %s553 = scalar_lea.vmem %s505, 48
    %v554 = vld [vmem:[%s553] sm:$0xff]
    %v556 = vadd.s32 %v511, 48
    %vm557 = vcmp.eq.s32.totalorder %v556, %v508
    %v558 = vsel %vm557, 1.0, %v554
    %559 = vst [vmem:[%s553] sm:$0xff] %v558
    %s560 = scalar_lea.vmem %s505, 56
    %v561 = vld [vmem:[%s560] sm:$0xff]
    %v563 = vadd.s32 %v511, 56
    %vm564 = vcmp.eq.s32.totalorder %v563, %v508
    %v565 = vsel %vm564, 1.0, %v561
    %566 = vst [vmem:[%s560] sm:$0xff] %v565
    // While loop
    $region90: #{custom-call.2} parent=1 // loop_pre_header
      _
    $region91: #{custom-call.2} parent=1 // loop_header
      %s568 = sphi 0, %s3602
      %v569 = vlaneseq
      %v570 = vand.u32 %v569, 127
      %v571 = vmov %v570
      %v572 = vlaneseq
      %v573 = vshrl.u32 %v572, 7
      %v574 = vmov %v573
      %s575 = smov [#allocation12]
      %v576 = vlaneseq
      %v577 = vand.u32 %v576, 127
      %vm578 = vcmp.ge.s32.totalorder %v577, 0
      %vm579 = vcmp.lt.s32.totalorder %v577, 64
      %vm580 = vmand %vm578, %vm579
      %v581 = vld [vmem:[%s575] sm:$0xff]
      %v582 = vsel %vm580, %v581, 0.0
      %v583 = vmul.f32 %v582, %v582
      %vm586 = vcmp.eq.s32.totalorder %v574, %v571
      %v587 = vsel %vm586, 0.0, %v583
      %s588 = scalar_lea.vmem %s575, 8
      %v589 = vld [vmem:[%s588] sm:$0xff]
      %v590 = vsel %vm580, %v589, 0.0
      %v591 = vmul.f32 %v590, %v590
      %v593 = vadd.s32 %v574, 8
      %vm594 = vcmp.eq.s32.totalorder %v593, %v571
      %v595 = vsel %vm594, 0.0, %v591
      %v596 = vadd.f32 %v587, %v595
      %v597 = vadd.f32 %v583, %v591
      %s598 = scalar_lea.vmem %s575, 16
      %v599 = vld [vmem:[%s598] sm:$0xff]
      %v600 = vsel %vm580, %v599, 0.0
      %v601 = vmul.f32 %v600, %v600
      %v603 = vadd.s32 %v574, 16
      %vm604 = vcmp.eq.s32.totalorder %v603, %v571
      %v605 = vsel %vm604, 0.0, %v601
      %v606 = vadd.f32 %v596, %v605
      %v607 = vadd.f32 %v597, %v601
      %s608 = scalar_lea.vmem %s575, 24
      %v609 = vld [vmem:[%s608] sm:$0xff]
      %v610 = vsel %vm580, %v609, 0.0
      %v611 = vmul.f32 %v610, %v610
      %v613 = vadd.s32 %v574, 24
      %vm614 = vcmp.eq.s32.totalorder %v613, %v571
      %v615 = vsel %vm614, 0.0, %v611
      %v616 = vadd.f32 %v606, %v615
      %v617 = vadd.f32 %v607, %v611
      %s618 = scalar_lea.vmem %s575, 32
      %v619 = vld [vmem:[%s618] sm:$0xff]
      %v620 = vsel %vm580, %v619, 0.0
      %v621 = vmul.f32 %v620, %v620
      %v623 = vadd.s32 %v574, 32
      %vm624 = vcmp.eq.s32.totalorder %v623, %v571
      %v625 = vsel %vm624, 0.0, %v621
      %v626 = vadd.f32 %v616, %v625
      %v627 = vadd.f32 %v617, %v621
      %s628 = scalar_lea.vmem %s575, 40
      %v629 = vld [vmem:[%s628] sm:$0xff]
      %v630 = vsel %vm580, %v629, 0.0
      %v631 = vmul.f32 %v630, %v630
      %v633 = vadd.s32 %v574, 40
      %vm634 = vcmp.eq.s32.totalorder %v633, %v571
      %v635 = vsel %vm634, 0.0, %v631
      %v636 = vadd.f32 %v626, %v635
      %v637 = vadd.f32 %v627, %v631
      %s638 = scalar_lea.vmem %s575, 48
      %v639 = vld [vmem:[%s638] sm:$0xff]
      %v640 = vsel %vm580, %v639, 0.0
      %v641 = vmul.f32 %v640, %v640
      %v643 = vadd.s32 %v574, 48
      %vm644 = vcmp.eq.s32.totalorder %v643, %v571
      %v645 = vsel %vm644, 0.0, %v641
      %v646 = vadd.f32 %v636, %v645
      %v647 = vadd.f32 %v637, %v641
      %s648 = scalar_lea.vmem %s575, 56
      %v649 = vld [vmem:[%s648] sm:$0xff]
      %v650 = vsel %vm580, %v649, 0.0
      %v651 = vmul.f32 %v650, %v650
      %v653 = vadd.s32 %v574, 56
      %vm654 = vcmp.eq.s32.totalorder %v653, %v571
      %v655 = vsel %vm654, 0.0, %v651
      %v656 = vadd.f32 %v646, %v655
      %v657 = vadd.f32 %v647, %v651
      %v658 = vlaneseq
      %v659 = vand.u32 %v658, 127
      %v660 = vmov %v659
      %v661 = vlaneseq
      %v662 = vshrl.u32 %v661, 7
      %v663 = vmov %v662
      %s664 = smov [#allocation13]
      %v665 = vlaneseq
      %v666 = vand.u32 %v665, 127
      %vm667 = vcmp.ge.s32.totalorder %v666, 0
      %vm668 = vcmp.lt.s32.totalorder %v666, 64
      %vm669 = vmand %vm667, %vm668
      %v670 = vld [vmem:[%s664] sm:$0xff]
      %v671 = vsel %vm669, %v670, 0.0
      %v672 = vmul.f32 %v671, %v671
      %v673 = vadd.f32 %v656, %v672
      %v674 = vadd.f32 %v657, %v672
      %s675 = scalar_lea.vmem %s664, 8
      %v676 = vld [vmem:[%s675] sm:$0xff]
      %v677 = vsel %vm669, %v676, 0.0
      %v678 = vmul.f32 %v677, %v677
      %v679 = vadd.f32 %v673, %v678
      %v680 = vadd.f32 %v674, %v678
      %s681 = scalar_lea.vmem %s664, 16
      %v682 = vld [vmem:[%s681] sm:$0xff]
      %v683 = vsel %vm669, %v682, 0.0
      %v684 = vmul.f32 %v683, %v683
      %v685 = vadd.f32 %v679, %v684
      %v686 = vadd.f32 %v680, %v684
      %s687 = scalar_lea.vmem %s664, 24
      %v688 = vld [vmem:[%s687] sm:$0xff]
      %v689 = vsel %vm669, %v688, 0.0
      %v690 = vmul.f32 %v689, %v689
      %v691 = vadd.f32 %v685, %v690
      %v692 = vadd.f32 %v686, %v690
      %s693 = scalar_lea.vmem %s664, 32
      %v694 = vld [vmem:[%s693] sm:$0xff]
      %v695 = vsel %vm669, %v694, 0.0
      %v696 = vmul.f32 %v695, %v695
      %v697 = vadd.f32 %v691, %v696
      %v698 = vadd.f32 %v692, %v696
      %s699 = scalar_lea.vmem %s664, 40
      %v700 = vld [vmem:[%s699] sm:$0xff]
      %v701 = vsel %vm669, %v700, 0.0
      %v702 = vmul.f32 %v701, %v701
      %v703 = vadd.f32 %v697, %v702
      %v704 = vadd.f32 %v698, %v702
      %s705 = scalar_lea.vmem %s664, 48
      %v706 = vld [vmem:[%s705] sm:$0xff]
      %v707 = vsel %vm669, %v706, 0.0
      %v708 = vmul.f32 %v707, %v707
      %v709 = vadd.f32 %v703, %v708
      %v710 = vadd.f32 %v704, %v708
      %s711 = scalar_lea.vmem %s664, 56
      %v712 = vld [vmem:[%s711] sm:$0xff]
      %v713 = vsel %vm669, %v712, 0.0
      %v714 = vmul.f32 %v713, %v713
      %v715 = vadd.f32 %v709, %v714
      %v716 = vadd.f32 %v710, %v714
      %v717 = vlaneseq
      %v718 = vand.u32 %v717, 127
      %v719 = vmov %v718
      %v720 = vlaneseq
      %v721 = vshrl.u32 %v720, 7
      %v722 = vmov %v721
      %s723 = smov [#allocation14]
      %v724 = vlaneseq
      %v725 = vand.u32 %v724, 127
      %vm726 = vcmp.ge.s32.totalorder %v725, 0
      %vm727 = vcmp.lt.s32.totalorder %v725, 64
      %vm728 = vmand %vm726, %vm727
      %v729 = vld [vmem:[%s723] sm:$0xff]
      %v730 = vsel %vm728, %v729, 0.0
      %v731 = vmul.f32 %v730, %v730
      %v732 = vadd.f32 %v715, %v731
      %v733 = vadd.f32 %v716, %v731
      %s734 = scalar_lea.vmem %s723, 8
      %v735 = vld [vmem:[%s734] sm:$0xff]
      %v736 = vsel %vm728, %v735, 0.0
      %v737 = vmul.f32 %v736, %v736
      %v738 = vadd.f32 %v732, %v737
      %v739 = vadd.f32 %v733, %v737
      %s740 = scalar_lea.vmem %s723, 16
      %v741 = vld [vmem:[%s740] sm:$0xff]
      %v742 = vsel %vm728, %v741, 0.0
      %v743 = vmul.f32 %v742, %v742
      %v744 = vadd.f32 %v738, %v743
      %v745 = vadd.f32 %v739, %v743
      %s746 = scalar_lea.vmem %s723, 24
      %v747 = vld [vmem:[%s746] sm:$0xff]
      %v748 = vsel %vm728, %v747, 0.0
      %v749 = vmul.f32 %v748, %v748
      %v750 = vadd.f32 %v744, %v749
      %v751 = vadd.f32 %v745, %v749
      %s752 = scalar_lea.vmem %s723, 32
      %v753 = vld [vmem:[%s752] sm:$0xff]
      %v754 = vsel %vm728, %v753, 0.0
      %v755 = vmul.f32 %v754, %v754
      %v756 = vadd.f32 %v750, %v755
      %v757 = vadd.f32 %v751, %v755
      %s758 = scalar_lea.vmem %s723, 40
      %v759 = vld [vmem:[%s758] sm:$0xff]
      %v760 = vsel %vm728, %v759, 0.0
      %v761 = vmul.f32 %v760, %v760
      %v762 = vadd.f32 %v756, %v761
      %v763 = vadd.f32 %v757, %v761
      %s764 = scalar_lea.vmem %s723, 48
      %v765 = vld [vmem:[%s764] sm:$0xff]
      %v766 = vsel %vm728, %v765, 0.0
      %v767 = vmul.f32 %v766, %v766
      %v768 = vadd.f32 %v762, %v767
      %v769 = vadd.f32 %v763, %v767
      %s770 = scalar_lea.vmem %s723, 56
      %v771 = vld [vmem:[%s770] sm:$0xff]
      %v772 = vsel %vm728, %v771, 0.0
      %v773 = vmul.f32 %v772, %v772
      %v774 = vadd.f32 %v768, %v773
      %v775 = vadd.f32 %v769, %v773
      %v776 = vlaneseq
      %v777 = vand.u32 %v776, 127
      %v778 = vmov %v777
      %v779 = vlaneseq
      %v780 = vshrl.u32 %v779, 7
      %v781 = vmov %v780
      %s782 = smov [#allocation15]
      %v783 = vlaneseq
      %v784 = vand.u32 %v783, 127
      %vm785 = vcmp.ge.s32.totalorder %v784, 0
      %vm786 = vcmp.lt.s32.totalorder %v784, 64
      %vm787 = vmand %vm785, %vm786
      %v788 = vld [vmem:[%s782] sm:$0xff]
      %v789 = vsel %vm787, %v788, 0.0
      %v790 = vmul.f32 %v789, %v789
      %vm793 = vcmp.eq.s32.totalorder %v781, %v778
      %v794 = vsel %vm793, 0.0, %v790
      %v795 = vadd.f32 %v774, %v794
      %v796 = vadd.f32 %v775, %v790
      %s797 = scalar_lea.vmem %s782, 8
      %v798 = vld [vmem:[%s797] sm:$0xff]
      %v799 = vsel %vm787, %v798, 0.0
      %v800 = vmul.f32 %v799, %v799
      %v802 = vadd.s32 %v781, 8
      %vm803 = vcmp.eq.s32.totalorder %v802, %v778
      %v804 = vsel %vm803, 0.0, %v800
      %v805 = vadd.f32 %v795, %v804
      %v806 = vadd.f32 %v796, %v800
      %s807 = scalar_lea.vmem %s782, 16
      %v808 = vld [vmem:[%s807] sm:$0xff]
      %v809 = vsel %vm787, %v808, 0.0
      %v810 = vmul.f32 %v809, %v809
      %v812 = vadd.s32 %v781, 16
      %vm813 = vcmp.eq.s32.totalorder %v812, %v778
      %v814 = vsel %vm813, 0.0, %v810
      %v815 = vadd.f32 %v805, %v814
      %v816 = vadd.f32 %v806, %v810
      %s817 = scalar_lea.vmem %s782, 24
      %v818 = vld [vmem:[%s817] sm:$0xff]
      %v819 = vsel %vm787, %v818, 0.0
      %v820 = vmul.f32 %v819, %v819
      %v822 = vadd.s32 %v781, 24
      %vm823 = vcmp.eq.s32.totalorder %v822, %v778
      %v824 = vsel %vm823, 0.0, %v820
      %v825 = vadd.f32 %v815, %v824
      %v826 = vadd.f32 %v816, %v820
      %s827 = scalar_lea.vmem %s782, 32
      %v828 = vld [vmem:[%s827] sm:$0xff]
      %v829 = vsel %vm787, %v828, 0.0
      %v830 = vmul.f32 %v829, %v829
      %v832 = vadd.s32 %v781, 32
      %vm833 = vcmp.eq.s32.totalorder %v832, %v778
      %v834 = vsel %vm833, 0.0, %v830
      %v835 = vadd.f32 %v825, %v834
      %v836 = vadd.f32 %v826, %v830
      %s837 = scalar_lea.vmem %s782, 40
      %v838 = vld [vmem:[%s837] sm:$0xff]
      %v839 = vsel %vm787, %v838, 0.0
      %v840 = vmul.f32 %v839, %v839
      %v842 = vadd.s32 %v781, 40
      %vm843 = vcmp.eq.s32.totalorder %v842, %v778
      %v844 = vsel %vm843, 0.0, %v840
      %v845 = vadd.f32 %v835, %v844
      %v846 = vadd.f32 %v836, %v840
      %s847 = scalar_lea.vmem %s782, 48
      %v848 = vld [vmem:[%s847] sm:$0xff]
      %v849 = vsel %vm787, %v848, 0.0
      %v850 = vmul.f32 %v849, %v849
      %v852 = vadd.s32 %v781, 48
      %vm853 = vcmp.eq.s32.totalorder %v852, %v778
      %v854 = vsel %vm853, 0.0, %v850
      %v855 = vadd.f32 %v845, %v854
      %v856 = vadd.f32 %v846, %v850
      %s857 = scalar_lea.vmem %s782, 56
      %v858 = vld [vmem:[%s857] sm:$0xff]
      %v859 = vsel %vm787, %v858, 0.0
      %v860 = vmul.f32 %v859, %v859
      %v862 = vadd.s32 %v781, 56
      %vm863 = vcmp.eq.s32.totalorder %v862, %v778
      %v864 = vsel %vm863, 0.0, %v860
      %v865 = vadd.f32 %v855, %v864
      %v866 = vadd.f32 %v856, %v860
      %867 = vadd.xlane.f32.xlu0 %v866
      %v868 = vpop.xlane.xlu0 %867
      %v869 = vrot.slane %v868, 4
      %v870 = vadd.f32 %v868, %v869
      %v871 = vrot.slane %v870, 2
      %v872 = vadd.f32 %v870, %v871
      %v873 = vrot.slane %v872, 1
      %v874 = vadd.f32 %v872, %v873
      %875 = vadd.xlane.f32.xlu0 %v865
      %v876 = vpop.xlane.xlu0 %875
      %v877 = vrot.slane %v876, 4
      %v878 = vadd.f32 %v876, %v877
      %v879 = vrot.slane %v878, 2
      %v880 = vadd.f32 %v878, %v879
      %v881 = vrot.slane %v880, 1
      %v882 = vadd.f32 %v880, %v881
      %s883 = vtos %v882
      %s884 = vtos %v874
      %s885 = smul.f32 1e-10, %s884
      %p886 = scmp.le.f32.partialorder %s883, %s885
      %p887 = scmp.ge.s32.totalorder %s568, 15
      %p888 = por %p886, %p887
    $region92: #{custom-call.2} parent=1 // loop_header_branch
      %3604 = sbr.rel (%p888) target = $region96
    $region93: #{custom-call.2} parent=1 // loop_body
      loop: start=0, step=1, limit=127
      $region97: #{custom-call.2} parent=93 // loop_pre_header
        _
      $region98: #{custom-call.2} parent=93 // loop_header
        %s890 = sphi 0, %s894
        %p891 = scmp.ge.s32.totalorder %s890, 127
      $region99: #{custom-call.2} parent=93 // loop_header_branch
        %893 = sbr.rel (%p891) target = $region103
      $region100: #{custom-call.2} parent=93 // loop_body
        #allocation16 [shape = 'f32[1024]{0}', space=vmem, size = 0x1000, scoped, tag = 'a_tl_diag vmem']
        #allocation17 [shape = 'f32[1024]{0}', space=vmem, size = 0x1000, scoped, tag = 'a_tr_diag vmem']
        #allocation18 [shape = 'f32[1024]{0}', space=vmem, size = 0x1000, scoped, tag = 'a_br_diag vmem']
        #allocation19 [shape = 'f32[1024]{0}', space=vmem, size = 0x1000, scoped, tag = 'rt1 vmem']
        #allocation20 [shape = 'f32[1024]{0}', space=vmem, size = 0x1000, scoped, tag = 'rt2 vmem']
        #allocation21 [shape = 'f32[1024]{0}', space=vmem, size = 0x1000, scoped, tag = 'c vmem']
        #allocation22 [shape = 'f32[1024]{0}', space=vmem, size = 0x1000, scoped, tag = 's vmem']
        #allocation23 [shape = 'f32[32768]{0}', space=vmem, size = 0x20000, scoped, tag = 'c broadcast']
        #allocation24 [shape = 'f32[32768]{0}', space=vmem, size = 0x20000, scoped, tag = 's broadcast']
        %s895 = smov [#allocation12]
        %s896 = smov [#allocation16]
        %v897 = vlaneseq
        %v898 = vand.u32 %v897, 127
        %v899 = vmov %v898
        %v900 = vlaneseq
        %v901 = vshrl.u32 %v900, 7
        %v902 = vmov %v901
        %v903 = vld [vmem:[%s895] sm:$0xff]
        %vm906 = vcmp.eq.s32.totalorder %v902, %v899
        %v907 = vsel %vm906, %v903, 0.0
        %s908 = scalar_lea.vmem %s895, 8
        %v909 = vld [vmem:[%s908] sm:$0xff]
        %v911 = vadd.s32 %v902, 8
        %vm912 = vcmp.eq.s32.totalorder %v911, %v899
        %v913 = vsel %vm912, %v909, %v907
        %s914 = scalar_lea.vmem %s895, 16
        %v915 = vld [vmem:[%s914] sm:$0xff]
        %v917 = vadd.s32 %v902, 16
        %vm918 = vcmp.eq.s32.totalorder %v917, %v899
        %v919 = vsel %vm918, %v915, %v913
        %s920 = scalar_lea.vmem %s895, 24
        %v921 = vld [vmem:[%s920] sm:$0xff]
        %v923 = vadd.s32 %v902, 24
        %vm924 = vcmp.eq.s32.totalorder %v923, %v899
        %v925 = vsel %vm924, %v921, %v919
        %s926 = scalar_lea.vmem %s895, 32
        %v927 = vld [vmem:[%s926] sm:$0xff]
        %v929 = vadd.s32 %v902, 32
        %vm930 = vcmp.eq.s32.totalorder %v929, %v899
        %v931 = vsel %vm930, %v927, %v925
        %s932 = scalar_lea.vmem %s895, 40
        %v933 = vld [vmem:[%s932] sm:$0xff]
        %v935 = vadd.s32 %v902, 40
        %vm936 = vcmp.eq.s32.totalorder %v935, %v899
        %v937 = vsel %vm936, %v933, %v931
        %s938 = scalar_lea.vmem %s895, 48
        %v939 = vld [vmem:[%s938] sm:$0xff]
        %v941 = vadd.s32 %v902, 48
        %vm942 = vcmp.eq.s32.totalorder %v941, %v899
        %v943 = vsel %vm942, %v939, %v937
        %s944 = scalar_lea.vmem %s895, 56
        %v945 = vld [vmem:[%s944] sm:$0xff]
        %v947 = vadd.s32 %v902, 56
        %vm948 = vcmp.eq.s32.totalorder %v947, %v899
        %v949 = vsel %vm948, %v945, %v943
        %v950 = vrot.slane %v949, 4
        %v951 = vadd.f32 %v949, %v950
        %v952 = vrot.slane %v951, 2
        %v953 = vadd.f32 %v951, %v952
        %v954 = vrot.slane %v953, 1
        %v955 = vadd.f32 %v953, %v954
        %956 = vst [vmem:[%s896] sm:$0x1] %v955
        %s957 = smov [#allocation13]
        %s958 = smov [#allocation17]
        %v959 = vlaneseq
        %v960 = vand.u32 %v959, 127
        %v961 = vmov %v960
        %v962 = vlaneseq
        %v963 = vshrl.u32 %v962, 7
        %v964 = vmov %v963
        %v965 = vld [vmem:[%s957] sm:$0xff]
        %vm968 = vcmp.eq.s32.totalorder %v964, %v961
        %v969 = vsel %vm968, %v965, 0.0
        %s970 = scalar_lea.vmem %s957, 8
        %v971 = vld [vmem:[%s970] sm:$0xff]
        %v973 = vadd.s32 %v964, 8
        %vm974 = vcmp.eq.s32.totalorder %v973, %v961
        %v975 = vsel %vm974, %v971, %v969
        %s976 = scalar_lea.vmem %s957, 16
        %v977 = vld [vmem:[%s976] sm:$0xff]
        %v979 = vadd.s32 %v964, 16
        %vm980 = vcmp.eq.s32.totalorder %v979, %v961
        %v981 = vsel %vm980, %v977, %v975
        %s982 = scalar_lea.vmem %s957, 24
        %v983 = vld [vmem:[%s982] sm:$0xff]
        %v985 = vadd.s32 %v964, 24
        %vm986 = vcmp.eq.s32.totalorder %v985, %v961
        %v987 = vsel %vm986, %v983, %v981
        %s988 = scalar_lea.vmem %s957, 32
        %v989 = vld [vmem:[%s988] sm:$0xff]
        %v991 = vadd.s32 %v964, 32
        %vm992 = vcmp.eq.s32.totalorder %v991, %v961
        %v993 = vsel %vm992, %v989, %v987
        %s994 = scalar_lea.vmem %s957, 40
        %v995 = vld [vmem:[%s994] sm:$0xff]
        %v997 = vadd.s32 %v964, 40
        %vm998 = vcmp.eq.s32.totalorder %v997, %v961
        %v999 = vsel %vm998, %v995, %v993
        %s1000 = scalar_lea.vmem %s957, 48
        %v1001 = vld [vmem:[%s1000] sm:$0xff]
        %v1003 = vadd.s32 %v964, 48
        %vm1004 = vcmp.eq.s32.totalorder %v1003, %v961
        %v1005 = vsel %vm1004, %v1001, %v999
        %s1006 = scalar_lea.vmem %s957, 56
        %v1007 = vld [vmem:[%s1006] sm:$0xff]
        %v1009 = vadd.s32 %v964, 56
        %vm1010 = vcmp.eq.s32.totalorder %v1009, %v961
        %v1011 = vsel %vm1010, %v1007, %v1005
        %v1012 = vrot.slane %v1011, 4
        %v1013 = vadd.f32 %v1011, %v1012
        %v1014 = vrot.slane %v1013, 2
        %v1015 = vadd.f32 %v1013, %v1014
        %v1016 = vrot.slane %v1015, 1
        %v1017 = vadd.f32 %v1015, %v1016
        %1018 = vst [vmem:[%s958] sm:$0x1] %v1017
        %s1019 = smov [#allocation15]
        %s1020 = smov [#allocation18]
        %v1021 = vlaneseq
        %v1022 = vand.u32 %v1021, 127
        %v1023 = vmov %v1022
        %v1024 = vlaneseq
        %v1025 = vshrl.u32 %v1024, 7
        %v1026 = vmov %v1025
        %v1027 = vld [vmem:[%s1019] sm:$0xff]
        %vm1030 = vcmp.eq.s32.totalorder %v1026, %v1023
        %v1031 = vsel %vm1030, %v1027, 0.0
        %s1032 = scalar_lea.vmem %s1019, 8
        %v1033 = vld [vmem:[%s1032] sm:$0xff]
        %v1035 = vadd.s32 %v1026, 8
        %vm1036 = vcmp.eq.s32.totalorder %v1035, %v1023
        %v1037 = vsel %vm1036, %v1033, %v1031
        %s1038 = scalar_lea.vmem %s1019, 16
        %v1039 = vld [vmem:[%s1038] sm:$0xff]
        %v1041 = vadd.s32 %v1026, 16
        %vm1042 = vcmp.eq.s32.totalorder %v1041, %v1023
        %v1043 = vsel %vm1042, %v1039, %v1037
        %s1044 = scalar_lea.vmem %s1019, 24
        %v1045 = vld [vmem:[%s1044] sm:$0xff]
        %v1047 = vadd.s32 %v1026, 24
        %vm1048 = vcmp.eq.s32.totalorder %v1047, %v1023
        %v1049 = vsel %vm1048, %v1045, %v1043
        %s1050 = scalar_lea.vmem %s1019, 32
        %v1051 = vld [vmem:[%s1050] sm:$0xff]
        %v1053 = vadd.s32 %v1026, 32
        %vm1054 = vcmp.eq.s32.totalorder %v1053, %v1023
        %v1055 = vsel %vm1054, %v1051, %v1049
        %s1056 = scalar_lea.vmem %s1019, 40
        %v1057 = vld [vmem:[%s1056] sm:$0xff]
        %v1059 = vadd.s32 %v1026, 40
        %vm1060 = vcmp.eq.s32.totalorder %v1059, %v1023
        %v1061 = vsel %vm1060, %v1057, %v1055
        %s1062 = scalar_lea.vmem %s1019, 48
        %v1063 = vld [vmem:[%s1062] sm:$0xff]
        %v1065 = vadd.s32 %v1026, 48
        %vm1066 = vcmp.eq.s32.totalorder %v1065, %v1023
        %v1067 = vsel %vm1066, %v1063, %v1061
        %s1068 = scalar_lea.vmem %s1019, 56
        %v1069 = vld [vmem:[%s1068] sm:$0xff]
        %v1071 = vadd.s32 %v1026, 56
        %vm1072 = vcmp.eq.s32.totalorder %v1071, %v1023
        %v1073 = vsel %vm1072, %v1069, %v1067
        %v1074 = vrot.slane %v1073, 4
        %v1075 = vadd.f32 %v1073, %v1074
        %v1076 = vrot.slane %v1075, 2
        %v1077 = vadd.f32 %v1075, %v1076
        %v1078 = vrot.slane %v1077, 1
        %v1079 = vadd.f32 %v1077, %v1078
        %1080 = vst [vmem:[%s1020] sm:$0x1] %v1079
        %s1081 = smov [#allocation21]
        %s1082 = smov [#allocation22]
        %s1083 = smov [#allocation16]
        %v1084 = vld [vmem:[%s1083] sm:$0xff]
        %s1085 = smov [#allocation17]
        %v1086 = vld [vmem:[%s1085] sm:$0xff]
        %s1087 = smov [#allocation18]
        %v1088 = vld [vmem:[%s1087] sm:$0xff]
        %v1089 = vsub.f32 %v1088, %v1084
        %v1090 = vmul.f32 2.0, %v1086
        %v1091 = vrcp.pop %v1090
        %v1092 = vmul.f32 %v1089, %v1091
        %vm1093 = vcmp.ge.f32.partialorder %v1092, 0.0
        %v1094 = vmul.f32 %v1092, %v1092
        %v1095 = vadd.f32 1.0, %v1094
        %v1096 = vrsqrt.pop %v1095
        %v1097 = vmul.f32 %v1095, %v1096
        %vm1098 = vcmp.eq.f32.partialorder %v1095, inf
        %v1099 = vsel %vm1098, %v1095, %v1097
        %vm1100 = vcmp.eq.f32.partialorder %v1095, 0.0
        %v1101 = vand.u32 %v1095, 2147483648
        %v1102 = vsel %vm1100, %v1101, %v1099
        %v1103 = vxor.u32 %v1102, 2147483648
        %v1104 = vsel %vm1093, %v1102, %v1103
        %v1105 = vadd.f32 %v1092, %v1104
        %v1106 = vrcp.pop %v1105
        %v1107 = vand.u32 2147483647, %v1084
        %v1108 = vand.u32 2147483647, %v1086
        %v1109 = vand.u32 2147483647, %v1088
        %v1110 = vmin.f32 %v1107, %v1109
        %v1111 = vmul.f32 1.1920929e-08, %v1110
        %vm1112 = vcmp.le.f32.partialorder %v1108, %v1111
        %v1113 = vsel %vm1112, 0.0, %v1106
        %v1114 = vmul.f32 %v1113, %v1113
        %v1115 = vadd.f32 1.0, %v1114
        %v1116 = vrsqrt.pop %v1115
        %v1117 = vmul.f32 %v1113, %v1116
        %v1118 = vmul.f32 %v1113, %v1086
        %v1119 = vsub.f32 %v1084, %v1118
        %v1120 = vmul.f32 %v1113, %v1086
        %v1121 = vadd.f32 %v1088, %v1120
        %s1122 = smov [#allocation19]
        %1123 = vst [vmem:[%s1122] sm:$0xff] %v1119
        %s1124 = smov [#allocation20]
        %1125 = vst [vmem:[%s1124] sm:$0xff] %v1121
        %s1126 = smov %s1081
        %1127 = vst [vmem:[%s1126] sm:$0xff] %v1116
        %s1128 = smov %s1082
        %1129 = vst [vmem:[%s1128] sm:$0xff] %v1117
        %s1130 = smov [#allocation21]
        %v1131 = vld [vmem:[%s1130] ss:$0 sm:$0xff]
        %v1132 = vlaneseq
        %v1133 = vand.u32 %v1132, 127
        %v1134 = vmov %v1133
        %v1135 = vlaneseq
        %v1136 = vshrl.u32 %v1135, 7
        %v1137 = vmov %v1136
        %vm1139 = vcmp.eq.s32.totalorder %v1137, %v1134
        %v1140 = vsel %vm1139, %v1131, 0.0
        %1141 = vadd.xlane.f32.xlu0 %v1140
        %v1142 = vpop.xlane.xlu0 %1141
        %s1143 = smov [#allocation23]
        %1144 = vst [vmem:[%s1143] sm:$0xff] %v1142
        %s1145 = smov [#allocation21]
        %v1146 = vld [vmem:[%s1145] ss:$0 sm:$0xff]
        %v1147 = vlaneseq
        %v1148 = vand.u32 %v1147, 127
        %v1149 = vmov %v1148
        %v1150 = vlaneseq
        %v1151 = vshrl.u32 %v1150, 7
        %v1152 = vmov %v1151
        %v1153 = vadd.s32 %v1152, 8
        %vm1154 = vcmp.eq.s32.totalorder %v1153, %v1149
        %v1155 = vsel %vm1154, %v1146, 0.0
        %1156 = vadd.xlane.f32.xlu0 %v1155
        %v1157 = vpop.xlane.xlu0 %1156
        %s1158 = smov [#allocation23]
        %s1159 = scalar_lea.vmem %s1158, 8
        %1160 = vst [vmem:[%s1159] sm:$0xff] %v1157
        %s1161 = smov [#allocation21]
        %v1162 = vld [vmem:[%s1161] ss:$0 sm:$0xff]
        %v1163 = vlaneseq
        %v1164 = vand.u32 %v1163, 127
        %v1165 = vmov %v1164
        %v1166 = vlaneseq
        %v1167 = vshrl.u32 %v1166, 7
        %v1168 = vmov %v1167
        %v1169 = vadd.s32 %v1168, 16
        %vm1170 = vcmp.eq.s32.totalorder %v1169, %v1165
        %v1171 = vsel %vm1170, %v1162, 0.0
        %1172 = vadd.xlane.f32.xlu0 %v1171
        %v1173 = vpop.xlane.xlu0 %1172
        %s1174 = smov [#allocation23]
        %s1175 = scalar_lea.vmem %s1174, 16
        %1176 = vst [vmem:[%s1175] sm:$0xff] %v1173
        %s1177 = smov [#allocation21]
        %v1178 = vld [vmem:[%s1177] ss:$0 sm:$0xff]
        %v1179 = vlaneseq
        %v1180 = vand.u32 %v1179, 127
        %v1181 = vmov %v1180
        %v1182 = vlaneseq
        %v1183 = vshrl.u32 %v1182, 7
        %v1184 = vmov %v1183
        %v1185 = vadd.s32 %v1184, 24
        %vm1186 = vcmp.eq.s32.totalorder %v1185, %v1181
        %v1187 = vsel %vm1186, %v1178, 0.0
        %1188 = vadd.xlane.f32.xlu0 %v1187
        %v1189 = vpop.xlane.xlu0 %1188
        %s1190 = smov [#allocation23]
        %s1191 = scalar_lea.vmem %s1190, 24
        %1192 = vst [vmem:[%s1191] sm:$0xff] %v1189
        %s1193 = smov [#allocation21]
        %v1194 = vld [vmem:[%s1193] ss:$0 sm:$0xff]
        %v1195 = vlaneseq
        %v1196 = vand.u32 %v1195, 127
        %v1197 = vmov %v1196
        %v1198 = vlaneseq
        %v1199 = vshrl.u32 %v1198, 7
        %v1200 = vmov %v1199
        %v1201 = vadd.s32 %v1200, 32
        %vm1202 = vcmp.eq.s32.totalorder %v1201, %v1197
        %v1203 = vsel %vm1202, %v1194, 0.0
        %1204 = vadd.xlane.f32.xlu0 %v1203
        %v1205 = vpop.xlane.xlu0 %1204
        %s1206 = smov [#allocation23]
        %s1207 = scalar_lea.vmem %s1206, 32
        %1208 = vst [vmem:[%s1207] sm:$0xff] %v1205
        %s1209 = smov [#allocation21]
        %v1210 = vld [vmem:[%s1209] ss:$0 sm:$0xff]
        %v1211 = vlaneseq
        %v1212 = vand.u32 %v1211, 127
        %v1213 = vmov %v1212
        %v1214 = vlaneseq
        %v1215 = vshrl.u32 %v1214, 7
        %v1216 = vmov %v1215
        %v1217 = vadd.s32 %v1216, 40
        %vm1218 = vcmp.eq.s32.totalorder %v1217, %v1213
        %v1219 = vsel %vm1218, %v1210, 0.0
        %1220 = vadd.xlane.f32.xlu0 %v1219
        %v1221 = vpop.xlane.xlu0 %1220
        %s1222 = smov [#allocation23]
        %s1223 = scalar_lea.vmem %s1222, 40
        %1224 = vst [vmem:[%s1223] sm:$0xff] %v1221
        %s1225 = smov [#allocation21]
        %v1226 = vld [vmem:[%s1225] ss:$0 sm:$0xff]
        %v1227 = vlaneseq
        %v1228 = vand.u32 %v1227, 127
        %v1229 = vmov %v1228
        %v1230 = vlaneseq
        %v1231 = vshrl.u32 %v1230, 7
        %v1232 = vmov %v1231
        %v1233 = vadd.s32 %v1232, 48
        %vm1234 = vcmp.eq.s32.totalorder %v1233, %v1229
        %v1235 = vsel %vm1234, %v1226, 0.0
        %1236 = vadd.xlane.f32.xlu0 %v1235
        %v1237 = vpop.xlane.xlu0 %1236
        %s1238 = smov [#allocation23]
        %s1239 = scalar_lea.vmem %s1238, 48
        %1240 = vst [vmem:[%s1239] sm:$0xff] %v1237
        %s1241 = smov [#allocation21]
        %v1242 = vld [vmem:[%s1241] ss:$0 sm:$0xff]
        %v1243 = vlaneseq
        %v1244 = vand.u32 %v1243, 127
        %v1245 = vmov %v1244
        %v1246 = vlaneseq
        %v1247 = vshrl.u32 %v1246, 7
        %v1248 = vmov %v1247
        %v1249 = vadd.s32 %v1248, 56
        %vm1250 = vcmp.eq.s32.totalorder %v1249, %v1245
        %v1251 = vsel %vm1250, %v1242, 0.0
        %1252 = vadd.xlane.f32.xlu0 %v1251
        %v1253 = vpop.xlane.xlu0 %1252
        %s1254 = smov [#allocation23]
        %s1255 = scalar_lea.vmem %s1254, 56
        %1256 = vst [vmem:[%s1255] sm:$0xff] %v1253
        %s1257 = smov [#allocation22]
        %v1258 = vld [vmem:[%s1257] ss:$0 sm:$0xff]
        %v1259 = vlaneseq
        %v1260 = vand.u32 %v1259, 127
        %v1261 = vmov %v1260
        %v1262 = vlaneseq
        %v1263 = vshrl.u32 %v1262, 7
        %v1264 = vmov %v1263
        %vm1266 = vcmp.eq.s32.totalorder %v1264, %v1261
        %v1267 = vsel %vm1266, %v1258, 0.0
        %1268 = vadd.xlane.f32.xlu0 %v1267
        %v1269 = vpop.xlane.xlu0 %1268
        %s1270 = smov [#allocation24]
        %1271 = vst [vmem:[%s1270] sm:$0xff] %v1269
        %s1272 = smov [#allocation22]
        %v1273 = vld [vmem:[%s1272] ss:$0 sm:$0xff]
        %v1274 = vlaneseq
        %v1275 = vand.u32 %v1274, 127
        %v1276 = vmov %v1275
        %v1277 = vlaneseq
        %v1278 = vshrl.u32 %v1277, 7
        %v1279 = vmov %v1278
        %v1280 = vadd.s32 %v1279, 8
        %vm1281 = vcmp.eq.s32.totalorder %v1280, %v1276
        %v1282 = vsel %vm1281, %v1273, 0.0
        %1283 = vadd.xlane.f32.xlu0 %v1282
        %v1284 = vpop.xlane.xlu0 %1283
        %s1285 = smov [#allocation24]
        %s1286 = scalar_lea.vmem %s1285, 8
        %1287 = vst [vmem:[%s1286] sm:$0xff] %v1284
        %s1288 = smov [#allocation22]
        %v1289 = vld [vmem:[%s1288] ss:$0 sm:$0xff]
        %v1290 = vlaneseq
        %v1291 = vand.u32 %v1290, 127
        %v1292 = vmov %v1291
        %v1293 = vlaneseq
        %v1294 = vshrl.u32 %v1293, 7
        %v1295 = vmov %v1294
        %v1296 = vadd.s32 %v1295, 16
        %vm1297 = vcmp.eq.s32.totalorder %v1296, %v1292
        %v1298 = vsel %vm1297, %v1289, 0.0
        %1299 = vadd.xlane.f32.xlu0 %v1298
        %v1300 = vpop.xlane.xlu0 %1299
        %s1301 = smov [#allocation24]
        %s1302 = scalar_lea.vmem %s1301, 16
        %1303 = vst [vmem:[%s1302] sm:$0xff] %v1300
        %s1304 = smov [#allocation22]
        %v1305 = vld [vmem:[%s1304] ss:$0 sm:$0xff]
        %v1306 = vlaneseq
        %v1307 = vand.u32 %v1306, 127
        %v1308 = vmov %v1307
        %v1309 = vlaneseq
        %v1310 = vshrl.u32 %v1309, 7
        %v1311 = vmov %v1310
        %v1312 = vadd.s32 %v1311, 24
        %vm1313 = vcmp.eq.s32.totalorder %v1312, %v1308
        %v1314 = vsel %vm1313, %v1305, 0.0
        %1315 = vadd.xlane.f32.xlu0 %v1314
        %v1316 = vpop.xlane.xlu0 %1315
        %s1317 = smov [#allocation24]
        %s1318 = scalar_lea.vmem %s1317, 24
        %1319 = vst [vmem:[%s1318] sm:$0xff] %v1316
        %s1320 = smov [#allocation22]
        %v1321 = vld [vmem:[%s1320] ss:$0 sm:$0xff]
        %v1322 = vlaneseq
        %v1323 = vand.u32 %v1322, 127
        %v1324 = vmov %v1323
        %v1325 = vlaneseq
        %v1326 = vshrl.u32 %v1325, 7
        %v1327 = vmov %v1326
        %v1328 = vadd.s32 %v1327, 32
        %vm1329 = vcmp.eq.s32.totalorder %v1328, %v1324
        %v1330 = vsel %vm1329, %v1321, 0.0
        %1331 = vadd.xlane.f32.xlu0 %v1330
        %v1332 = vpop.xlane.xlu0 %1331
        %s1333 = smov [#allocation24]
        %s1334 = scalar_lea.vmem %s1333, 32
        %1335 = vst [vmem:[%s1334] sm:$0xff] %v1332
        %s1336 = smov [#allocation22]
        %v1337 = vld [vmem:[%s1336] ss:$0 sm:$0xff]
        %v1338 = vlaneseq
        %v1339 = vand.u32 %v1338, 127
        %v1340 = vmov %v1339
        %v1341 = vlaneseq
        %v1342 = vshrl.u32 %v1341, 7
        %v1343 = vmov %v1342
        %v1344 = vadd.s32 %v1343, 40
        %vm1345 = vcmp.eq.s32.totalorder %v1344, %v1340
        %v1346 = vsel %vm1345, %v1337, 0.0
        %1347 = vadd.xlane.f32.xlu0 %v1346
        %v1348 = vpop.xlane.xlu0 %1347
        %s1349 = smov [#allocation24]
        %s1350 = scalar_lea.vmem %s1349, 40
        %1351 = vst [vmem:[%s1350] sm:$0xff] %v1348
        %s1352 = smov [#allocation22]
        %v1353 = vld [vmem:[%s1352] ss:$0 sm:$0xff]
        %v1354 = vlaneseq
        %v1355 = vand.u32 %v1354, 127
        %v1356 = vmov %v1355
        %v1357 = vlaneseq
        %v1358 = vshrl.u32 %v1357, 7
        %v1359 = vmov %v1358
        %v1360 = vadd.s32 %v1359, 48
        %vm1361 = vcmp.eq.s32.totalorder %v1360, %v1356
        %v1362 = vsel %vm1361, %v1353, 0.0
        %1363 = vadd.xlane.f32.xlu0 %v1362
        %v1364 = vpop.xlane.xlu0 %1363
        %s1365 = smov [#allocation24]
        %s1366 = scalar_lea.vmem %s1365, 48
        %1367 = vst [vmem:[%s1366] sm:$0xff] %v1364
        %s1368 = smov [#allocation22]
        %v1369 = vld [vmem:[%s1368] ss:$0 sm:$0xff]
        %v1370 = vlaneseq
        %v1371 = vand.u32 %v1370, 127
        %v1372 = vmov %v1371
        %v1373 = vlaneseq
        %v1374 = vshrl.u32 %v1373, 7
        %v1375 = vmov %v1374
        %v1376 = vadd.s32 %v1375, 56
        %vm1377 = vcmp.eq.s32.totalorder %v1376, %v1372
        %v1378 = vsel %vm1377, %v1369, 0.0
        %1379 = vadd.xlane.f32.xlu0 %v1378
        %v1380 = vpop.xlane.xlu0 %1379
        %s1381 = smov [#allocation24]
        %s1382 = scalar_lea.vmem %s1381, 56
        %1383 = vst [vmem:[%s1382] sm:$0xff] %v1380
        %s1384 = smov [#allocation23]
        %v1385 = vld [vmem:[%s1384] sm:$0xff]
        %s1386 = smov [#allocation24]
        %v1387 = vld [vmem:[%s1386] sm:$0xff]
        %s1388 = smov [#allocation12]
        %s1389 = smov [#allocation13]
        %s1390 = smov [#allocation14]
        %s1391 = smov [#allocation15]
        %v1392 = vld [vmem:[%s1388] sm:$0xff]
        %v1393 = vld [vmem:[%s1389] sm:$0xff]
        %v1394 = vld [vmem:[%s1390] sm:$0xff]
        %v1395 = vld [vmem:[%s1391] sm:$0xff]
        %v1396 = vmul.f32 %v1385, %v1392
        %v1397 = vmul.f32 %v1387, %v1394
        %v1398 = vsub.f32 %v1396, %v1397
        %v1399 = vmul.f32 %v1385, %v1393
        %v1400 = vmul.f32 %v1387, %v1395
        %v1401 = vsub.f32 %v1399, %v1400
        %v1402 = vmul.f32 %v1387, %v1392
        %v1403 = vmul.f32 %v1385, %v1394
        %v1404 = vadd.f32 %v1402, %v1403
        %v1405 = vmul.f32 %v1387, %v1393
        %v1406 = vmul.f32 %v1385, %v1395
        %v1407 = vadd.f32 %v1405, %v1406
        %1408 = vst [vmem:[%s1388] sm:$0xff] %v1398
        %1409 = vst [vmem:[%s1389] sm:$0xff] %v1401
        %1410 = vst [vmem:[%s1390] sm:$0xff] %v1404
        %1411 = vst [vmem:[%s1391] sm:$0xff] %v1407
        %s1412 = smov [#allocation23]
        %s1413 = scalar_lea.vmem %s1412, 8
        %v1414 = vld [vmem:[%s1413] sm:$0xff]
        %s1415 = smov [#allocation24]
        %s1416 = scalar_lea.vmem %s1415, 8
        %v1417 = vld [vmem:[%s1416] sm:$0xff]
        %s1418 = smov [#allocation12]
        %s1419 = scalar_lea.vmem %s1418, 8
        %s1420 = smov [#allocation13]
        %s1421 = scalar_lea.vmem %s1420, 8
        %s1422 = smov [#allocation14]
        %s1423 = scalar_lea.vmem %s1422, 8
        %s1424 = smov [#allocation15]
        %s1425 = scalar_lea.vmem %s1424, 8
        %v1426 = vld [vmem:[%s1419] sm:$0xff]
        %v1427 = vld [vmem:[%s1421] sm:$0xff]
        %v1428 = vld [vmem:[%s1423] sm:$0xff]
        %v1429 = vld [vmem:[%s1425] sm:$0xff]
        %v1430 = vmul.f32 %v1414, %v1426
        %v1431 = vmul.f32 %v1417, %v1428
        %v1432 = vsub.f32 %v1430, %v1431
        %v1433 = vmul.f32 %v1414, %v1427
        %v1434 = vmul.f32 %v1417, %v1429
        %v1435 = vsub.f32 %v1433, %v1434
        %v1436 = vmul.f32 %v1417, %v1426
        %v1437 = vmul.f32 %v1414, %v1428
        %v1438 = vadd.f32 %v1436, %v1437
        %v1439 = vmul.f32 %v1417, %v1427
        %v1440 = vmul.f32 %v1414, %v1429
        %v1441 = vadd.f32 %v1439, %v1440
        %1442 = vst [vmem:[%s1419] sm:$0xff] %v1432
        %1443 = vst [vmem:[%s1421] sm:$0xff] %v1435
        %1444 = vst [vmem:[%s1423] sm:$0xff] %v1438
        %1445 = vst [vmem:[%s1425] sm:$0xff] %v1441
        %s1446 = smov [#allocation23]
        %s1447 = scalar_lea.vmem %s1446, 16
        %v1448 = vld [vmem:[%s1447] sm:$0xff]
        %s1449 = smov [#allocation24]
        %s1450 = scalar_lea.vmem %s1449, 16
        %v1451 = vld [vmem:[%s1450] sm:$0xff]
        %s1452 = smov [#allocation12]
        %s1453 = scalar_lea.vmem %s1452, 16
        %s1454 = smov [#allocation13]
        %s1455 = scalar_lea.vmem %s1454, 16
        %s1456 = smov [#allocation14]
        %s1457 = scalar_lea.vmem %s1456, 16
        %s1458 = smov [#allocation15]
        %s1459 = scalar_lea.vmem %s1458, 16
        %v1460 = vld [vmem:[%s1453] sm:$0xff]
        %v1461 = vld [vmem:[%s1455] sm:$0xff]
        %v1462 = vld [vmem:[%s1457] sm:$0xff]
        %v1463 = vld [vmem:[%s1459] sm:$0xff]
        %v1464 = vmul.f32 %v1448, %v1460
        %v1465 = vmul.f32 %v1451, %v1462
        %v1466 = vsub.f32 %v1464, %v1465
        %v1467 = vmul.f32 %v1448, %v1461
        %v1468 = vmul.f32 %v1451, %v1463
        %v1469 = vsub.f32 %v1467, %v1468
        %v1470 = vmul.f32 %v1451, %v1460
        %v1471 = vmul.f32 %v1448, %v1462
        %v1472 = vadd.f32 %v1470, %v1471
        %v1473 = vmul.f32 %v1451, %v1461
        %v1474 = vmul.f32 %v1448, %v1463
        %v1475 = vadd.f32 %v1473, %v1474
        %1476 = vst [vmem:[%s1453] sm:$0xff] %v1466
        %1477 = vst [vmem:[%s1455] sm:$0xff] %v1469
        %1478 = vst [vmem:[%s1457] sm:$0xff] %v1472
        %1479 = vst [vmem:[%s1459] sm:$0xff] %v1475
        %s1480 = smov [#allocation23]
        %s1481 = scalar_lea.vmem %s1480, 24
        %v1482 = vld [vmem:[%s1481] sm:$0xff]
        %s1483 = smov [#allocation24]
        %s1484 = scalar_lea.vmem %s1483, 24
        %v1485 = vld [vmem:[%s1484] sm:$0xff]
        %s1486 = smov [#allocation12]
        %s1487 = scalar_lea.vmem %s1486, 24
        %s1488 = smov [#allocation13]
        %s1489 = scalar_lea.vmem %s1488, 24
        %s1490 = smov [#allocation14]
        %s1491 = scalar_lea.vmem %s1490, 24
        %s1492 = smov [#allocation15]
        %s1493 = scalar_lea.vmem %s1492, 24
        %v1494 = vld [vmem:[%s1487] sm:$0xff]
        %v1495 = vld [vmem:[%s1489] sm:$0xff]
        %v1496 = vld [vmem:[%s1491] sm:$0xff]
        %v1497 = vld [vmem:[%s1493] sm:$0xff]
        %v1498 = vmul.f32 %v1482, %v1494
        %v1499 = vmul.f32 %v1485, %v1496
        %v1500 = vsub.f32 %v1498, %v1499
        %v1501 = vmul.f32 %v1482, %v1495
        %v1502 = vmul.f32 %v1485, %v1497
        %v1503 = vsub.f32 %v1501, %v1502
        %v1504 = vmul.f32 %v1485, %v1494
        %v1505 = vmul.f32 %v1482, %v1496
        %v1506 = vadd.f32 %v1504, %v1505
        %v1507 = vmul.f32 %v1485, %v1495
        %v1508 = vmul.f32 %v1482, %v1497
        %v1509 = vadd.f32 %v1507, %v1508
        %1510 = vst [vmem:[%s1487] sm:$0xff] %v1500
        %1511 = vst [vmem:[%s1489] sm:$0xff] %v1503
        %1512 = vst [vmem:[%s1491] sm:$0xff] %v1506
        %1513 = vst [vmem:[%s1493] sm:$0xff] %v1509
        %s1514 = smov [#allocation23]
        %s1515 = scalar_lea.vmem %s1514, 32
        %v1516 = vld [vmem:[%s1515] sm:$0xff]
        %s1517 = smov [#allocation24]
        %s1518 = scalar_lea.vmem %s1517, 32
        %v1519 = vld [vmem:[%s1518] sm:$0xff]
        %s1520 = smov [#allocation12]
        %s1521 = scalar_lea.vmem %s1520, 32
        %s1522 = smov [#allocation13]
        %s1523 = scalar_lea.vmem %s1522, 32
        %s1524 = smov [#allocation14]
        %s1525 = scalar_lea.vmem %s1524, 32
        %s1526 = smov [#allocation15]
        %s1527 = scalar_lea.vmem %s1526, 32
        %v1528 = vld [vmem:[%s1521] sm:$0xff]
        %v1529 = vld [vmem:[%s1523] sm:$0xff]
        %v1530 = vld [vmem:[%s1525] sm:$0xff]
        %v1531 = vld [vmem:[%s1527] sm:$0xff]
        %v1532 = vmul.f32 %v1516, %v1528
        %v1533 = vmul.f32 %v1519, %v1530
        %v1534 = vsub.f32 %v1532, %v1533
        %v1535 = vmul.f32 %v1516, %v1529
        %v1536 = vmul.f32 %v1519, %v1531
        %v1537 = vsub.f32 %v1535, %v1536
        %v1538 = vmul.f32 %v1519, %v1528
        %v1539 = vmul.f32 %v1516, %v1530
        %v1540 = vadd.f32 %v1538, %v1539
        %v1541 = vmul.f32 %v1519, %v1529
        %v1542 = vmul.f32 %v1516, %v1531
        %v1543 = vadd.f32 %v1541, %v1542
        %1544 = vst [vmem:[%s1521] sm:$0xff] %v1534
        %1545 = vst [vmem:[%s1523] sm:$0xff] %v1537
        %1546 = vst [vmem:[%s1525] sm:$0xff] %v1540
        %1547 = vst [vmem:[%s1527] sm:$0xff] %v1543
        %s1548 = smov [#allocation23]
        %s1549 = scalar_lea.vmem %s1548, 40
        %v1550 = vld [vmem:[%s1549] sm:$0xff]
        %s1551 = smov [#allocation24]
        %s1552 = scalar_lea.vmem %s1551, 40
        %v1553 = vld [vmem:[%s1552] sm:$0xff]
        %s1554 = smov [#allocation12]
        %s1555 = scalar_lea.vmem %s1554, 40
        %s1556 = smov [#allocation13]
        %s1557 = scalar_lea.vmem %s1556, 40
        %s1558 = smov [#allocation14]
        %s1559 = scalar_lea.vmem %s1558, 40
        %s1560 = smov [#allocation15]
        %s1561 = scalar_lea.vmem %s1560, 40
        %v1562 = vld [vmem:[%s1555] sm:$0xff]
        %v1563 = vld [vmem:[%s1557] sm:$0xff]
        %v1564 = vld [vmem:[%s1559] sm:$0xff]
        %v1565 = vld [vmem:[%s1561] sm:$0xff]
        %v1566 = vmul.f32 %v1550, %v1562
        %v1567 = vmul.f32 %v1553, %v1564
        %v1568 = vsub.f32 %v1566, %v1567
        %v1569 = vmul.f32 %v1550, %v1563
        %v1570 = vmul.f32 %v1553, %v1565
        %v1571 = vsub.f32 %v1569, %v1570
        %v1572 = vmul.f32 %v1553, %v1562
        %v1573 = vmul.f32 %v1550, %v1564
        %v1574 = vadd.f32 %v1572, %v1573
        %v1575 = vmul.f32 %v1553, %v1563
        %v1576 = vmul.f32 %v1550, %v1565
        %v1577 = vadd.f32 %v1575, %v1576
        %1578 = vst [vmem:[%s1555] sm:$0xff] %v1568
        %1579 = vst [vmem:[%s1557] sm:$0xff] %v1571
        %1580 = vst [vmem:[%s1559] sm:$0xff] %v1574
        %1581 = vst [vmem:[%s1561] sm:$0xff] %v1577
        %s1582 = smov [#allocation23]
        %s1583 = scalar_lea.vmem %s1582, 48
        %v1584 = vld [vmem:[%s1583] sm:$0xff]
        %s1585 = smov [#allocation24]
        %s1586 = scalar_lea.vmem %s1585, 48
        %v1587 = vld [vmem:[%s1586] sm:$0xff]
        %s1588 = smov [#allocation12]
        %s1589 = scalar_lea.vmem %s1588, 48
        %s1590 = smov [#allocation13]
        %s1591 = scalar_lea.vmem %s1590, 48
        %s1592 = smov [#allocation14]
        %s1593 = scalar_lea.vmem %s1592, 48
        %s1594 = smov [#allocation15]
        %s1595 = scalar_lea.vmem %s1594, 48
        %v1596 = vld [vmem:[%s1589] sm:$0xff]
        %v1597 = vld [vmem:[%s1591] sm:$0xff]
        %v1598 = vld [vmem:[%s1593] sm:$0xff]
        %v1599 = vld [vmem:[%s1595] sm:$0xff]
        %v1600 = vmul.f32 %v1584, %v1596
        %v1601 = vmul.f32 %v1587, %v1598
        %v1602 = vsub.f32 %v1600, %v1601
        %v1603 = vmul.f32 %v1584, %v1597
        %v1604 = vmul.f32 %v1587, %v1599
        %v1605 = vsub.f32 %v1603, %v1604
        %v1606 = vmul.f32 %v1587, %v1596
        %v1607 = vmul.f32 %v1584, %v1598
        %v1608 = vadd.f32 %v1606, %v1607
        %v1609 = vmul.f32 %v1587, %v1597
        %v1610 = vmul.f32 %v1584, %v1599
        %v1611 = vadd.f32 %v1609, %v1610
        %1612 = vst [vmem:[%s1589] sm:$0xff] %v1602
        %1613 = vst [vmem:[%s1591] sm:$0xff] %v1605
        %1614 = vst [vmem:[%s1593] sm:$0xff] %v1608
        %1615 = vst [vmem:[%s1595] sm:$0xff] %v1611
        %s1616 = smov [#allocation23]
        %s1617 = scalar_lea.vmem %s1616, 56
        %v1618 = vld [vmem:[%s1617] sm:$0xff]
        %s1619 = smov [#allocation24]
        %s1620 = scalar_lea.vmem %s1619, 56
        %v1621 = vld [vmem:[%s1620] sm:$0xff]
        %s1622 = smov [#allocation12]
        %s1623 = scalar_lea.vmem %s1622, 56
        %s1624 = smov [#allocation13]
        %s1625 = scalar_lea.vmem %s1624, 56
        %s1626 = smov [#allocation14]
        %s1627 = scalar_lea.vmem %s1626, 56
        %s1628 = smov [#allocation15]
        %s1629 = scalar_lea.vmem %s1628, 56
        %v1630 = vld [vmem:[%s1623] sm:$0xff]
        %v1631 = vld [vmem:[%s1625] sm:$0xff]
        %v1632 = vld [vmem:[%s1627] sm:$0xff]
        %v1633 = vld [vmem:[%s1629] sm:$0xff]
        %v1634 = vmul.f32 %v1618, %v1630
        %v1635 = vmul.f32 %v1621, %v1632
        %v1636 = vsub.f32 %v1634, %v1635
        %v1637 = vmul.f32 %v1618, %v1631
        %v1638 = vmul.f32 %v1621, %v1633
        %v1639 = vsub.f32 %v1637, %v1638
        %v1640 = vmul.f32 %v1621, %v1630
        %v1641 = vmul.f32 %v1618, %v1632
        %v1642 = vadd.f32 %v1640, %v1641
        %v1643 = vmul.f32 %v1621, %v1631
        %v1644 = vmul.f32 %v1618, %v1633
        %v1645 = vadd.f32 %v1643, %v1644
        %1646 = vst [vmem:[%s1623] sm:$0xff] %v1636
        %1647 = vst [vmem:[%s1625] sm:$0xff] %v1639
        %1648 = vst [vmem:[%s1627] sm:$0xff] %v1642
        %1649 = vst [vmem:[%s1629] sm:$0xff] %v1645
        %s1650 = smov [#allocation21]
        %v1651 = vld [vmem:[%s1650] ss:$0 sm:$0xff]
        %s1652 = smov [#allocation22]
        %v1653 = vld [vmem:[%s1652] ss:$0 sm:$0xff]
        %s1654 = smov [#allocation12]
        %s1655 = smov [#allocation13]
        %s1656 = smov [#allocation14]
        %s1657 = smov [#allocation15]
        %v1658 = vld [vmem:[%s1654] sm:$0xff]
        %v1659 = vld [vmem:[%s1655] sm:$0xff]
        %v1660 = vld [vmem:[%s1656] sm:$0xff]
        %v1661 = vld [vmem:[%s1657] sm:$0xff]
        %v1662 = vmul.f32 %v1651, %v1658
        %v1663 = vmul.f32 %v1653, %v1659
        %v1664 = vsub.f32 %v1662, %v1663
        %v1665 = vmul.f32 %v1653, %v1658
        %v1666 = vmul.f32 %v1651, %v1659
        %v1667 = vadd.f32 %v1665, %v1666
        %v1668 = vmul.f32 %v1651, %v1660
        %v1669 = vmul.f32 %v1653, %v1661
        %v1670 = vsub.f32 %v1668, %v1669
        %v1671 = vmul.f32 %v1653, %v1660
        %v1672 = vmul.f32 %v1651, %v1661
        %v1673 = vadd.f32 %v1671, %v1672
        %1674 = vst [vmem:[%s1654] sm:$0xff] %v1664
        %1675 = vst [vmem:[%s1655] sm:$0xff] %v1667
        %1676 = vst [vmem:[%s1656] sm:$0xff] %v1670
        %1677 = vst [vmem:[%s1657] sm:$0xff] %v1673
        %s1678 = smov [#allocation12]
        %s1679 = scalar_lea.vmem %s1678, 8
        %s1680 = smov [#allocation13]
        %s1681 = scalar_lea.vmem %s1680, 8
        %s1682 = smov [#allocation14]
        %s1683 = scalar_lea.vmem %s1682, 8
        %s1684 = smov [#allocation15]
        %s1685 = scalar_lea.vmem %s1684, 8
        %v1686 = vld [vmem:[%s1679] sm:$0xff]
        %v1687 = vld [vmem:[%s1681] sm:$0xff]
        %v1688 = vld [vmem:[%s1683] sm:$0xff]
        %v1689 = vld [vmem:[%s1685] sm:$0xff]
        %v1690 = vmul.f32 %v1651, %v1686
        %v1691 = vmul.f32 %v1653, %v1687
        %v1692 = vsub.f32 %v1690, %v1691
        %v1693 = vmul.f32 %v1653, %v1686
        %v1694 = vmul.f32 %v1651, %v1687
        %v1695 = vadd.f32 %v1693, %v1694
        %v1696 = vmul.f32 %v1651, %v1688
        %v1697 = vmul.f32 %v1653, %v1689
        %v1698 = vsub.f32 %v1696, %v1697
        %v1699 = vmul.f32 %v1653, %v1688
        %v1700 = vmul.f32 %v1651, %v1689
        %v1701 = vadd.f32 %v1699, %v1700
        %1702 = vst [vmem:[%s1679] sm:$0xff] %v1692
        %1703 = vst [vmem:[%s1681] sm:$0xff] %v1695
        %1704 = vst [vmem:[%s1683] sm:$0xff] %v1698
        %1705 = vst [vmem:[%s1685] sm:$0xff] %v1701
        %s1706 = smov [#allocation12]
        %s1707 = scalar_lea.vmem %s1706, 16
        %s1708 = smov [#allocation13]
        %s1709 = scalar_lea.vmem %s1708, 16
        %s1710 = smov [#allocation14]
        %s1711 = scalar_lea.vmem %s1710, 16
        %s1712 = smov [#allocation15]
        %s1713 = scalar_lea.vmem %s1712, 16
        %v1714 = vld [vmem:[%s1707] sm:$0xff]
        %v1715 = vld [vmem:[%s1709] sm:$0xff]
        %v1716 = vld [vmem:[%s1711] sm:$0xff]
        %v1717 = vld [vmem:[%s1713] sm:$0xff]
        %v1718 = vmul.f32 %v1651, %v1714
        %v1719 = vmul.f32 %v1653, %v1715
        %v1720 = vsub.f32 %v1718, %v1719
        %v1721 = vmul.f32 %v1653, %v1714
        %v1722 = vmul.f32 %v1651, %v1715
        %v1723 = vadd.f32 %v1721, %v1722
        %v1724 = vmul.f32 %v1651, %v1716
        %v1725 = vmul.f32 %v1653, %v1717
        %v1726 = vsub.f32 %v1724, %v1725
        %v1727 = vmul.f32 %v1653, %v1716
        %v1728 = vmul.f32 %v1651, %v1717
        %v1729 = vadd.f32 %v1727, %v1728
        %1730 = vst [vmem:[%s1707] sm:$0xff] %v1720
        %1731 = vst [vmem:[%s1709] sm:$0xff] %v1723
        %1732 = vst [vmem:[%s1711] sm:$0xff] %v1726
        %1733 = vst [vmem:[%s1713] sm:$0xff] %v1729
        %s1734 = smov [#allocation12]
        %s1735 = scalar_lea.vmem %s1734, 24
        %s1736 = smov [#allocation13]
        %s1737 = scalar_lea.vmem %s1736, 24
        %s1738 = smov [#allocation14]
        %s1739 = scalar_lea.vmem %s1738, 24
        %s1740 = smov [#allocation15]
        %s1741 = scalar_lea.vmem %s1740, 24
        %v1742 = vld [vmem:[%s1735] sm:$0xff]
        %v1743 = vld [vmem:[%s1737] sm:$0xff]
        %v1744 = vld [vmem:[%s1739] sm:$0xff]
        %v1745 = vld [vmem:[%s1741] sm:$0xff]
        %v1746 = vmul.f32 %v1651, %v1742
        %v1747 = vmul.f32 %v1653, %v1743
        %v1748 = vsub.f32 %v1746, %v1747
        %v1749 = vmul.f32 %v1653, %v1742
        %v1750 = vmul.f32 %v1651, %v1743
        %v1751 = vadd.f32 %v1749, %v1750
        %v1752 = vmul.f32 %v1651, %v1744
        %v1753 = vmul.f32 %v1653, %v1745
        %v1754 = vsub.f32 %v1752, %v1753
        %v1755 = vmul.f32 %v1653, %v1744
        %v1756 = vmul.f32 %v1651, %v1745
        %v1757 = vadd.f32 %v1755, %v1756
        %1758 = vst [vmem:[%s1735] sm:$0xff] %v1748
        %1759 = vst [vmem:[%s1737] sm:$0xff] %v1751
        %1760 = vst [vmem:[%s1739] sm:$0xff] %v1754
        %1761 = vst [vmem:[%s1741] sm:$0xff] %v1757
        %s1762 = smov [#allocation12]
        %s1763 = scalar_lea.vmem %s1762, 32
        %s1764 = smov [#allocation13]
        %s1765 = scalar_lea.vmem %s1764, 32
        %s1766 = smov [#allocation14]
        %s1767 = scalar_lea.vmem %s1766, 32
        %s1768 = smov [#allocation15]
        %s1769 = scalar_lea.vmem %s1768, 32
        %v1770 = vld [vmem:[%s1763] sm:$0xff]
        %v1771 = vld [vmem:[%s1765] sm:$0xff]
        %v1772 = vld [vmem:[%s1767] sm:$0xff]
        %v1773 = vld [vmem:[%s1769] sm:$0xff]
        %v1774 = vmul.f32 %v1651, %v1770
        %v1775 = vmul.f32 %v1653, %v1771
        %v1776 = vsub.f32 %v1774, %v1775
        %v1777 = vmul.f32 %v1653, %v1770
        %v1778 = vmul.f32 %v1651, %v1771
        %v1779 = vadd.f32 %v1777, %v1778
        %v1780 = vmul.f32 %v1651, %v1772
        %v1781 = vmul.f32 %v1653, %v1773
        %v1782 = vsub.f32 %v1780, %v1781
        %v1783 = vmul.f32 %v1653, %v1772
        %v1784 = vmul.f32 %v1651, %v1773
        %v1785 = vadd.f32 %v1783, %v1784
        %1786 = vst [vmem:[%s1763] sm:$0xff] %v1776
        %1787 = vst [vmem:[%s1765] sm:$0xff] %v1779
        %1788 = vst [vmem:[%s1767] sm:$0xff] %v1782
        %1789 = vst [vmem:[%s1769] sm:$0xff] %v1785
        %s1790 = smov [#allocation12]
        %s1791 = scalar_lea.vmem %s1790, 40
        %s1792 = smov [#allocation13]
        %s1793 = scalar_lea.vmem %s1792, 40
        %s1794 = smov [#allocation14]
        %s1795 = scalar_lea.vmem %s1794, 40
        %s1796 = smov [#allocation15]
        %s1797 = scalar_lea.vmem %s1796, 40
        %v1798 = vld [vmem:[%s1791] sm:$0xff]
        %v1799 = vld [vmem:[%s1793] sm:$0xff]
        %v1800 = vld [vmem:[%s1795] sm:$0xff]
        %v1801 = vld [vmem:[%s1797] sm:$0xff]
        %v1802 = vmul.f32 %v1651, %v1798
        %v1803 = vmul.f32 %v1653, %v1799
        %v1804 = vsub.f32 %v1802, %v1803
        %v1805 = vmul.f32 %v1653, %v1798
        %v1806 = vmul.f32 %v1651, %v1799
        %v1807 = vadd.f32 %v1805, %v1806
        %v1808 = vmul.f32 %v1651, %v1800
        %v1809 = vmul.f32 %v1653, %v1801
        %v1810 = vsub.f32 %v1808, %v1809
        %v1811 = vmul.f32 %v1653, %v1800
        %v1812 = vmul.f32 %v1651, %v1801
        %v1813 = vadd.f32 %v1811, %v1812
        %1814 = vst [vmem:[%s1791] sm:$0xff] %v1804
        %1815 = vst [vmem:[%s1793] sm:$0xff] %v1807
        %1816 = vst [vmem:[%s1795] sm:$0xff] %v1810
        %1817 = vst [vmem:[%s1797] sm:$0xff] %v1813
        %s1818 = smov [#allocation12]
        %s1819 = scalar_lea.vmem %s1818, 48
        %s1820 = smov [#allocation13]
        %s1821 = scalar_lea.vmem %s1820, 48
        %s1822 = smov [#allocation14]
        %s1823 = scalar_lea.vmem %s1822, 48
        %s1824 = smov [#allocation15]
        %s1825 = scalar_lea.vmem %s1824, 48
        %v1826 = vld [vmem:[%s1819] sm:$0xff]
        %v1827 = vld [vmem:[%s1821] sm:$0xff]
        %v1828 = vld [vmem:[%s1823] sm:$0xff]
        %v1829 = vld [vmem:[%s1825] sm:$0xff]
        %v1830 = vmul.f32 %v1651, %v1826
        %v1831 = vmul.f32 %v1653, %v1827
        %v1832 = vsub.f32 %v1830, %v1831
        %v1833 = vmul.f32 %v1653, %v1826
        %v1834 = vmul.f32 %v1651, %v1827
        %v1835 = vadd.f32 %v1833, %v1834
        %v1836 = vmul.f32 %v1651, %v1828
        %v1837 = vmul.f32 %v1653, %v1829
        %v1838 = vsub.f32 %v1836, %v1837
        %v1839 = vmul.f32 %v1653, %v1828
        %v1840 = vmul.f32 %v1651, %v1829
        %v1841 = vadd.f32 %v1839, %v1840
        %1842 = vst [vmem:[%s1819] sm:$0xff] %v1832
        %1843 = vst [vmem:[%s1821] sm:$0xff] %v1835
        %1844 = vst [vmem:[%s1823] sm:$0xff] %v1838
        %1845 = vst [vmem:[%s1825] sm:$0xff] %v1841
        %s1846 = smov [#allocation12]
        %s1847 = scalar_lea.vmem %s1846, 56
        %s1848 = smov [#allocation13]
        %s1849 = scalar_lea.vmem %s1848, 56
        %s1850 = smov [#allocation14]
        %s1851 = scalar_lea.vmem %s1850, 56
        %s1852 = smov [#allocation15]
        %s1853 = scalar_lea.vmem %s1852, 56
        %v1854 = vld [vmem:[%s1847] sm:$0xff]
        %v1855 = vld [vmem:[%s1849] sm:$0xff]
        %v1856 = vld [vmem:[%s1851] sm:$0xff]
        %v1857 = vld [vmem:[%s1853] sm:$0xff]
        %v1858 = vmul.f32 %v1651, %v1854
        %v1859 = vmul.f32 %v1653, %v1855
        %v1860 = vsub.f32 %v1858, %v1859
        %v1861 = vmul.f32 %v1653, %v1854
        %v1862 = vmul.f32 %v1651, %v1855
        %v1863 = vadd.f32 %v1861, %v1862
        %v1864 = vmul.f32 %v1651, %v1856
        %v1865 = vmul.f32 %v1653, %v1857
        %v1866 = vsub.f32 %v1864, %v1865
        %v1867 = vmul.f32 %v1653, %v1856
        %v1868 = vmul.f32 %v1651, %v1857
        %v1869 = vadd.f32 %v1867, %v1868
        %1870 = vst [vmem:[%s1847] sm:$0xff] %v1860
        %1871 = vst [vmem:[%s1849] sm:$0xff] %v1863
        %1872 = vst [vmem:[%s1851] sm:$0xff] %v1866
        %1873 = vst [vmem:[%s1853] sm:$0xff] %v1869
        %s1874 = smov [#allocation12]
        %s1875 = smov [#allocation19]
        %v1876 = vlaneseq
        %v1877 = vand.u32 %v1876, 127
        %v1878 = vmov %v1877
        %v1879 = vlaneseq
        %v1880 = vshrl.u32 %v1879, 7
        %v1881 = vmov %v1880
        %v1882 = vld [vmem:[%s1875] ss:$0 sm:$0xff]
        %v1883 = vld [vmem:[%s1874] sm:$0xff]
        %vm1886 = vcmp.eq.s32.totalorder %v1881, %v1878
        %v1887 = vsel %vm1886, %v1882, %v1883
        %1888 = vst [vmem:[%s1874] sm:$0xff] %v1887
        %v1889 = vld [vmem:[%s1875] ss:$0 sm:$0xff]
        %s1890 = scalar_lea.vmem %s1874, 8
        %v1891 = vld [vmem:[%s1890] sm:$0xff]
        %v1893 = vadd.s32 %v1881, 8
        %vm1894 = vcmp.eq.s32.totalorder %v1893, %v1878
        %v1895 = vsel %vm1894, %v1889, %v1891
        %1896 = vst [vmem:[%s1890] sm:$0xff] %v1895
        %v1897 = vld [vmem:[%s1875] ss:$0 sm:$0xff]
        %s1898 = scalar_lea.vmem %s1874, 16
        %v1899 = vld [vmem:[%s1898] sm:$0xff]
        %v1901 = vadd.s32 %v1881, 16
        %vm1902 = vcmp.eq.s32.totalorder %v1901, %v1878
        %v1903 = vsel %vm1902, %v1897, %v1899
        %1904 = vst [vmem:[%s1898] sm:$0xff] %v1903
        %v1905 = vld [vmem:[%s1875] ss:$0 sm:$0xff]
        %s1906 = scalar_lea.vmem %s1874, 24
        %v1907 = vld [vmem:[%s1906] sm:$0xff]
        %v1909 = vadd.s32 %v1881, 24
        %vm1910 = vcmp.eq.s32.totalorder %v1909, %v1878
        %v1911 = vsel %vm1910, %v1905, %v1907
        %1912 = vst [vmem:[%s1906] sm:$0xff] %v1911
        %v1913 = vld [vmem:[%s1875] ss:$0 sm:$0xff]
        %s1914 = scalar_lea.vmem %s1874, 32
        %v1915 = vld [vmem:[%s1914] sm:$0xff]
        %v1917 = vadd.s32 %v1881, 32
        %vm1918 = vcmp.eq.s32.totalorder %v1917, %v1878
        %v1919 = vsel %vm1918, %v1913, %v1915
        %1920 = vst [vmem:[%s1914] sm:$0xff] %v1919
        %v1921 = vld [vmem:[%s1875] ss:$0 sm:$0xff]
        %s1922 = scalar_lea.vmem %s1874, 40
        %v1923 = vld [vmem:[%s1922] sm:$0xff]
        %v1925 = vadd.s32 %v1881, 40
        %vm1926 = vcmp.eq.s32.totalorder %v1925, %v1878
        %v1927 = vsel %vm1926, %v1921, %v1923
        %1928 = vst [vmem:[%s1922] sm:$0xff] %v1927
        %v1929 = vld [vmem:[%s1875] ss:$0 sm:$0xff]
        %s1930 = scalar_lea.vmem %s1874, 48
        %v1931 = vld [vmem:[%s1930] sm:$0xff]
        %v1933 = vadd.s32 %v1881, 48
        %vm1934 = vcmp.eq.s32.totalorder %v1933, %v1878
        %v1935 = vsel %vm1934, %v1929, %v1931
        %1936 = vst [vmem:[%s1930] sm:$0xff] %v1935
        %v1937 = vld [vmem:[%s1875] ss:$0 sm:$0xff]
        %s1938 = scalar_lea.vmem %s1874, 56
        %v1939 = vld [vmem:[%s1938] sm:$0xff]
        %v1941 = vadd.s32 %v1881, 56
        %vm1942 = vcmp.eq.s32.totalorder %v1941, %v1878
        %v1943 = vsel %vm1942, %v1937, %v1939
        %1944 = vst [vmem:[%s1938] sm:$0xff] %v1943
        %s1945 = smov [#allocation13]
        %v1946 = vlaneseq
        %v1947 = vand.u32 %v1946, 127
        %v1948 = vmov %v1947
        %v1949 = vlaneseq
        %v1950 = vshrl.u32 %v1949, 7
        %v1951 = vmov %v1950
        %v1952 = vld [vmem:[%s1945] sm:$0xff]
        %vm1955 = vcmp.eq.s32.totalorder %v1951, %v1948
        %v1956 = vsel %vm1955, 0.0, %v1952
        %1957 = vst [vmem:[%s1945] sm:$0xff] %v1956
        %s1958 = scalar_lea.vmem %s1945, 8
        %v1959 = vld [vmem:[%s1958] sm:$0xff]
        %v1961 = vadd.s32 %v1951, 8
        %vm1962 = vcmp.eq.s32.totalorder %v1961, %v1948
        %v1963 = vsel %vm1962, 0.0, %v1959
        %1964 = vst [vmem:[%s1958] sm:$0xff] %v1963
        %s1965 = scalar_lea.vmem %s1945, 16
        %v1966 = vld [vmem:[%s1965] sm:$0xff]
        %v1968 = vadd.s32 %v1951, 16
        %vm1969 = vcmp.eq.s32.totalorder %v1968, %v1948
        %v1970 = vsel %vm1969, 0.0, %v1966
        %1971 = vst [vmem:[%s1965] sm:$0xff] %v1970
        %s1972 = scalar_lea.vmem %s1945, 24
        %v1973 = vld [vmem:[%s1972] sm:$0xff]
        %v1975 = vadd.s32 %v1951, 24
        %vm1976 = vcmp.eq.s32.totalorder %v1975, %v1948
        %v1977 = vsel %vm1976, 0.0, %v1973
        %1978 = vst [vmem:[%s1972] sm:$0xff] %v1977
        %s1979 = scalar_lea.vmem %s1945, 32
        %v1980 = vld [vmem:[%s1979] sm:$0xff]
        %v1982 = vadd.s32 %v1951, 32
        %vm1983 = vcmp.eq.s32.totalorder %v1982, %v1948
        %v1984 = vsel %vm1983, 0.0, %v1980
        %1985 = vst [vmem:[%s1979] sm:$0xff] %v1984
        %s1986 = scalar_lea.vmem %s1945, 40
        %v1987 = vld [vmem:[%s1986] sm:$0xff]
        %v1989 = vadd.s32 %v1951, 40
        %vm1990 = vcmp.eq.s32.totalorder %v1989, %v1948
        %v1991 = vsel %vm1990, 0.0, %v1987
        %1992 = vst [vmem:[%s1986] sm:$0xff] %v1991
        %s1993 = scalar_lea.vmem %s1945, 48
        %v1994 = vld [vmem:[%s1993] sm:$0xff]
        %v1996 = vadd.s32 %v1951, 48
        %vm1997 = vcmp.eq.s32.totalorder %v1996, %v1948
        %v1998 = vsel %vm1997, 0.0, %v1994
        %1999 = vst [vmem:[%s1993] sm:$0xff] %v1998
        %s2000 = scalar_lea.vmem %s1945, 56
        %v2001 = vld [vmem:[%s2000] sm:$0xff]
        %v2003 = vadd.s32 %v1951, 56
        %vm2004 = vcmp.eq.s32.totalorder %v2003, %v1948
        %v2005 = vsel %vm2004, 0.0, %v2001
        %2006 = vst [vmem:[%s2000] sm:$0xff] %v2005
        %s2007 = smov [#allocation14]
        %v2008 = vlaneseq
        %v2009 = vand.u32 %v2008, 127
        %v2010 = vmov %v2009
        %v2011 = vlaneseq
        %v2012 = vshrl.u32 %v2011, 7
        %v2013 = vmov %v2012
        %v2014 = vld [vmem:[%s2007] sm:$0xff]
        %vm2017 = vcmp.eq.s32.totalorder %v2013, %v2010
        %v2018 = vsel %vm2017, 0.0, %v2014
        %2019 = vst [vmem:[%s2007] sm:$0xff] %v2018
        %s2020 = scalar_lea.vmem %s2007, 8
        %v2021 = vld [vmem:[%s2020] sm:$0xff]
        %v2023 = vadd.s32 %v2013, 8
        %vm2024 = vcmp.eq.s32.totalorder %v2023, %v2010
        %v2025 = vsel %vm2024, 0.0, %v2021
        %2026 = vst [vmem:[%s2020] sm:$0xff] %v2025
        %s2027 = scalar_lea.vmem %s2007, 16
        %v2028 = vld [vmem:[%s2027] sm:$0xff]
        %v2030 = vadd.s32 %v2013, 16
        %vm2031 = vcmp.eq.s32.totalorder %v2030, %v2010
        %v2032 = vsel %vm2031, 0.0, %v2028
        %2033 = vst [vmem:[%s2027] sm:$0xff] %v2032
        %s2034 = scalar_lea.vmem %s2007, 24
        %v2035 = vld [vmem:[%s2034] sm:$0xff]
        %v2037 = vadd.s32 %v2013, 24
        %vm2038 = vcmp.eq.s32.totalorder %v2037, %v2010
        %v2039 = vsel %vm2038, 0.0, %v2035
        %2040 = vst [vmem:[%s2034] sm:$0xff] %v2039
        %s2041 = scalar_lea.vmem %s2007, 32
        %v2042 = vld [vmem:[%s2041] sm:$0xff]
        %v2044 = vadd.s32 %v2013, 32
        %vm2045 = vcmp.eq.s32.totalorder %v2044, %v2010
        %v2046 = vsel %vm2045, 0.0, %v2042
        %2047 = vst [vmem:[%s2041] sm:$0xff] %v2046
        %s2048 = scalar_lea.vmem %s2007, 40
        %v2049 = vld [vmem:[%s2048] sm:$0xff]
        %v2051 = vadd.s32 %v2013, 40
        %vm2052 = vcmp.eq.s32.totalorder %v2051, %v2010
        %v2053 = vsel %vm2052, 0.0, %v2049
        %2054 = vst [vmem:[%s2048] sm:$0xff] %v2053
        %s2055 = scalar_lea.vmem %s2007, 48
        %v2056 = vld [vmem:[%s2055] sm:$0xff]
        %v2058 = vadd.s32 %v2013, 48
        %vm2059 = vcmp.eq.s32.totalorder %v2058, %v2010
        %v2060 = vsel %vm2059, 0.0, %v2056
        %2061 = vst [vmem:[%s2055] sm:$0xff] %v2060
        %s2062 = scalar_lea.vmem %s2007, 56
        %v2063 = vld [vmem:[%s2062] sm:$0xff]
        %v2065 = vadd.s32 %v2013, 56
        %vm2066 = vcmp.eq.s32.totalorder %v2065, %v2010
        %v2067 = vsel %vm2066, 0.0, %v2063
        %2068 = vst [vmem:[%s2062] sm:$0xff] %v2067
        %s2069 = smov [#allocation15]
        %s2070 = smov [#allocation20]
        %v2071 = vlaneseq
        %v2072 = vand.u32 %v2071, 127
        %v2073 = vmov %v2072
        %v2074 = vlaneseq
        %v2075 = vshrl.u32 %v2074, 7
        %v2076 = vmov %v2075
        %v2077 = vld [vmem:[%s2070] ss:$0 sm:$0xff]
        %v2078 = vld [vmem:[%s2069] sm:$0xff]
        %vm2081 = vcmp.eq.s32.totalorder %v2076, %v2073
        %v2082 = vsel %vm2081, %v2077, %v2078
        %2083 = vst [vmem:[%s2069] sm:$0xff] %v2082
        %v2084 = vld [vmem:[%s2070] ss:$0 sm:$0xff]
        %s2085 = scalar_lea.vmem %s2069, 8
        %v2086 = vld [vmem:[%s2085] sm:$0xff]
        %v2088 = vadd.s32 %v2076, 8
        %vm2089 = vcmp.eq.s32.totalorder %v2088, %v2073
        %v2090 = vsel %vm2089, %v2084, %v2086
        %2091 = vst [vmem:[%s2085] sm:$0xff] %v2090
        %v2092 = vld [vmem:[%s2070] ss:$0 sm:$0xff]
        %s2093 = scalar_lea.vmem %s2069, 16
        %v2094 = vld [vmem:[%s2093] sm:$0xff]
        %v2096 = vadd.s32 %v2076, 16
        %vm2097 = vcmp.eq.s32.totalorder %v2096, %v2073
        %v2098 = vsel %vm2097, %v2092, %v2094
        %2099 = vst [vmem:[%s2093] sm:$0xff] %v2098
        %v2100 = vld [vmem:[%s2070] ss:$0 sm:$0xff]
        %s2101 = scalar_lea.vmem %s2069, 24
        %v2102 = vld [vmem:[%s2101] sm:$0xff]
        %v2104 = vadd.s32 %v2076, 24
        %vm2105 = vcmp.eq.s32.totalorder %v2104, %v2073
        %v2106 = vsel %vm2105, %v2100, %v2102
        %2107 = vst [vmem:[%s2101] sm:$0xff] %v2106
        %v2108 = vld [vmem:[%s2070] ss:$0 sm:$0xff]
        %s2109 = scalar_lea.vmem %s2069, 32
        %v2110 = vld [vmem:[%s2109] sm:$0xff]
        %v2112 = vadd.s32 %v2076, 32
        %vm2113 = vcmp.eq.s32.totalorder %v2112, %v2073
        %v2114 = vsel %vm2113, %v2108, %v2110
        %2115 = vst [vmem:[%s2109] sm:$0xff] %v2114
        %v2116 = vld [vmem:[%s2070] ss:$0 sm:$0xff]
        %s2117 = scalar_lea.vmem %s2069, 40
        %v2118 = vld [vmem:[%s2117] sm:$0xff]
        %v2120 = vadd.s32 %v2076, 40
        %vm2121 = vcmp.eq.s32.totalorder %v2120, %v2073
        %v2122 = vsel %vm2121, %v2116, %v2118
        %2123 = vst [vmem:[%s2117] sm:$0xff] %v2122
        %v2124 = vld [vmem:[%s2070] ss:$0 sm:$0xff]
        %s2125 = scalar_lea.vmem %s2069, 48
        %v2126 = vld [vmem:[%s2125] sm:$0xff]
        %v2128 = vadd.s32 %v2076, 48
        %vm2129 = vcmp.eq.s32.totalorder %v2128, %v2073
        %v2130 = vsel %vm2129, %v2124, %v2126
        %2131 = vst [vmem:[%s2125] sm:$0xff] %v2130
        %v2132 = vld [vmem:[%s2070] ss:$0 sm:$0xff]
        %s2133 = scalar_lea.vmem %s2069, 56
        %v2134 = vld [vmem:[%s2133] sm:$0xff]
        %v2136 = vadd.s32 %v2076, 56
        %vm2137 = vcmp.eq.s32.totalorder %v2136, %v2073
        %v2138 = vsel %vm2137, %v2132, %v2134
        %2139 = vst [vmem:[%s2133] sm:$0xff] %v2138
        %s2140 = smov [#allocation12]
        %s2141 = smov [#allocation13]
        %v2142 = vld [vmem:[%s2141] sm:$0xff]
        %2143 = vrot.lane.b32.xlu0 %v2142, 1
        %v2144 = vpop.permute.xlu0 %2143
        %v2145 = vld [vmem:[%s2140] sm:$0xff]
        %v2146 = vld [vmem:[%s2140] sm:$0xff]
        %2147 = vrot.lane.b32.xlu0 %v2146, 1
        %v2148 = vpop.permute.xlu0 %2147
        %v2149 = vlaneseq
        %v2150 = vand.u32 %v2149, 127
        %vm2151 = vcmp.eq.s32.totalorder %v2150, 0
        %v2152 = vsel %vm2151, %v2146, %v2148
        %v2153 = vlaneseq
        %v2154 = vand.u32 %v2153, 127
        %vm2155 = vcmp.eq.s32.totalorder %v2154, 1
        %v2156 = vsel %vm2155, %v2144, %v2152
        %v2157 = vlaneseq
        %v2158 = vand.u32 %v2157, 127
        %vm2159 = vcmp.ge.s32.totalorder %v2158, 0
        %vm2160 = vcmp.lt.s32.totalorder %v2158, 64
        %vm2161 = vmand %vm2159, %vm2160
        %v2162 = vsel %vm2161, %v2156, 0.0
        %v2163 = vld [vmem:[%s2141] sm:$0xff]
        %2164 = vrot.lane.b32.xlu0 %v2163, 127
        %v2165 = vpop.permute.xlu0 %2164
        %v2166 = vlaneseq
        %v2167 = vand.u32 %v2166, 127
        %vm2168 = vcmp.eq.s32.totalorder %v2167, 63
        %v2169 = vsel %vm2168, %v2145, %v2165
        %s2170 = smov [#allocation12]
        %s2171 = scalar_lea.vmem %s2170, 8
        %s2172 = smov [#allocation13]
        %s2173 = scalar_lea.vmem %s2172, 8
        %v2174 = vld [vmem:[%s2173] sm:$0xff]
        %2175 = vrot.lane.b32.xlu0 %v2174, 1
        %v2176 = vpop.permute.xlu0 %2175
        %v2177 = vld [vmem:[%s2171] sm:$0xff]
        %v2178 = vld [vmem:[%s2171] sm:$0xff]
        %2179 = vrot.lane.b32.xlu0 %v2178, 1
        %v2180 = vpop.permute.xlu0 %2179
        %v2181 = vlaneseq
        %v2182 = vand.u32 %v2181, 127
        %vm2183 = vcmp.eq.s32.totalorder %v2182, 0
        %v2184 = vsel %vm2183, %v2178, %v2180
        %v2185 = vlaneseq
        %v2186 = vand.u32 %v2185, 127
        %vm2187 = vcmp.eq.s32.totalorder %v2186, 1
        %v2188 = vsel %vm2187, %v2176, %v2184
        %v2189 = vlaneseq
        %v2190 = vand.u32 %v2189, 127
        %vm2191 = vcmp.ge.s32.totalorder %v2190, 0
        %vm2192 = vcmp.lt.s32.totalorder %v2190, 64
        %vm2193 = vmand %vm2191, %vm2192
        %v2194 = vsel %vm2193, %v2188, 0.0
        %v2195 = vld [vmem:[%s2173] sm:$0xff]
        %2196 = vrot.lane.b32.xlu0 %v2195, 127
        %v2197 = vpop.permute.xlu0 %2196
        %v2198 = vlaneseq
        %v2199 = vand.u32 %v2198, 127
        %vm2200 = vcmp.eq.s32.totalorder %v2199, 63
        %v2201 = vsel %vm2200, %v2177, %v2197
        %s2202 = smov [#allocation12]
        %s2203 = scalar_lea.vmem %s2202, 16
        %s2204 = smov [#allocation13]
        %s2205 = scalar_lea.vmem %s2204, 16
        %v2206 = vld [vmem:[%s2205] sm:$0xff]
        %2207 = vrot.lane.b32.xlu0 %v2206, 1
        %v2208 = vpop.permute.xlu0 %2207
        %v2209 = vld [vmem:[%s2203] sm:$0xff]
        %v2210 = vld [vmem:[%s2203] sm:$0xff]
        %2211 = vrot.lane.b32.xlu0 %v2210, 1
        %v2212 = vpop.permute.xlu0 %2211
        %v2213 = vlaneseq
        %v2214 = vand.u32 %v2213, 127
        %vm2215 = vcmp.eq.s32.totalorder %v2214, 0
        %v2216 = vsel %vm2215, %v2210, %v2212
        %v2217 = vlaneseq
        %v2218 = vand.u32 %v2217, 127
        %vm2219 = vcmp.eq.s32.totalorder %v2218, 1
        %v2220 = vsel %vm2219, %v2208, %v2216
        %v2221 = vlaneseq
        %v2222 = vand.u32 %v2221, 127
        %vm2223 = vcmp.ge.s32.totalorder %v2222, 0
        %vm2224 = vcmp.lt.s32.totalorder %v2222, 64
        %vm2225 = vmand %vm2223, %vm2224
        %v2226 = vsel %vm2225, %v2220, 0.0
        %v2227 = vld [vmem:[%s2205] sm:$0xff]
        %2228 = vrot.lane.b32.xlu0 %v2227, 127
        %v2229 = vpop.permute.xlu0 %2228
        %v2230 = vlaneseq
        %v2231 = vand.u32 %v2230, 127
        %vm2232 = vcmp.eq.s32.totalorder %v2231, 63
        %v2233 = vsel %vm2232, %v2209, %v2229
        %s2234 = smov [#allocation12]
        %s2235 = scalar_lea.vmem %s2234, 24
        %s2236 = smov [#allocation13]
        %s2237 = scalar_lea.vmem %s2236, 24
        %v2238 = vld [vmem:[%s2237] sm:$0xff]
        %2239 = vrot.lane.b32.xlu0 %v2238, 1
        %v2240 = vpop.permute.xlu0 %2239
        %v2241 = vld [vmem:[%s2235] sm:$0xff]
        %v2242 = vld [vmem:[%s2235] sm:$0xff]
        %2243 = vrot.lane.b32.xlu0 %v2242, 1
        %v2244 = vpop.permute.xlu0 %2243
        %v2245 = vlaneseq
        %v2246 = vand.u32 %v2245, 127
        %vm2247 = vcmp.eq.s32.totalorder %v2246, 0
        %v2248 = vsel %vm2247, %v2242, %v2244
        %v2249 = vlaneseq
        %v2250 = vand.u32 %v2249, 127
        %vm2251 = vcmp.eq.s32.totalorder %v2250, 1
        %v2252 = vsel %vm2251, %v2240, %v2248
        %v2253 = vlaneseq
        %v2254 = vand.u32 %v2253, 127
        %vm2255 = vcmp.ge.s32.totalorder %v2254, 0
        %vm2256 = vcmp.lt.s32.totalorder %v2254, 64
        %vm2257 = vmand %vm2255, %vm2256
        %v2258 = vsel %vm2257, %v2252, 0.0
        %v2259 = vld [vmem:[%s2237] sm:$0xff]
        %2260 = vrot.lane.b32.xlu0 %v2259, 127
        %v2261 = vpop.permute.xlu0 %2260
        %v2262 = vlaneseq
        %v2263 = vand.u32 %v2262, 127
        %vm2264 = vcmp.eq.s32.totalorder %v2263, 63
        %v2265 = vsel %vm2264, %v2241, %v2261
        %s2266 = smov [#allocation12]
        %s2267 = scalar_lea.vmem %s2266, 32
        %s2268 = smov [#allocation13]
        %s2269 = scalar_lea.vmem %s2268, 32
        %v2270 = vld [vmem:[%s2269] sm:$0xff]
        %2271 = vrot.lane.b32.xlu0 %v2270, 1
        %v2272 = vpop.permute.xlu0 %2271
        %v2273 = vld [vmem:[%s2267] sm:$0xff]
        %v2274 = vld [vmem:[%s2267] sm:$0xff]
        %2275 = vrot.lane.b32.xlu0 %v2274, 1
        %v2276 = vpop.permute.xlu0 %2275
        %v2277 = vlaneseq
        %v2278 = vand.u32 %v2277, 127
        %vm2279 = vcmp.eq.s32.totalorder %v2278, 0
        %v2280 = vsel %vm2279, %v2274, %v2276
        %v2281 = vlaneseq
        %v2282 = vand.u32 %v2281, 127
        %vm2283 = vcmp.eq.s32.totalorder %v2282, 1
        %v2284 = vsel %vm2283, %v2272, %v2280
        %v2285 = vlaneseq
        %v2286 = vand.u32 %v2285, 127
        %vm2287 = vcmp.ge.s32.totalorder %v2286, 0
        %vm2288 = vcmp.lt.s32.totalorder %v2286, 64
        %vm2289 = vmand %vm2287, %vm2288
        %v2290 = vsel %vm2289, %v2284, 0.0
        %v2291 = vld [vmem:[%s2269] sm:$0xff]
        %2292 = vrot.lane.b32.xlu0 %v2291, 127
        %v2293 = vpop.permute.xlu0 %2292
        %v2294 = vlaneseq
        %v2295 = vand.u32 %v2294, 127
        %vm2296 = vcmp.eq.s32.totalorder %v2295, 63
        %v2297 = vsel %vm2296, %v2273, %v2293
        %s2298 = smov [#allocation12]
        %s2299 = scalar_lea.vmem %s2298, 40
        %s2300 = smov [#allocation13]
        %s2301 = scalar_lea.vmem %s2300, 40
        %v2302 = vld [vmem:[%s2301] sm:$0xff]
        %2303 = vrot.lane.b32.xlu0 %v2302, 1
        %v2304 = vpop.permute.xlu0 %2303
        %v2305 = vld [vmem:[%s2299] sm:$0xff]
        %v2306 = vld [vmem:[%s2299] sm:$0xff]
        %2307 = vrot.lane.b32.xlu0 %v2306, 1
        %v2308 = vpop.permute.xlu0 %2307
        %v2309 = vlaneseq
        %v2310 = vand.u32 %v2309, 127
        %vm2311 = vcmp.eq.s32.totalorder %v2310, 0
        %v2312 = vsel %vm2311, %v2306, %v2308
        %v2313 = vlaneseq
        %v2314 = vand.u32 %v2313, 127
        %vm2315 = vcmp.eq.s32.totalorder %v2314, 1
        %v2316 = vsel %vm2315, %v2304, %v2312
        %v2317 = vlaneseq
        %v2318 = vand.u32 %v2317, 127
        %vm2319 = vcmp.ge.s32.totalorder %v2318, 0
        %vm2320 = vcmp.lt.s32.totalorder %v2318, 64
        %vm2321 = vmand %vm2319, %vm2320
        %v2322 = vsel %vm2321, %v2316, 0.0
        %v2323 = vld [vmem:[%s2301] sm:$0xff]
        %2324 = vrot.lane.b32.xlu0 %v2323, 127
        %v2325 = vpop.permute.xlu0 %2324
        %v2326 = vlaneseq
        %v2327 = vand.u32 %v2326, 127
        %vm2328 = vcmp.eq.s32.totalorder %v2327, 63
        %v2329 = vsel %vm2328, %v2305, %v2325
        %s2330 = smov [#allocation12]
        %s2331 = scalar_lea.vmem %s2330, 48
        %s2332 = smov [#allocation13]
        %s2333 = scalar_lea.vmem %s2332, 48
        %v2334 = vld [vmem:[%s2333] sm:$0xff]
        %2335 = vrot.lane.b32.xlu0 %v2334, 1
        %v2336 = vpop.permute.xlu0 %2335
        %v2337 = vld [vmem:[%s2331] sm:$0xff]
        %v2338 = vld [vmem:[%s2331] sm:$0xff]
        %2339 = vrot.lane.b32.xlu0 %v2338, 1
        %v2340 = vpop.permute.xlu0 %2339
        %v2341 = vlaneseq
        %v2342 = vand.u32 %v2341, 127
        %vm2343 = vcmp.eq.s32.totalorder %v2342, 0
        %v2344 = vsel %vm2343, %v2338, %v2340
        %v2345 = vlaneseq
        %v2346 = vand.u32 %v2345, 127
        %vm2347 = vcmp.eq.s32.totalorder %v2346, 1
        %v2348 = vsel %vm2347, %v2336, %v2344
        %v2349 = vlaneseq
        %v2350 = vand.u32 %v2349, 127
        %vm2351 = vcmp.ge.s32.totalorder %v2350, 0
        %vm2352 = vcmp.lt.s32.totalorder %v2350, 64
        %vm2353 = vmand %vm2351, %vm2352
        %v2354 = vsel %vm2353, %v2348, 0.0
        %v2355 = vld [vmem:[%s2333] sm:$0xff]
        %2356 = vrot.lane.b32.xlu0 %v2355, 127
        %v2357 = vpop.permute.xlu0 %2356
        %v2358 = vlaneseq
        %v2359 = vand.u32 %v2358, 127
        %vm2360 = vcmp.eq.s32.totalorder %v2359, 63
        %v2361 = vsel %vm2360, %v2337, %v2357
        %s2362 = smov [#allocation12]
        %s2363 = scalar_lea.vmem %s2362, 56
        %s2364 = smov [#allocation13]
        %s2365 = scalar_lea.vmem %s2364, 56
        %v2366 = vld [vmem:[%s2365] sm:$0xff]
        %2367 = vrot.lane.b32.xlu0 %v2366, 1
        %v2368 = vpop.permute.xlu0 %2367
        %v2369 = vld [vmem:[%s2363] sm:$0xff]
        %v2370 = vld [vmem:[%s2363] sm:$0xff]
        %2371 = vrot.lane.b32.xlu0 %v2370, 1
        %v2372 = vpop.permute.xlu0 %2371
        %v2373 = vlaneseq
        %v2374 = vand.u32 %v2373, 127
        %vm2375 = vcmp.eq.s32.totalorder %v2374, 0
        %v2376 = vsel %vm2375, %v2370, %v2372
        %v2377 = vlaneseq
        %v2378 = vand.u32 %v2377, 127
        %vm2379 = vcmp.eq.s32.totalorder %v2378, 1
        %v2380 = vsel %vm2379, %v2368, %v2376
        %v2381 = vlaneseq
        %v2382 = vand.u32 %v2381, 127
        %vm2383 = vcmp.ge.s32.totalorder %v2382, 0
        %vm2384 = vcmp.lt.s32.totalorder %v2382, 64
        %vm2385 = vmand %vm2383, %vm2384
        %v2386 = vsel %vm2385, %v2380, 0.0
        %v2387 = vld [vmem:[%s2365] sm:$0xff]
        %2388 = vrot.lane.b32.xlu0 %v2387, 127
        %v2389 = vpop.permute.xlu0 %2388
        %v2390 = vlaneseq
        %v2391 = vand.u32 %v2390, 127
        %vm2392 = vcmp.eq.s32.totalorder %v2391, 63
        %v2393 = vsel %vm2392, %v2369, %v2389
        %2394 = vst [vmem:[%s2140] sm:$0xff] %v2162
        %2395 = vst [vmem:[%s2141] sm:$0xff] %v2169
        %2396 = vst [vmem:[%s2171] sm:$0xff] %v2194
        %2397 = vst [vmem:[%s2173] sm:$0xff] %v2201
        %2398 = vst [vmem:[%s2203] sm:$0xff] %v2226
        %2399 = vst [vmem:[%s2205] sm:$0xff] %v2233
        %2400 = vst [vmem:[%s2235] sm:$0xff] %v2258
        %2401 = vst [vmem:[%s2237] sm:$0xff] %v2265
        %2402 = vst [vmem:[%s2267] sm:$0xff] %v2290
        %2403 = vst [vmem:[%s2269] sm:$0xff] %v2297
        %2404 = vst [vmem:[%s2299] sm:$0xff] %v2322
        %2405 = vst [vmem:[%s2301] sm:$0xff] %v2329
        %2406 = vst [vmem:[%s2331] sm:$0xff] %v2354
        %2407 = vst [vmem:[%s2333] sm:$0xff] %v2361
        %2408 = vst [vmem:[%s2363] sm:$0xff] %v2386
        %2409 = vst [vmem:[%s2365] sm:$0xff] %v2393
        %s2410 = smov [#allocation14]
        %s2411 = smov [#allocation15]
        %v2412 = vld [vmem:[%s2411] sm:$0xff]
        %2413 = vrot.lane.b32.xlu0 %v2412, 1
        %v2414 = vpop.permute.xlu0 %2413
        %v2415 = vld [vmem:[%s2410] sm:$0xff]
        %v2416 = vld [vmem:[%s2410] sm:$0xff]
        %2417 = vrot.lane.b32.xlu0 %v2416, 1
        %v2418 = vpop.permute.xlu0 %2417
        %v2419 = vlaneseq
        %v2420 = vand.u32 %v2419, 127
        %vm2421 = vcmp.eq.s32.totalorder %v2420, 0
        %v2422 = vsel %vm2421, %v2416, %v2418
        %v2423 = vlaneseq
        %v2424 = vand.u32 %v2423, 127
        %vm2425 = vcmp.eq.s32.totalorder %v2424, 1
        %v2426 = vsel %vm2425, %v2414, %v2422
        %v2427 = vlaneseq
        %v2428 = vand.u32 %v2427, 127
        %vm2429 = vcmp.ge.s32.totalorder %v2428, 0
        %vm2430 = vcmp.lt.s32.totalorder %v2428, 64
        %vm2431 = vmand %vm2429, %vm2430
        %v2432 = vsel %vm2431, %v2426, 0.0
        %v2433 = vld [vmem:[%s2411] sm:$0xff]
        %2434 = vrot.lane.b32.xlu0 %v2433, 127
        %v2435 = vpop.permute.xlu0 %2434
        %v2436 = vlaneseq
        %v2437 = vand.u32 %v2436, 127
        %vm2438 = vcmp.eq.s32.totalorder %v2437, 63
        %v2439 = vsel %vm2438, %v2415, %v2435
        %s2440 = smov [#allocation14]
        %s2441 = scalar_lea.vmem %s2440, 8
        %s2442 = smov [#allocation15]
        %s2443 = scalar_lea.vmem %s2442, 8
        %v2444 = vld [vmem:[%s2443] sm:$0xff]
        %2445 = vrot.lane.b32.xlu0 %v2444, 1
        %v2446 = vpop.permute.xlu0 %2445
        %v2447 = vld [vmem:[%s2441] sm:$0xff]
        %v2448 = vld [vmem:[%s2441] sm:$0xff]
        %2449 = vrot.lane.b32.xlu0 %v2448, 1
        %v2450 = vpop.permute.xlu0 %2449
        %v2451 = vlaneseq
        %v2452 = vand.u32 %v2451, 127
        %vm2453 = vcmp.eq.s32.totalorder %v2452, 0
        %v2454 = vsel %vm2453, %v2448, %v2450
        %v2455 = vlaneseq
        %v2456 = vand.u32 %v2455, 127
        %vm2457 = vcmp.eq.s32.totalorder %v2456, 1
        %v2458 = vsel %vm2457, %v2446, %v2454
        %v2459 = vlaneseq
        %v2460 = vand.u32 %v2459, 127
        %vm2461 = vcmp.ge.s32.totalorder %v2460, 0
        %vm2462 = vcmp.lt.s32.totalorder %v2460, 64
        %vm2463 = vmand %vm2461, %vm2462
        %v2464 = vsel %vm2463, %v2458, 0.0
        %v2465 = vld [vmem:[%s2443] sm:$0xff]
        %2466 = vrot.lane.b32.xlu0 %v2465, 127
        %v2467 = vpop.permute.xlu0 %2466
        %v2468 = vlaneseq
        %v2469 = vand.u32 %v2468, 127
        %vm2470 = vcmp.eq.s32.totalorder %v2469, 63
        %v2471 = vsel %vm2470, %v2447, %v2467
        %s2472 = smov [#allocation14]
        %s2473 = scalar_lea.vmem %s2472, 16
        %s2474 = smov [#allocation15]
        %s2475 = scalar_lea.vmem %s2474, 16
        %v2476 = vld [vmem:[%s2475] sm:$0xff]
        %2477 = vrot.lane.b32.xlu0 %v2476, 1
        %v2478 = vpop.permute.xlu0 %2477
        %v2479 = vld [vmem:[%s2473] sm:$0xff]
        %v2480 = vld [vmem:[%s2473] sm:$0xff]
        %2481 = vrot.lane.b32.xlu0 %v2480, 1
        %v2482 = vpop.permute.xlu0 %2481
        %v2483 = vlaneseq
        %v2484 = vand.u32 %v2483, 127
        %vm2485 = vcmp.eq.s32.totalorder %v2484, 0
        %v2486 = vsel %vm2485, %v2480, %v2482
        %v2487 = vlaneseq
        %v2488 = vand.u32 %v2487, 127
        %vm2489 = vcmp.eq.s32.totalorder %v2488, 1
        %v2490 = vsel %vm2489, %v2478, %v2486
        %v2491 = vlaneseq
        %v2492 = vand.u32 %v2491, 127
        %vm2493 = vcmp.ge.s32.totalorder %v2492, 0
        %vm2494 = vcmp.lt.s32.totalorder %v2492, 64
        %vm2495 = vmand %vm2493, %vm2494
        %v2496 = vsel %vm2495, %v2490, 0.0
        %v2497 = vld [vmem:[%s2475] sm:$0xff]
        %2498 = vrot.lane.b32.xlu0 %v2497, 127
        %v2499 = vpop.permute.xlu0 %2498
        %v2500 = vlaneseq
        %v2501 = vand.u32 %v2500, 127
        %vm2502 = vcmp.eq.s32.totalorder %v2501, 63
        %v2503 = vsel %vm2502, %v2479, %v2499
        %s2504 = smov [#allocation14]
        %s2505 = scalar_lea.vmem %s2504, 24
        %s2506 = smov [#allocation15]
        %s2507 = scalar_lea.vmem %s2506, 24
        %v2508 = vld [vmem:[%s2507] sm:$0xff]
        %2509 = vrot.lane.b32.xlu0 %v2508, 1
        %v2510 = vpop.permute.xlu0 %2509
        %v2511 = vld [vmem:[%s2505] sm:$0xff]
        %v2512 = vld [vmem:[%s2505] sm:$0xff]
        %2513 = vrot.lane.b32.xlu0 %v2512, 1
        %v2514 = vpop.permute.xlu0 %2513
        %v2515 = vlaneseq
        %v2516 = vand.u32 %v2515, 127
        %vm2517 = vcmp.eq.s32.totalorder %v2516, 0
        %v2518 = vsel %vm2517, %v2512, %v2514
        %v2519 = vlaneseq
        %v2520 = vand.u32 %v2519, 127
        %vm2521 = vcmp.eq.s32.totalorder %v2520, 1
        %v2522 = vsel %vm2521, %v2510, %v2518
        %v2523 = vlaneseq
        %v2524 = vand.u32 %v2523, 127
        %vm2525 = vcmp.ge.s32.totalorder %v2524, 0
        %vm2526 = vcmp.lt.s32.totalorder %v2524, 64
        %vm2527 = vmand %vm2525, %vm2526
        %v2528 = vsel %vm2527, %v2522, 0.0
        %v2529 = vld [vmem:[%s2507] sm:$0xff]
        %2530 = vrot.lane.b32.xlu0 %v2529, 127
        %v2531 = vpop.permute.xlu0 %2530
        %v2532 = vlaneseq
        %v2533 = vand.u32 %v2532, 127
        %vm2534 = vcmp.eq.s32.totalorder %v2533, 63
        %v2535 = vsel %vm2534, %v2511, %v2531
        %s2536 = smov [#allocation14]
        %s2537 = scalar_lea.vmem %s2536, 32
        %s2538 = smov [#allocation15]
        %s2539 = scalar_lea.vmem %s2538, 32
        %v2540 = vld [vmem:[%s2539] sm:$0xff]
        %2541 = vrot.lane.b32.xlu0 %v2540, 1
        %v2542 = vpop.permute.xlu0 %2541
        %v2543 = vld [vmem:[%s2537] sm:$0xff]
        %v2544 = vld [vmem:[%s2537] sm:$0xff]
        %2545 = vrot.lane.b32.xlu0 %v2544, 1
        %v2546 = vpop.permute.xlu0 %2545
        %v2547 = vlaneseq
        %v2548 = vand.u32 %v2547, 127
        %vm2549 = vcmp.eq.s32.totalorder %v2548, 0
        %v2550 = vsel %vm2549, %v2544, %v2546
        %v2551 = vlaneseq
        %v2552 = vand.u32 %v2551, 127
        %vm2553 = vcmp.eq.s32.totalorder %v2552, 1
        %v2554 = vsel %vm2553, %v2542, %v2550
        %v2555 = vlaneseq
        %v2556 = vand.u32 %v2555, 127
        %vm2557 = vcmp.ge.s32.totalorder %v2556, 0
        %vm2558 = vcmp.lt.s32.totalorder %v2556, 64
        %vm2559 = vmand %vm2557, %vm2558
        %v2560 = vsel %vm2559, %v2554, 0.0
        %v2561 = vld [vmem:[%s2539] sm:$0xff]
        %2562 = vrot.lane.b32.xlu0 %v2561, 127
        %v2563 = vpop.permute.xlu0 %2562
        %v2564 = vlaneseq
        %v2565 = vand.u32 %v2564, 127
        %vm2566 = vcmp.eq.s32.totalorder %v2565, 63
        %v2567 = vsel %vm2566, %v2543, %v2563
        %s2568 = smov [#allocation14]
        %s2569 = scalar_lea.vmem %s2568, 40
        %s2570 = smov [#allocation15]
        %s2571 = scalar_lea.vmem %s2570, 40
        %v2572 = vld [vmem:[%s2571] sm:$0xff]
        %2573 = vrot.lane.b32.xlu0 %v2572, 1
        %v2574 = vpop.permute.xlu0 %2573
        %v2575 = vld [vmem:[%s2569] sm:$0xff]
        %v2576 = vld [vmem:[%s2569] sm:$0xff]
        %2577 = vrot.lane.b32.xlu0 %v2576, 1
        %v2578 = vpop.permute.xlu0 %2577
        %v2579 = vlaneseq
        %v2580 = vand.u32 %v2579, 127
        %vm2581 = vcmp.eq.s32.totalorder %v2580, 0
        %v2582 = vsel %vm2581, %v2576, %v2578
        %v2583 = vlaneseq
        %v2584 = vand.u32 %v2583, 127
        %vm2585 = vcmp.eq.s32.totalorder %v2584, 1
        %v2586 = vsel %vm2585, %v2574, %v2582
        %v2587 = vlaneseq
        %v2588 = vand.u32 %v2587, 127
        %vm2589 = vcmp.ge.s32.totalorder %v2588, 0
        %vm2590 = vcmp.lt.s32.totalorder %v2588, 64
        %vm2591 = vmand %vm2589, %vm2590
        %v2592 = vsel %vm2591, %v2586, 0.0
        %v2593 = vld [vmem:[%s2571] sm:$0xff]
        %2594 = vrot.lane.b32.xlu0 %v2593, 127
        %v2595 = vpop.permute.xlu0 %2594
        %v2596 = vlaneseq
        %v2597 = vand.u32 %v2596, 127
        %vm2598 = vcmp.eq.s32.totalorder %v2597, 63
        %v2599 = vsel %vm2598, %v2575, %v2595
        %s2600 = smov [#allocation14]
        %s2601 = scalar_lea.vmem %s2600, 48
        %s2602 = smov [#allocation15]
        %s2603 = scalar_lea.vmem %s2602, 48
        %v2604 = vld [vmem:[%s2603] sm:$0xff]
        %2605 = vrot.lane.b32.xlu0 %v2604, 1
        %v2606 = vpop.permute.xlu0 %2605
        %v2607 = vld [vmem:[%s2601] sm:$0xff]
        %v2608 = vld [vmem:[%s2601] sm:$0xff]
        %2609 = vrot.lane.b32.xlu0 %v2608, 1
        %v2610 = vpop.permute.xlu0 %2609
        %v2611 = vlaneseq
        %v2612 = vand.u32 %v2611, 127
        %vm2613 = vcmp.eq.s32.totalorder %v2612, 0
        %v2614 = vsel %vm2613, %v2608, %v2610
        %v2615 = vlaneseq
        %v2616 = vand.u32 %v2615, 127
        %vm2617 = vcmp.eq.s32.totalorder %v2616, 1
        %v2618 = vsel %vm2617, %v2606, %v2614
        %v2619 = vlaneseq
        %v2620 = vand.u32 %v2619, 127
        %vm2621 = vcmp.ge.s32.totalorder %v2620, 0
        %vm2622 = vcmp.lt.s32.totalorder %v2620, 64
        %vm2623 = vmand %vm2621, %vm2622
        %v2624 = vsel %vm2623, %v2618, 0.0
        %v2625 = vld [vmem:[%s2603] sm:$0xff]
        %2626 = vrot.lane.b32.xlu0 %v2625, 127
        %v2627 = vpop.permute.xlu0 %2626
        %v2628 = vlaneseq
        %v2629 = vand.u32 %v2628, 127
        %vm2630 = vcmp.eq.s32.totalorder %v2629, 63
        %v2631 = vsel %vm2630, %v2607, %v2627
        %s2632 = smov [#allocation14]
        %s2633 = scalar_lea.vmem %s2632, 56
        %s2634 = smov [#allocation15]
        %s2635 = scalar_lea.vmem %s2634, 56
        %v2636 = vld [vmem:[%s2635] sm:$0xff]
        %2637 = vrot.lane.b32.xlu0 %v2636, 1
        %v2638 = vpop.permute.xlu0 %2637
        %v2639 = vld [vmem:[%s2633] sm:$0xff]
        %v2640 = vld [vmem:[%s2633] sm:$0xff]
        %2641 = vrot.lane.b32.xlu0 %v2640, 1
        %v2642 = vpop.permute.xlu0 %2641
        %v2643 = vlaneseq
        %v2644 = vand.u32 %v2643, 127
        %vm2645 = vcmp.eq.s32.totalorder %v2644, 0
        %v2646 = vsel %vm2645, %v2640, %v2642
        %v2647 = vlaneseq
        %v2648 = vand.u32 %v2647, 127
        %vm2649 = vcmp.eq.s32.totalorder %v2648, 1
        %v2650 = vsel %vm2649, %v2638, %v2646
        %v2651 = vlaneseq
        %v2652 = vand.u32 %v2651, 127
        %vm2653 = vcmp.ge.s32.totalorder %v2652, 0
        %vm2654 = vcmp.lt.s32.totalorder %v2652, 64
        %vm2655 = vmand %vm2653, %vm2654
        %v2656 = vsel %vm2655, %v2650, 0.0
        %v2657 = vld [vmem:[%s2635] sm:$0xff]
        %2658 = vrot.lane.b32.xlu0 %v2657, 127
        %v2659 = vpop.permute.xlu0 %2658
        %v2660 = vlaneseq
        %v2661 = vand.u32 %v2660, 127
        %vm2662 = vcmp.eq.s32.totalorder %v2661, 63
        %v2663 = vsel %vm2662, %v2639, %v2659
        %2664 = vst [vmem:[%s2410] sm:$0xff] %v2432
        %2665 = vst [vmem:[%s2411] sm:$0xff] %v2439
        %2666 = vst [vmem:[%s2441] sm:$0xff] %v2464
        %2667 = vst [vmem:[%s2443] sm:$0xff] %v2471
        %2668 = vst [vmem:[%s2473] sm:$0xff] %v2496
        %2669 = vst [vmem:[%s2475] sm:$0xff] %v2503
        %2670 = vst [vmem:[%s2505] sm:$0xff] %v2528
        %2671 = vst [vmem:[%s2507] sm:$0xff] %v2535
        %2672 = vst [vmem:[%s2537] sm:$0xff] %v2560
        %2673 = vst [vmem:[%s2539] sm:$0xff] %v2567
        %2674 = vst [vmem:[%s2569] sm:$0xff] %v2592
        %2675 = vst [vmem:[%s2571] sm:$0xff] %v2599
        %2676 = vst [vmem:[%s2601] sm:$0xff] %v2624
        %2677 = vst [vmem:[%s2603] sm:$0xff] %v2631
        %2678 = vst [vmem:[%s2633] sm:$0xff] %v2656
        %2679 = vst [vmem:[%s2635] sm:$0xff] %v2663
        %s2680 = smov [#allocation12]
        %s2681 = smov [#allocation14]
        %v2682 = vld [vmem:[%s2680] ss:$0 sm:$0xff]
        %s2684 = scalar_lea.vmem %s2680, 4294967295
        %v2685 = vld [vmem:[%s2684] sm:$0xfe]
        %v2686 = vlaneseq
        %v2687 = vshrl.u32 %v2686, 7
        %vm2688 = vcmp.eq.s32.totalorder %v2687, 0
        %v2689 = vsel %vm2688, %v2682, %v2685
        %s2690 = scalar_lea.vmem %s2680, 7
        %v2691 = vld [vmem:[%s2690] ss:$0 sm:$0xff]
        %2692 = vst [vmem:[%s2680] sm:$0xff] %v2689
        %s2693 = scalar_lea.vmem %s2680, 8
        %s2695 = scalar_lea.vmem %s2693, 4294967295
        %v2696 = vld [vmem:[%s2695] sm:$0xfe]
        %v2697 = vlaneseq
        %v2698 = vshrl.u32 %v2697, 7
        %vm2699 = vcmp.eq.s32.totalorder %v2698, 0
        %v2700 = vsel %vm2699, %v2691, %v2696
        %s2701 = scalar_lea.vmem %s2693, 7
        %v2702 = vld [vmem:[%s2701] ss:$0 sm:$0xff]
        %2703 = vst [vmem:[%s2693] sm:$0xff] %v2700
        %s2704 = scalar_lea.vmem %s2680, 16
        %s2706 = scalar_lea.vmem %s2704, 4294967295
        %v2707 = vld [vmem:[%s2706] sm:$0xfe]
        %v2708 = vlaneseq
        %v2709 = vshrl.u32 %v2708, 7
        %vm2710 = vcmp.eq.s32.totalorder %v2709, 0
        %v2711 = vsel %vm2710, %v2702, %v2707
        %s2712 = scalar_lea.vmem %s2704, 7
        %v2713 = vld [vmem:[%s2712] ss:$0 sm:$0xff]
        %2714 = vst [vmem:[%s2704] sm:$0xff] %v2711
        %s2715 = scalar_lea.vmem %s2680, 24
        %s2717 = scalar_lea.vmem %s2715, 4294967295
        %v2718 = vld [vmem:[%s2717] sm:$0xfe]
        %v2719 = vlaneseq
        %v2720 = vshrl.u32 %v2719, 7
        %vm2721 = vcmp.eq.s32.totalorder %v2720, 0
        %v2722 = vsel %vm2721, %v2713, %v2718
        %s2723 = scalar_lea.vmem %s2715, 7
        %v2724 = vld [vmem:[%s2723] ss:$0 sm:$0xff]
        %2725 = vst [vmem:[%s2715] sm:$0xff] %v2722
        %s2726 = scalar_lea.vmem %s2680, 32
        %s2728 = scalar_lea.vmem %s2726, 4294967295
        %v2729 = vld [vmem:[%s2728] sm:$0xfe]
        %v2730 = vlaneseq
        %v2731 = vshrl.u32 %v2730, 7
        %vm2732 = vcmp.eq.s32.totalorder %v2731, 0
        %v2733 = vsel %vm2732, %v2724, %v2729
        %s2734 = scalar_lea.vmem %s2726, 7
        %v2735 = vld [vmem:[%s2734] ss:$0 sm:$0xff]
        %2736 = vst [vmem:[%s2726] sm:$0xff] %v2733
        %s2737 = scalar_lea.vmem %s2680, 40
        %s2739 = scalar_lea.vmem %s2737, 4294967295
        %v2740 = vld [vmem:[%s2739] sm:$0xfe]
        %v2741 = vlaneseq
        %v2742 = vshrl.u32 %v2741, 7
        %vm2743 = vcmp.eq.s32.totalorder %v2742, 0
        %v2744 = vsel %vm2743, %v2735, %v2740
        %s2745 = scalar_lea.vmem %s2737, 7
        %v2746 = vld [vmem:[%s2745] ss:$0 sm:$0xff]
        %2747 = vst [vmem:[%s2737] sm:$0xff] %v2744
        %s2748 = scalar_lea.vmem %s2680, 48
        %s2750 = scalar_lea.vmem %s2748, 4294967295
        %v2751 = vld [vmem:[%s2750] sm:$0xfe]
        %v2752 = vlaneseq
        %v2753 = vshrl.u32 %v2752, 7
        %vm2754 = vcmp.eq.s32.totalorder %v2753, 0
        %v2755 = vsel %vm2754, %v2746, %v2751
        %s2756 = scalar_lea.vmem %s2748, 7
        %v2757 = vld [vmem:[%s2756] ss:$0 sm:$0xff]
        %2758 = vst [vmem:[%s2748] sm:$0xff] %v2755
        %s2759 = scalar_lea.vmem %s2680, 56
        %s2761 = scalar_lea.vmem %s2759, 4294967295
        %v2762 = vld [vmem:[%s2761] sm:$0xfe]
        %v2763 = vlaneseq
        %v2764 = vshrl.u32 %v2763, 7
        %vm2765 = vcmp.eq.s32.totalorder %v2764, 0
        %v2766 = vsel %vm2765, %v2757, %v2762
        %s2767 = scalar_lea.vmem %s2759, 7
        %v2768 = vld [vmem:[%s2767] ss:$0 sm:$0xff]
        %2769 = vst [vmem:[%s2759] sm:$0xff] %v2766
        %v2770 = vld [vmem:[%s2681] ss:$0 sm:$0xff]
        %s2771 = scalar_lea.vmem %s2680, 1
        %2772 = vst [vmem:[%s2771] sm:$0x1] %v2770
        %s2773 = scalar_lea.vmem %s2681, 56
        %s2774 = scalar_lea.vmem %s2773, 1
        %v2775 = vld [vmem:[%s2774] sm:$0x7f]
        %v2776 = vlaneseq
        %v2777 = vshrl.u32 %v2776, 7
        %vm2778 = vcmp.eq.s32.totalorder %v2777, 7
        %v2779 = vsel %vm2778, %v2768, %v2775
        %v2780 = vld [vmem:[%s2773] ss:$0 sm:$0xff]
        %2781 = vst [vmem:[%s2773] sm:$0xff] %v2779
        %s2782 = scalar_lea.vmem %s2681, 48
        %s2783 = scalar_lea.vmem %s2782, 1
        %v2784 = vld [vmem:[%s2783] sm:$0x7f]
        %v2785 = vlaneseq
        %v2786 = vshrl.u32 %v2785, 7
        %vm2787 = vcmp.eq.s32.totalorder %v2786, 7
        %v2788 = vsel %vm2787, %v2780, %v2784
        %v2789 = vld [vmem:[%s2782] ss:$0 sm:$0xff]
        %2790 = vst [vmem:[%s2782] sm:$0xff] %v2788
        %s2791 = scalar_lea.vmem %s2681, 40
        %s2792 = scalar_lea.vmem %s2791, 1
        %v2793 = vld [vmem:[%s2792] sm:$0x7f]
        %v2794 = vlaneseq
        %v2795 = vshrl.u32 %v2794, 7
        %vm2796 = vcmp.eq.s32.totalorder %v2795, 7
        %v2797 = vsel %vm2796, %v2789, %v2793
        %v2798 = vld [vmem:[%s2791] ss:$0 sm:$0xff]
        %2799 = vst [vmem:[%s2791] sm:$0xff] %v2797
        %s2800 = scalar_lea.vmem %s2681, 32
        %s2801 = scalar_lea.vmem %s2800, 1
        %v2802 = vld [vmem:[%s2801] sm:$0x7f]
        %v2803 = vlaneseq
        %v2804 = vshrl.u32 %v2803, 7
        %vm2805 = vcmp.eq.s32.totalorder %v2804, 7
        %v2806 = vsel %vm2805, %v2798, %v2802
        %v2807 = vld [vmem:[%s2800] ss:$0 sm:$0xff]
        %2808 = vst [vmem:[%s2800] sm:$0xff] %v2806
        %s2809 = scalar_lea.vmem %s2681, 24
        %s2810 = scalar_lea.vmem %s2809, 1
        %v2811 = vld [vmem:[%s2810] sm:$0x7f]
        %v2812 = vlaneseq
        %v2813 = vshrl.u32 %v2812, 7
        %vm2814 = vcmp.eq.s32.totalorder %v2813, 7
        %v2815 = vsel %vm2814, %v2807, %v2811
        %v2816 = vld [vmem:[%s2809] ss:$0 sm:$0xff]
        %2817 = vst [vmem:[%s2809] sm:$0xff] %v2815
        %s2818 = scalar_lea.vmem %s2681, 16
        %s2819 = scalar_lea.vmem %s2818, 1
        %v2820 = vld [vmem:[%s2819] sm:$0x7f]
        %v2821 = vlaneseq
        %v2822 = vshrl.u32 %v2821, 7
        %vm2823 = vcmp.eq.s32.totalorder %v2822, 7
        %v2824 = vsel %vm2823, %v2816, %v2820
        %v2825 = vld [vmem:[%s2818] ss:$0 sm:$0xff]
        %2826 = vst [vmem:[%s2818] sm:$0xff] %v2824
        %s2827 = scalar_lea.vmem %s2681, 8
        %s2828 = scalar_lea.vmem %s2827, 1
        %v2829 = vld [vmem:[%s2828] sm:$0x7f]
        %v2830 = vlaneseq
        %v2831 = vshrl.u32 %v2830, 7
        %vm2832 = vcmp.eq.s32.totalorder %v2831, 7
        %v2833 = vsel %vm2832, %v2825, %v2829
        %v2834 = vld [vmem:[%s2827] ss:$0 sm:$0xff]
        %2835 = vst [vmem:[%s2827] sm:$0xff] %v2833
        %s2836 = scalar_lea.vmem %s2681, 1
        %v2837 = vld [vmem:[%s2836] sm:$0x7f]
        %v2838 = vlaneseq
        %v2839 = vshrl.u32 %v2838, 7
        %vm2840 = vcmp.eq.s32.totalorder %v2839, 7
        %v2841 = vsel %vm2840, %v2834, %v2837
        %v2842 = vld [vmem:[%s2681] ss:$0 sm:$0xff]
        %2843 = vst [vmem:[%s2681] sm:$0xff] %v2841
        %s2844 = smov [#allocation13]
        %s2845 = smov [#allocation15]
        %v2846 = vld [vmem:[%s2844] ss:$0 sm:$0xff]
        %s2848 = scalar_lea.vmem %s2844, 4294967295
        %v2849 = vld [vmem:[%s2848] sm:$0xfe]
        %v2850 = vlaneseq
        %v2851 = vshrl.u32 %v2850, 7
        %vm2852 = vcmp.eq.s32.totalorder %v2851, 0
        %v2853 = vsel %vm2852, %v2846, %v2849
        %s2854 = scalar_lea.vmem %s2844, 7
        %v2855 = vld [vmem:[%s2854] ss:$0 sm:$0xff]
        %2856 = vst [vmem:[%s2844] sm:$0xff] %v2853
        %s2857 = scalar_lea.vmem %s2844, 8
        %s2859 = scalar_lea.vmem %s2857, 4294967295
        %v2860 = vld [vmem:[%s2859] sm:$0xfe]
        %v2861 = vlaneseq
        %v2862 = vshrl.u32 %v2861, 7
        %vm2863 = vcmp.eq.s32.totalorder %v2862, 0
        %v2864 = vsel %vm2863, %v2855, %v2860
        %s2865 = scalar_lea.vmem %s2857, 7
        %v2866 = vld [vmem:[%s2865] ss:$0 sm:$0xff]
        %2867 = vst [vmem:[%s2857] sm:$0xff] %v2864
        %s2868 = scalar_lea.vmem %s2844, 16
        %s2870 = scalar_lea.vmem %s2868, 4294967295
        %v2871 = vld [vmem:[%s2870] sm:$0xfe]
        %v2872 = vlaneseq
        %v2873 = vshrl.u32 %v2872, 7
        %vm2874 = vcmp.eq.s32.totalorder %v2873, 0
        %v2875 = vsel %vm2874, %v2866, %v2871
        %s2876 = scalar_lea.vmem %s2868, 7
        %v2877 = vld [vmem:[%s2876] ss:$0 sm:$0xff]
        %2878 = vst [vmem:[%s2868] sm:$0xff] %v2875
        %s2879 = scalar_lea.vmem %s2844, 24
        %s2881 = scalar_lea.vmem %s2879, 4294967295
        %v2882 = vld [vmem:[%s2881] sm:$0xfe]
        %v2883 = vlaneseq
        %v2884 = vshrl.u32 %v2883, 7
        %vm2885 = vcmp.eq.s32.totalorder %v2884, 0
        %v2886 = vsel %vm2885, %v2877, %v2882
        %s2887 = scalar_lea.vmem %s2879, 7
        %v2888 = vld [vmem:[%s2887] ss:$0 sm:$0xff]
        %2889 = vst [vmem:[%s2879] sm:$0xff] %v2886
        %s2890 = scalar_lea.vmem %s2844, 32
        %s2892 = scalar_lea.vmem %s2890, 4294967295
        %v2893 = vld [vmem:[%s2892] sm:$0xfe]
        %v2894 = vlaneseq
        %v2895 = vshrl.u32 %v2894, 7
        %vm2896 = vcmp.eq.s32.totalorder %v2895, 0
        %v2897 = vsel %vm2896, %v2888, %v2893
        %s2898 = scalar_lea.vmem %s2890, 7
        %v2899 = vld [vmem:[%s2898] ss:$0 sm:$0xff]
        %2900 = vst [vmem:[%s2890] sm:$0xff] %v2897
        %s2901 = scalar_lea.vmem %s2844, 40
        %s2903 = scalar_lea.vmem %s2901, 4294967295
        %v2904 = vld [vmem:[%s2903] sm:$0xfe]
        %v2905 = vlaneseq
        %v2906 = vshrl.u32 %v2905, 7
        %vm2907 = vcmp.eq.s32.totalorder %v2906, 0
        %v2908 = vsel %vm2907, %v2899, %v2904
        %s2909 = scalar_lea.vmem %s2901, 7
        %v2910 = vld [vmem:[%s2909] ss:$0 sm:$0xff]
        %2911 = vst [vmem:[%s2901] sm:$0xff] %v2908
        %s2912 = scalar_lea.vmem %s2844, 48
        %s2914 = scalar_lea.vmem %s2912, 4294967295
        %v2915 = vld [vmem:[%s2914] sm:$0xfe]
        %v2916 = vlaneseq
        %v2917 = vshrl.u32 %v2916, 7
        %vm2918 = vcmp.eq.s32.totalorder %v2917, 0
        %v2919 = vsel %vm2918, %v2910, %v2915
        %s2920 = scalar_lea.vmem %s2912, 7
        %v2921 = vld [vmem:[%s2920] ss:$0 sm:$0xff]
        %2922 = vst [vmem:[%s2912] sm:$0xff] %v2919
        %s2923 = scalar_lea.vmem %s2844, 56
        %s2925 = scalar_lea.vmem %s2923, 4294967295
        %v2926 = vld [vmem:[%s2925] sm:$0xfe]
        %v2927 = vlaneseq
        %v2928 = vshrl.u32 %v2927, 7
        %vm2929 = vcmp.eq.s32.totalorder %v2928, 0
        %v2930 = vsel %vm2929, %v2921, %v2926
        %s2931 = scalar_lea.vmem %s2923, 7
        %v2932 = vld [vmem:[%s2931] ss:$0 sm:$0xff]
        %2933 = vst [vmem:[%s2923] sm:$0xff] %v2930
        %v2934 = vld [vmem:[%s2845] ss:$0 sm:$0xff]
        %s2935 = scalar_lea.vmem %s2844, 1
        %2936 = vst [vmem:[%s2935] sm:$0x1] %v2934
        %s2937 = scalar_lea.vmem %s2845, 56
        %s2938 = scalar_lea.vmem %s2937, 1
        %v2939 = vld [vmem:[%s2938] sm:$0x7f]
        %v2940 = vlaneseq
        %v2941 = vshrl.u32 %v2940, 7
        %vm2942 = vcmp.eq.s32.totalorder %v2941, 7
        %v2943 = vsel %vm2942, %v2932, %v2939
        %v2944 = vld [vmem:[%s2937] ss:$0 sm:$0xff]
        %2945 = vst [vmem:[%s2937] sm:$0xff] %v2943
        %s2946 = scalar_lea.vmem %s2845, 48
        %s2947 = scalar_lea.vmem %s2946, 1
        %v2948 = vld [vmem:[%s2947] sm:$0x7f]
        %v2949 = vlaneseq
        %v2950 = vshrl.u32 %v2949, 7
        %vm2951 = vcmp.eq.s32.totalorder %v2950, 7
        %v2952 = vsel %vm2951, %v2944, %v2948
        %v2953 = vld [vmem:[%s2946] ss:$0 sm:$0xff]
        %2954 = vst [vmem:[%s2946] sm:$0xff] %v2952
        %s2955 = scalar_lea.vmem %s2845, 40
        %s2956 = scalar_lea.vmem %s2955, 1
        %v2957 = vld [vmem:[%s2956] sm:$0x7f]
        %v2958 = vlaneseq
        %v2959 = vshrl.u32 %v2958, 7
        %vm2960 = vcmp.eq.s32.totalorder %v2959, 7
        %v2961 = vsel %vm2960, %v2953, %v2957
        %v2962 = vld [vmem:[%s2955] ss:$0 sm:$0xff]
        %2963 = vst [vmem:[%s2955] sm:$0xff] %v2961
        %s2964 = scalar_lea.vmem %s2845, 32
        %s2965 = scalar_lea.vmem %s2964, 1
        %v2966 = vld [vmem:[%s2965] sm:$0x7f]
        %v2967 = vlaneseq
        %v2968 = vshrl.u32 %v2967, 7
        %vm2969 = vcmp.eq.s32.totalorder %v2968, 7
        %v2970 = vsel %vm2969, %v2962, %v2966
        %v2971 = vld [vmem:[%s2964] ss:$0 sm:$0xff]
        %2972 = vst [vmem:[%s2964] sm:$0xff] %v2970
        %s2973 = scalar_lea.vmem %s2845, 24
        %s2974 = scalar_lea.vmem %s2973, 1
        %v2975 = vld [vmem:[%s2974] sm:$0x7f]
        %v2976 = vlaneseq
        %v2977 = vshrl.u32 %v2976, 7
        %vm2978 = vcmp.eq.s32.totalorder %v2977, 7
        %v2979 = vsel %vm2978, %v2971, %v2975
        %v2980 = vld [vmem:[%s2973] ss:$0 sm:$0xff]
        %2981 = vst [vmem:[%s2973] sm:$0xff] %v2979
        %s2982 = scalar_lea.vmem %s2845, 16
        %s2983 = scalar_lea.vmem %s2982, 1
        %v2984 = vld [vmem:[%s2983] sm:$0x7f]
        %v2985 = vlaneseq
        %v2986 = vshrl.u32 %v2985, 7
        %vm2987 = vcmp.eq.s32.totalorder %v2986, 7
        %v2988 = vsel %vm2987, %v2980, %v2984
        %v2989 = vld [vmem:[%s2982] ss:$0 sm:$0xff]
        %2990 = vst [vmem:[%s2982] sm:$0xff] %v2988
        %s2991 = scalar_lea.vmem %s2845, 8
        %s2992 = scalar_lea.vmem %s2991, 1
        %v2993 = vld [vmem:[%s2992] sm:$0x7f]
        %v2994 = vlaneseq
        %v2995 = vshrl.u32 %v2994, 7
        %vm2996 = vcmp.eq.s32.totalorder %v2995, 7
        %v2997 = vsel %vm2996, %v2989, %v2993
        %v2998 = vld [vmem:[%s2991] ss:$0 sm:$0xff]
        %2999 = vst [vmem:[%s2991] sm:$0xff] %v2997
        %s3000 = scalar_lea.vmem %s2845, 1
        %v3001 = vld [vmem:[%s3000] sm:$0x7f]
        %v3002 = vlaneseq
        %v3003 = vshrl.u32 %v3002, 7
        %vm3004 = vcmp.eq.s32.totalorder %v3003, 7
        %v3005 = vsel %vm3004, %v2998, %v3001
        %v3006 = vld [vmem:[%s2845] ss:$0 sm:$0xff]
        %3007 = vst [vmem:[%s2845] sm:$0xff] %v3005
        %s3008 = smov [#allocation23]
        %v3009 = vld [vmem:[%s3008] sm:$0xff]
        %s3010 = smov [#allocation24]
        %v3011 = vld [vmem:[%s3010] sm:$0xff]
        %s3012 = smov [#allocation8]
        %s3013 = smov [#allocation9]
        %s3014 = smov [#allocation10]
        %s3015 = smov [#allocation11]
        %v3016 = vld [vmem:[%s3012] sm:$0xff]
        %v3017 = vld [vmem:[%s3013] sm:$0xff]
        %v3018 = vld [vmem:[%s3014] sm:$0xff]
        %v3019 = vld [vmem:[%s3015] sm:$0xff]
        %v3020 = vmul.f32 %v3009, %v3016
        %v3021 = vmul.f32 %v3011, %v3018
        %v3022 = vsub.f32 %v3020, %v3021
        %v3023 = vmul.f32 %v3009, %v3017
        %v3024 = vmul.f32 %v3011, %v3019
        %v3025 = vsub.f32 %v3023, %v3024
        %v3026 = vmul.f32 %v3011, %v3016
        %v3027 = vmul.f32 %v3009, %v3018
        %v3028 = vadd.f32 %v3026, %v3027
        %v3029 = vmul.f32 %v3011, %v3017
        %v3030 = vmul.f32 %v3009, %v3019
        %v3031 = vadd.f32 %v3029, %v3030
        %3032 = vst [vmem:[%s3012] sm:$0xff] %v3022
        %3033 = vst [vmem:[%s3013] sm:$0xff] %v3025
        %3034 = vst [vmem:[%s3014] sm:$0xff] %v3028
        %3035 = vst [vmem:[%s3015] sm:$0xff] %v3031
        %s3036 = smov [#allocation23]
        %s3037 = scalar_lea.vmem %s3036, 8
        %v3038 = vld [vmem:[%s3037] sm:$0xff]
        %s3039 = smov [#allocation24]
        %s3040 = scalar_lea.vmem %s3039, 8
        %v3041 = vld [vmem:[%s3040] sm:$0xff]
        %s3042 = smov [#allocation8]
        %s3043 = scalar_lea.vmem %s3042, 8
        %s3044 = smov [#allocation9]
        %s3045 = scalar_lea.vmem %s3044, 8
        %s3046 = smov [#allocation10]
        %s3047 = scalar_lea.vmem %s3046, 8
        %s3048 = smov [#allocation11]
        %s3049 = scalar_lea.vmem %s3048, 8
        %v3050 = vld [vmem:[%s3043] sm:$0xff]
        %v3051 = vld [vmem:[%s3045] sm:$0xff]
        %v3052 = vld [vmem:[%s3047] sm:$0xff]
        %v3053 = vld [vmem:[%s3049] sm:$0xff]
        %v3054 = vmul.f32 %v3038, %v3050
        %v3055 = vmul.f32 %v3041, %v3052
        %v3056 = vsub.f32 %v3054, %v3055
        %v3057 = vmul.f32 %v3038, %v3051
        %v3058 = vmul.f32 %v3041, %v3053
        %v3059 = vsub.f32 %v3057, %v3058
        %v3060 = vmul.f32 %v3041, %v3050
        %v3061 = vmul.f32 %v3038, %v3052
        %v3062 = vadd.f32 %v3060, %v3061
        %v3063 = vmul.f32 %v3041, %v3051
        %v3064 = vmul.f32 %v3038, %v3053
        %v3065 = vadd.f32 %v3063, %v3064
        %3066 = vst [vmem:[%s3043] sm:$0xff] %v3056
        %3067 = vst [vmem:[%s3045] sm:$0xff] %v3059
        %3068 = vst [vmem:[%s3047] sm:$0xff] %v3062
        %3069 = vst [vmem:[%s3049] sm:$0xff] %v3065
        %s3070 = smov [#allocation23]
        %s3071 = scalar_lea.vmem %s3070, 16
        %v3072 = vld [vmem:[%s3071] sm:$0xff]
        %s3073 = smov [#allocation24]
        %s3074 = scalar_lea.vmem %s3073, 16
        %v3075 = vld [vmem:[%s3074] sm:$0xff]
        %s3076 = smov [#allocation8]
        %s3077 = scalar_lea.vmem %s3076, 16
        %s3078 = smov [#allocation9]
        %s3079 = scalar_lea.vmem %s3078, 16
        %s3080 = smov [#allocation10]
        %s3081 = scalar_lea.vmem %s3080, 16
        %s3082 = smov [#allocation11]
        %s3083 = scalar_lea.vmem %s3082, 16
        %v3084 = vld [vmem:[%s3077] sm:$0xff]
        %v3085 = vld [vmem:[%s3079] sm:$0xff]
        %v3086 = vld [vmem:[%s3081] sm:$0xff]
        %v3087 = vld [vmem:[%s3083] sm:$0xff]
        %v3088 = vmul.f32 %v3072, %v3084
        %v3089 = vmul.f32 %v3075, %v3086
        %v3090 = vsub.f32 %v3088, %v3089
        %v3091 = vmul.f32 %v3072, %v3085
        %v3092 = vmul.f32 %v3075, %v3087
        %v3093 = vsub.f32 %v3091, %v3092
        %v3094 = vmul.f32 %v3075, %v3084
        %v3095 = vmul.f32 %v3072, %v3086
        %v3096 = vadd.f32 %v3094, %v3095
        %v3097 = vmul.f32 %v3075, %v3085
        %v3098 = vmul.f32 %v3072, %v3087
        %v3099 = vadd.f32 %v3097, %v3098
        %3100 = vst [vmem:[%s3077] sm:$0xff] %v3090
        %3101 = vst [vmem:[%s3079] sm:$0xff] %v3093
        %3102 = vst [vmem:[%s3081] sm:$0xff] %v3096
        %3103 = vst [vmem:[%s3083] sm:$0xff] %v3099
        %s3104 = smov [#allocation23]
        %s3105 = scalar_lea.vmem %s3104, 24
        %v3106 = vld [vmem:[%s3105] sm:$0xff]
        %s3107 = smov [#allocation24]
        %s3108 = scalar_lea.vmem %s3107, 24
        %v3109 = vld [vmem:[%s3108] sm:$0xff]
        %s3110 = smov [#allocation8]
        %s3111 = scalar_lea.vmem %s3110, 24
        %s3112 = smov [#allocation9]
        %s3113 = scalar_lea.vmem %s3112, 24
        %s3114 = smov [#allocation10]
        %s3115 = scalar_lea.vmem %s3114, 24
        %s3116 = smov [#allocation11]
        %s3117 = scalar_lea.vmem %s3116, 24
        %v3118 = vld [vmem:[%s3111] sm:$0xff]
        %v3119 = vld [vmem:[%s3113] sm:$0xff]
        %v3120 = vld [vmem:[%s3115] sm:$0xff]
        %v3121 = vld [vmem:[%s3117] sm:$0xff]
        %v3122 = vmul.f32 %v3106, %v3118
        %v3123 = vmul.f32 %v3109, %v3120
        %v3124 = vsub.f32 %v3122, %v3123
        %v3125 = vmul.f32 %v3106, %v3119
        %v3126 = vmul.f32 %v3109, %v3121
        %v3127 = vsub.f32 %v3125, %v3126
        %v3128 = vmul.f32 %v3109, %v3118
        %v3129 = vmul.f32 %v3106, %v3120
        %v3130 = vadd.f32 %v3128, %v3129
        %v3131 = vmul.f32 %v3109, %v3119
        %v3132 = vmul.f32 %v3106, %v3121
        %v3133 = vadd.f32 %v3131, %v3132
        %3134 = vst [vmem:[%s3111] sm:$0xff] %v3124
        %3135 = vst [vmem:[%s3113] sm:$0xff] %v3127
        %3136 = vst [vmem:[%s3115] sm:$0xff] %v3130
        %3137 = vst [vmem:[%s3117] sm:$0xff] %v3133
        %s3138 = smov [#allocation23]
        %s3139 = scalar_lea.vmem %s3138, 32
        %v3140 = vld [vmem:[%s3139] sm:$0xff]
        %s3141 = smov [#allocation24]
        %s3142 = scalar_lea.vmem %s3141, 32
        %v3143 = vld [vmem:[%s3142] sm:$0xff]
        %s3144 = smov [#allocation8]
        %s3145 = scalar_lea.vmem %s3144, 32
        %s3146 = smov [#allocation9]
        %s3147 = scalar_lea.vmem %s3146, 32
        %s3148 = smov [#allocation10]
        %s3149 = scalar_lea.vmem %s3148, 32
        %s3150 = smov [#allocation11]
        %s3151 = scalar_lea.vmem %s3150, 32
        %v3152 = vld [vmem:[%s3145] sm:$0xff]
        %v3153 = vld [vmem:[%s3147] sm:$0xff]
        %v3154 = vld [vmem:[%s3149] sm:$0xff]
        %v3155 = vld [vmem:[%s3151] sm:$0xff]
        %v3156 = vmul.f32 %v3140, %v3152
        %v3157 = vmul.f32 %v3143, %v3154
        %v3158 = vsub.f32 %v3156, %v3157
        %v3159 = vmul.f32 %v3140, %v3153
        %v3160 = vmul.f32 %v3143, %v3155
        %v3161 = vsub.f32 %v3159, %v3160
        %v3162 = vmul.f32 %v3143, %v3152
        %v3163 = vmul.f32 %v3140, %v3154
        %v3164 = vadd.f32 %v3162, %v3163
        %v3165 = vmul.f32 %v3143, %v3153
        %v3166 = vmul.f32 %v3140, %v3155
        %v3167 = vadd.f32 %v3165, %v3166
        %3168 = vst [vmem:[%s3145] sm:$0xff] %v3158
        %3169 = vst [vmem:[%s3147] sm:$0xff] %v3161
        %3170 = vst [vmem:[%s3149] sm:$0xff] %v3164
        %3171 = vst [vmem:[%s3151] sm:$0xff] %v3167
        %s3172 = smov [#allocation23]
        %s3173 = scalar_lea.vmem %s3172, 40
        %v3174 = vld [vmem:[%s3173] sm:$0xff]
        %s3175 = smov [#allocation24]
        %s3176 = scalar_lea.vmem %s3175, 40
        %v3177 = vld [vmem:[%s3176] sm:$0xff]
        %s3178 = smov [#allocation8]
        %s3179 = scalar_lea.vmem %s3178, 40
        %s3180 = smov [#allocation9]
        %s3181 = scalar_lea.vmem %s3180, 40
        %s3182 = smov [#allocation10]
        %s3183 = scalar_lea.vmem %s3182, 40
        %s3184 = smov [#allocation11]
        %s3185 = scalar_lea.vmem %s3184, 40
        %v3186 = vld [vmem:[%s3179] sm:$0xff]
        %v3187 = vld [vmem:[%s3181] sm:$0xff]
        %v3188 = vld [vmem:[%s3183] sm:$0xff]
        %v3189 = vld [vmem:[%s3185] sm:$0xff]
        %v3190 = vmul.f32 %v3174, %v3186
        %v3191 = vmul.f32 %v3177, %v3188
        %v3192 = vsub.f32 %v3190, %v3191
        %v3193 = vmul.f32 %v3174, %v3187
        %v3194 = vmul.f32 %v3177, %v3189
        %v3195 = vsub.f32 %v3193, %v3194
        %v3196 = vmul.f32 %v3177, %v3186
        %v3197 = vmul.f32 %v3174, %v3188
        %v3198 = vadd.f32 %v3196, %v3197
        %v3199 = vmul.f32 %v3177, %v3187
        %v3200 = vmul.f32 %v3174, %v3189
        %v3201 = vadd.f32 %v3199, %v3200
        %3202 = vst [vmem:[%s3179] sm:$0xff] %v3192
        %3203 = vst [vmem:[%s3181] sm:$0xff] %v3195
        %3204 = vst [vmem:[%s3183] sm:$0xff] %v3198
        %3205 = vst [vmem:[%s3185] sm:$0xff] %v3201
        %s3206 = smov [#allocation23]
        %s3207 = scalar_lea.vmem %s3206, 48
        %v3208 = vld [vmem:[%s3207] sm:$0xff]
        %s3209 = smov [#allocation24]
        %s3210 = scalar_lea.vmem %s3209, 48
        %v3211 = vld [vmem:[%s3210] sm:$0xff]
        %s3212 = smov [#allocation8]
        %s3213 = scalar_lea.vmem %s3212, 48
        %s3214 = smov [#allocation9]
        %s3215 = scalar_lea.vmem %s3214, 48
        %s3216 = smov [#allocation10]
        %s3217 = scalar_lea.vmem %s3216, 48
        %s3218 = smov [#allocation11]
        %s3219 = scalar_lea.vmem %s3218, 48
        %v3220 = vld [vmem:[%s3213] sm:$0xff]
        %v3221 = vld [vmem:[%s3215] sm:$0xff]
        %v3222 = vld [vmem:[%s3217] sm:$0xff]
        %v3223 = vld [vmem:[%s3219] sm:$0xff]
        %v3224 = vmul.f32 %v3208, %v3220
        %v3225 = vmul.f32 %v3211, %v3222
        %v3226 = vsub.f32 %v3224, %v3225
        %v3227 = vmul.f32 %v3208, %v3221
        %v3228 = vmul.f32 %v3211, %v3223
        %v3229 = vsub.f32 %v3227, %v3228
        %v3230 = vmul.f32 %v3211, %v3220
        %v3231 = vmul.f32 %v3208, %v3222
        %v3232 = vadd.f32 %v3230, %v3231
        %v3233 = vmul.f32 %v3211, %v3221
        %v3234 = vmul.f32 %v3208, %v3223
        %v3235 = vadd.f32 %v3233, %v3234
        %3236 = vst [vmem:[%s3213] sm:$0xff] %v3226
        %3237 = vst [vmem:[%s3215] sm:$0xff] %v3229
        %3238 = vst [vmem:[%s3217] sm:$0xff] %v3232
        %3239 = vst [vmem:[%s3219] sm:$0xff] %v3235
        %s3240 = smov [#allocation23]
        %s3241 = scalar_lea.vmem %s3240, 56
        %v3242 = vld [vmem:[%s3241] sm:$0xff]
        %s3243 = smov [#allocation24]
        %s3244 = scalar_lea.vmem %s3243, 56
        %v3245 = vld [vmem:[%s3244] sm:$0xff]
        %s3246 = smov [#allocation8]
        %s3247 = scalar_lea.vmem %s3246, 56
        %s3248 = smov [#allocation9]
        %s3249 = scalar_lea.vmem %s3248, 56
        %s3250 = smov [#allocation10]
        %s3251 = scalar_lea.vmem %s3250, 56
        %s3252 = smov [#allocation11]
        %s3253 = scalar_lea.vmem %s3252, 56
        %v3254 = vld [vmem:[%s3247] sm:$0xff]
        %v3255 = vld [vmem:[%s3249] sm:$0xff]
        %v3256 = vld [vmem:[%s3251] sm:$0xff]
        %v3257 = vld [vmem:[%s3253] sm:$0xff]
        %v3258 = vmul.f32 %v3242, %v3254
        %v3259 = vmul.f32 %v3245, %v3256
        %v3260 = vsub.f32 %v3258, %v3259
        %v3261 = vmul.f32 %v3242, %v3255
        %v3262 = vmul.f32 %v3245, %v3257
        %v3263 = vsub.f32 %v3261, %v3262
        %v3264 = vmul.f32 %v3245, %v3254
        %v3265 = vmul.f32 %v3242, %v3256
        %v3266 = vadd.f32 %v3264, %v3265
        %v3267 = vmul.f32 %v3245, %v3255
        %v3268 = vmul.f32 %v3242, %v3257
        %v3269 = vadd.f32 %v3267, %v3268
        %3270 = vst [vmem:[%s3247] sm:$0xff] %v3260
        %3271 = vst [vmem:[%s3249] sm:$0xff] %v3263
        %3272 = vst [vmem:[%s3251] sm:$0xff] %v3266
        %3273 = vst [vmem:[%s3253] sm:$0xff] %v3269
        %s3274 = smov [#allocation8]
        %s3275 = smov [#allocation10]
        %v3276 = vld [vmem:[%s3274] ss:$0 sm:$0xff]
        %s3278 = scalar_lea.vmem %s3274, 4294967295
        %v3279 = vld [vmem:[%s3278] sm:$0xfe]
        %v3280 = vlaneseq
        %v3281 = vshrl.u32 %v3280, 7
        %vm3282 = vcmp.eq.s32.totalorder %v3281, 0
        %v3283 = vsel %vm3282, %v3276, %v3279
        %s3284 = scalar_lea.vmem %s3274, 7
        %v3285 = vld [vmem:[%s3284] ss:$0 sm:$0xff]
        %3286 = vst [vmem:[%s3274] sm:$0xff] %v3283
        %s3287 = scalar_lea.vmem %s3274, 8
        %s3289 = scalar_lea.vmem %s3287, 4294967295
        %v3290 = vld [vmem:[%s3289] sm:$0xfe]
        %v3291 = vlaneseq
        %v3292 = vshrl.u32 %v3291, 7
        %vm3293 = vcmp.eq.s32.totalorder %v3292, 0
        %v3294 = vsel %vm3293, %v3285, %v3290
        %s3295 = scalar_lea.vmem %s3287, 7
        %v3296 = vld [vmem:[%s3295] ss:$0 sm:$0xff]
        %3297 = vst [vmem:[%s3287] sm:$0xff] %v3294
        %s3298 = scalar_lea.vmem %s3274, 16
        %s3300 = scalar_lea.vmem %s3298, 4294967295
        %v3301 = vld [vmem:[%s3300] sm:$0xfe]
        %v3302 = vlaneseq
        %v3303 = vshrl.u32 %v3302, 7
        %vm3304 = vcmp.eq.s32.totalorder %v3303, 0
        %v3305 = vsel %vm3304, %v3296, %v3301
        %s3306 = scalar_lea.vmem %s3298, 7
        %v3307 = vld [vmem:[%s3306] ss:$0 sm:$0xff]
        %3308 = vst [vmem:[%s3298] sm:$0xff] %v3305
        %s3309 = scalar_lea.vmem %s3274, 24
        %s3311 = scalar_lea.vmem %s3309, 4294967295
        %v3312 = vld [vmem:[%s3311] sm:$0xfe]
        %v3313 = vlaneseq
        %v3314 = vshrl.u32 %v3313, 7
        %vm3315 = vcmp.eq.s32.totalorder %v3314, 0
        %v3316 = vsel %vm3315, %v3307, %v3312
        %s3317 = scalar_lea.vmem %s3309, 7
        %v3318 = vld [vmem:[%s3317] ss:$0 sm:$0xff]
        %3319 = vst [vmem:[%s3309] sm:$0xff] %v3316
        %s3320 = scalar_lea.vmem %s3274, 32
        %s3322 = scalar_lea.vmem %s3320, 4294967295
        %v3323 = vld [vmem:[%s3322] sm:$0xfe]
        %v3324 = vlaneseq
        %v3325 = vshrl.u32 %v3324, 7
        %vm3326 = vcmp.eq.s32.totalorder %v3325, 0
        %v3327 = vsel %vm3326, %v3318, %v3323
        %s3328 = scalar_lea.vmem %s3320, 7
        %v3329 = vld [vmem:[%s3328] ss:$0 sm:$0xff]
        %3330 = vst [vmem:[%s3320] sm:$0xff] %v3327
        %s3331 = scalar_lea.vmem %s3274, 40
        %s3333 = scalar_lea.vmem %s3331, 4294967295
        %v3334 = vld [vmem:[%s3333] sm:$0xfe]
        %v3335 = vlaneseq
        %v3336 = vshrl.u32 %v3335, 7
        %vm3337 = vcmp.eq.s32.totalorder %v3336, 0
        %v3338 = vsel %vm3337, %v3329, %v3334
        %s3339 = scalar_lea.vmem %s3331, 7
        %v3340 = vld [vmem:[%s3339] ss:$0 sm:$0xff]
        %3341 = vst [vmem:[%s3331] sm:$0xff] %v3338
        %s3342 = scalar_lea.vmem %s3274, 48
        %s3344 = scalar_lea.vmem %s3342, 4294967295
        %v3345 = vld [vmem:[%s3344] sm:$0xfe]
        %v3346 = vlaneseq
        %v3347 = vshrl.u32 %v3346, 7
        %vm3348 = vcmp.eq.s32.totalorder %v3347, 0
        %v3349 = vsel %vm3348, %v3340, %v3345
        %s3350 = scalar_lea.vmem %s3342, 7
        %v3351 = vld [vmem:[%s3350] ss:$0 sm:$0xff]
        %3352 = vst [vmem:[%s3342] sm:$0xff] %v3349
        %s3353 = scalar_lea.vmem %s3274, 56
        %s3355 = scalar_lea.vmem %s3353, 4294967295
        %v3356 = vld [vmem:[%s3355] sm:$0xfe]
        %v3357 = vlaneseq
        %v3358 = vshrl.u32 %v3357, 7
        %vm3359 = vcmp.eq.s32.totalorder %v3358, 0
        %v3360 = vsel %vm3359, %v3351, %v3356
        %s3361 = scalar_lea.vmem %s3353, 7
        %v3362 = vld [vmem:[%s3361] ss:$0 sm:$0xff]
        %3363 = vst [vmem:[%s3353] sm:$0xff] %v3360
        %v3364 = vld [vmem:[%s3275] ss:$0 sm:$0xff]
        %s3365 = scalar_lea.vmem %s3274, 1
        %3366 = vst [vmem:[%s3365] sm:$0x1] %v3364
        %s3367 = scalar_lea.vmem %s3275, 56
        %s3368 = scalar_lea.vmem %s3367, 1
        %v3369 = vld [vmem:[%s3368] sm:$0x7f]
        %v3370 = vlaneseq
        %v3371 = vshrl.u32 %v3370, 7
        %vm3372 = vcmp.eq.s32.totalorder %v3371, 7
        %v3373 = vsel %vm3372, %v3362, %v3369
        %v3374 = vld [vmem:[%s3367] ss:$0 sm:$0xff]
        %3375 = vst [vmem:[%s3367] sm:$0xff] %v3373
        %s3376 = scalar_lea.vmem %s3275, 48
        %s3377 = scalar_lea.vmem %s3376, 1
        %v3378 = vld [vmem:[%s3377] sm:$0x7f]
        %v3379 = vlaneseq
        %v3380 = vshrl.u32 %v3379, 7
        %vm3381 = vcmp.eq.s32.totalorder %v3380, 7
        %v3382 = vsel %vm3381, %v3374, %v3378
        %v3383 = vld [vmem:[%s3376] ss:$0 sm:$0xff]
        %3384 = vst [vmem:[%s3376] sm:$0xff] %v3382
        %s3385 = scalar_lea.vmem %s3275, 40
        %s3386 = scalar_lea.vmem %s3385, 1
        %v3387 = vld [vmem:[%s3386] sm:$0x7f]
        %v3388 = vlaneseq
        %v3389 = vshrl.u32 %v3388, 7
        %vm3390 = vcmp.eq.s32.totalorder %v3389, 7
        %v3391 = vsel %vm3390, %v3383, %v3387
        %v3392 = vld [vmem:[%s3385] ss:$0 sm:$0xff]
        %3393 = vst [vmem:[%s3385] sm:$0xff] %v3391
        %s3394 = scalar_lea.vmem %s3275, 32
        %s3395 = scalar_lea.vmem %s3394, 1
        %v3396 = vld [vmem:[%s3395] sm:$0x7f]
        %v3397 = vlaneseq
        %v3398 = vshrl.u32 %v3397, 7
        %vm3399 = vcmp.eq.s32.totalorder %v3398, 7
        %v3400 = vsel %vm3399, %v3392, %v3396
        %v3401 = vld [vmem:[%s3394] ss:$0 sm:$0xff]
        %3402 = vst [vmem:[%s3394] sm:$0xff] %v3400
        %s3403 = scalar_lea.vmem %s3275, 24
        %s3404 = scalar_lea.vmem %s3403, 1
        %v3405 = vld [vmem:[%s3404] sm:$0x7f]
        %v3406 = vlaneseq
        %v3407 = vshrl.u32 %v3406, 7
        %vm3408 = vcmp.eq.s32.totalorder %v3407, 7
        %v3409 = vsel %vm3408, %v3401, %v3405
        %v3410 = vld [vmem:[%s3403] ss:$0 sm:$0xff]
        %3411 = vst [vmem:[%s3403] sm:$0xff] %v3409
        %s3412 = scalar_lea.vmem %s3275, 16
        %s3413 = scalar_lea.vmem %s3412, 1
        %v3414 = vld [vmem:[%s3413] sm:$0x7f]
        %v3415 = vlaneseq
        %v3416 = vshrl.u32 %v3415, 7
        %vm3417 = vcmp.eq.s32.totalorder %v3416, 7
        %v3418 = vsel %vm3417, %v3410, %v3414
        %v3419 = vld [vmem:[%s3412] ss:$0 sm:$0xff]
        %3420 = vst [vmem:[%s3412] sm:$0xff] %v3418
        %s3421 = scalar_lea.vmem %s3275, 8
        %s3422 = scalar_lea.vmem %s3421, 1
        %v3423 = vld [vmem:[%s3422] sm:$0x7f]
        %v3424 = vlaneseq
        %v3425 = vshrl.u32 %v3424, 7
        %vm3426 = vcmp.eq.s32.totalorder %v3425, 7
        %v3427 = vsel %vm3426, %v3419, %v3423
        %v3428 = vld [vmem:[%s3421] ss:$0 sm:$0xff]
        %3429 = vst [vmem:[%s3421] sm:$0xff] %v3427
        %s3430 = scalar_lea.vmem %s3275, 1
        %v3431 = vld [vmem:[%s3430] sm:$0x7f]
        %v3432 = vlaneseq
        %v3433 = vshrl.u32 %v3432, 7
        %vm3434 = vcmp.eq.s32.totalorder %v3433, 7
        %v3435 = vsel %vm3434, %v3428, %v3431
        %v3436 = vld [vmem:[%s3275] ss:$0 sm:$0xff]
        %3437 = vst [vmem:[%s3275] sm:$0xff] %v3435
        %s3438 = smov [#allocation9]
        %s3439 = smov [#allocation11]
        %v3440 = vld [vmem:[%s3438] ss:$0 sm:$0xff]
        %s3442 = scalar_lea.vmem %s3438, 4294967295
        %v3443 = vld [vmem:[%s3442] sm:$0xfe]
        %v3444 = vlaneseq
        %v3445 = vshrl.u32 %v3444, 7
        %vm3446 = vcmp.eq.s32.totalorder %v3445, 0
        %v3447 = vsel %vm3446, %v3440, %v3443
        %s3448 = scalar_lea.vmem %s3438, 7
        %v3449 = vld [vmem:[%s3448] ss:$0 sm:$0xff]
        %3450 = vst [vmem:[%s3438] sm:$0xff] %v3447
        %s3451 = scalar_lea.vmem %s3438, 8
        %s3453 = scalar_lea.vmem %s3451, 4294967295
        %v3454 = vld [vmem:[%s3453] sm:$0xfe]
        %v3455 = vlaneseq
        %v3456 = vshrl.u32 %v3455, 7
        %vm3457 = vcmp.eq.s32.totalorder %v3456, 0
        %v3458 = vsel %vm3457, %v3449, %v3454
        %s3459 = scalar_lea.vmem %s3451, 7
        %v3460 = vld [vmem:[%s3459] ss:$0 sm:$0xff]
        %3461 = vst [vmem:[%s3451] sm:$0xff] %v3458
        %s3462 = scalar_lea.vmem %s3438, 16
        %s3464 = scalar_lea.vmem %s3462, 4294967295
        %v3465 = vld [vmem:[%s3464] sm:$0xfe]
        %v3466 = vlaneseq
        %v3467 = vshrl.u32 %v3466, 7
        %vm3468 = vcmp.eq.s32.totalorder %v3467, 0
        %v3469 = vsel %vm3468, %v3460, %v3465
        %s3470 = scalar_lea.vmem %s3462, 7
        %v3471 = vld [vmem:[%s3470] ss:$0 sm:$0xff]
        %3472 = vst [vmem:[%s3462] sm:$0xff] %v3469
        %s3473 = scalar_lea.vmem %s3438, 24
        %s3475 = scalar_lea.vmem %s3473, 4294967295
        %v3476 = vld [vmem:[%s3475] sm:$0xfe]
        %v3477 = vlaneseq
        %v3478 = vshrl.u32 %v3477, 7
        %vm3479 = vcmp.eq.s32.totalorder %v3478, 0
        %v3480 = vsel %vm3479, %v3471, %v3476
        %s3481 = scalar_lea.vmem %s3473, 7
        %v3482 = vld [vmem:[%s3481] ss:$0 sm:$0xff]
        %3483 = vst [vmem:[%s3473] sm:$0xff] %v3480
        %s3484 = scalar_lea.vmem %s3438, 32
        %s3486 = scalar_lea.vmem %s3484, 4294967295
        %v3487 = vld [vmem:[%s3486] sm:$0xfe]
        %v3488 = vlaneseq
        %v3489 = vshrl.u32 %v3488, 7
        %vm3490 = vcmp.eq.s32.totalorder %v3489, 0
        %v3491 = vsel %vm3490, %v3482, %v3487
        %s3492 = scalar_lea.vmem %s3484, 7
        %v3493 = vld [vmem:[%s3492] ss:$0 sm:$0xff]
        %3494 = vst [vmem:[%s3484] sm:$0xff] %v3491
        %s3495 = scalar_lea.vmem %s3438, 40
        %s3497 = scalar_lea.vmem %s3495, 4294967295
        %v3498 = vld [vmem:[%s3497] sm:$0xfe]
        %v3499 = vlaneseq
        %v3500 = vshrl.u32 %v3499, 7
        %vm3501 = vcmp.eq.s32.totalorder %v3500, 0
        %v3502 = vsel %vm3501, %v3493, %v3498
        %s3503 = scalar_lea.vmem %s3495, 7
        %v3504 = vld [vmem:[%s3503] ss:$0 sm:$0xff]
        %3505 = vst [vmem:[%s3495] sm:$0xff] %v3502
        %s3506 = scalar_lea.vmem %s3438, 48
        %s3508 = scalar_lea.vmem %s3506, 4294967295
        %v3509 = vld [vmem:[%s3508] sm:$0xfe]
        %v3510 = vlaneseq
        %v3511 = vshrl.u32 %v3510, 7
        %vm3512 = vcmp.eq.s32.totalorder %v3511, 0
        %v3513 = vsel %vm3512, %v3504, %v3509
        %s3514 = scalar_lea.vmem %s3506, 7
        %v3515 = vld [vmem:[%s3514] ss:$0 sm:$0xff]
        %3516 = vst [vmem:[%s3506] sm:$0xff] %v3513
        %s3517 = scalar_lea.vmem %s3438, 56
        %s3519 = scalar_lea.vmem %s3517, 4294967295
        %v3520 = vld [vmem:[%s3519] sm:$0xfe]
        %v3521 = vlaneseq
        %v3522 = vshrl.u32 %v3521, 7
        %vm3523 = vcmp.eq.s32.totalorder %v3522, 0
        %v3524 = vsel %vm3523, %v3515, %v3520
        %s3525 = scalar_lea.vmem %s3517, 7
        %v3526 = vld [vmem:[%s3525] ss:$0 sm:$0xff]
        %3527 = vst [vmem:[%s3517] sm:$0xff] %v3524
        %v3528 = vld [vmem:[%s3439] ss:$0 sm:$0xff]
        %s3529 = scalar_lea.vmem %s3438, 1
        %3530 = vst [vmem:[%s3529] sm:$0x1] %v3528
        %s3531 = scalar_lea.vmem %s3439, 56
        %s3532 = scalar_lea.vmem %s3531, 1
        %v3533 = vld [vmem:[%s3532] sm:$0x7f]
        %v3534 = vlaneseq
        %v3535 = vshrl.u32 %v3534, 7
        %vm3536 = vcmp.eq.s32.totalorder %v3535, 7
        %v3537 = vsel %vm3536, %v3526, %v3533
        %v3538 = vld [vmem:[%s3531] ss:$0 sm:$0xff]
        %3539 = vst [vmem:[%s3531] sm:$0xff] %v3537
        %s3540 = scalar_lea.vmem %s3439, 48
        %s3541 = scalar_lea.vmem %s3540, 1
        %v3542 = vld [vmem:[%s3541] sm:$0x7f]
        %v3543 = vlaneseq
        %v3544 = vshrl.u32 %v3543, 7
        %vm3545 = vcmp.eq.s32.totalorder %v3544, 7
        %v3546 = vsel %vm3545, %v3538, %v3542
        %v3547 = vld [vmem:[%s3540] ss:$0 sm:$0xff]
        %3548 = vst [vmem:[%s3540] sm:$0xff] %v3546
        %s3549 = scalar_lea.vmem %s3439, 40
        %s3550 = scalar_lea.vmem %s3549, 1
        %v3551 = vld [vmem:[%s3550] sm:$0x7f]
        %v3552 = vlaneseq
        %v3553 = vshrl.u32 %v3552, 7
        %vm3554 = vcmp.eq.s32.totalorder %v3553, 7
        %v3555 = vsel %vm3554, %v3547, %v3551
        %v3556 = vld [vmem:[%s3549] ss:$0 sm:$0xff]
        %3557 = vst [vmem:[%s3549] sm:$0xff] %v3555
        %s3558 = scalar_lea.vmem %s3439, 32
        %s3559 = scalar_lea.vmem %s3558, 1
        %v3560 = vld [vmem:[%s3559] sm:$0x7f]
        %v3561 = vlaneseq
        %v3562 = vshrl.u32 %v3561, 7
        %vm3563 = vcmp.eq.s32.totalorder %v3562, 7
        %v3564 = vsel %vm3563, %v3556, %v3560
        %v3565 = vld [vmem:[%s3558] ss:$0 sm:$0xff]
        %3566 = vst [vmem:[%s3558] sm:$0xff] %v3564
        %s3567 = scalar_lea.vmem %s3439, 24
        %s3568 = scalar_lea.vmem %s3567, 1
        %v3569 = vld [vmem:[%s3568] sm:$0x7f]
        %v3570 = vlaneseq
        %v3571 = vshrl.u32 %v3570, 7
        %vm3572 = vcmp.eq.s32.totalorder %v3571, 7
        %v3573 = vsel %vm3572, %v3565, %v3569
        %v3574 = vld [vmem:[%s3567] ss:$0 sm:$0xff]
        %3575 = vst [vmem:[%s3567] sm:$0xff] %v3573
        %s3576 = scalar_lea.vmem %s3439, 16
        %s3577 = scalar_lea.vmem %s3576, 1
        %v3578 = vld [vmem:[%s3577] sm:$0x7f]
        %v3579 = vlaneseq
        %v3580 = vshrl.u32 %v3579, 7
        %vm3581 = vcmp.eq.s32.totalorder %v3580, 7
        %v3582 = vsel %vm3581, %v3574, %v3578
        %v3583 = vld [vmem:[%s3576] ss:$0 sm:$0xff]
        %3584 = vst [vmem:[%s3576] sm:$0xff] %v3582
        %s3585 = scalar_lea.vmem %s3439, 8
        %s3586 = scalar_lea.vmem %s3585, 1
        %v3587 = vld [vmem:[%s3586] sm:$0x7f]
        %v3588 = vlaneseq
        %v3589 = vshrl.u32 %v3588, 7
        %vm3590 = vcmp.eq.s32.totalorder %v3589, 7
        %v3591 = vsel %vm3590, %v3583, %v3587
        %v3592 = vld [vmem:[%s3585] ss:$0 sm:$0xff]
        %3593 = vst [vmem:[%s3585] sm:$0xff] %v3591
        %s3594 = scalar_lea.vmem %s3439, 1
        %v3595 = vld [vmem:[%s3594] sm:$0x7f]
        %v3596 = vlaneseq
        %v3597 = vshrl.u32 %v3596, 7
        %vm3598 = vcmp.eq.s32.totalorder %v3597, 7
        %v3599 = vsel %vm3598, %v3592, %v3595
        %v3600 = vld [vmem:[%s3439] ss:$0 sm:$0xff]
        %3601 = vst [vmem:[%s3439] sm:$0xff] %v3599
      $region101: #{custom-call.2} parent=93 // loop_footer
        %s894 = sadd.s32 1, %s890
      $region102: #{custom-call.2} parent=93 // loop_footer_branch
        %889 = sbr.rel target = $region98
      $region103: #{custom-call.2} parent=93 // loop_exit
        _
      %s3602 = sadd.s32 %s568, 1
    $region94: #{custom-call.2} parent=1 // loop_footer
      _
    $region95: #{custom-call.2} parent=1 // loop_footer_branch
      %567 = sbr.rel target = $region91
    $region96: #{custom-call.2} parent=1 // loop_exit
      _
    %s3605 = smov [#allocation12]
    %s3606 = smov [#allocation4]
    %v3607 = vlaneseq
    %v3608 = vand.u32 %v3607, 127
    %v3609 = vmov %v3608
    %v3610 = vlaneseq
    %v3611 = vshrl.u32 %v3610, 7
    %v3612 = vmov %v3611
    %v3613 = vld [vmem:[%s3605] sm:$0xff]
    %vm3616 = vcmp.eq.s32.totalorder %v3612, %v3609
    %v3617 = vsel %vm3616, %v3613, 0.0
    %s3618 = scalar_lea.vmem %s3605, 8
    %v3619 = vld [vmem:[%s3618] sm:$0xff]
    %v3621 = vadd.s32 %v3612, 8
    %vm3622 = vcmp.eq.s32.totalorder %v3621, %v3609
    %v3623 = vsel %vm3622, %v3619, %v3617
    %s3624 = scalar_lea.vmem %s3605, 16
    %v3625 = vld [vmem:[%s3624] sm:$0xff]
    %v3627 = vadd.s32 %v3612, 16
    %vm3628 = vcmp.eq.s32.totalorder %v3627, %v3609
    %v3629 = vsel %vm3628, %v3625, %v3623
    %s3630 = scalar_lea.vmem %s3605, 24
    %v3631 = vld [vmem:[%s3630] sm:$0xff]
    %v3633 = vadd.s32 %v3612, 24
    %vm3634 = vcmp.eq.s32.totalorder %v3633, %v3609
    %v3635 = vsel %vm3634, %v3631, %v3629
    %s3636 = scalar_lea.vmem %s3605, 32
    %v3637 = vld [vmem:[%s3636] sm:$0xff]
    %v3639 = vadd.s32 %v3612, 32
    %vm3640 = vcmp.eq.s32.totalorder %v3639, %v3609
    %v3641 = vsel %vm3640, %v3637, %v3635
    %s3642 = scalar_lea.vmem %s3605, 40
    %v3643 = vld [vmem:[%s3642] sm:$0xff]
    %v3645 = vadd.s32 %v3612, 40
    %vm3646 = vcmp.eq.s32.totalorder %v3645, %v3609
    %v3647 = vsel %vm3646, %v3643, %v3641
    %s3648 = scalar_lea.vmem %s3605, 48
    %v3649 = vld [vmem:[%s3648] sm:$0xff]
    %v3651 = vadd.s32 %v3612, 48
    %vm3652 = vcmp.eq.s32.totalorder %v3651, %v3609
    %v3653 = vsel %vm3652, %v3649, %v3647
    %s3654 = scalar_lea.vmem %s3605, 56
    %v3655 = vld [vmem:[%s3654] sm:$0xff]
    %v3657 = vadd.s32 %v3612, 56
    %vm3658 = vcmp.eq.s32.totalorder %v3657, %v3609
    %v3659 = vsel %vm3658, %v3655, %v3653
    %v3660 = vrot.slane %v3659, 4
    %v3661 = vadd.f32 %v3659, %v3660
    %v3662 = vrot.slane %v3661, 2
    %v3663 = vadd.f32 %v3661, %v3662
    %v3664 = vrot.slane %v3663, 1
    %v3665 = vadd.f32 %v3663, %v3664
    %3666 = vst [vmem:[%s3606] sm:$0x1] %v3665
    %s3667 = smov [#allocation15]
    %s3668 = smov [#allocation6]
    %v3669 = vlaneseq
    %v3670 = vand.u32 %v3669, 127
    %v3671 = vmov %v3670
    %v3672 = vlaneseq
    %v3673 = vshrl.u32 %v3672, 7
    %v3674 = vmov %v3673
    %v3675 = vld [vmem:[%s3667] sm:$0xff]
    %vm3678 = vcmp.eq.s32.totalorder %v3674, %v3671
    %v3679 = vsel %vm3678, %v3675, 0.0
    %s3680 = scalar_lea.vmem %s3667, 8
    %v3681 = vld [vmem:[%s3680] sm:$0xff]
    %v3683 = vadd.s32 %v3674, 8
    %vm3684 = vcmp.eq.s32.totalorder %v3683, %v3671
    %v3685 = vsel %vm3684, %v3681, %v3679
    %s3686 = scalar_lea.vmem %s3667, 16
    %v3687 = vld [vmem:[%s3686] sm:$0xff]
    %v3689 = vadd.s32 %v3674, 16
    %vm3690 = vcmp.eq.s32.totalorder %v3689, %v3671
    %v3691 = vsel %vm3690, %v3687, %v3685
    %s3692 = scalar_lea.vmem %s3667, 24
    %v3693 = vld [vmem:[%s3692] sm:$0xff]
    %v3695 = vadd.s32 %v3674, 24
    %vm3696 = vcmp.eq.s32.totalorder %v3695, %v3671
    %v3697 = vsel %vm3696, %v3693, %v3691
    %s3698 = scalar_lea.vmem %s3667, 32
    %v3699 = vld [vmem:[%s3698] sm:$0xff]
    %v3701 = vadd.s32 %v3674, 32
    %vm3702 = vcmp.eq.s32.totalorder %v3701, %v3671
    %v3703 = vsel %vm3702, %v3699, %v3697
    %s3704 = scalar_lea.vmem %s3667, 40
    %v3705 = vld [vmem:[%s3704] sm:$0xff]
    %v3707 = vadd.s32 %v3674, 40
    %vm3708 = vcmp.eq.s32.totalorder %v3707, %v3671
    %v3709 = vsel %vm3708, %v3705, %v3703
    %s3710 = scalar_lea.vmem %s3667, 48
    %v3711 = vld [vmem:[%s3710] sm:$0xff]
    %v3713 = vadd.s32 %v3674, 48
    %vm3714 = vcmp.eq.s32.totalorder %v3713, %v3671
    %v3715 = vsel %vm3714, %v3711, %v3709
    %s3716 = scalar_lea.vmem %s3667, 56
    %v3717 = vld [vmem:[%s3716] sm:$0xff]
    %v3719 = vadd.s32 %v3674, 56
    %vm3720 = vcmp.eq.s32.totalorder %v3719, %v3671
    %v3721 = vsel %vm3720, %v3717, %v3715
    %v3722 = vrot.slane %v3721, 4
    %v3723 = vadd.f32 %v3721, %v3722
    %v3724 = vrot.slane %v3723, 2
    %v3725 = vadd.f32 %v3723, %v3724
    %v3726 = vrot.slane %v3725, 1
    %v3727 = vadd.f32 %v3725, %v3726
    %3728 = vst [vmem:[%s3668] sm:$0x1] %v3727
    %s3730 = sshllo.u32 0, 1
    %v3732 = vld [vmem:[#allocation4] sm:%s3730]
    %s3733 = sshllo.u32 0, 1
    %3734 = vst [vmem:[#allocation5] sm:%s3733] %v3732
    %s3736 = sshllo.u32 0, 1
    %v3738 = vld [vmem:[#allocation6] sm:%s3736]
    %s3739 = sshllo.u32 0, 1
    %3740 = vst [vmem:[#allocation7] sm:%s3739] %v3738
    // Predicated region
    $region104: #{custom-call.2} parent=1 // pred_check
      _
    $region105: #{custom-call.2} parent=1 // pred_check_branch
      %3742 = sbr.rel (0) target = $region107
    $region106: #{custom-call.2} parent=1 // pred_region
      %p3744 = scmp.gt.s32.totalorder 1, 0
      // Predicated region
      $region108: #{custom-call.2} parent=106 // pred_check
        %p3745 = pneg %p3744
      $region109: #{custom-call.2} parent=106 // pred_check_branch
        %3747 = sbr.rel (%p3745) target = $region111
      $region110: #{custom-call.2} parent=106 // pred_region
        %s3748 = sshra.s32 1, 3
        %p3749 = scmp.gt.s32.totalorder %s3748, 0
        // Predicated region
        $region112: #{custom-call.2} parent=110 // pred_check
          %p3750 = pneg %p3749
        $region113: #{custom-call.2} parent=110 // pred_check_branch
          %3752 = sbr.rel (%p3750) target = $region115
        $region114: #{custom-call.2} parent=110 // pred_region
          %s3753 = ssub.s32 %s3748, 1
          %s3754 = smul.u32 %s3753, 128
          %s3755 = sshra.s32 %s3754, 4
          %s3756 = scalar_lea.vmem [#allocation5], %s3755
          %v3757 = vld [vmem:[#allocation5] sm:$0xff]
          // While loop
          $region116: #{custom-call.2} parent=114 // loop_pre_header
            _
          $region117: #{custom-call.2} parent=114 // loop_header
            %s3758 = sphi [#allocation5], %s3780
            %s3759 = sphi %s4, %s3781
            %v3760 = vphi %v3757, %v3782
            %s3761 = ssub.s32 %s3756, 64
            %p3762 = scmp.gt.s32.totalorder %s3758, %s3761
          $region118: #{custom-call.2} parent=114 // loop_header_branch
            %3764 = sbr.rel (%p3762) target = $region122
          $region119: #{custom-call.2} parent=114 // loop_body
            %3765 = vst [vmem:[%s3759] sm:$0xff] %v3760
            %v3766 = vld [vmem:[%s3758 + $0x8] sm:$0xff]
            %3767 = vst [vmem:[%s3759 + $0x8] sm:$0xff] %v3766
            %v3768 = vld [vmem:[%s3758 + $0x10] sm:$0xff]
            %3769 = vst [vmem:[%s3759 + $0x10] sm:$0xff] %v3768
            %v3770 = vld [vmem:[%s3758 + $0x18] sm:$0xff]
            %3771 = vst [vmem:[%s3759 + $0x18] sm:$0xff] %v3770
            %v3772 = vld [vmem:[%s3758 + $0x20] sm:$0xff]
            %3773 = vst [vmem:[%s3759 + $0x20] sm:$0xff] %v3772
            %v3774 = vld [vmem:[%s3758 + $0x28] sm:$0xff]
            %3775 = vst [vmem:[%s3759 + $0x28] sm:$0xff] %v3774
            %v3776 = vld [vmem:[%s3758 + $0x30] sm:$0xff]
            %3777 = vst [vmem:[%s3759 + $0x30] sm:$0xff] %v3776
            %v3778 = vld [vmem:[%s3758 + $0x38] sm:$0xff]
            %3779 = vst [vmem:[%s3759 + $0x38] sm:$0xff] %v3778
          $region120: #{custom-call.2} parent=114 // loop_footer
            %s3780 = scalar_lea.vmem %s3758, 64
            %s3781 = scalar_lea.vmem %s3759, 64
            %v3782 = vld [vmem:[%s3758 + $0x40] sm:$0xff]
          $region121: #{custom-call.2} parent=114 // loop_footer_branch
            %3783 = sbr.rel target = $region117
          $region122: #{custom-call.2} parent=114 // loop_exit
            _
          // While loop
          $region123: #{custom-call.2} parent=114 // loop_pre_header
            _
          $region124: #{custom-call.2} parent=114 // loop_header
            %s3784 = sphi %s3758, %s3792
            %s3785 = sphi %s3759, %s3793
            %v3786 = vphi %v3760, %v3786
            %p3787 = scmp.gt.s32.totalorder %s3784, %s3756
          $region125: #{custom-call.2} parent=114 // loop_header_branch
            %3789 = sbr.rel (%p3787) target = $region129
          $region126: #{custom-call.2} parent=114 // loop_body
            %v3790 = vld [vmem:[%s3784] sm:$0xff]
            %3791 = vst [vmem:[%s3785] sm:$0xff] %v3790
          $region127: #{custom-call.2} parent=114 // loop_footer
            %s3792 = scalar_lea.vmem %s3784, 8
            %s3793 = scalar_lea.vmem %s3785, 8
          $region128: #{custom-call.2} parent=114 // loop_footer_branch
            %3794 = sbr.rel target = $region124
          $region129: #{custom-call.2} parent=114 // loop_exit
            _
        $region115: #{custom-call.2} parent=110 // pred_fallthru
          _
        %s3795 = sand.u32 1, 7
        %s3796 = sshllo.u32 0, %s3795
        %s3797 = smul.u32 %s3748, 128
        %s3798 = sshra.s32 %s3797, 4
        %s3799 = scalar_lea.vmem %s4, %s3798
        %s3800 = smul.u32 %s3748, 128
        %s3801 = sshra.s32 %s3800, 4
        %s3802 = scalar_lea.vmem [#allocation5], %s3801
        %v3803 = vld [vmem:[%s3802] sm:%s3796]
        %3804 = vst [vmem:[%s3799] sm:%s3796] %v3803
      $region111: #{custom-call.2} parent=106 // pred_fallthru
        _
    $region107: #{custom-call.2} parent=1 // pred_fallthru
      _
    // Predicated region
    $region130: #{custom-call.2} parent=1 // pred_check
      _
    $region131: #{custom-call.2} parent=1 // pred_check_branch
      %3806 = sbr.rel (0) target = $region133
    $region132: #{custom-call.2} parent=1 // pred_region
      %p3808 = scmp.gt.s32.totalorder 1, 0
      // Predicated region
      $region134: #{custom-call.2} parent=132 // pred_check
        %p3809 = pneg %p3808
      $region135: #{custom-call.2} parent=132 // pred_check_branch
        %3811 = sbr.rel (%p3809) target = $region137
      $region136: #{custom-call.2} parent=132 // pred_region
        %s3812 = sshra.s32 1, 3
        %p3813 = scmp.gt.s32.totalorder %s3812, 0
        // Predicated region
        $region138: #{custom-call.2} parent=136 // pred_check
          %p3814 = pneg %p3813
        $region139: #{custom-call.2} parent=136 // pred_check_branch
          %3816 = sbr.rel (%p3814) target = $region141
        $region140: #{custom-call.2} parent=136 // pred_region
          %s3817 = ssub.s32 %s3812, 1
          %s3818 = smul.u32 %s3817, 128
          %s3819 = sshra.s32 %s3818, 4
          %s3820 = scalar_lea.vmem [#allocation7], %s3819
          %v3821 = vld [vmem:[#allocation7] sm:$0xff]
          // While loop
          $region142: #{custom-call.2} parent=140 // loop_pre_header
            _
          $region143: #{custom-call.2} parent=140 // loop_header
            %s3822 = sphi [#allocation7], %s3844
            %s3823 = sphi %s5, %s3845
            %v3824 = vphi %v3821, %v3846
            %s3825 = ssub.s32 %s3820, 64
            %p3826 = scmp.gt.s32.totalorder %s3822, %s3825
          $region144: #{custom-call.2} parent=140 // loop_header_branch
            %3828 = sbr.rel (%p3826) target = $region148
          $region145: #{custom-call.2} parent=140 // loop_body
            %3829 = vst [vmem:[%s3823] sm:$0xff] %v3824
            %v3830 = vld [vmem:[%s3822 + $0x8] sm:$0xff]
            %3831 = vst [vmem:[%s3823 + $0x8] sm:$0xff] %v3830
            %v3832 = vld [vmem:[%s3822 + $0x10] sm:$0xff]
            %3833 = vst [vmem:[%s3823 + $0x10] sm:$0xff] %v3832
            %v3834 = vld [vmem:[%s3822 + $0x18] sm:$0xff]
            %3835 = vst [vmem:[%s3823 + $0x18] sm:$0xff] %v3834
            %v3836 = vld [vmem:[%s3822 + $0x20] sm:$0xff]
            %3837 = vst [vmem:[%s3823 + $0x20] sm:$0xff] %v3836
            %v3838 = vld [vmem:[%s3822 + $0x28] sm:$0xff]
            %3839 = vst [vmem:[%s3823 + $0x28] sm:$0xff] %v3838
            %v3840 = vld [vmem:[%s3822 + $0x30] sm:$0xff]
            %3841 = vst [vmem:[%s3823 + $0x30] sm:$0xff] %v3840
            %v3842 = vld [vmem:[%s3822 + $0x38] sm:$0xff]
            %3843 = vst [vmem:[%s3823 + $0x38] sm:$0xff] %v3842
          $region146: #{custom-call.2} parent=140 // loop_footer
            %s3844 = scalar_lea.vmem %s3822, 64
            %s3845 = scalar_lea.vmem %s3823, 64
            %v3846 = vld [vmem:[%s3822 + $0x40] sm:$0xff]
          $region147: #{custom-call.2} parent=140 // loop_footer_branch
            %3847 = sbr.rel target = $region143
          $region148: #{custom-call.2} parent=140 // loop_exit
            _
          // While loop
          $region149: #{custom-call.2} parent=140 // loop_pre_header
            _
          $region150: #{custom-call.2} parent=140 // loop_header
            %s3848 = sphi %s3822, %s3856
            %s3849 = sphi %s3823, %s3857
            %v3850 = vphi %v3824, %v3850
            %p3851 = scmp.gt.s32.totalorder %s3848, %s3820
          $region151: #{custom-call.2} parent=140 // loop_header_branch
            %3853 = sbr.rel (%p3851) target = $region155
          $region152: #{custom-call.2} parent=140 // loop_body
            %v3854 = vld [vmem:[%s3848] sm:$0xff]
            %3855 = vst [vmem:[%s3849] sm:$0xff] %v3854
          $region153: #{custom-call.2} parent=140 // loop_footer
            %s3856 = scalar_lea.vmem %s3848, 8
            %s3857 = scalar_lea.vmem %s3849, 8
          $region154: #{custom-call.2} parent=140 // loop_footer_branch
            %3858 = sbr.rel target = $region150
          $region155: #{custom-call.2} parent=140 // loop_exit
            _
        $region141: #{custom-call.2} parent=136 // pred_fallthru
          _
        %s3859 = sand.u32 1, 7
        %s3860 = sshllo.u32 0, %s3859
        %s3861 = smul.u32 %s3812, 128
        %s3862 = sshra.s32 %s3861, 4
        %s3863 = scalar_lea.vmem %s5, %s3862
        %s3864 = smul.u32 %s3812, 128
        %s3865 = sshra.s32 %s3864, 4
        %s3866 = scalar_lea.vmem [#allocation7], %s3865
        %v3867 = vld [vmem:[%s3866] sm:%s3860]
        %3868 = vst [vmem:[%s3863] sm:%s3860] %v3867
      $region137: #{custom-call.2} parent=132 // pred_fallthru
        _
    $region133: #{custom-call.2} parent=1 // pred_fallthru
      _
    %p3870 = scmp.gt.s32.totalorder 64, 0
    // Predicated region
    $region156: #{custom-call.2} parent=1 // pred_check
      %p3871 = pneg %p3870
    $region157: #{custom-call.2} parent=1 // pred_check_branch
      %3873 = sbr.rel (%p3871) target = $region159
    $region158: #{custom-call.2} parent=1 // pred_region
      %s3874 = sshra.s32 64, 3
      %p3875 = scmp.gt.s32.totalorder %s3874, 0
      // Predicated region
      $region160: #{custom-call.2} parent=158 // pred_check
        %p3876 = pneg %p3875
      $region161: #{custom-call.2} parent=158 // pred_check_branch
        %3878 = sbr.rel (%p3876) target = $region163
      $region162: #{custom-call.2} parent=158 // pred_region
        %s3879 = ssub.s32 %s3874, 1
        %s3880 = smul.u32 %s3879, 128
        %s3881 = sshra.s32 %s3880, 4
        %s3882 = scalar_lea.vmem [#allocation8], %s3881
        %v3883 = vld [vmem:[#allocation8] sm:$0xff]
        // While loop
        $region164: #{custom-call.2} parent=162 // loop_pre_header
          _
        $region165: #{custom-call.2} parent=162 // loop_header
          %s3884 = sphi [#allocation8], %s3906
          %s3885 = sphi %s6, %s3907
          %v3886 = vphi %v3883, %v3908
          %s3887 = ssub.s32 %s3882, 64
          %p3888 = scmp.gt.s32.totalorder %s3884, %s3887
        $region166: #{custom-call.2} parent=162 // loop_header_branch
          %3890 = sbr.rel (%p3888) target = $region170
        $region167: #{custom-call.2} parent=162 // loop_body
          %3891 = vst [vmem:[%s3885] sm:$0xff] %v3886
          %v3892 = vld [vmem:[%s3884 + $0x8] sm:$0xff]
          %3893 = vst [vmem:[%s3885 + $0x8] sm:$0xff] %v3892
          %v3894 = vld [vmem:[%s3884 + $0x10] sm:$0xff]
          %3895 = vst [vmem:[%s3885 + $0x10] sm:$0xff] %v3894
          %v3896 = vld [vmem:[%s3884 + $0x18] sm:$0xff]
          %3897 = vst [vmem:[%s3885 + $0x18] sm:$0xff] %v3896
          %v3898 = vld [vmem:[%s3884 + $0x20] sm:$0xff]
          %3899 = vst [vmem:[%s3885 + $0x20] sm:$0xff] %v3898
          %v3900 = vld [vmem:[%s3884 + $0x28] sm:$0xff]
          %3901 = vst [vmem:[%s3885 + $0x28] sm:$0xff] %v3900
          %v3902 = vld [vmem:[%s3884 + $0x30] sm:$0xff]
          %3903 = vst [vmem:[%s3885 + $0x30] sm:$0xff] %v3902
          %v3904 = vld [vmem:[%s3884 + $0x38] sm:$0xff]
          %3905 = vst [vmem:[%s3885 + $0x38] sm:$0xff] %v3904
        $region168: #{custom-call.2} parent=162 // loop_footer
          %s3906 = scalar_lea.vmem %s3884, 64
          %s3907 = scalar_lea.vmem %s3885, 64
          %v3908 = vld [vmem:[%s3884 + $0x40] sm:$0xff]
        $region169: #{custom-call.2} parent=162 // loop_footer_branch
          %3909 = sbr.rel target = $region165
        $region170: #{custom-call.2} parent=162 // loop_exit
          _
        // While loop
        $region171: #{custom-call.2} parent=162 // loop_pre_header
          _
        $region172: #{custom-call.2} parent=162 // loop_header
          %s3910 = sphi %s3884, %s3918
          %s3911 = sphi %s3885, %s3919
          %v3912 = vphi %v3886, %v3912
          %p3913 = scmp.gt.s32.totalorder %s3910, %s3882
        $region173: #{custom-call.2} parent=162 // loop_header_branch
          %3915 = sbr.rel (%p3913) target = $region177
        $region174: #{custom-call.2} parent=162 // loop_body
          %v3916 = vld [vmem:[%s3910] sm:$0xff]
          %3917 = vst [vmem:[%s3911] sm:$0xff] %v3916
        $region175: #{custom-call.2} parent=162 // loop_footer
          %s3918 = scalar_lea.vmem %s3910, 8
          %s3919 = scalar_lea.vmem %s3911, 8
        $region176: #{custom-call.2} parent=162 // loop_footer_branch
          %3920 = sbr.rel target = $region172
        $region177: #{custom-call.2} parent=162 // loop_exit
          _
      $region163: #{custom-call.2} parent=158 // pred_fallthru
        _
      %s3921 = sand.u32 64, 7
      %s3922 = sshllo.u32 0, %s3921
      %s3923 = smul.u32 %s3874, 128
      %s3924 = sshra.s32 %s3923, 4
      %s3925 = scalar_lea.vmem %s6, %s3924
      %s3926 = smul.u32 %s3874, 128
      %s3927 = sshra.s32 %s3926, 4
      %s3928 = scalar_lea.vmem [#allocation8], %s3927
      %v3929 = vld [vmem:[%s3928] sm:%s3922]
      %3930 = vst [vmem:[%s3925] sm:%s3922] %v3929
    $region159: #{custom-call.2} parent=1 // pred_fallthru
      _
    %p3932 = scmp.gt.s32.totalorder 64, 0
    // Predicated region
    $region178: #{custom-call.2} parent=1 // pred_check
      %p3933 = pneg %p3932
    $region179: #{custom-call.2} parent=1 // pred_check_branch
      %3935 = sbr.rel (%p3933) target = $region181
    $region180: #{custom-call.2} parent=1 // pred_region
      %s3936 = sshra.s32 64, 3
      %p3937 = scmp.gt.s32.totalorder %s3936, 0
      // Predicated region
      $region182: #{custom-call.2} parent=180 // pred_check
        %p3938 = pneg %p3937
      $region183: #{custom-call.2} parent=180 // pred_check_branch
        %3940 = sbr.rel (%p3938) target = $region185
      $region184: #{custom-call.2} parent=180 // pred_region
        %s3941 = ssub.s32 %s3936, 1
        %s3942 = smul.u32 %s3941, 128
        %s3943 = sshra.s32 %s3942, 4
        %s3944 = scalar_lea.vmem [#allocation9], %s3943
        %v3945 = vld [vmem:[#allocation9] sm:$0xff]
        // While loop
        $region186: #{custom-call.2} parent=184 // loop_pre_header
          _
        $region187: #{custom-call.2} parent=184 // loop_header
          %s3946 = sphi [#allocation9], %s3968
          %s3947 = sphi %s7, %s3969
          %v3948 = vphi %v3945, %v3970
          %s3949 = ssub.s32 %s3944, 64
          %p3950 = scmp.gt.s32.totalorder %s3946, %s3949
        $region188: #{custom-call.2} parent=184 // loop_header_branch
          %3952 = sbr.rel (%p3950) target = $region192
        $region189: #{custom-call.2} parent=184 // loop_body
          %3953 = vst [vmem:[%s3947] sm:$0xff] %v3948
          %v3954 = vld [vmem:[%s3946 + $0x8] sm:$0xff]
          %3955 = vst [vmem:[%s3947 + $0x8] sm:$0xff] %v3954
          %v3956 = vld [vmem:[%s3946 + $0x10] sm:$0xff]
          %3957 = vst [vmem:[%s3947 + $0x10] sm:$0xff] %v3956
          %v3958 = vld [vmem:[%s3946 + $0x18] sm:$0xff]
          %3959 = vst [vmem:[%s3947 + $0x18] sm:$0xff] %v3958
          %v3960 = vld [vmem:[%s3946 + $0x20] sm:$0xff]
          %3961 = vst [vmem:[%s3947 + $0x20] sm:$0xff] %v3960
          %v3962 = vld [vmem:[%s3946 + $0x28] sm:$0xff]
          %3963 = vst [vmem:[%s3947 + $0x28] sm:$0xff] %v3962
          %v3964 = vld [vmem:[%s3946 + $0x30] sm:$0xff]
          %3965 = vst [vmem:[%s3947 + $0x30] sm:$0xff] %v3964
          %v3966 = vld [vmem:[%s3946 + $0x38] sm:$0xff]
          %3967 = vst [vmem:[%s3947 + $0x38] sm:$0xff] %v3966
        $region190: #{custom-call.2} parent=184 // loop_footer
          %s3968 = scalar_lea.vmem %s3946, 64
          %s3969 = scalar_lea.vmem %s3947, 64
          %v3970 = vld [vmem:[%s3946 + $0x40] sm:$0xff]
        $region191: #{custom-call.2} parent=184 // loop_footer_branch
          %3971 = sbr.rel target = $region187
        $region192: #{custom-call.2} parent=184 // loop_exit
          _
        // While loop
        $region193: #{custom-call.2} parent=184 // loop_pre_header
          _
        $region194: #{custom-call.2} parent=184 // loop_header
          %s3972 = sphi %s3946, %s3980
          %s3973 = sphi %s3947, %s3981
          %v3974 = vphi %v3948, %v3974
          %p3975 = scmp.gt.s32.totalorder %s3972, %s3944
        $region195: #{custom-call.2} parent=184 // loop_header_branch
          %3977 = sbr.rel (%p3975) target = $region199
        $region196: #{custom-call.2} parent=184 // loop_body
          %v3978 = vld [vmem:[%s3972] sm:$0xff]
          %3979 = vst [vmem:[%s3973] sm:$0xff] %v3978
        $region197: #{custom-call.2} parent=184 // loop_footer
          %s3980 = scalar_lea.vmem %s3972, 8
          %s3981 = scalar_lea.vmem %s3973, 8
        $region198: #{custom-call.2} parent=184 // loop_footer_branch
          %3982 = sbr.rel target = $region194
        $region199: #{custom-call.2} parent=184 // loop_exit
          _
      $region185: #{custom-call.2} parent=180 // pred_fallthru
        _
      %s3983 = sand.u32 64, 7
      %s3984 = sshllo.u32 0, %s3983
      %s3985 = smul.u32 %s3936, 128
      %s3986 = sshra.s32 %s3985, 4
      %s3987 = scalar_lea.vmem %s7, %s3986
      %s3988 = smul.u32 %s3936, 128
      %s3989 = sshra.s32 %s3988, 4
      %s3990 = scalar_lea.vmem [#allocation9], %s3989
      %v3991 = vld [vmem:[%s3990] sm:%s3984]
      %3992 = vst [vmem:[%s3987] sm:%s3984] %v3991
    $region181: #{custom-call.2} parent=1 // pred_fallthru
      _
    %p3994 = scmp.gt.s32.totalorder 64, 0
    // Predicated region
    $region200: #{custom-call.2} parent=1 // pred_check
      %p3995 = pneg %p3994
    $region201: #{custom-call.2} parent=1 // pred_check_branch
      %3997 = sbr.rel (%p3995) target = $region203
    $region202: #{custom-call.2} parent=1 // pred_region
      %s3998 = sshra.s32 64, 3
      %p3999 = scmp.gt.s32.totalorder %s3998, 0
      // Predicated region
      $region204: #{custom-call.2} parent=202 // pred_check
        %p4000 = pneg %p3999
      $region205: #{custom-call.2} parent=202 // pred_check_branch
        %4002 = sbr.rel (%p4000) target = $region207
      $region206: #{custom-call.2} parent=202 // pred_region
        %s4003 = ssub.s32 %s3998, 1
        %s4004 = smul.u32 %s4003, 128
        %s4005 = sshra.s32 %s4004, 4
        %s4006 = scalar_lea.vmem [#allocation10], %s4005
        %v4007 = vld [vmem:[#allocation10] sm:$0xff]
        // While loop
        $region208: #{custom-call.2} parent=206 // loop_pre_header
          _
        $region209: #{custom-call.2} parent=206 // loop_header
          %s4008 = sphi [#allocation10], %s4030
          %s4009 = sphi %s8, %s4031
          %v4010 = vphi %v4007, %v4032
          %s4011 = ssub.s32 %s4006, 64
          %p4012 = scmp.gt.s32.totalorder %s4008, %s4011
        $region210: #{custom-call.2} parent=206 // loop_header_branch
          %4014 = sbr.rel (%p4012) target = $region214
        $region211: #{custom-call.2} parent=206 // loop_body
          %4015 = vst [vmem:[%s4009] sm:$0xff] %v4010
          %v4016 = vld [vmem:[%s4008 + $0x8] sm:$0xff]
          %4017 = vst [vmem:[%s4009 + $0x8] sm:$0xff] %v4016
          %v4018 = vld [vmem:[%s4008 + $0x10] sm:$0xff]
          %4019 = vst [vmem:[%s4009 + $0x10] sm:$0xff] %v4018
          %v4020 = vld [vmem:[%s4008 + $0x18] sm:$0xff]
          %4021 = vst [vmem:[%s4009 + $0x18] sm:$0xff] %v4020
          %v4022 = vld [vmem:[%s4008 + $0x20] sm:$0xff]
          %4023 = vst [vmem:[%s4009 + $0x20] sm:$0xff] %v4022
          %v4024 = vld [vmem:[%s4008 + $0x28] sm:$0xff]
          %4025 = vst [vmem:[%s4009 + $0x28] sm:$0xff] %v4024
          %v4026 = vld [vmem:[%s4008 + $0x30] sm:$0xff]
          %4027 = vst [vmem:[%s4009 + $0x30] sm:$0xff] %v4026
          %v4028 = vld [vmem:[%s4008 + $0x38] sm:$0xff]
          %4029 = vst [vmem:[%s4009 + $0x38] sm:$0xff] %v4028
        $region212: #{custom-call.2} parent=206 // loop_footer
          %s4030 = scalar_lea.vmem %s4008, 64
          %s4031 = scalar_lea.vmem %s4009, 64
          %v4032 = vld [vmem:[%s4008 + $0x40] sm:$0xff]
        $region213: #{custom-call.2} parent=206 // loop_footer_branch
          %4033 = sbr.rel target = $region209
        $region214: #{custom-call.2} parent=206 // loop_exit
          _
        // While loop
        $region215: #{custom-call.2} parent=206 // loop_pre_header
          _
        $region216: #{custom-call.2} parent=206 // loop_header
          %s4034 = sphi %s4008, %s4042
          %s4035 = sphi %s4009, %s4043
          %v4036 = vphi %v4010, %v4036
          %p4037 = scmp.gt.s32.totalorder %s4034, %s4006
        $region217: #{custom-call.2} parent=206 // loop_header_branch
          %4039 = sbr.rel (%p4037) target = $region221
        $region218: #{custom-call.2} parent=206 // loop_body
          %v4040 = vld [vmem:[%s4034] sm:$0xff]
          %4041 = vst [vmem:[%s4035] sm:$0xff] %v4040
        $region219: #{custom-call.2} parent=206 // loop_footer
          %s4042 = scalar_lea.vmem %s4034, 8
          %s4043 = scalar_lea.vmem %s4035, 8
        $region220: #{custom-call.2} parent=206 // loop_footer_branch
          %4044 = sbr.rel target = $region216
        $region221: #{custom-call.2} parent=206 // loop_exit
          _
      $region207: #{custom-call.2} parent=202 // pred_fallthru
        _
      %s4045 = sand.u32 64, 7
      %s4046 = sshllo.u32 0, %s4045
      %s4047 = smul.u32 %s3998, 128
      %s4048 = sshra.s32 %s4047, 4
      %s4049 = scalar_lea.vmem %s8, %s4048
      %s4050 = smul.u32 %s3998, 128
      %s4051 = sshra.s32 %s4050, 4
      %s4052 = scalar_lea.vmem [#allocation10], %s4051
      %v4053 = vld [vmem:[%s4052] sm:%s4046]
      %4054 = vst [vmem:[%s4049] sm:%s4046] %v4053
    $region203: #{custom-call.2} parent=1 // pred_fallthru
      _
    %p4056 = scmp.gt.s32.totalorder 64, 0
    // Predicated region
    $region222: #{custom-call.2} parent=1 // pred_check
      %p4057 = pneg %p4056
    $region223: #{custom-call.2} parent=1 // pred_check_branch
      %4059 = sbr.rel (%p4057) target = $region225
    $region224: #{custom-call.2} parent=1 // pred_region
      %s4060 = sshra.s32 64, 3
      %p4061 = scmp.gt.s32.totalorder %s4060, 0
      // Predicated region
      $region226: #{custom-call.2} parent=224 // pred_check
        %p4062 = pneg %p4061
      $region227: #{custom-call.2} parent=224 // pred_check_branch
        %4064 = sbr.rel (%p4062) target = $region229
      $region228: #{custom-call.2} parent=224 // pred_region
        %s4065 = ssub.s32 %s4060, 1
        %s4066 = smul.u32 %s4065, 128
        %s4067 = sshra.s32 %s4066, 4
        %s4068 = scalar_lea.vmem [#allocation11], %s4067
        %v4069 = vld [vmem:[#allocation11] sm:$0xff]
        // While loop
        $region230: #{custom-call.2} parent=228 // loop_pre_header
          _
        $region231: #{custom-call.2} parent=228 // loop_header
          %s4070 = sphi [#allocation11], %s4092
          %s4071 = sphi %s9, %s4093
          %v4072 = vphi %v4069, %v4094
          %s4073 = ssub.s32 %s4068, 64
          %p4074 = scmp.gt.s32.totalorder %s4070, %s4073
        $region232: #{custom-call.2} parent=228 // loop_header_branch
          %4076 = sbr.rel (%p4074) target = $region236
        $region233: #{custom-call.2} parent=228 // loop_body
          %4077 = vst [vmem:[%s4071] sm:$0xff] %v4072
          %v4078 = vld [vmem:[%s4070 + $0x8] sm:$0xff]
          %4079 = vst [vmem:[%s4071 + $0x8] sm:$0xff] %v4078
          %v4080 = vld [vmem:[%s4070 + $0x10] sm:$0xff]
          %4081 = vst [vmem:[%s4071 + $0x10] sm:$0xff] %v4080
          %v4082 = vld [vmem:[%s4070 + $0x18] sm:$0xff]
          %4083 = vst [vmem:[%s4071 + $0x18] sm:$0xff] %v4082
          %v4084 = vld [vmem:[%s4070 + $0x20] sm:$0xff]
          %4085 = vst [vmem:[%s4071 + $0x20] sm:$0xff] %v4084
          %v4086 = vld [vmem:[%s4070 + $0x28] sm:$0xff]
          %4087 = vst [vmem:[%s4071 + $0x28] sm:$0xff] %v4086
          %v4088 = vld [vmem:[%s4070 + $0x30] sm:$0xff]
          %4089 = vst [vmem:[%s4071 + $0x30] sm:$0xff] %v4088
          %v4090 = vld [vmem:[%s4070 + $0x38] sm:$0xff]
          %4091 = vst [vmem:[%s4071 + $0x38] sm:$0xff] %v4090
        $region234: #{custom-call.2} parent=228 // loop_footer
          %s4092 = scalar_lea.vmem %s4070, 64
          %s4093 = scalar_lea.vmem %s4071, 64
          %v4094 = vld [vmem:[%s4070 + $0x40] sm:$0xff]
        $region235: #{custom-call.2} parent=228 // loop_footer_branch
          %4095 = sbr.rel target = $region231
        $region236: #{custom-call.2} parent=228 // loop_exit
          _
        // While loop
        $region237: #{custom-call.2} parent=228 // loop_pre_header
          _
        $region238: #{custom-call.2} parent=228 // loop_header
          %s4096 = sphi %s4070, %s4104
          %s4097 = sphi %s4071, %s4105
          %v4098 = vphi %v4072, %v4098
          %p4099 = scmp.gt.s32.totalorder %s4096, %s4068
        $region239: #{custom-call.2} parent=228 // loop_header_branch
          %4101 = sbr.rel (%p4099) target = $region243
        $region240: #{custom-call.2} parent=228 // loop_body
          %v4102 = vld [vmem:[%s4096] sm:$0xff]
          %4103 = vst [vmem:[%s4097] sm:$0xff] %v4102
        $region241: #{custom-call.2} parent=228 // loop_footer
          %s4104 = scalar_lea.vmem %s4096, 8
          %s4105 = scalar_lea.vmem %s4097, 8
        $region242: #{custom-call.2} parent=228 // loop_footer_branch
          %4106 = sbr.rel target = $region238
        $region243: #{custom-call.2} parent=228 // loop_exit
          _
      $region229: #{custom-call.2} parent=224 // pred_fallthru
        _
      %s4107 = sand.u32 64, 7
      %s4108 = sshllo.u32 0, %s4107
      %s4109 = smul.u32 %s4060, 128
      %s4110 = sshra.s32 %s4109, 4
      %s4111 = scalar_lea.vmem %s9, %s4110
      %s4112 = smul.u32 %s4060, 128
      %s4113 = sshra.s32 %s4112, 4
      %s4114 = scalar_lea.vmem [#allocation11], %s4113
      %v4115 = vld [vmem:[%s4114] sm:%s4108]
      %4116 = vst [vmem:[%s4111] sm:%s4108] %v4115
    $region225: #{custom-call.2} parent=1 // pred_fallthru
      _
    // Predicated region
    $region244: #{custom-call.2} parent=1 // pred_check
      _
    $region245: #{custom-call.2} parent=1 // pred_check_branch
      %4118 = sbr.rel (0) target = $region247
    $region246: #{custom-call.2} parent=1 // pred_region
      _
    $region247: #{custom-call.2} parent=1 // pred_fallthru
      _
    // Predicated region
    $region248: #{custom-call.2} parent=1 // pred_check
      _
    $region249: #{custom-call.2} parent=1 // pred_check_branch
      %4120 = sbr.rel (0) target = $region251
    $region250: #{custom-call.2} parent=1 // pred_region
      _
    $region251: #{custom-call.2} parent=1 // pred_fallthru
      _

// kernel: _lambda_.6
$region0: #{_lambda_.6}
  #allocation0 [shape = 'u32[]', space=smem, size = 0x4, offset = 0x4, fixed_abs, tag = 'smem constant byte address 0x4 - core index']
  #allocation1 [shape = 'u32[144,128]{1,0:T(1,128)}', space=vmem, size = 0x12000, scoped, tag = 'internal scratch']
  #allocation2 [shape = 'f32[32,128]{1,0:T(8,128)}', space=vmem, size = 0x4000, scoped, tag = 'scratch operand']
  %s0 = inlined_call_operand.hbm [shape: bf16[64,768], index: 0, kind: input, shape index: {}]
  %s1 = inlined_call_operand.hbm [shape: bf16[768,128], index: 1, kind: input, shape index: {}]
  %s2 = inlined_call_operand.hbm [shape: f32[1,128], index: 2, kind: input, shape index: {}]
  %s3 = inlined_call_operand.hbm [shape: bf16[64,128], index: 3, kind: output, shape index: {0}]
  %s4 = inlined_call_operand.hbm [shape: f32[2,1,128], index: 4, kind: output, shape index: {1}]
  %5 = xla_tuple %s3, %s4
  %s6 = sld [smem:[#allocation0]]
  $region73: #{_lambda_.6} parent=0
    _
  %s8 = ssub.s32 1, %s6
  %s9 = scalar_select 0, %s8, %s6
  $region1: #{_lambda_.6} parent=0
    #allocation3 [shape = 'u8[32768]{0}', space=vmem, size = 0x8000, scoped, tag = 'input window, operand 0']
    #allocation4 [shape = 's32[2]{0}', space=sflag, size = 0x8, scoped, tag = 'scoped memory for _lambda_.6']
    #allocation5 [shape = 's32[2]{0}', space=sflag, size = 0x8, scoped, tag = 'scoped memory for _lambda_.6']
    #allocation6 [shape = 'u8[131072]{0}', space=vmem, size = 0x20000, scoped, tag = 'input window, operand 1']
    #allocation7 [shape = 's32[2]{0}', space=sflag, size = 0x8, scoped, tag = 'scoped memory for _lambda_.6']
    #allocation8 [shape = 'u8[512]{0}', space=vmem, size = 0x400, scoped, tag = 'input window, operand 2, single buffered']
    #allocation9 [shape = 'u8[16384]{0}', space=vmem, size = 0x4000, scoped, tag = 'output window, operand 0']
    #allocation10 [shape = 'u8[1024]{0}', space=vmem, size = 0x400, scoped, tag = 'output window, operand 1']
    #allocation11 [shape = 's32[2]{0}', space=sflag, size = 0x8, scoped, tag = 'scoped memory for _lambda_.6']
    %10 = vsyncpa [#allocation4], 0
    %s11 = scalar_lea.sflag [#allocation4], 1
    %12 = vsyncpa %s11, 0
    %13 = vsyncpa [#allocation7], 0
    %s14 = scalar_lea.sflag [#allocation7], 1
    %15 = vsyncpa %s14, 0
    %16 = vsyncpa [#allocation5], 0
    %s17 = scalar_lea.sflag [#allocation5], 1
    %18 = vsyncpa %s17, 0
    %19 = vsyncpa [#allocation11], 0
    %s20 = scalar_lea.sflag [#allocation11], 1
    %21 = vsyncpa %s20, 0
    loop: start=0, step=1, limit=8
    $region2: #{_lambda_.6} parent=1 // loop_pre_header
      _
    $region3: #{_lambda_.6} parent=1 // loop_header
      %s23 = sphi 0, %s27
      %p24 = scmp.ge.s32.totalorder %s23, 8
      %s30 = sphi 0, %s42
      %s31 = sphi 0, %s38
      %s32 = sphi 0, %s30
      %s33 = sphi 0, %s31
      %s34 = sphi 0, %s32
      %s35 = sphi 0, %s33
      %s47 = sphi 0, %s49
      %s50 = sphi 0, %s47
      %s51 = sphi 0, %s50
      %s67 = sphi 0, %s51
      %s73 = sphi 0, %s75
      %s76 = sphi 0, %s73
      %s77 = sphi 0, %s76
      %s93 = sphi 0, %s77
      %s97 = sphi 0, %s97
      %s99 = sphi 0, %s97
      %s100 = sphi 0, %s99
      %s114 = sphi 0, %s100
      %s120 = sphi 0, %s122
      %s123 = sphi 0, %s120
      %s124 = sphi 0, %s123
      %s140 = sphi 0, %s124
      %s146 = sphi 0, %s148
      %s149 = sphi 0, %s146
      %s150 = sphi 0, %s149
      %s166 = sphi 0, %s150
    $region4: #{_lambda_.6} parent=1 // loop_header_branch
      %26 = sbr.rel (%p24) target = $region8
    $region5: #{_lambda_.6} parent=1 // loop_body
      %s28 = ssub.s32 %s23, 1
      %s29 = ssub.s32 %s23, 2
      %s36 = sadd.s32 1, %s31
      %p37 = scmp.ge.s32.totalorder %s36, 3
      %s38 = scalar_select %p37, 0, %s36
      %s39 = sadd.s32 1, %s30
      %s40 = scalar_select %p37, %s39, %s30
      %p41 = scmp.ge.s32.totalorder %s40, 2
      %s42 = scalar_select %p41, 0, %s40
      %s43 = ssub.s32 %s30, %s42
      %s44 = ssub.s32 %s31, %s38
      %s45 = sor.u32 %s43, %s44
      %p46 = scmp.eq.s32.totalorder %s45, 0
      %s48 = sadd.s32 %s47, 1
      %s49 = scalar_select %p46, %s47, %s48
      %p52 = pneg %p46
      %p53 = scmp.eq.s32.totalorder %s23, 5
      %p54 = por %p52, %p53
      %p55 = scmp.ne.s32.totalorder %s47, %s50
      %p56 = scmp.eq.s32.totalorder %s23, 0
      %p57 = por %p55, %p56
      %p58 = scmp.ne.s32.totalorder %s47, %s50
      %p59 = scmp.eq.s32.totalorder %s28, 5
      %p60 = por %p58, %p59
      %p61 = scmp.ne.s32.totalorder %s50, %s51
      %p62 = scmp.eq.s32.totalorder %s28, 0
      %p63 = por %p61, %p62
      %p64 = scmp.ne.s32.totalorder %s50, %s51
      %p65 = scmp.eq.s32.totalorder %s29, 5
      %p66 = por %p64, %p65
      %p68 = scmp.ne.s32.totalorder %s51, %s67
      %p69 = scmp.eq.s32.totalorder %s29, 0
      %p70 = por %p68, %p69
      %s71 = ssub.s32 %s31, %s38
      %p72 = scmp.eq.s32.totalorder %s71, 0
      %s74 = sadd.s32 %s73, 1
      %s75 = scalar_select %p72, %s73, %s74
      %p78 = pneg %p72
      %p79 = scmp.eq.s32.totalorder %s23, 5
      %p80 = por %p78, %p79
      %p81 = scmp.ne.s32.totalorder %s73, %s76
      %p82 = scmp.eq.s32.totalorder %s23, 0
      %p83 = por %p81, %p82
      %p84 = scmp.ne.s32.totalorder %s73, %s76
      %p85 = scmp.eq.s32.totalorder %s28, 5
      %p86 = por %p84, %p85
      %p87 = scmp.ne.s32.totalorder %s76, %s77
      %p88 = scmp.eq.s32.totalorder %s28, 0
      %p89 = por %p87, %p88
      %p90 = scmp.ne.s32.totalorder %s76, %s77
      %p91 = scmp.eq.s32.totalorder %s29, 5
      %p92 = por %p90, %p91
      %p94 = scmp.ne.s32.totalorder %s77, %s93
      %p95 = scmp.eq.s32.totalorder %s29, 0
      %p96 = por %p94, %p95
      %s98 = sadd.s32 %s97, 1
      %p101 = scmp.eq.s32.totalorder %s23, 5
      %p102 = scmp.ne.s32.totalorder %s97, %s99
      %p103 = scmp.eq.s32.totalorder %s23, 0
      %p104 = por %p102, %p103
      %p105 = scmp.ne.s32.totalorder %s97, %s99
      %p106 = scmp.eq.s32.totalorder %s28, 5
      %p107 = por %p105, %p106
      %p108 = scmp.ne.s32.totalorder %s99, %s100
      %p109 = scmp.eq.s32.totalorder %s28, 0
      %p110 = por %p108, %p109
      %p111 = scmp.ne.s32.totalorder %s99, %s100
      %p112 = scmp.eq.s32.totalorder %s29, 5
      %p113 = por %p111, %p112
      %p115 = scmp.ne.s32.totalorder %s100, %s114
      %p116 = scmp.eq.s32.totalorder %s29, 0
      %p117 = por %p115, %p116
      %s118 = ssub.s32 %s30, %s42
      %p119 = scmp.eq.s32.totalorder %s118, 0
      %s121 = sadd.s32 %s120, 1
      %s122 = scalar_select %p119, %s120, %s121
      %p125 = pneg %p119
      %p126 = scmp.eq.s32.totalorder %s23, 5
      %p127 = por %p125, %p126
      %p128 = scmp.ne.s32.totalorder %s120, %s123
      %p129 = scmp.eq.s32.totalorder %s23, 0
      %p130 = por %p128, %p129
      %p131 = scmp.ne.s32.totalorder %s120, %s123
      %p132 = scmp.eq.s32.totalorder %s28, 5
      %p133 = por %p131, %p132
      %p134 = scmp.ne.s32.totalorder %s123, %s124
      %p135 = scmp.eq.s32.totalorder %s28, 0
      %p136 = por %p134, %p135
      %p137 = scmp.ne.s32.totalorder %s123, %s124
      %p138 = scmp.eq.s32.totalorder %s29, 5
      %p139 = por %p137, %p138
      %p141 = scmp.ne.s32.totalorder %s124, %s140
      %p142 = scmp.eq.s32.totalorder %s29, 0
      %p143 = por %p141, %p142
      %s144 = ssub.s32 %s30, %s42
      %p145 = scmp.eq.s32.totalorder %s144, 0
      %s147 = sadd.s32 %s146, 1
      %s148 = scalar_select %p145, %s146, %s147
      %p151 = pneg %p145
      %p152 = scmp.eq.s32.totalorder %s23, 5
      %p153 = por %p151, %p152
      %p154 = scmp.ne.s32.totalorder %s146, %s149
      %p155 = scmp.eq.s32.totalorder %s23, 0
      %p156 = por %p154, %p155
      %p157 = scmp.ne.s32.totalorder %s146, %s149
      %p158 = scmp.eq.s32.totalorder %s28, 5
      %p159 = por %p157, %p158
      %p160 = scmp.ne.s32.totalorder %s149, %s150
      %p161 = scmp.eq.s32.totalorder %s28, 0
      %p162 = por %p160, %p161
      %p163 = scmp.ne.s32.totalorder %s149, %s150
      %p164 = scmp.eq.s32.totalorder %s29, 5
      %p165 = por %p163, %p164
      %p167 = scmp.ne.s32.totalorder %s150, %s166
      %p168 = scmp.eq.s32.totalorder %s29, 0
      %p169 = por %p167, %p168
      %p170 = scmp.le.s32.totalorder 1, %s23
      %p171 = scmp.lt.s32.totalorder %s23, 7
      %p172 = pnand %p170, %p171
      %p173 = pneg %p172
      // Predicated region
      $region9: #{_lambda_.6} parent=5 // pred_check
        _
      $region10: #{_lambda_.6} parent=5 // pred_check_branch
        %175 = sbr.rel (%p172) target = $region12
      $region11: #{_lambda_.6} parent=5 // pred_region
        %s176 = ssub.s32 %s23, 1
        // Predicated region
        $region13: #{_lambda_.6} parent=11 // pred_check
          %p177 = pneg %p110
        $region14: #{_lambda_.6} parent=11 // pred_check_branch
          %179 = sbr.rel (%p177) target = $region16
        $region15: #{_lambda_.6} parent=11 // pred_region
          %s181 = ssub.s32 16, 16
          %182 = vsyncadd [#allocation7], %s181
          %s184 = sshll.u32 [#allocation8], 4
          %s185 = int_to_ptr.vmem [resolvable:$true] %s184
          %187 = dma.hbm_to_vmem [thread:$0]  %s2, 16, %s185, [#allocation7]
        $region16: #{_lambda_.6} parent=11 // pred_fallthru
          _
      $region12: #{_lambda_.6} parent=5 // pred_fallthru
        _
      %p188 = scmp.lt.s32.totalorder %s23, 6
      // Predicated region
      $region17: #{_lambda_.6} parent=5 // pred_check
        %p189 = pneg %p188
      $region18: #{_lambda_.6} parent=5 // pred_check_branch
        %191 = sbr.rel (%p189) target = $region20
      $region19: #{_lambda_.6} parent=5 // pred_region
        // Predicated region
        $region21: #{_lambda_.6} parent=19 // pred_check
          %p192 = pneg %p57
        $region22: #{_lambda_.6} parent=19 // pred_check_branch
          %194 = sbr.rel (%p192) target = $region24
        $region23: #{_lambda_.6} parent=19 // pred_region
          %s195 = sand.u32 %s47, 1
          %s196 = scalar_lea.sflag [#allocation4], %s195
          %s197 = sand.u32 %s47, 1
          %s198 = smul.addr %s197, 32
          %s199 = scalar_lea.vmem [#allocation3], %s198
          %s200 = smul.u32 4, %s30
          %s201 = smul.u32 2, %s31
          %s203 = ssub.s32 512, 512
          %204 = vsyncadd %s196, %s203
          %s205 = smul.addr %s200, 6
          %s206 = sadd.s32 %s201, %s205
          %s207 = smul.addr %s206, 64
          %s208 = scalar_lea.hbm %s0, %s207
          %s209 = sshll.u32 %s199, 4
          %s210 = int_to_ptr.vmem [resolvable:$true] %s209
          %215 = dma.hbm_to_vmem [thread:$0]  %s208, 512, %s210, %s196, 384, 128, 8
        $region24: #{_lambda_.6} parent=19 // pred_fallthru
          _
        // Predicated region
        $region25: #{_lambda_.6} parent=19 // pred_check
          %p216 = pneg %p83
        $region26: #{_lambda_.6} parent=19 // pred_check_branch
          %218 = sbr.rel (%p216) target = $region28
        $region27: #{_lambda_.6} parent=19 // pred_region
          %s219 = sand.u32 %s23, 1
          %s220 = scalar_lea.sflag [#allocation7], %s219
          %s221 = sand.u32 %s73, 1
          %s222 = smul.addr %s221, 128
          %s223 = scalar_lea.vmem [#allocation6], %s222
          %s224 = smul.u32 32, %s31
          %s226 = ssub.s32 2048, 2048
          %227 = vsyncadd %s220, %s226
          %s228 = smul.addr %s224, 64
          %s229 = scalar_lea.hbm %s1, %s228
          %s230 = sshll.u32 %s223, 4
          %s231 = int_to_ptr.vmem [resolvable:$true] %s230
          %236 = dma.hbm_to_vmem [thread:$0]  %s229, 2048, %s231, %s220, 64, 64, 4
        $region28: #{_lambda_.6} parent=19 // pred_fallthru
          _
      $region20: #{_lambda_.6} parent=5 // pred_fallthru
        _
      %p237 = scmp.le.s32.totalorder 1, %s23
      %p238 = scmp.lt.s32.totalorder %s23, 7
      %p239 = pnand %p237, %p238
      %p240 = pneg %p239
      // Predicated region
      $region29: #{_lambda_.6} parent=5 // pred_check
        _
      $region30: #{_lambda_.6} parent=5 // pred_check_branch
        %242 = sbr.rel (%p239) target = $region32
      $region31: #{_lambda_.6} parent=5 // pred_region
        %s243 = ssub.s32 %s23, 1
        %s244 = sand.u32 %s50, 1
        %s245 = scalar_lea.sflag [#allocation4], %s244
        %s246 = sand.u32 %s50, 1
        %s247 = smul.addr %s246, 32
        %s248 = scalar_lea.vmem [#allocation3], %s247
        // Predicated region
        $region33: #{_lambda_.6} parent=31 // pred_check
          %p249 = pneg %p63
        $region34: #{_lambda_.6} parent=31 // pred_check_branch
          %251 = sbr.rel (%p249) target = $region36
        $region35: #{_lambda_.6} parent=31 // pred_region
          %252 = dma.done %s245, 512
        $region36: #{_lambda_.6} parent=31 // pred_fallthru
          _
        %s253 = sand.u32 %s28, 1
        %s254 = scalar_lea.sflag [#allocation7], %s253
        %s255 = sand.u32 %s76, 1
        %s256 = smul.addr %s255, 128
        %s257 = scalar_lea.vmem [#allocation6], %s256
        // Predicated region
        $region37: #{_lambda_.6} parent=31 // pred_check
          %p258 = pneg %p89
        $region38: #{_lambda_.6} parent=31 // pred_check_branch
          %260 = sbr.rel (%p258) target = $region40
        $region39: #{_lambda_.6} parent=31 // pred_region
          %261 = dma.done %s254, 2048
        $region40: #{_lambda_.6} parent=31 // pred_fallthru
          _
        // Predicated region
        $region41: #{_lambda_.6} parent=31 // pred_check
          %p262 = pneg %p110
        $region42: #{_lambda_.6} parent=31 // pred_check_branch
          %264 = sbr.rel (%p262) target = $region44
        $region43: #{_lambda_.6} parent=31 // pred_region
          %265 = dma.done [#allocation7], 16
        $region44: #{_lambda_.6} parent=31 // pred_fallthru
          _
        %s266 = sand.u32 %s50, 1
        %s267 = scalar_lea.sflag [#allocation4], %s266
        %s268 = sand.u32 %s50, 1
        %s269 = smul.addr %s268, 32
        %s270 = scalar_lea.vmem [#allocation3], %s269
        %p271 = pneg %p63
        %p272 = pneg %p60
        %s273 = sand.u32 %s28, 1
        %s274 = scalar_lea.sflag [#allocation7], %s273
        %s275 = sand.u32 %s76, 1
        %s276 = smul.addr %s275, 128
        %s277 = scalar_lea.vmem [#allocation6], %s276
        %p278 = pneg %p89
        %p279 = pneg %p86
        %p280 = pneg %p110
        %p281 = pneg %p107
        %p282 = pneg %p136
        %p283 = pneg %p133
        %s284 = sand.u32 %s123, 1
        %s285 = scalar_lea.sflag [#allocation5], %s284
        %s286 = sand.u32 %s123, 1
        %s287 = smul.addr %s286, 16
        %s288 = scalar_lea.vmem [#allocation9], %s287
        %p289 = pneg %p162
        %p290 = pneg %p159
        %s291 = sand.u32 %s149, 1
        %s292 = scalar_lea.sflag [#allocation11], %s291
        %s293 = sand.u32 %s149, 1
        %s294 = scalar_lea.vmem [#allocation10], %s293
        %s295 = smul.u32 4, %s32
        %s296 = smul.u32 2, %s33
        %s297 = smul.u32 32, %s33
        %s298 = smul.u32 4, %s32
        %p300 = scmp.eq.s32.totalorder %s33, 0
        // Predicated region
        $region45: #{_lambda_.6} parent=31 // pred_check
          %p301 = pneg %p300
        $region46: #{_lambda_.6} parent=31 // pred_check_branch
          %303 = sbr.rel (%p301) target = $region48
        $region47: #{_lambda_.6} parent=31 // pred_region
          %v304 = vld [vmem:[#allocation8] sm:$0x1]
          %v306 = vlaneseq
          %v307 = vshrl.u32 %v306, 7
          %v308 = vsub.s32 0, %v307
          %v309 = vrot.slane %v304, %v308
          %311 = vst [vmem:[#allocation2] sm:$0xff] %v309
          %312 = vst [vmem:[#allocation2 + $0x8] sm:$0xff] %v309
          %313 = vst [vmem:[#allocation2 + $0x10] sm:$0xff] %v309
          %314 = vst [vmem:[#allocation2 + $0x18] sm:$0xff] %v309
        $region48: #{_lambda_.6} parent=31 // pred_fallthru
          _
        %v315 = vld [vmem:[#allocation2] sm:$0xff]
        %v316 = vld [vmem:[#allocation2 + $0x8] sm:$0xff]
        %v317 = vld [vmem:[#allocation2 + $0x10] sm:$0xff]
        %v318 = vld [vmem:[#allocation2 + $0x18] sm:$0xff]
        %v319 = vld [vmem:[%s248] sm:$0xff]
        %v320 = vld [vmem:[%s248 + $0x8] sm:$0xff]
        %v321 = vld [vmem:[%s248 + $0x10] sm:$0xff]
        %v322 = vld [vmem:[%s248 + $0x18] sm:$0xff]
        %v323 = vld [vmem:[%s257] sm:$0xf]
        %v324 = vld [vmem:[%s257 + $0x4] sm:$0xf]
        %v325 = vld [vmem:[%s257 + $0x8] sm:$0xf]
        %v326 = vld [vmem:[%s257 + $0xc] sm:$0xf]
        %v327 = vld [vmem:[%s257 + $0x10] sm:$0xf]
        %v328 = vld [vmem:[%s257 + $0x14] sm:$0xf]
        %v329 = vld [vmem:[%s257 + $0x18] sm:$0xf]
        %v330 = vld [vmem:[%s257 + $0x1c] sm:$0xf]
        %v331 = vld [vmem:[%s257 + $0x20] sm:$0xf]
        %v332 = vld [vmem:[%s257 + $0x24] sm:$0xf]
        %v333 = vld [vmem:[%s257 + $0x28] sm:$0xf]
        %v334 = vld [vmem:[%s257 + $0x2c] sm:$0xf]
        %v335 = vld [vmem:[%s257 + $0x30] sm:$0xf]
        %v336 = vld [vmem:[%s257 + $0x34] sm:$0xf]
        %v337 = vld [vmem:[%s257 + $0x38] sm:$0xf]
        %v338 = vld [vmem:[%s257 + $0x3c] sm:$0xf]
        %v339 = vld [vmem:[%s257 + $0x40] sm:$0xf]
        %v340 = vld [vmem:[%s257 + $0x44] sm:$0xf]
        %v341 = vld [vmem:[%s257 + $0x48] sm:$0xf]
        %v342 = vld [vmem:[%s257 + $0x4c] sm:$0xf]
        %v343 = vld [vmem:[%s257 + $0x50] sm:$0xf]
        %v344 = vld [vmem:[%s257 + $0x54] sm:$0xf]
        %v345 = vld [vmem:[%s257 + $0x58] sm:$0xf]
        %v346 = vld [vmem:[%s257 + $0x5c] sm:$0xf]
        %v347 = vld [vmem:[%s257 + $0x60] sm:$0xf]
        %v348 = vld [vmem:[%s257 + $0x64] sm:$0xf]
        %v349 = vld [vmem:[%s257 + $0x68] sm:$0xf]
        %v350 = vld [vmem:[%s257 + $0x6c] sm:$0xf]
        %v351 = vld [vmem:[%s257 + $0x70] sm:$0xf]
        %v352 = vld [vmem:[%s257 + $0x74] sm:$0xf]
        %v353 = vld [vmem:[%s257 + $0x78] sm:$0xf]
        %v354 = vld [vmem:[%s257 + $0x7c] sm:$0xf]
        %v359 = vunpack.c.l.b16 %v319
        %v360 = vunpack.c.h.b16 %v319
        %v361 = vunpack.c.l.b16 %v320
        %v362 = vunpack.c.h.b16 %v320
        %v363 = vunpack.c.l.b16 %v321
        %v364 = vunpack.c.h.b16 %v321
        %v365 = vunpack.c.l.b16 %v322
        %v366 = vunpack.c.h.b16 %v322
        %v367 = vpack.c.b16 %v361, %v359
        %v368 = vpack.c.b16 %v362, %v360
        %v369 = vpack.c.b16 %v365, %v363
        %v370 = vpack.c.b16 %v366, %v364
        %v407 = vunpack.c.l.b16 %v323
        %v408 = vunpack.c.l.b16 %v324
        %v409 = vunpack.c.l.b16 %v325
        %v410 = vunpack.c.l.b16 %v326
        %v411 = vunpack.c.l.b16 %v327
        %v412 = vunpack.c.l.b16 %v328
        %v413 = vunpack.c.l.b16 %v329
        %v414 = vunpack.c.l.b16 %v330
        %v415 = vunpack.c.l.b16 %v331
        %v416 = vunpack.c.l.b16 %v332
        %v417 = vunpack.c.l.b16 %v333
        %v418 = vunpack.c.l.b16 %v334
        %v419 = vunpack.c.l.b16 %v335
        %v420 = vunpack.c.l.b16 %v336
        %v421 = vunpack.c.l.b16 %v337
        %v422 = vunpack.c.l.b16 %v338
        %v423 = vunpack.c.l.b16 %v339
        %v424 = vunpack.c.l.b16 %v340
        %v425 = vunpack.c.l.b16 %v341
        %v426 = vunpack.c.l.b16 %v342
        %v427 = vunpack.c.l.b16 %v343
        %v428 = vunpack.c.l.b16 %v344
        %v429 = vunpack.c.l.b16 %v345
        %v430 = vunpack.c.l.b16 %v346
        %v431 = vunpack.c.l.b16 %v347
        %v432 = vunpack.c.l.b16 %v348
        %v433 = vunpack.c.l.b16 %v349
        %v434 = vunpack.c.l.b16 %v350
        %v435 = vunpack.c.l.b16 %v351
        %v436 = vunpack.c.l.b16 %v352
        %v437 = vunpack.c.l.b16 %v353
        %v438 = vunpack.c.l.b16 %v354
        %v439 = vpack.c.b16 %v408, %v407
        %v440 = vpack.c.b16 %v410, %v409
        %v441 = vpack.c.b16 %v412, %v411
        %v442 = vpack.c.b16 %v414, %v413
        %v443 = vpack.c.b16 %v416, %v415
        %v444 = vpack.c.b16 %v418, %v417
        %v445 = vpack.c.b16 %v420, %v419
        %v446 = vpack.c.b16 %v422, %v421
        %v447 = vpack.c.b16 %v424, %v423
        %v448 = vpack.c.b16 %v426, %v425
        %v449 = vpack.c.b16 %v428, %v427
        %v450 = vpack.c.b16 %v430, %v429
        %v451 = vpack.c.b16 %v432, %v431
        %v452 = vpack.c.b16 %v434, %v433
        %v453 = vpack.c.b16 %v436, %v435
        %v454 = vpack.c.b16 %v438, %v437
        %471 = vmatprep.subr.bf16.mxu0 0
        %472 = vmatpush1.bf16.msra.mxu0 %v439
        %473 = vmatprep.subr.bf16.mxu0 0
        %474 = vmatpush1.bf16.msra.mxu0 %v440
        %475 = vmatprep.subr.bf16.mxu0 0
        %476 = vmatpush1.bf16.msra.mxu0 %v441
        %477 = vmatprep.subr.bf16.mxu0 0
        %478 = vmatpush1.bf16.msra.mxu0 %v442
        %479 = vmatprep.subr.bf16.mxu0 0
        %480 = vmatpush1.bf16.msra.mxu0 %v443
        %481 = vmatprep.subr.bf16.mxu0 0
        %482 = vmatpush1.bf16.msra.mxu0 %v444
        %483 = vmatprep.subr.bf16.mxu0 0
        %484 = vmatpush1.bf16.msra.mxu0 %v445
        %485 = vmatprep.subr.bf16.mxu0 0
        %486 = vmatpush1.bf16.msra.mxu0 %v446
        %487 = vmatprep.subr.bf16.mxu0 0
        %488 = vmatpush1.bf16.msra.mxu0 %v447
        %489 = vmatprep.subr.bf16.mxu0 0
        %490 = vmatpush1.bf16.msra.mxu0 %v448
        %491 = vmatprep.subr.bf16.mxu0 0
        %492 = vmatpush1.bf16.msra.mxu0 %v449
        %493 = vmatprep.subr.bf16.mxu0 0
        %494 = vmatpush1.bf16.msra.mxu0 %v450
        %495 = vmatprep.subr.bf16.mxu0 0
        %496 = vmatpush1.bf16.msra.mxu0 %v451
        %497 = vmatprep.subr.bf16.mxu0 0
        %498 = vmatpush1.bf16.msra.mxu0 %v452
        %499 = vmatprep.subr.bf16.mxu0 0
        %500 = vmatpush1.bf16.msra.mxu0 %v453
        %501 = vmatprep.subr.bf16.mxu0 0
        %502 = vmatpush1.bf16.msra.mxu0 %v454
        %503 = vmatprep.mubr.bf16.mxu0 %v368
        %504 = vmatmul.mubr.bf16.gmra.mrb[0].mxu0 %v367
        %v505 = vpop.f32.mrb[0].mxu0
        %v506 = vadd.f32 0.0, %v505
        %v507 = vpop.f32.mrb[0].mxu0
        %v508 = vpop.f32.mrb[0].mxu0
        %v509 = vadd.f32 0.0, %v508
        %v510 = vpop.f32.mrb[0].mxu0
        %511 = vmatprep.mubr.bf16.mxu0 %v370
        %512 = vmatmul.mubr.bf16.gmra.mrb[0].mxu0 %v369
        %v513 = vpop.f32.mrb[0].mxu0
        %v514 = vadd.f32 0.0, %v513
        %v515 = vpop.f32.mrb[0].mxu0
        %v516 = vpop.f32.mrb[0].mxu0
        %v517 = vadd.f32 0.0, %v516
        %v518 = vpop.f32.mrb[0].mxu0
        %519 = vdwg.mxu0
        %v520 = vadd.f32 %v315, %v506
        %v521 = vadd.f32 %v316, %v509
        %v522 = vadd.f32 %v317, %v514
        %v523 = vadd.f32 %v318, %v517
        %524 = vst [vmem:[#allocation2] sm:$0xff] %v520
        %525 = vst [vmem:[#allocation2 + $0x8] sm:$0xff] %v521
        %526 = vst [vmem:[#allocation2 + $0x10] sm:$0xff] %v522
        %527 = vst [vmem:[#allocation2 + $0x18] sm:$0xff] %v523
        %p528 = scmp.eq.s32.totalorder %s33, 2
        // Predicated region
        $region49: #{_lambda_.6} parent=31 // pred_check
          %p529 = pneg %p528
        $region50: #{_lambda_.6} parent=31 // pred_check_branch
          %531 = sbr.rel (%p529) target = $region52
        $region51: #{_lambda_.6} parent=31 // pred_region
          %v532 = vld [vmem:[#allocation2] sm:$0xff]
          %v533 = vld [vmem:[#allocation2 + $0x8] sm:$0xff]
          %v534 = vld [vmem:[#allocation2 + $0x10] sm:$0xff]
          %v535 = vld [vmem:[#allocation2 + $0x18] sm:$0xff]
          %v536 = vpack.c.bf16 %v533, %v532
          %v537 = vpack.c.bf16 %v535, %v534
          %v540 = vunpack.c.l.b16 %v536
          %v541 = vunpack.c.h.b16 %v536
          %v542 = vunpack.c.l.b16 %v537
          %v543 = vunpack.c.h.b16 %v537
          %v544 = vpack.c.b16 %v540, %v540
          %v545 = vpack.c.b16 %v541, %v541
          %v546 = vpack.c.b16 %v542, %v542
          %v547 = vpack.c.b16 %v543, %v543
          %552 = vst [vmem:[%s288] sm:$0xf] %v544
          %553 = vst [vmem:[%s288 + $0x4] sm:$0xf] %v545
          %554 = vst [vmem:[%s288 + $0x8] sm:$0xf] %v546
          %555 = vst [vmem:[%s288 + $0xc] sm:$0xf] %v547
          %v556 = vadd.f32 %v532, %v533
          %v557 = vadd.f32 %v556, %v534
          %v558 = vadd.f32 %v557, %v535
          %v559 = vrot.slane %v558, 4
          %v560 = vadd.f32 %v558, %v559
          %v561 = vrot.slane %v560, 2
          %v562 = vadd.f32 %v560, %v561
          %v563 = vrot.slane %v562, 1
          %v564 = vadd.f32 %v562, %v563
          %565 = vst [vmem:[%s294] sm:$0x1] %v564
        $region52: #{_lambda_.6} parent=31 // pred_fallthru
          _
        %s566 = sand.u32 %s123, 1
        %s567 = scalar_lea.sflag [#allocation5], %s566
        %s568 = sand.u32 %s123, 1
        %s569 = smul.addr %s568, 16
        %s570 = scalar_lea.vmem [#allocation9], %s569
        %s571 = sand.u32 %s149, 1
        %s572 = scalar_lea.sflag [#allocation11], %s571
        %s573 = sand.u32 %s149, 1
        %s574 = scalar_lea.vmem [#allocation10], %s573
        // Predicated region
        $region53: #{_lambda_.6} parent=31 // pred_check
          %p575 = pneg %p133
        $region54: #{_lambda_.6} parent=31 // pred_check_branch
          %577 = sbr.rel (%p575) target = $region56
        $region55: #{_lambda_.6} parent=31 // pred_region
          %s578 = smul.u32 4, %s32
          %s580 = ssub.s32 256, 256
          %581 = vsyncadd %s567, %s580
          %s582 = smul.addr %s578, 64
          %s583 = scalar_lea.hbm %s3, %s582
          %s584 = sshll.u32 %s570, 4
          %s585 = int_to_ptr.vmem [resolvable:$true] %s584
          %590 = dma.vmem_to_hbm [thread:$0]  %s585, 256, %s583, %s567, 64, 64, 4
        $region56: #{_lambda_.6} parent=31 // pred_fallthru
          _
        // Predicated region
        $region57: #{_lambda_.6} parent=31 // pred_check
          %p591 = pneg %p159
        $region58: #{_lambda_.6} parent=31 // pred_check_branch
          %593 = sbr.rel (%p591) target = $region60
        $region59: #{_lambda_.6} parent=31 // pred_region
          %s595 = ssub.s32 16, 16
          %596 = vsyncadd %s572, %s595
          %s597 = smul.addr %s32, 16
          %s598 = scalar_lea.hbm %s4, %s597
          %s600 = sshll.u32 %s574, 4
          %s601 = int_to_ptr.vmem [resolvable:$true] %s600
          %603 = dma.vmem_to_hbm [thread:$0]  %s601, 16, %s598, %s572
        $region60: #{_lambda_.6} parent=31 // pred_fallthru
          _
      $region32: #{_lambda_.6} parent=5 // pred_fallthru
        _
      %p604 = scmp.le.s32.totalorder 2, %s23
      // Predicated region
      $region61: #{_lambda_.6} parent=5 // pred_check
        %p605 = pneg %p604
      $region62: #{_lambda_.6} parent=5 // pred_check_branch
        %607 = sbr.rel (%p605) target = $region64
      $region63: #{_lambda_.6} parent=5 // pred_region
        %s608 = ssub.s32 %s23, 2
        // Predicated region
        $region65: #{_lambda_.6} parent=63 // pred_check
          %p609 = pneg %p139
        $region66: #{_lambda_.6} parent=63 // pred_check_branch
          %611 = sbr.rel (%p609) target = $region68
        $region67: #{_lambda_.6} parent=63 // pred_region
          %s612 = sand.u32 %s124, 1
          %s613 = scalar_lea.sflag [#allocation5], %s612
          %s614 = sand.u32 %s124, 1
          %s615 = smul.addr %s614, 16
          %s616 = scalar_lea.vmem [#allocation9], %s615
          %617 = dma.done %s613, 256
        $region68: #{_lambda_.6} parent=63 // pred_fallthru
          _
        // Predicated region
        $region69: #{_lambda_.6} parent=63 // pred_check
          %p618 = pneg %p165
        $region70: #{_lambda_.6} parent=63 // pred_check_branch
          %620 = sbr.rel (%p618) target = $region72
        $region71: #{_lambda_.6} parent=63 // pred_region
          %s621 = sand.u32 %s150, 1
          %s622 = scalar_lea.sflag [#allocation11], %s621
          %s623 = sand.u32 %s150, 1
          %s624 = scalar_lea.vmem [#allocation10], %s623
          %625 = dma.done %s622, 16
        $region72: #{_lambda_.6} parent=63 // pred_fallthru
          _
      $region64: #{_lambda_.6} parent=5 // pred_fallthru
        _
    $region6: #{_lambda_.6} parent=1 // loop_footer
      %s27 = sadd.s32 1, %s23
    $region7: #{_lambda_.6} parent=1 // loop_footer_branch
      %22 = sbr.rel target = $region3
    $region8: #{_lambda_.6} parent=1 // loop_exit
      _
    %626 = vsyncpa [#allocation4], 1
    %s627 = scalar_lea.sflag [#allocation4], 1
    %628 = vsyncpa %s627, 1
    %629 = vsyncpa [#allocation7], 1
    %s630 = scalar_lea.sflag [#allocation7], 1
    %631 = vsyncpa %s630, 1
    %632 = vsyncpa [#allocation5], 1
    %s633 = scalar_lea.sflag [#allocation5], 1
    %634 = vsyncpa %s633, 1
    %635 = vsyncpa [#allocation11], 1
    %s636 = scalar_lea.sflag [#allocation11], 1
    %637 = vsyncpa %s636, 1

// kernel: _lambda_.7
$region0: #{_lambda_.7}
  #allocation0 [shape = 'u32[]', space=smem, size = 0x4, offset = 0x4, fixed_abs, tag = 'smem constant byte address 0x4 - core index']
  #allocation1 [shape = 'u32[144,128]{1,0:T(1,128)}', space=vmem, size = 0x12000, scoped, tag = 'internal scratch']
  %s0 = inlined_call_operand.hbm [shape: bf16[64,128], index: 0, kind: input, shape index: {}]
  %s1 = inlined_call_operand.hbm [shape: f32[1,128], index: 1, kind: input, shape index: {}]
  %s2 = inlined_call_operand.hbm [shape: f32[1,128,128], index: 2, kind: output, shape index: {}]
  %s3 = sld [smem:[#allocation0]]
  $region53: #{_lambda_.7} parent=0
    _
  %s5 = ssub.s32 1, %s3
  %s6 = scalar_select 0, %s5, %s3
  $region1: #{_lambda_.7} parent=0
    #allocation2 [shape = 'u8[8192]{0}', space=vmem, size = 0x2000, scoped, tag = 'input window, operand 0']
    #allocation3 [shape = 's32[2]{0}', space=sflag, size = 0x8, scoped, tag = 'scoped memory for _lambda_.7']
    #allocation4 [shape = 's32[2]{0}', space=sflag, size = 0x8, scoped, tag = 'scoped memory for _lambda_.7']
    #allocation5 [shape = 'u8[512]{0}', space=vmem, size = 0x400, scoped, tag = 'input window, operand 1, single buffered']
    #allocation6 [shape = 's32[1]{0}', space=sflag, size = 0x4, scoped, tag = 'scoped memory for _lambda_.7']
    #allocation7 [shape = 'u8[65536]{0}', space=vmem, size = 0x10000, scoped, tag = 'output window, operand 0, single buffered']
    %7 = vsyncpa [#allocation3], 0
    %s8 = scalar_lea.sflag [#allocation3], 1
    %9 = vsyncpa %s8, 0
    %10 = vsyncpa [#allocation6], 0
    %11 = vsyncpa [#allocation4], 0
    loop: start=0, step=1, limit=6
    $region2: #{_lambda_.7} parent=1 // loop_pre_header
      _
    $region3: #{_lambda_.7} parent=1 // loop_header
      %s13 = sphi 0, %s17
      %p14 = scmp.ge.s32.totalorder %s13, 6
      %s20 = sphi 0, %s32
      %s21 = sphi 0, %s28
      %s22 = sphi 0, %s20
      %s23 = sphi 0, %s21
      %s24 = sphi 0, %s22
      %s25 = sphi 0, %s23
      %s39 = sphi 0, %s41
      %s42 = sphi 0, %s39
      %s43 = sphi 0, %s42
      %s59 = sphi 0, %s43
      %s63 = sphi 0, %s63
      %s65 = sphi 0, %s63
      %s66 = sphi 0, %s65
      %s80 = sphi 0, %s66
      %s86 = sphi 0, %s88
      %s89 = sphi 0, %s86
      %s90 = sphi 0, %s89
      %s106 = sphi 0, %s90
    $region4: #{_lambda_.7} parent=1 // loop_header_branch
      %16 = sbr.rel (%p14) target = $region8
    $region5: #{_lambda_.7} parent=1 // loop_body
      %s18 = ssub.s32 %s13, 1
      %s19 = ssub.s32 %s13, 2
      %s26 = sadd.s32 1, %s21
      %p27 = scmp.ge.s32.totalorder %s26, 4
      %s28 = scalar_select %p27, 0, %s26
      %s29 = sadd.s32 1, %s20
      %s30 = scalar_select %p27, %s29, %s20
      %p31 = scmp.ge.s32.totalorder %s30, 1
      %s32 = scalar_select %p31, 0, %s30
      %s33 = smul.u32 %s20, 4
      %s34 = sadd.s32 %s33, %s21
      %s35 = smul.u32 %s32, 4
      %s36 = sadd.s32 %s35, %s28
      %s37 = ssub.s32 %s34, %s36
      %p38 = scmp.eq.s32.totalorder %s37, 0
      %s40 = sadd.s32 %s39, 1
      %s41 = scalar_select %p38, %s39, %s40
      %p44 = pneg %p38
      %p45 = scmp.eq.s32.totalorder %s13, 3
      %p46 = por %p44, %p45
      %p47 = scmp.ne.s32.totalorder %s39, %s42
      %p48 = scmp.eq.s32.totalorder %s13, 0
      %p49 = por %p47, %p48
      %p50 = scmp.ne.s32.totalorder %s39, %s42
      %p51 = scmp.eq.s32.totalorder %s18, 3
      %p52 = por %p50, %p51
      %p53 = scmp.ne.s32.totalorder %s42, %s43
      %p54 = scmp.eq.s32.totalorder %s18, 0
      %p55 = por %p53, %p54
      %p56 = scmp.ne.s32.totalorder %s42, %s43
      %p57 = scmp.eq.s32.totalorder %s19, 3
      %p58 = por %p56, %p57
      %p60 = scmp.ne.s32.totalorder %s43, %s59
      %p61 = scmp.eq.s32.totalorder %s19, 0
      %p62 = por %p60, %p61
      %s64 = sadd.s32 %s63, 1
      %p67 = scmp.eq.s32.totalorder %s13, 3
      %p68 = scmp.ne.s32.totalorder %s63, %s65
      %p69 = scmp.eq.s32.totalorder %s13, 0
      %p70 = por %p68, %p69
      %p71 = scmp.ne.s32.totalorder %s63, %s65
      %p72 = scmp.eq.s32.totalorder %s18, 3
      %p73 = por %p71, %p72
      %p74 = scmp.ne.s32.totalorder %s65, %s66
      %p75 = scmp.eq.s32.totalorder %s18, 0
      %p76 = por %p74, %p75
      %p77 = scmp.ne.s32.totalorder %s65, %s66
      %p78 = scmp.eq.s32.totalorder %s19, 3
      %p79 = por %p77, %p78
      %p81 = scmp.ne.s32.totalorder %s66, %s80
      %p82 = scmp.eq.s32.totalorder %s19, 0
      %p83 = por %p81, %p82
      %s84 = ssub.s32 %s20, %s32
      %p85 = scmp.eq.s32.totalorder %s84, 0
      %s87 = sadd.s32 %s86, 1
      %s88 = scalar_select %p85, %s86, %s87
      %p91 = pneg %p85
      %p92 = scmp.eq.s32.totalorder %s13, 3
      %p93 = por %p91, %p92
      %p94 = scmp.ne.s32.totalorder %s86, %s89
      %p95 = scmp.eq.s32.totalorder %s13, 0
      %p96 = por %p94, %p95
      %p97 = scmp.ne.s32.totalorder %s86, %s89
      %p98 = scmp.eq.s32.totalorder %s18, 3
      %p99 = por %p97, %p98
      %p100 = scmp.ne.s32.totalorder %s89, %s90
      %p101 = scmp.eq.s32.totalorder %s18, 0
      %p102 = por %p100, %p101
      %p103 = scmp.ne.s32.totalorder %s89, %s90
      %p104 = scmp.eq.s32.totalorder %s19, 3
      %p105 = por %p103, %p104
      %p107 = scmp.ne.s32.totalorder %s90, %s106
      %p108 = scmp.eq.s32.totalorder %s19, 0
      %p109 = por %p107, %p108
      %p110 = scmp.le.s32.totalorder 1, %s13
      %p111 = scmp.lt.s32.totalorder %s13, 5
      %p112 = pnand %p110, %p111
      %p113 = pneg %p112
      // Predicated region
      $region9: #{_lambda_.7} parent=5 // pred_check
        _
      $region10: #{_lambda_.7} parent=5 // pred_check_branch
        %115 = sbr.rel (%p112) target = $region12
      $region11: #{_lambda_.7} parent=5 // pred_region
        %s116 = ssub.s32 %s13, 1
        // Predicated region
        $region13: #{_lambda_.7} parent=11 // pred_check
          %p117 = pneg %p76
        $region14: #{_lambda_.7} parent=11 // pred_check_branch
          %119 = sbr.rel (%p117) target = $region16
        $region15: #{_lambda_.7} parent=11 // pred_region
          %s121 = ssub.s32 16, 16
          %122 = vsyncadd [#allocation6], %s121
          %s124 = sshll.u32 [#allocation5], 4
          %s125 = int_to_ptr.vmem [resolvable:$true] %s124
          %127 = dma.hbm_to_vmem [thread:$0]  %s1, 16, %s125, [#allocation6]
        $region16: #{_lambda_.7} parent=11 // pred_fallthru
          _
      $region12: #{_lambda_.7} parent=5 // pred_fallthru
        _
      %p128 = scmp.lt.s32.totalorder %s13, 4
      // Predicated region
      $region17: #{_lambda_.7} parent=5 // pred_check
        %p129 = pneg %p128
      $region18: #{_lambda_.7} parent=5 // pred_check_branch
        %131 = sbr.rel (%p129) target = $region20
      $region19: #{_lambda_.7} parent=5 // pred_region
        // Predicated region
        $region21: #{_lambda_.7} parent=19 // pred_check
          %p132 = pneg %p49
        $region22: #{_lambda_.7} parent=19 // pred_check_branch
          %134 = sbr.rel (%p132) target = $region24
        $region23: #{_lambda_.7} parent=19 // pred_region
          %s135 = sand.u32 %s39, 1
          %s136 = scalar_lea.sflag [#allocation3], %s135
          %s137 = sand.u32 %s39, 1
          %s138 = smul.addr %s137, 8
          %s139 = scalar_lea.vmem [#allocation2], %s138
          %s140 = smul.u32 %s20, 4
          %s141 = sadd.s32 %s140, %s21
          %s142 = smul.u32 2, %s141
          %s144 = ssub.s32 128, 128
          %145 = vsyncadd %s136, %s144
          %s146 = smul.addr %s142, 64
          %s147 = scalar_lea.hbm %s0, %s146
          %s148 = sshll.u32 %s139, 4
          %s149 = int_to_ptr.vmem [resolvable:$true] %s148
          %154 = dma.hbm_to_vmem [thread:$0]  %s147, 128, %s149, %s136, 64, 64, 4
        $region24: #{_lambda_.7} parent=19 // pred_fallthru
          _
      $region20: #{_lambda_.7} parent=5 // pred_fallthru
        _
      %p155 = scmp.le.s32.totalorder 1, %s13
      %p156 = scmp.lt.s32.totalorder %s13, 5
      %p157 = pnand %p155, %p156
      %p158 = pneg %p157
      // Predicated region
      $region25: #{_lambda_.7} parent=5 // pred_check
        _
      $region26: #{_lambda_.7} parent=5 // pred_check_branch
        %160 = sbr.rel (%p157) target = $region28
      $region27: #{_lambda_.7} parent=5 // pred_region
        %s161 = ssub.s32 %s13, 1
        %s162 = sand.u32 %s42, 1
        %s163 = scalar_lea.sflag [#allocation3], %s162
        %s164 = sand.u32 %s42, 1
        %s165 = smul.addr %s164, 8
        %s166 = scalar_lea.vmem [#allocation2], %s165
        // Predicated region
        $region29: #{_lambda_.7} parent=27 // pred_check
          %p167 = pneg %p55
        $region30: #{_lambda_.7} parent=27 // pred_check_branch
          %169 = sbr.rel (%p167) target = $region32
        $region31: #{_lambda_.7} parent=27 // pred_region
          %170 = dma.done %s163, 128
        $region32: #{_lambda_.7} parent=27 // pred_fallthru
          _
        // Predicated region
        $region33: #{_lambda_.7} parent=27 // pred_check
          %p171 = pneg %p76
        $region34: #{_lambda_.7} parent=27 // pred_check_branch
          %173 = sbr.rel (%p171) target = $region36
        $region35: #{_lambda_.7} parent=27 // pred_region
          %174 = dma.done [#allocation6], 16
        $region36: #{_lambda_.7} parent=27 // pred_fallthru
          _
        %s175 = sand.u32 %s42, 1
        %s176 = scalar_lea.sflag [#allocation3], %s175
        %s177 = sand.u32 %s42, 1
        %s178 = smul.addr %s177, 8
        %s179 = scalar_lea.vmem [#allocation2], %s178
        %p180 = pneg %p55
        %p181 = pneg %p52
        %p182 = pneg %p76
        %p183 = pneg %p73
        %p184 = pneg %p102
        %p185 = pneg %p99
        %s186 = smul.u32 %s22, 4
        %s187 = sadd.s32 %s186, %s23
        %s188 = smul.u32 2, %s187
        %p190 = scmp.eq.s32.totalorder %s23, 0
        // Predicated region
        $region37: #{_lambda_.7} parent=27 // pred_check
          %p191 = pneg %p190
        $region38: #{_lambda_.7} parent=27 // pred_check_branch
          %193 = sbr.rel (%p191) target = $region40
        $region39: #{_lambda_.7} parent=27 // pred_region
          %194 = vst [vmem:[#allocation7] sm:$0xff] 0.0
          %195 = vst [vmem:[#allocation7 + $0x8] sm:$0xff] 0.0
          %196 = vst [vmem:[#allocation7 + $0x10] sm:$0xff] 0.0
          %197 = vst [vmem:[#allocation7 + $0x18] sm:$0xff] 0.0
          %198 = vst [vmem:[#allocation7 + $0x20] sm:$0xff] 0.0
          %199 = vst [vmem:[#allocation7 + $0x28] sm:$0xff] 0.0
          %200 = vst [vmem:[#allocation7 + $0x30] sm:$0xff] 0.0
          %201 = vst [vmem:[#allocation7 + $0x38] sm:$0xff] 0.0
          %202 = vst [vmem:[#allocation7 + $0x40] sm:$0xff] 0.0
          %203 = vst [vmem:[#allocation7 + $0x48] sm:$0xff] 0.0
          %204 = vst [vmem:[#allocation7 + $0x50] sm:$0xff] 0.0
          %205 = vst [vmem:[#allocation7 + $0x58] sm:$0xff] 0.0
          %206 = vst [vmem:[#allocation7 + $0x60] sm:$0xff] 0.0
          %207 = vst [vmem:[#allocation7 + $0x68] sm:$0xff] 0.0
          %208 = vst [vmem:[#allocation7 + $0x70] sm:$0xff] 0.0
          %209 = vst [vmem:[#allocation7 + $0x78] sm:$0xff] 0.0
        $region40: #{_lambda_.7} parent=27 // pred_fallthru
          _
        %v210 = vld [vmem:[%s166] sm:$0xf]
        %v211 = vld [vmem:[%s166 + $0x4] sm:$0xf]
        %v212 = vunpack.c.l.bf16 %v210
        %v213 = vunpack.c.l.bf16 %v211
        %v214 = vld [vmem:[#allocation5] sm:$0x1]
        %v216 = vlaneseq
        %v217 = vshrl.u32 %v216, 7
        %v218 = vsub.s32 0, %v217
        %v219 = vrot.slane %v214, %v218
        %v221 = vsub.f32 %v212, %v219
        %v222 = vsub.f32 %v213, %v219
        %v223 = vpack.c.bf16 %v222, %v221
        %v224 = vld [vmem:[#allocation7] sm:$0xff]
        %v225 = vld [vmem:[#allocation7 + $0x8] sm:$0xff]
        %v226 = vld [vmem:[#allocation7 + $0x10] sm:$0xff]
        %v227 = vld [vmem:[#allocation7 + $0x18] sm:$0xff]
        %v228 = vld [vmem:[#allocation7 + $0x20] sm:$0xff]
        %v229 = vld [vmem:[#allocation7 + $0x28] sm:$0xff]
        %v230 = vld [vmem:[#allocation7 + $0x30] sm:$0xff]
        %v231 = vld [vmem:[#allocation7 + $0x38] sm:$0xff]
        %v232 = vld [vmem:[#allocation7 + $0x40] sm:$0xff]
        %v233 = vld [vmem:[#allocation7 + $0x48] sm:$0xff]
        %v234 = vld [vmem:[#allocation7 + $0x50] sm:$0xff]
        %v235 = vld [vmem:[#allocation7 + $0x58] sm:$0xff]
        %v236 = vld [vmem:[#allocation7 + $0x60] sm:$0xff]
        %v237 = vld [vmem:[#allocation7 + $0x68] sm:$0xff]
        %v238 = vld [vmem:[#allocation7 + $0x70] sm:$0xff]
        %v239 = vld [vmem:[#allocation7 + $0x78] sm:$0xff]
        %240 = vxpose.xlu0.c.b16.start [1/8] %v223, 128
        %241 = vxpose.xlu0.c.b16.cont [2/8] 0, 128
        %242 = vxpose.xlu0.c.b16.cont [3/8] 0, 128
        %243 = vxpose.xlu0.c.b16.cont [4/8] 0, 128
        %244 = vxpose.xlu0.c.b16.cont [5/8] 0, 128
        %245 = vxpose.xlu0.c.b16.cont [6/8] 0, 128
        %246 = vxpose.xlu0.c.b16.cont [7/8] 0, 128
        %247 = vxpose.xlu0.c.b16.end [8/8] 0, 128
        %v248 = vpop.trf.xlu0
        %v249 = vpop.trf.xlu0
        %v250 = vpop.trf.xlu0
        %v251 = vpop.trf.xlu0
        %v252 = vpop.trf.xlu0
        %v253 = vpop.trf.xlu0
        %v254 = vpop.trf.xlu0
        %v255 = vpop.trf.xlu0
        %vm256 = vcmask 130048
        %v258 = vsel %vm256, %v248, 0
        %v261 = vsel %vm256, %v249, 0
        %v264 = vsel %vm256, %v250, 0
        %v267 = vsel %vm256, %v251, 0
        %v270 = vsel %vm256, %v252, 0
        %v273 = vsel %vm256, %v253, 0
        %v276 = vsel %vm256, %v254, 0
        %v279 = vsel %vm256, %v255, 0
        %281 = vmatprep.subr.bf16.mxu0 0
        %282 = vmatpush1.bf16.msra.mxu0 %v223
        %283 = vmatprep.subr.bf16.mxu0 0
        %284 = vmatpush1.bf16.msra.mxu0 0
        %285 = vmatprep.subr.bf16.mxu0 0
        %286 = vmatpush1.bf16.msra.mxu0 0
        %287 = vmatprep.subr.bf16.mxu0 0
        %288 = vmatpush1.bf16.msra.mxu0 0
        %289 = vmatprep.subr.bf16.mxu0 0
        %290 = vmatpush1.bf16.msra.mxu0 0
        %291 = vmatprep.subr.bf16.mxu0 0
        %292 = vmatpush1.bf16.msra.mxu0 0
        %293 = vmatprep.subr.bf16.mxu0 0
        %294 = vmatpush1.bf16.msra.mxu0 0
        %295 = vmatprep.subr.bf16.mxu0 0
        %296 = vmatpush1.bf16.msra.mxu0 0
        %297 = vmatprep.subr.bf16.mxu0 0
        %298 = vmatpush1.bf16.msra.mxu0 0
        %299 = vmatprep.subr.bf16.mxu0 0
        %300 = vmatpush1.bf16.msra.mxu0 0
        %301 = vmatprep.subr.bf16.mxu0 0
        %302 = vmatpush1.bf16.msra.mxu0 0
        %303 = vmatprep.subr.bf16.mxu0 0
        %304 = vmatpush1.bf16.msra.mxu0 0
        %305 = vmatprep.subr.bf16.mxu0 0
        %306 = vmatpush1.bf16.msra.mxu0 0
        %307 = vmatprep.subr.bf16.mxu0 0
        %308 = vmatpush1.bf16.msra.mxu0 0
        %309 = vmatprep.subr.bf16.mxu0 0
        %310 = vmatpush1.bf16.msra.mxu0 0
        %311 = vmatprep.subr.bf16.mxu0 0
        %312 = vmatpush1.bf16.msra.mxu0 0
        %313 = vmatprep.mubr.bf16.mxu0 0
        %314 = vmatmul.mubr.bf16.gmra.mrb[0].mxu0 %v258
        %v315 = vpop.f32.mrb[0].mxu0
        %v316 = vadd.f32 0.0, %v315
        %v317 = vpop.f32.mrb[0].mxu0
        %v318 = vpop.f32.mrb[0].mxu0
        %v319 = vadd.f32 0.0, %v318
        %v320 = vpop.f32.mrb[0].mxu0
        %321 = vmatprep.mubr.bf16.mxu0 0
        %322 = vmatmul.mubr.bf16.gmra.mrb[0].mxu0 %v261
        %v323 = vpop.f32.mrb[0].mxu0
        %v324 = vadd.f32 0.0, %v323
        %v325 = vpop.f32.mrb[0].mxu0
        %v326 = vpop.f32.mrb[0].mxu0
        %v327 = vadd.f32 0.0, %v326
        %v328 = vpop.f32.mrb[0].mxu0
        %329 = vmatprep.mubr.bf16.mxu0 0
        %330 = vmatmul.mubr.bf16.gmra.mrb[0].mxu0 %v264
        %v331 = vpop.f32.mrb[0].mxu0
        %v332 = vadd.f32 0.0, %v331
        %v333 = vpop.f32.mrb[0].mxu0
        %v334 = vpop.f32.mrb[0].mxu0
        %v335 = vadd.f32 0.0, %v334
        %v336 = vpop.f32.mrb[0].mxu0
        %337 = vmatprep.mubr.bf16.mxu0 0
        %338 = vmatmul.mubr.bf16.gmra.mrb[0].mxu0 %v267
        %v339 = vpop.f32.mrb[0].mxu0
        %v340 = vadd.f32 0.0, %v339
        %v341 = vpop.f32.mrb[0].mxu0
        %v342 = vpop.f32.mrb[0].mxu0
        %v343 = vadd.f32 0.0, %v342
        %v344 = vpop.f32.mrb[0].mxu0
        %345 = vmatprep.mubr.bf16.mxu0 0
        %346 = vmatmul.mubr.bf16.gmra.mrb[0].mxu0 %v270
        %v347 = vpop.f32.mrb[0].mxu0
        %v348 = vadd.f32 0.0, %v347
        %v349 = vpop.f32.mrb[0].mxu0
        %v350 = vpop.f32.mrb[0].mxu0
        %v351 = vadd.f32 0.0, %v350
        %v352 = vpop.f32.mrb[0].mxu0
        %353 = vmatprep.mubr.bf16.mxu0 0
        %354 = vmatmul.mubr.bf16.gmra.mrb[0].mxu0 %v273
        %v355 = vpop.f32.mrb[0].mxu0
        %v356 = vadd.f32 0.0, %v355
        %v357 = vpop.f32.mrb[0].mxu0
        %v358 = vpop.f32.mrb[0].mxu0
        %v359 = vadd.f32 0.0, %v358
        %v360 = vpop.f32.mrb[0].mxu0
        %361 = vmatprep.mubr.bf16.mxu0 0
        %362 = vmatmul.mubr.bf16.gmra.mrb[0].mxu0 %v276
        %v363 = vpop.f32.mrb[0].mxu0
        %v364 = vadd.f32 0.0, %v363
        %v365 = vpop.f32.mrb[0].mxu0
        %v366 = vpop.f32.mrb[0].mxu0
        %v367 = vadd.f32 0.0, %v366
        %v368 = vpop.f32.mrb[0].mxu0
        %369 = vmatprep.mubr.bf16.mxu0 0
        %370 = vmatmul.mubr.bf16.gmra.mrb[0].mxu0 %v279
        %v371 = vpop.f32.mrb[0].mxu0
        %v372 = vadd.f32 0.0, %v371
        %v373 = vpop.f32.mrb[0].mxu0
        %v374 = vpop.f32.mrb[0].mxu0
        %v375 = vadd.f32 0.0, %v374
        %v376 = vpop.f32.mrb[0].mxu0
        %377 = vdwg.mxu0
        %v378 = vadd.f32 %v224, %v316
        %v379 = vadd.f32 %v225, %v319
        %v380 = vadd.f32 %v226, %v324
        %v381 = vadd.f32 %v227, %v327
        %v382 = vadd.f32 %v228, %v332
        %v383 = vadd.f32 %v229, %v335
        %v384 = vadd.f32 %v230, %v340
        %v385 = vadd.f32 %v231, %v343
        %v386 = vadd.f32 %v232, %v348
        %v387 = vadd.f32 %v233, %v351
        %v388 = vadd.f32 %v234, %v356
        %v389 = vadd.f32 %v235, %v359
        %v390 = vadd.f32 %v236, %v364
        %v391 = vadd.f32 %v237, %v367
        %v392 = vadd.f32 %v238, %v372
        %v393 = vadd.f32 %v239, %v375
        %394 = vst [vmem:[#allocation7] sm:$0xff] %v378
        %395 = vst [vmem:[#allocation7 + $0x8] sm:$0xff] %v379
        %396 = vst [vmem:[#allocation7 + $0x10] sm:$0xff] %v380
        %397 = vst [vmem:[#allocation7 + $0x18] sm:$0xff] %v381
        %398 = vst [vmem:[#allocation7 + $0x20] sm:$0xff] %v382
        %399 = vst [vmem:[#allocation7 + $0x28] sm:$0xff] %v383
        %400 = vst [vmem:[#allocation7 + $0x30] sm:$0xff] %v384
        %401 = vst [vmem:[#allocation7 + $0x38] sm:$0xff] %v385
        %402 = vst [vmem:[#allocation7 + $0x40] sm:$0xff] %v386
        %403 = vst [vmem:[#allocation7 + $0x48] sm:$0xff] %v387
        %404 = vst [vmem:[#allocation7 + $0x50] sm:$0xff] %v388
        %405 = vst [vmem:[#allocation7 + $0x58] sm:$0xff] %v389
        %406 = vst [vmem:[#allocation7 + $0x60] sm:$0xff] %v390
        %407 = vst [vmem:[#allocation7 + $0x68] sm:$0xff] %v391
        %408 = vst [vmem:[#allocation7 + $0x70] sm:$0xff] %v392
        %409 = vst [vmem:[#allocation7 + $0x78] sm:$0xff] %v393
        // Predicated region
        $region41: #{_lambda_.7} parent=27 // pred_check
          %p410 = pneg %p99
        $region42: #{_lambda_.7} parent=27 // pred_check_branch
          %412 = sbr.rel (%p410) target = $region44
        $region43: #{_lambda_.7} parent=27 // pred_region
          %s414 = ssub.s32 2048, 2048
          %415 = vsyncadd [#allocation4], %s414
          %s416 = smul.addr %s22, 16
          %s417 = smul.addr %s416, 128
          %s418 = scalar_lea.hbm %s2, %s417
          %s419 = sshll.u32 [#allocation7], 4
          %s420 = int_to_ptr.vmem [resolvable:$true] %s419
          %425 = dma.vmem_to_hbm [thread:$0]  %s420, 2048, %s418, [#allocation4], 128, 128, 8
        $region44: #{_lambda_.7} parent=27 // pred_fallthru
          _
        // Predicated region
        $region45: #{_lambda_.7} parent=27 // pred_check
          %p426 = pneg %p99
        $region46: #{_lambda_.7} parent=27 // pred_check_branch
          %428 = sbr.rel (%p426) target = $region48
        $region47: #{_lambda_.7} parent=27 // pred_region
          %429 = dma.done [#allocation4], 2048
        $region48: #{_lambda_.7} parent=27 // pred_fallthru
          _
      $region28: #{_lambda_.7} parent=5 // pred_fallthru
        _
      %p430 = scmp.le.s32.totalorder 2, %s13
      // Predicated region
      $region49: #{_lambda_.7} parent=5 // pred_check
        %p431 = pneg %p430
      $region50: #{_lambda_.7} parent=5 // pred_check_branch
        %433 = sbr.rel (%p431) target = $region52
      $region51: #{_lambda_.7} parent=5 // pred_region
        %s434 = ssub.s32 %s13, 2
      $region52: #{_lambda_.7} parent=5 // pred_fallthru
        _
    $region6: #{_lambda_.7} parent=1 // loop_footer
      %s17 = sadd.s32 1, %s13
    $region7: #{_lambda_.7} parent=1 // loop_footer_branch
      %12 = sbr.rel target = $region3
    $region8: #{_lambda_.7} parent=1 // loop_exit
      _
    %435 = vsyncpa [#allocation3], 1
    %s436 = scalar_lea.sflag [#allocation3], 1
    %437 = vsyncpa %s436, 1
    %438 = vsyncpa [#allocation6], 1
    %439 = vsyncpa [#allocation4], 1
    %s440 = scalar_lea.sflag [#allocation4], 1
    %441 = vsyncpa %s440, 1

// kernel: custom-call.3
$region0: #{custom-call.3}
  %s0 = inlined_call_operand.vmem [shape: f32[64,64], index: 0, kind: input, shape index: {}]
  %s1 = inlined_call_operand.vmem [shape: f32[64,64], index: 1, kind: input, shape index: {}]
  %s2 = inlined_call_operand.vmem [shape: f32[64,64], index: 2, kind: input, shape index: {}]
  %s3 = inlined_call_operand.vmem [shape: f32[64,64], index: 3, kind: input, shape index: {}]
  %s4 = inlined_call_operand.vmem [shape: f32[64], index: 4, kind: output, shape index: {0}]
  %s5 = inlined_call_operand.vmem [shape: f32[64], index: 5, kind: output, shape index: {1}]
  %s6 = inlined_call_operand.hbm [shape: f32[64,64], index: 6, kind: output, shape index: {2}]
  %s7 = inlined_call_operand.hbm [shape: f32[64,64], index: 7, kind: output, shape index: {3}]
  %s8 = inlined_call_operand.hbm [shape: f32[64,64], index: 8, kind: output, shape index: {4}]
  %s9 = inlined_call_operand.hbm [shape: f32[64,64], index: 9, kind: output, shape index: {5}]
  %10 = xla_tuple %s4, %s5, %s6, %s7, %s8, %s9
  $region1: #{custom-call.3} parent=0
    #allocation0 [shape = 'u8[32768]{0}', space=vmem, size = 0x8000, scoped, tag = 'operand span for operand 0']
    #allocation1 [shape = 'u8[32768]{0}', space=vmem, size = 0x8000, scoped, tag = 'operand span for operand 1']
    #allocation2 [shape = 'u8[32768]{0}', space=vmem, size = 0x8000, scoped, tag = 'operand span for operand 2']
    #allocation3 [shape = 'u8[32768]{0}', space=vmem, size = 0x8000, scoped, tag = 'operand span for operand 3']
    #allocation4 [shape = 'u8[4096]{0}', space=vmem, size = 0x1000, scoped, tag = 'operand span for operand 4']
    #allocation5 [shape = 'u8[512]{0}', space=vmem, size = 0x400, scoped, tag = 'packed  for operand 4']
    #allocation6 [shape = 'u8[4096]{0}', space=vmem, size = 0x1000, scoped, tag = 'operand span for operand 5']
    #allocation7 [shape = 'u8[512]{0}', space=vmem, size = 0x400, scoped, tag = 'packed  for operand 5']
    #allocation8 [shape = 'u8[32768]{0}', space=vmem, size = 0x8000, scoped, tag = 'operand span for operand 6']
    #allocation9 [shape = 's32[1]{0}', space=sflag, size = 0x4, scoped, tag = 'scoped memory for custom-call.3']
    #allocation10 [shape = 'u8[32768]{0}', space=vmem, size = 0x8000, scoped, tag = 'operand span for operand 7']
    #allocation11 [shape = 's32[1]{0}', space=sflag, size = 0x4, scoped, tag = 'scoped memory for custom-call.3']
    #allocation12 [shape = 'u8[32768]{0}', space=vmem, size = 0x8000, scoped, tag = 'operand span for operand 8']
    #allocation13 [shape = 'u8[32768]{0}', space=vmem, size = 0x8000, scoped, tag = 'operand span for operand 9']
    #allocation14 [shape = 's32[1]{0}', space=sflag, size = 0x4, scoped, tag = 'scoped memory for custom-call.3']
    #allocation15 [shape = 'f32[64,64]{1,0}', space=vmem, size = 0x8000, scoped, tag = 'a top-left matrix']
    #allocation16 [shape = 'f32[64,64]{1,0}', space=vmem, size = 0x8000, scoped, tag = 'a top-right matrix']
    #allocation17 [shape = 'f32[64,64]{1,0}', space=vmem, size = 0x8000, scoped, tag = 'a bottom-left matrix']
    #allocation18 [shape = 'f32[64,64]{1,0}', space=vmem, size = 0x8000, scoped, tag = 'a bottom-right matrix']
    %11 = vsyncpa [#allocation9], 0
    %12 = vsyncpa [#allocation11], 0
    %13 = vsyncpa [#allocation14], 0
    %p15 = scmp.gt.s32.totalorder 64, 0
    // Predicated region
    $region2: #{custom-call.3} parent=1 // pred_check
      %p16 = pneg %p15
    $region3: #{custom-call.3} parent=1 // pred_check_branch
      %18 = sbr.rel (%p16) target = $region5
    $region4: #{custom-call.3} parent=1 // pred_region
      %s19 = sshra.s32 64, 3
      %p20 = scmp.gt.s32.totalorder %s19, 0
      // Predicated region
      $region6: #{custom-call.3} parent=4 // pred_check
        %p21 = pneg %p20
      $region7: #{custom-call.3} parent=4 // pred_check_branch
        %23 = sbr.rel (%p21) target = $region9
      $region8: #{custom-call.3} parent=4 // pred_region
        %s24 = ssub.s32 %s19, 1
        %s25 = smul.u32 %s24, 128
        %s26 = sshra.s32 %s25, 4
        %s27 = scalar_lea.vmem %s0, %s26
        %v28 = vld [vmem:[%s0] sm:$0xff]
        // While loop
        $region10: #{custom-call.3} parent=8 // loop_pre_header
          _
        $region11: #{custom-call.3} parent=8 // loop_header
          %s29 = sphi %s0, %s51
          %s30 = sphi [#allocation0], %s52
          %v31 = vphi %v28, %v53
          %s32 = ssub.s32 %s27, 64
          %p33 = scmp.gt.s32.totalorder %s29, %s32
        $region12: #{custom-call.3} parent=8 // loop_header_branch
          %35 = sbr.rel (%p33) target = $region16
        $region13: #{custom-call.3} parent=8 // loop_body
          %36 = vst [vmem:[%s30] sm:$0xff] %v31
          %v37 = vld [vmem:[%s29 + $0x8] sm:$0xff]
          %38 = vst [vmem:[%s30 + $0x8] sm:$0xff] %v37
          %v39 = vld [vmem:[%s29 + $0x10] sm:$0xff]
          %40 = vst [vmem:[%s30 + $0x10] sm:$0xff] %v39
          %v41 = vld [vmem:[%s29 + $0x18] sm:$0xff]
          %42 = vst [vmem:[%s30 + $0x18] sm:$0xff] %v41
          %v43 = vld [vmem:[%s29 + $0x20] sm:$0xff]
          %44 = vst [vmem:[%s30 + $0x20] sm:$0xff] %v43
          %v45 = vld [vmem:[%s29 + $0x28] sm:$0xff]
          %46 = vst [vmem:[%s30 + $0x28] sm:$0xff] %v45
          %v47 = vld [vmem:[%s29 + $0x30] sm:$0xff]
          %48 = vst [vmem:[%s30 + $0x30] sm:$0xff] %v47
          %v49 = vld [vmem:[%s29 + $0x38] sm:$0xff]
          %50 = vst [vmem:[%s30 + $0x38] sm:$0xff] %v49
        $region14: #{custom-call.3} parent=8 // loop_footer
          %s51 = scalar_lea.vmem %s29, 64
          %s52 = scalar_lea.vmem %s30, 64
          %v53 = vld [vmem:[%s29 + $0x40] sm:$0xff]
        $region15: #{custom-call.3} parent=8 // loop_footer_branch
          %54 = sbr.rel target = $region11
        $region16: #{custom-call.3} parent=8 // loop_exit
          _
        // While loop
        $region17: #{custom-call.3} parent=8 // loop_pre_header
          _
        $region18: #{custom-call.3} parent=8 // loop_header
          %s55 = sphi %s29, %s63
          %s56 = sphi %s30, %s64
          %v57 = vphi %v31, %v57
          %p58 = scmp.gt.s32.totalorder %s55, %s27
        $region19: #{custom-call.3} parent=8 // loop_header_branch
          %60 = sbr.rel (%p58) target = $region23
        $region20: #{custom-call.3} parent=8 // loop_body
          %v61 = vld [vmem:[%s55] sm:$0xff]
          %62 = vst [vmem:[%s56] sm:$0xff] %v61
        $region21: #{custom-call.3} parent=8 // loop_footer
          %s63 = scalar_lea.vmem %s55, 8
          %s64 = scalar_lea.vmem %s56, 8
        $region22: #{custom-call.3} parent=8 // loop_footer_branch
          %65 = sbr.rel target = $region18
        $region23: #{custom-call.3} parent=8 // loop_exit
          _
      $region9: #{custom-call.3} parent=4 // pred_fallthru
        _
      %s66 = sand.u32 64, 7
      %s67 = sshllo.u32 0, %s66
      %s68 = smul.u32 %s19, 128
      %s69 = sshra.s32 %s68, 4
      %s70 = scalar_lea.vmem [#allocation0], %s69
      %s71 = smul.u32 %s19, 128
      %s72 = sshra.s32 %s71, 4
      %s73 = scalar_lea.vmem %s0, %s72
      %v74 = vld [vmem:[%s73] sm:%s67]
      %75 = vst [vmem:[%s70] sm:%s67] %v74
    $region5: #{custom-call.3} parent=1 // pred_fallthru
      _
    %p77 = scmp.gt.s32.totalorder 64, 0
    // Predicated region
    $region24: #{custom-call.3} parent=1 // pred_check
      %p78 = pneg %p77
    $region25: #{custom-call.3} parent=1 // pred_check_branch
      %80 = sbr.rel (%p78) target = $region27
    $region26: #{custom-call.3} parent=1 // pred_region
      %s81 = sshra.s32 64, 3
      %p82 = scmp.gt.s32.totalorder %s81, 0
      // Predicated region
      $region28: #{custom-call.3} parent=26 // pred_check
        %p83 = pneg %p82
      $region29: #{custom-call.3} parent=26 // pred_check_branch
        %85 = sbr.rel (%p83) target = $region31
      $region30: #{custom-call.3} parent=26 // pred_region
        %s86 = ssub.s32 %s81, 1
        %s87 = smul.u32 %s86, 128
        %s88 = sshra.s32 %s87, 4
        %s89 = scalar_lea.vmem %s1, %s88
        %v90 = vld [vmem:[%s1] sm:$0xff]
        // While loop
        $region32: #{custom-call.3} parent=30 // loop_pre_header
          _
        $region33: #{custom-call.3} parent=30 // loop_header
          %s91 = sphi %s1, %s113
          %s92 = sphi [#allocation1], %s114
          %v93 = vphi %v90, %v115
          %s94 = ssub.s32 %s89, 64
          %p95 = scmp.gt.s32.totalorder %s91, %s94
        $region34: #{custom-call.3} parent=30 // loop_header_branch
          %97 = sbr.rel (%p95) target = $region38
        $region35: #{custom-call.3} parent=30 // loop_body
          %98 = vst [vmem:[%s92] sm:$0xff] %v93
          %v99 = vld [vmem:[%s91 + $0x8] sm:$0xff]
          %100 = vst [vmem:[%s92 + $0x8] sm:$0xff] %v99
          %v101 = vld [vmem:[%s91 + $0x10] sm:$0xff]
          %102 = vst [vmem:[%s92 + $0x10] sm:$0xff] %v101
          %v103 = vld [vmem:[%s91 + $0x18] sm:$0xff]
          %104 = vst [vmem:[%s92 + $0x18] sm:$0xff] %v103
          %v105 = vld [vmem:[%s91 + $0x20] sm:$0xff]
          %106 = vst [vmem:[%s92 + $0x20] sm:$0xff] %v105
          %v107 = vld [vmem:[%s91 + $0x28] sm:$0xff]
          %108 = vst [vmem:[%s92 + $0x28] sm:$0xff] %v107
          %v109 = vld [vmem:[%s91 + $0x30] sm:$0xff]
          %110 = vst [vmem:[%s92 + $0x30] sm:$0xff] %v109
          %v111 = vld [vmem:[%s91 + $0x38] sm:$0xff]
          %112 = vst [vmem:[%s92 + $0x38] sm:$0xff] %v111
        $region36: #{custom-call.3} parent=30 // loop_footer
          %s113 = scalar_lea.vmem %s91, 64
          %s114 = scalar_lea.vmem %s92, 64
          %v115 = vld [vmem:[%s91 + $0x40] sm:$0xff]
        $region37: #{custom-call.3} parent=30 // loop_footer_branch
          %116 = sbr.rel target = $region33
        $region38: #{custom-call.3} parent=30 // loop_exit
          _
        // While loop
        $region39: #{custom-call.3} parent=30 // loop_pre_header
          _
        $region40: #{custom-call.3} parent=30 // loop_header
          %s117 = sphi %s91, %s125
          %s118 = sphi %s92, %s126
          %v119 = vphi %v93, %v119
          %p120 = scmp.gt.s32.totalorder %s117, %s89
        $region41: #{custom-call.3} parent=30 // loop_header_branch
          %122 = sbr.rel (%p120) target = $region45
        $region42: #{custom-call.3} parent=30 // loop_body
          %v123 = vld [vmem:[%s117] sm:$0xff]
          %124 = vst [vmem:[%s118] sm:$0xff] %v123
        $region43: #{custom-call.3} parent=30 // loop_footer
          %s125 = scalar_lea.vmem %s117, 8
          %s126 = scalar_lea.vmem %s118, 8
        $region44: #{custom-call.3} parent=30 // loop_footer_branch
          %127 = sbr.rel target = $region40
        $region45: #{custom-call.3} parent=30 // loop_exit
          _
      $region31: #{custom-call.3} parent=26 // pred_fallthru
        _
      %s128 = sand.u32 64, 7
      %s129 = sshllo.u32 0, %s128
      %s130 = smul.u32 %s81, 128
      %s131 = sshra.s32 %s130, 4
      %s132 = scalar_lea.vmem [#allocation1], %s131
      %s133 = smul.u32 %s81, 128
      %s134 = sshra.s32 %s133, 4
      %s135 = scalar_lea.vmem %s1, %s134
      %v136 = vld [vmem:[%s135] sm:%s129]
      %137 = vst [vmem:[%s132] sm:%s129] %v136
    $region27: #{custom-call.3} parent=1 // pred_fallthru
      _
    %p139 = scmp.gt.s32.totalorder 64, 0
    // Predicated region
    $region46: #{custom-call.3} parent=1 // pred_check
      %p140 = pneg %p139
    $region47: #{custom-call.3} parent=1 // pred_check_branch
      %142 = sbr.rel (%p140) target = $region49
    $region48: #{custom-call.3} parent=1 // pred_region
      %s143 = sshra.s32 64, 3
      %p144 = scmp.gt.s32.totalorder %s143, 0
      // Predicated region
      $region50: #{custom-call.3} parent=48 // pred_check
        %p145 = pneg %p144
      $region51: #{custom-call.3} parent=48 // pred_check_branch
        %147 = sbr.rel (%p145) target = $region53
      $region52: #{custom-call.3} parent=48 // pred_region
        %s148 = ssub.s32 %s143, 1
        %s149 = smul.u32 %s148, 128
        %s150 = sshra.s32 %s149, 4
        %s151 = scalar_lea.vmem %s2, %s150
        %v152 = vld [vmem:[%s2] sm:$0xff]
        // While loop
        $region54: #{custom-call.3} parent=52 // loop_pre_header
          _
        $region55: #{custom-call.3} parent=52 // loop_header
          %s153 = sphi %s2, %s175
          %s154 = sphi [#allocation2], %s176
          %v155 = vphi %v152, %v177
          %s156 = ssub.s32 %s151, 64
          %p157 = scmp.gt.s32.totalorder %s153, %s156
        $region56: #{custom-call.3} parent=52 // loop_header_branch
          %159 = sbr.rel (%p157) target = $region60
        $region57: #{custom-call.3} parent=52 // loop_body
          %160 = vst [vmem:[%s154] sm:$0xff] %v155
          %v161 = vld [vmem:[%s153 + $0x8] sm:$0xff]
          %162 = vst [vmem:[%s154 + $0x8] sm:$0xff] %v161
          %v163 = vld [vmem:[%s153 + $0x10] sm:$0xff]
          %164 = vst [vmem:[%s154 + $0x10] sm:$0xff] %v163
          %v165 = vld [vmem:[%s153 + $0x18] sm:$0xff]
          %166 = vst [vmem:[%s154 + $0x18] sm:$0xff] %v165
          %v167 = vld [vmem:[%s153 + $0x20] sm:$0xff]
          %168 = vst [vmem:[%s154 + $0x20] sm:$0xff] %v167
          %v169 = vld [vmem:[%s153 + $0x28] sm:$0xff]
          %170 = vst [vmem:[%s154 + $0x28] sm:$0xff] %v169
          %v171 = vld [vmem:[%s153 + $0x30] sm:$0xff]
          %172 = vst [vmem:[%s154 + $0x30] sm:$0xff] %v171
          %v173 = vld [vmem:[%s153 + $0x38] sm:$0xff]
          %174 = vst [vmem:[%s154 + $0x38] sm:$0xff] %v173
        $region58: #{custom-call.3} parent=52 // loop_footer
          %s175 = scalar_lea.vmem %s153, 64
          %s176 = scalar_lea.vmem %s154, 64
          %v177 = vld [vmem:[%s153 + $0x40] sm:$0xff]
        $region59: #{custom-call.3} parent=52 // loop_footer_branch
          %178 = sbr.rel target = $region55
        $region60: #{custom-call.3} parent=52 // loop_exit
          _
        // While loop
        $region61: #{custom-call.3} parent=52 // loop_pre_header
          _
        $region62: #{custom-call.3} parent=52 // loop_header
          %s179 = sphi %s153, %s187
          %s180 = sphi %s154, %s188
          %v181 = vphi %v155, %v181
          %p182 = scmp.gt.s32.totalorder %s179, %s151
        $region63: #{custom-call.3} parent=52 // loop_header_branch
          %184 = sbr.rel (%p182) target = $region67
        $region64: #{custom-call.3} parent=52 // loop_body
          %v185 = vld [vmem:[%s179] sm:$0xff]
          %186 = vst [vmem:[%s180] sm:$0xff] %v185
        $region65: #{custom-call.3} parent=52 // loop_footer
          %s187 = scalar_lea.vmem %s179, 8
          %s188 = scalar_lea.vmem %s180, 8
        $region66: #{custom-call.3} parent=52 // loop_footer_branch
          %189 = sbr.rel target = $region62
        $region67: #{custom-call.3} parent=52 // loop_exit
          _
      $region53: #{custom-call.3} parent=48 // pred_fallthru
        _
      %s190 = sand.u32 64, 7
      %s191 = sshllo.u32 0, %s190
      %s192 = smul.u32 %s143, 128
      %s193 = sshra.s32 %s192, 4
      %s194 = scalar_lea.vmem [#allocation2], %s193
      %s195 = smul.u32 %s143, 128
      %s196 = sshra.s32 %s195, 4
      %s197 = scalar_lea.vmem %s2, %s196
      %v198 = vld [vmem:[%s197] sm:%s191]
      %199 = vst [vmem:[%s194] sm:%s191] %v198
    $region49: #{custom-call.3} parent=1 // pred_fallthru
      _
    %p201 = scmp.gt.s32.totalorder 64, 0
    // Predicated region
    $region68: #{custom-call.3} parent=1 // pred_check
      %p202 = pneg %p201
    $region69: #{custom-call.3} parent=1 // pred_check_branch
      %204 = sbr.rel (%p202) target = $region71
    $region70: #{custom-call.3} parent=1 // pred_region
      %s205 = sshra.s32 64, 3
      %p206 = scmp.gt.s32.totalorder %s205, 0
      // Predicated region
      $region72: #{custom-call.3} parent=70 // pred_check
        %p207 = pneg %p206
      $region73: #{custom-call.3} parent=70 // pred_check_branch
        %209 = sbr.rel (%p207) target = $region75
      $region74: #{custom-call.3} parent=70 // pred_region
        %s210 = ssub.s32 %s205, 1
        %s211 = smul.u32 %s210, 128
        %s212 = sshra.s32 %s211, 4
        %s213 = scalar_lea.vmem %s3, %s212
        %v214 = vld [vmem:[%s3] sm:$0xff]
        // While loop
        $region76: #{custom-call.3} parent=74 // loop_pre_header
          _
        $region77: #{custom-call.3} parent=74 // loop_header
          %s215 = sphi %s3, %s237
          %s216 = sphi [#allocation3], %s238
          %v217 = vphi %v214, %v239
          %s218 = ssub.s32 %s213, 64
          %p219 = scmp.gt.s32.totalorder %s215, %s218
        $region78: #{custom-call.3} parent=74 // loop_header_branch
          %221 = sbr.rel (%p219) target = $region82
        $region79: #{custom-call.3} parent=74 // loop_body
          %222 = vst [vmem:[%s216] sm:$0xff] %v217
          %v223 = vld [vmem:[%s215 + $0x8] sm:$0xff]
          %224 = vst [vmem:[%s216 + $0x8] sm:$0xff] %v223
          %v225 = vld [vmem:[%s215 + $0x10] sm:$0xff]
          %226 = vst [vmem:[%s216 + $0x10] sm:$0xff] %v225
          %v227 = vld [vmem:[%s215 + $0x18] sm:$0xff]
          %228 = vst [vmem:[%s216 + $0x18] sm:$0xff] %v227
          %v229 = vld [vmem:[%s215 + $0x20] sm:$0xff]
          %230 = vst [vmem:[%s216 + $0x20] sm:$0xff] %v229
          %v231 = vld [vmem:[%s215 + $0x28] sm:$0xff]
          %232 = vst [vmem:[%s216 + $0x28] sm:$0xff] %v231
          %v233 = vld [vmem:[%s215 + $0x30] sm:$0xff]
          %234 = vst [vmem:[%s216 + $0x30] sm:$0xff] %v233
          %v235 = vld [vmem:[%s215 + $0x38] sm:$0xff]
          %236 = vst [vmem:[%s216 + $0x38] sm:$0xff] %v235
        $region80: #{custom-call.3} parent=74 // loop_footer
          %s237 = scalar_lea.vmem %s215, 64
          %s238 = scalar_lea.vmem %s216, 64
          %v239 = vld [vmem:[%s215 + $0x40] sm:$0xff]
        $region81: #{custom-call.3} parent=74 // loop_footer_branch
          %240 = sbr.rel target = $region77
        $region82: #{custom-call.3} parent=74 // loop_exit
          _
        // While loop
        $region83: #{custom-call.3} parent=74 // loop_pre_header
          _
        $region84: #{custom-call.3} parent=74 // loop_header
          %s241 = sphi %s215, %s249
          %s242 = sphi %s216, %s250
          %v243 = vphi %v217, %v243
          %p244 = scmp.gt.s32.totalorder %s241, %s213
        $region85: #{custom-call.3} parent=74 // loop_header_branch
          %246 = sbr.rel (%p244) target = $region89
        $region86: #{custom-call.3} parent=74 // loop_body
          %v247 = vld [vmem:[%s241] sm:$0xff]
          %248 = vst [vmem:[%s242] sm:$0xff] %v247
        $region87: #{custom-call.3} parent=74 // loop_footer
          %s249 = scalar_lea.vmem %s241, 8
          %s250 = scalar_lea.vmem %s242, 8
        $region88: #{custom-call.3} parent=74 // loop_footer_branch
          %251 = sbr.rel target = $region84
        $region89: #{custom-call.3} parent=74 // loop_exit
          _
      $region75: #{custom-call.3} parent=70 // pred_fallthru
        _
      %s252 = sand.u32 64, 7
      %s253 = sshllo.u32 0, %s252
      %s254 = smul.u32 %s205, 128
      %s255 = sshra.s32 %s254, 4
      %s256 = scalar_lea.vmem [#allocation3], %s255
      %s257 = smul.u32 %s205, 128
      %s258 = sshra.s32 %s257, 4
      %s259 = scalar_lea.vmem %s3, %s258
      %v260 = vld [vmem:[%s259] sm:%s253]
      %261 = vst [vmem:[%s256] sm:%s253] %v260
    $region71: #{custom-call.3} parent=1 // pred_fallthru
      _
    %s262 = smov [#allocation15]
    %v263 = vld [vmem:[#allocation0] sm:$0xff]
    %264 = vst [vmem:[%s262] sm:$0xff] %v263
    %s265 = scalar_lea.vmem %s262, 8
    %s266 = scalar_lea.vmem [#allocation0], 8
    %v267 = vld [vmem:[%s266] sm:$0xff]
    %268 = vst [vmem:[%s265] sm:$0xff] %v267
    %s269 = scalar_lea.vmem %s262, 16
    %s270 = scalar_lea.vmem [#allocation0], 16
    %v271 = vld [vmem:[%s270] sm:$0xff]
    %272 = vst [vmem:[%s269] sm:$0xff] %v271
    %s273 = scalar_lea.vmem %s262, 24
    %s274 = scalar_lea.vmem [#allocation0], 24
    %v275 = vld [vmem:[%s274] sm:$0xff]
    %276 = vst [vmem:[%s273] sm:$0xff] %v275
    %s277 = scalar_lea.vmem %s262, 32
    %s278 = scalar_lea.vmem [#allocation0], 32
    %v279 = vld [vmem:[%s278] sm:$0xff]
    %280 = vst [vmem:[%s277] sm:$0xff] %v279
    %s281 = scalar_lea.vmem %s262, 40
    %s282 = scalar_lea.vmem [#allocation0], 40
    %v283 = vld [vmem:[%s282] sm:$0xff]
    %284 = vst [vmem:[%s281] sm:$0xff] %v283
    %s285 = scalar_lea.vmem %s262, 48
    %s286 = scalar_lea.vmem [#allocation0], 48
    %v287 = vld [vmem:[%s286] sm:$0xff]
    %288 = vst [vmem:[%s285] sm:$0xff] %v287
    %s289 = scalar_lea.vmem %s262, 56
    %s290 = scalar_lea.vmem [#allocation0], 56
    %v291 = vld [vmem:[%s290] sm:$0xff]
    %292 = vst [vmem:[%s289] sm:$0xff] %v291
    %s293 = smov [#allocation16]
    %v294 = vld [vmem:[#allocation1] sm:$0xff]
    %295 = vst [vmem:[%s293] sm:$0xff] %v294
    %s296 = scalar_lea.vmem %s293, 8
    %s297 = scalar_lea.vmem [#allocation1], 8
    %v298 = vld [vmem:[%s297] sm:$0xff]
    %299 = vst [vmem:[%s296] sm:$0xff] %v298
    %s300 = scalar_lea.vmem %s293, 16
    %s301 = scalar_lea.vmem [#allocation1], 16
    %v302 = vld [vmem:[%s301] sm:$0xff]
    %303 = vst [vmem:[%s300] sm:$0xff] %v302
    %s304 = scalar_lea.vmem %s293, 24
    %s305 = scalar_lea.vmem [#allocation1], 24
    %v306 = vld [vmem:[%s305] sm:$0xff]
    %307 = vst [vmem:[%s304] sm:$0xff] %v306
    %s308 = scalar_lea.vmem %s293, 32
    %s309 = scalar_lea.vmem [#allocation1], 32
    %v310 = vld [vmem:[%s309] sm:$0xff]
    %311 = vst [vmem:[%s308] sm:$0xff] %v310
    %s312 = scalar_lea.vmem %s293, 40
    %s313 = scalar_lea.vmem [#allocation1], 40
    %v314 = vld [vmem:[%s313] sm:$0xff]
    %315 = vst [vmem:[%s312] sm:$0xff] %v314
    %s316 = scalar_lea.vmem %s293, 48
    %s317 = scalar_lea.vmem [#allocation1], 48
    %v318 = vld [vmem:[%s317] sm:$0xff]
    %319 = vst [vmem:[%s316] sm:$0xff] %v318
    %s320 = scalar_lea.vmem %s293, 56
    %s321 = scalar_lea.vmem [#allocation1], 56
    %v322 = vld [vmem:[%s321] sm:$0xff]
    %323 = vst [vmem:[%s320] sm:$0xff] %v322
    %s324 = smov [#allocation17]
    %v325 = vld [vmem:[#allocation2] sm:$0xff]
    %326 = vst [vmem:[%s324] sm:$0xff] %v325
    %s327 = scalar_lea.vmem %s324, 8
    %s328 = scalar_lea.vmem [#allocation2], 8
    %v329 = vld [vmem:[%s328] sm:$0xff]
    %330 = vst [vmem:[%s327] sm:$0xff] %v329
    %s331 = scalar_lea.vmem %s324, 16
    %s332 = scalar_lea.vmem [#allocation2], 16
    %v333 = vld [vmem:[%s332] sm:$0xff]
    %334 = vst [vmem:[%s331] sm:$0xff] %v333
    %s335 = scalar_lea.vmem %s324, 24
    %s336 = scalar_lea.vmem [#allocation2], 24
    %v337 = vld [vmem:[%s336] sm:$0xff]
    %338 = vst [vmem:[%s335] sm:$0xff] %v337
    %s339 = scalar_lea.vmem %s324, 32
    %s340 = scalar_lea.vmem [#allocation2], 32
    %v341 = vld [vmem:[%s340] sm:$0xff]
    %342 = vst [vmem:[%s339] sm:$0xff] %v341
    %s343 = scalar_lea.vmem %s324, 40
    %s344 = scalar_lea.vmem [#allocation2], 40
    %v345 = vld [vmem:[%s344] sm:$0xff]
    %346 = vst [vmem:[%s343] sm:$0xff] %v345
    %s347 = scalar_lea.vmem %s324, 48
    %s348 = scalar_lea.vmem [#allocation2], 48
    %v349 = vld [vmem:[%s348] sm:$0xff]
    %350 = vst [vmem:[%s347] sm:$0xff] %v349
    %s351 = scalar_lea.vmem %s324, 56
    %s352 = scalar_lea.vmem [#allocation2], 56
    %v353 = vld [vmem:[%s352] sm:$0xff]
    %354 = vst [vmem:[%s351] sm:$0xff] %v353
    %s355 = smov [#allocation18]
    %v356 = vld [vmem:[#allocation3] sm:$0xff]
    %357 = vst [vmem:[%s355] sm:$0xff] %v356
    %s358 = scalar_lea.vmem %s355, 8
    %s359 = scalar_lea.vmem [#allocation3], 8
    %v360 = vld [vmem:[%s359] sm:$0xff]
    %361 = vst [vmem:[%s358] sm:$0xff] %v360
    %s362 = scalar_lea.vmem %s355, 16
    %s363 = scalar_lea.vmem [#allocation3], 16
    %v364 = vld [vmem:[%s363] sm:$0xff]
    %365 = vst [vmem:[%s362] sm:$0xff] %v364
    %s366 = scalar_lea.vmem %s355, 24
    %s367 = scalar_lea.vmem [#allocation3], 24
    %v368 = vld [vmem:[%s367] sm:$0xff]
    %369 = vst [vmem:[%s366] sm:$0xff] %v368
    %s370 = scalar_lea.vmem %s355, 32
    %s371 = scalar_lea.vmem [#allocation3], 32
    %v372 = vld [vmem:[%s371] sm:$0xff]
    %373 = vst [vmem:[%s370] sm:$0xff] %v372
    %s374 = scalar_lea.vmem %s355, 40
    %s375 = scalar_lea.vmem [#allocation3], 40
    %v376 = vld [vmem:[%s375] sm:$0xff]
    %377 = vst [vmem:[%s374] sm:$0xff] %v376
    %s378 = scalar_lea.vmem %s355, 48
    %s379 = scalar_lea.vmem [#allocation3], 48
    %v380 = vld [vmem:[%s379] sm:$0xff]
    %381 = vst [vmem:[%s378] sm:$0xff] %v380
    %s382 = scalar_lea.vmem %s355, 56
    %s383 = scalar_lea.vmem [#allocation3], 56
    %v384 = vld [vmem:[%s383] sm:$0xff]
    %385 = vst [vmem:[%s382] sm:$0xff] %v384
    %386 = vst [vmem:[#allocation8] sm:$0xff] 0.0
    %s387 = scalar_lea.vmem [#allocation8], 8
    %388 = vst [vmem:[%s387] sm:$0xff] 0.0
    %s389 = scalar_lea.vmem [#allocation8], 16
    %390 = vst [vmem:[%s389] sm:$0xff] 0.0
    %s391 = scalar_lea.vmem [#allocation8], 24
    %392 = vst [vmem:[%s391] sm:$0xff] 0.0
    %s393 = scalar_lea.vmem [#allocation8], 32
    %394 = vst [vmem:[%s393] sm:$0xff] 0.0
    %s395 = scalar_lea.vmem [#allocation8], 40
    %396 = vst [vmem:[%s395] sm:$0xff] 0.0
    %s397 = scalar_lea.vmem [#allocation8], 48
    %398 = vst [vmem:[%s397] sm:$0xff] 0.0
    %s399 = scalar_lea.vmem [#allocation8], 56
    %400 = vst [vmem:[%s399] sm:$0xff] 0.0
    %401 = vst [vmem:[#allocation10] sm:$0xff] 0.0
    %s402 = scalar_lea.vmem [#allocation10], 8
    %403 = vst [vmem:[%s402] sm:$0xff] 0.0
    %s404 = scalar_lea.vmem [#allocation10], 16
    %405 = vst [vmem:[%s404] sm:$0xff] 0.0
    %s406 = scalar_lea.vmem [#allocation10], 24
    %407 = vst [vmem:[%s406] sm:$0xff] 0.0
    %s408 = scalar_lea.vmem [#allocation10], 32
    %409 = vst [vmem:[%s408] sm:$0xff] 0.0
    %s410 = scalar_lea.vmem [#allocation10], 40
    %411 = vst [vmem:[%s410] sm:$0xff] 0.0
    %s412 = scalar_lea.vmem [#allocation10], 48
    %413 = vst [vmem:[%s412] sm:$0xff] 0.0
    %s414 = scalar_lea.vmem [#allocation10], 56
    %415 = vst [vmem:[%s414] sm:$0xff] 0.0
    %416 = vst [vmem:[#allocation12] sm:$0xff] 0.0
    %s417 = scalar_lea.vmem [#allocation12], 8
    %418 = vst [vmem:[%s417] sm:$0xff] 0.0
    %s419 = scalar_lea.vmem [#allocation12], 16
    %420 = vst [vmem:[%s419] sm:$0xff] 0.0
    %s421 = scalar_lea.vmem [#allocation12], 24
    %422 = vst [vmem:[%s421] sm:$0xff] 0.0
    %s423 = scalar_lea.vmem [#allocation12], 32
    %424 = vst [vmem:[%s423] sm:$0xff] 0.0
    %s425 = scalar_lea.vmem [#allocation12], 40
    %426 = vst [vmem:[%s425] sm:$0xff] 0.0
    %s427 = scalar_lea.vmem [#allocation12], 48
    %428 = vst [vmem:[%s427] sm:$0xff] 0.0
    %s429 = scalar_lea.vmem [#allocation12], 56
    %430 = vst [vmem:[%s429] sm:$0xff] 0.0
    %431 = vst [vmem:[#allocation13] sm:$0xff] 0.0
    %s432 = scalar_lea.vmem [#allocation13], 8
    %433 = vst [vmem:[%s432] sm:$0xff] 0.0
    %s434 = scalar_lea.vmem [#allocation13], 16
    %435 = vst [vmem:[%s434] sm:$0xff] 0.0
    %s436 = scalar_lea.vmem [#allocation13], 24
    %437 = vst [vmem:[%s436] sm:$0xff] 0.0
    %s438 = scalar_lea.vmem [#allocation13], 32
    %439 = vst [vmem:[%s438] sm:$0xff] 0.0
    %s440 = scalar_lea.vmem [#allocation13], 40
    %441 = vst [vmem:[%s440] sm:$0xff] 0.0
    %s442 = scalar_lea.vmem [#allocation13], 48
    %443 = vst [vmem:[%s442] sm:$0xff] 0.0
    %s444 = scalar_lea.vmem [#allocation13], 56
    %445 = vst [vmem:[%s444] sm:$0xff] 0.0
    %s446 = smov [#allocation8]
    %v447 = vlaneseq
    %v448 = vand.u32 %v447, 127
    %v449 = vmov %v448
    %v450 = vlaneseq
    %v451 = vshrl.u32 %v450, 7
    %v452 = vmov %v451
    %v453 = vld [vmem:[%s446] sm:$0xff]
    %vm456 = vcmp.eq.s32.totalorder %v452, %v449
    %v457 = vsel %vm456, 1.0, %v453
    %458 = vst [vmem:[%s446] sm:$0xff] %v457
    %s459 = scalar_lea.vmem %s446, 8
    %v460 = vld [vmem:[%s459] sm:$0xff]
    %v462 = vadd.s32 %v452, 8
    %vm463 = vcmp.eq.s32.totalorder %v462, %v449
    %v464 = vsel %vm463, 1.0, %v460
    %465 = vst [vmem:[%s459] sm:$0xff] %v464
    %s466 = scalar_lea.vmem %s446, 16
    %v467 = vld [vmem:[%s466] sm:$0xff]
    %v469 = vadd.s32 %v452, 16
    %vm470 = vcmp.eq.s32.totalorder %v469, %v449
    %v471 = vsel %vm470, 1.0, %v467
    %472 = vst [vmem:[%s466] sm:$0xff] %v471
    %s473 = scalar_lea.vmem %s446, 24
    %v474 = vld [vmem:[%s473] sm:$0xff]
    %v476 = vadd.s32 %v452, 24
    %vm477 = vcmp.eq.s32.totalorder %v476, %v449
    %v478 = vsel %vm477, 1.0, %v474
    %479 = vst [vmem:[%s473] sm:$0xff] %v478
    %s480 = scalar_lea.vmem %s446, 32
    %v481 = vld [vmem:[%s480] sm:$0xff]
    %v483 = vadd.s32 %v452, 32
    %vm484 = vcmp.eq.s32.totalorder %v483, %v449
    %v485 = vsel %vm484, 1.0, %v481
    %486 = vst [vmem:[%s480] sm:$0xff] %v485
    %s487 = scalar_lea.vmem %s446, 40
    %v488 = vld [vmem:[%s487] sm:$0xff]
    %v490 = vadd.s32 %v452, 40
    %vm491 = vcmp.eq.s32.totalorder %v490, %v449
    %v492 = vsel %vm491, 1.0, %v488
    %493 = vst [vmem:[%s487] sm:$0xff] %v492
    %s494 = scalar_lea.vmem %s446, 48
    %v495 = vld [vmem:[%s494] sm:$0xff]
    %v497 = vadd.s32 %v452, 48
    %vm498 = vcmp.eq.s32.totalorder %v497, %v449
    %v499 = vsel %vm498, 1.0, %v495
    %500 = vst [vmem:[%s494] sm:$0xff] %v499
    %s501 = scalar_lea.vmem %s446, 56
    %v502 = vld [vmem:[%s501] sm:$0xff]
    %v504 = vadd.s32 %v452, 56
    %vm505 = vcmp.eq.s32.totalorder %v504, %v449
    %v506 = vsel %vm505, 1.0, %v502
    %507 = vst [vmem:[%s501] sm:$0xff] %v506
    %s508 = smov [#allocation13]
    %v509 = vlaneseq
    %v510 = vand.u32 %v509, 127
    %v511 = vmov %v510
    %v512 = vlaneseq
    %v513 = vshrl.u32 %v512, 7
    %v514 = vmov %v513
    %v515 = vld [vmem:[%s508] sm:$0xff]
    %vm518 = vcmp.eq.s32.totalorder %v514, %v511
    %v519 = vsel %vm518, 1.0, %v515
    %520 = vst [vmem:[%s508] sm:$0xff] %v519
    %s521 = scalar_lea.vmem %s508, 8
    %v522 = vld [vmem:[%s521] sm:$0xff]
    %v524 = vadd.s32 %v514, 8
    %vm525 = vcmp.eq.s32.totalorder %v524, %v511
    %v526 = vsel %vm525, 1.0, %v522
    %527 = vst [vmem:[%s521] sm:$0xff] %v526
    %s528 = scalar_lea.vmem %s508, 16
    %v529 = vld [vmem:[%s528] sm:$0xff]
    %v531 = vadd.s32 %v514, 16
    %vm532 = vcmp.eq.s32.totalorder %v531, %v511
    %v533 = vsel %vm532, 1.0, %v529
    %534 = vst [vmem:[%s528] sm:$0xff] %v533
    %s535 = scalar_lea.vmem %s508, 24
    %v536 = vld [vmem:[%s535] sm:$0xff]
    %v538 = vadd.s32 %v514, 24
    %vm539 = vcmp.eq.s32.totalorder %v538, %v511
    %v540 = vsel %vm539, 1.0, %v536
    %541 = vst [vmem:[%s535] sm:$0xff] %v540
    %s542 = scalar_lea.vmem %s508, 32
    %v543 = vld [vmem:[%s542] sm:$0xff]
    %v545 = vadd.s32 %v514, 32
    %vm546 = vcmp.eq.s32.totalorder %v545, %v511
    %v547 = vsel %vm546, 1.0, %v543
    %548 = vst [vmem:[%s542] sm:$0xff] %v547
    %s549 = scalar_lea.vmem %s508, 40
    %v550 = vld [vmem:[%s549] sm:$0xff]
    %v552 = vadd.s32 %v514, 40
    %vm553 = vcmp.eq.s32.totalorder %v552, %v511
    %v554 = vsel %vm553, 1.0, %v550
    %555 = vst [vmem:[%s549] sm:$0xff] %v554
    %s556 = scalar_lea.vmem %s508, 48
    %v557 = vld [vmem:[%s556] sm:$0xff]
    %v559 = vadd.s32 %v514, 48
    %vm560 = vcmp.eq.s32.totalorder %v559, %v511
    %v561 = vsel %vm560, 1.0, %v557
    %562 = vst [vmem:[%s556] sm:$0xff] %v561
    %s563 = scalar_lea.vmem %s508, 56
    %v564 = vld [vmem:[%s563] sm:$0xff]
    %v566 = vadd.s32 %v514, 56
    %vm567 = vcmp.eq.s32.totalorder %v566, %v511
    %v568 = vsel %vm567, 1.0, %v564
    %569 = vst [vmem:[%s563] sm:$0xff] %v568
    // While loop
    $region90: #{custom-call.3} parent=1 // loop_pre_header
      _
    $region91: #{custom-call.3} parent=1 // loop_header
      %s571 = sphi 0, %s3605
      %v572 = vlaneseq
      %v573 = vand.u32 %v572, 127
      %v574 = vmov %v573
      %v575 = vlaneseq
      %v576 = vshrl.u32 %v575, 7
      %v577 = vmov %v576
      %s578 = smov [#allocation15]
      %v579 = vlaneseq
      %v580 = vand.u32 %v579, 127
      %vm581 = vcmp.ge.s32.totalorder %v580, 0
      %vm582 = vcmp.lt.s32.totalorder %v580, 64
      %vm583 = vmand %vm581, %vm582
      %v584 = vld [vmem:[%s578] sm:$0xff]
      %v585 = vsel %vm583, %v584, 0.0
      %v586 = vmul.f32 %v585, %v585
      %vm589 = vcmp.eq.s32.totalorder %v577, %v574
      %v590 = vsel %vm589, 0.0, %v586
      %s591 = scalar_lea.vmem %s578, 8
      %v592 = vld [vmem:[%s591] sm:$0xff]
      %v593 = vsel %vm583, %v592, 0.0
      %v594 = vmul.f32 %v593, %v593
      %v596 = vadd.s32 %v577, 8
      %vm597 = vcmp.eq.s32.totalorder %v596, %v574
      %v598 = vsel %vm597, 0.0, %v594
      %v599 = vadd.f32 %v590, %v598
      %v600 = vadd.f32 %v586, %v594
      %s601 = scalar_lea.vmem %s578, 16
      %v602 = vld [vmem:[%s601] sm:$0xff]
      %v603 = vsel %vm583, %v602, 0.0
      %v604 = vmul.f32 %v603, %v603
      %v606 = vadd.s32 %v577, 16
      %vm607 = vcmp.eq.s32.totalorder %v606, %v574
      %v608 = vsel %vm607, 0.0, %v604
      %v609 = vadd.f32 %v599, %v608
      %v610 = vadd.f32 %v600, %v604
      %s611 = scalar_lea.vmem %s578, 24
      %v612 = vld [vmem:[%s611] sm:$0xff]
      %v613 = vsel %vm583, %v612, 0.0
      %v614 = vmul.f32 %v613, %v613
      %v616 = vadd.s32 %v577, 24
      %vm617 = vcmp.eq.s32.totalorder %v616, %v574
      %v618 = vsel %vm617, 0.0, %v614
      %v619 = vadd.f32 %v609, %v618
      %v620 = vadd.f32 %v610, %v614
      %s621 = scalar_lea.vmem %s578, 32
      %v622 = vld [vmem:[%s621] sm:$0xff]
      %v623 = vsel %vm583, %v622, 0.0
      %v624 = vmul.f32 %v623, %v623
      %v626 = vadd.s32 %v577, 32
      %vm627 = vcmp.eq.s32.totalorder %v626, %v574
      %v628 = vsel %vm627, 0.0, %v624
      %v629 = vadd.f32 %v619, %v628
      %v630 = vadd.f32 %v620, %v624
      %s631 = scalar_lea.vmem %s578, 40
      %v632 = vld [vmem:[%s631] sm:$0xff]
      %v633 = vsel %vm583, %v632, 0.0
      %v634 = vmul.f32 %v633, %v633
      %v636 = vadd.s32 %v577, 40
      %vm637 = vcmp.eq.s32.totalorder %v636, %v574
      %v638 = vsel %vm637, 0.0, %v634
      %v639 = vadd.f32 %v629, %v638
      %v640 = vadd.f32 %v630, %v634
      %s641 = scalar_lea.vmem %s578, 48
      %v642 = vld [vmem:[%s641] sm:$0xff]
      %v643 = vsel %vm583, %v642, 0.0
      %v644 = vmul.f32 %v643, %v643
      %v646 = vadd.s32 %v577, 48
      %vm647 = vcmp.eq.s32.totalorder %v646, %v574
      %v648 = vsel %vm647, 0.0, %v644
      %v649 = vadd.f32 %v639, %v648
      %v650 = vadd.f32 %v640, %v644
      %s651 = scalar_lea.vmem %s578, 56
      %v652 = vld [vmem:[%s651] sm:$0xff]
      %v653 = vsel %vm583, %v652, 0.0
      %v654 = vmul.f32 %v653, %v653
      %v656 = vadd.s32 %v577, 56
      %vm657 = vcmp.eq.s32.totalorder %v656, %v574
      %v658 = vsel %vm657, 0.0, %v654
      %v659 = vadd.f32 %v649, %v658
      %v660 = vadd.f32 %v650, %v654
      %v661 = vlaneseq
      %v662 = vand.u32 %v661, 127
      %v663 = vmov %v662
      %v664 = vlaneseq
      %v665 = vshrl.u32 %v664, 7
      %v666 = vmov %v665
      %s667 = smov [#allocation16]
      %v668 = vlaneseq
      %v669 = vand.u32 %v668, 127
      %vm670 = vcmp.ge.s32.totalorder %v669, 0
      %vm671 = vcmp.lt.s32.totalorder %v669, 64
      %vm672 = vmand %vm670, %vm671
      %v673 = vld [vmem:[%s667] sm:$0xff]
      %v674 = vsel %vm672, %v673, 0.0
      %v675 = vmul.f32 %v674, %v674
      %v676 = vadd.f32 %v659, %v675
      %v677 = vadd.f32 %v660, %v675
      %s678 = scalar_lea.vmem %s667, 8
      %v679 = vld [vmem:[%s678] sm:$0xff]
      %v680 = vsel %vm672, %v679, 0.0
      %v681 = vmul.f32 %v680, %v680
      %v682 = vadd.f32 %v676, %v681
      %v683 = vadd.f32 %v677, %v681
      %s684 = scalar_lea.vmem %s667, 16
      %v685 = vld [vmem:[%s684] sm:$0xff]
      %v686 = vsel %vm672, %v685, 0.0
      %v687 = vmul.f32 %v686, %v686
      %v688 = vadd.f32 %v682, %v687
      %v689 = vadd.f32 %v683, %v687
      %s690 = scalar_lea.vmem %s667, 24
      %v691 = vld [vmem:[%s690] sm:$0xff]
      %v692 = vsel %vm672, %v691, 0.0
      %v693 = vmul.f32 %v692, %v692
      %v694 = vadd.f32 %v688, %v693
      %v695 = vadd.f32 %v689, %v693
      %s696 = scalar_lea.vmem %s667, 32
      %v697 = vld [vmem:[%s696] sm:$0xff]
      %v698 = vsel %vm672, %v697, 0.0
      %v699 = vmul.f32 %v698, %v698
      %v700 = vadd.f32 %v694, %v699
      %v701 = vadd.f32 %v695, %v699
      %s702 = scalar_lea.vmem %s667, 40
      %v703 = vld [vmem:[%s702] sm:$0xff]
      %v704 = vsel %vm672, %v703, 0.0
      %v705 = vmul.f32 %v704, %v704
      %v706 = vadd.f32 %v700, %v705
      %v707 = vadd.f32 %v701, %v705
      %s708 = scalar_lea.vmem %s667, 48
      %v709 = vld [vmem:[%s708] sm:$0xff]
      %v710 = vsel %vm672, %v709, 0.0
      %v711 = vmul.f32 %v710, %v710
      %v712 = vadd.f32 %v706, %v711
      %v713 = vadd.f32 %v707, %v711
      %s714 = scalar_lea.vmem %s667, 56
      %v715 = vld [vmem:[%s714] sm:$0xff]
      %v716 = vsel %vm672, %v715, 0.0
      %v717 = vmul.f32 %v716, %v716
      %v718 = vadd.f32 %v712, %v717
      %v719 = vadd.f32 %v713, %v717
      %v720 = vlaneseq
      %v721 = vand.u32 %v720, 127
      %v722 = vmov %v721
      %v723 = vlaneseq
      %v724 = vshrl.u32 %v723, 7
      %v725 = vmov %v724
      %s726 = smov [#allocation17]
      %v727 = vlaneseq
      %v728 = vand.u32 %v727, 127
      %vm729 = vcmp.ge.s32.totalorder %v728, 0
      %vm730 = vcmp.lt.s32.totalorder %v728, 64
      %vm731 = vmand %vm729, %vm730
      %v732 = vld [vmem:[%s726] sm:$0xff]
      %v733 = vsel %vm731, %v732, 0.0
      %v734 = vmul.f32 %v733, %v733
      %v735 = vadd.f32 %v718, %v734
      %v736 = vadd.f32 %v719, %v734
      %s737 = scalar_lea.vmem %s726, 8
      %v738 = vld [vmem:[%s737] sm:$0xff]
      %v739 = vsel %vm731, %v738, 0.0
      %v740 = vmul.f32 %v739, %v739
      %v741 = vadd.f32 %v735, %v740
      %v742 = vadd.f32 %v736, %v740
      %s743 = scalar_lea.vmem %s726, 16
      %v744 = vld [vmem:[%s743] sm:$0xff]
      %v745 = vsel %vm731, %v744, 0.0
      %v746 = vmul.f32 %v745, %v745
      %v747 = vadd.f32 %v741, %v746
      %v748 = vadd.f32 %v742, %v746
      %s749 = scalar_lea.vmem %s726, 24
      %v750 = vld [vmem:[%s749] sm:$0xff]
      %v751 = vsel %vm731, %v750, 0.0
      %v752 = vmul.f32 %v751, %v751
      %v753 = vadd.f32 %v747, %v752
      %v754 = vadd.f32 %v748, %v752
      %s755 = scalar_lea.vmem %s726, 32
      %v756 = vld [vmem:[%s755] sm:$0xff]
      %v757 = vsel %vm731, %v756, 0.0
      %v758 = vmul.f32 %v757, %v757
      %v759 = vadd.f32 %v753, %v758
      %v760 = vadd.f32 %v754, %v758
      %s761 = scalar_lea.vmem %s726, 40
      %v762 = vld [vmem:[%s761] sm:$0xff]
      %v763 = vsel %vm731, %v762, 0.0
      %v764 = vmul.f32 %v763, %v763
      %v765 = vadd.f32 %v759, %v764
      %v766 = vadd.f32 %v760, %v764
      %s767 = scalar_lea.vmem %s726, 48
      %v768 = vld [vmem:[%s767] sm:$0xff]
      %v769 = vsel %vm731, %v768, 0.0
      %v770 = vmul.f32 %v769, %v769
      %v771 = vadd.f32 %v765, %v770
      %v772 = vadd.f32 %v766, %v770
      %s773 = scalar_lea.vmem %s726, 56
      %v774 = vld [vmem:[%s773] sm:$0xff]
      %v775 = vsel %vm731, %v774, 0.0
      %v776 = vmul.f32 %v775, %v775
      %v777 = vadd.f32 %v771, %v776
      %v778 = vadd.f32 %v772, %v776
      %v779 = vlaneseq
      %v780 = vand.u32 %v779, 127
      %v781 = vmov %v780
      %v782 = vlaneseq
      %v783 = vshrl.u32 %v782, 7
      %v784 = vmov %v783
      %s785 = smov [#allocation18]
      %v786 = vlaneseq
      %v787 = vand.u32 %v786, 127
      %vm788 = vcmp.ge.s32.totalorder %v787, 0
      %vm789 = vcmp.lt.s32.totalorder %v787, 64
      %vm790 = vmand %vm788, %vm789
      %v791 = vld [vmem:[%s785] sm:$0xff]
      %v792 = vsel %vm790, %v791, 0.0
      %v793 = vmul.f32 %v792, %v792
      %vm796 = vcmp.eq.s32.totalorder %v784, %v781
      %v797 = vsel %vm796, 0.0, %v793
      %v798 = vadd.f32 %v777, %v797
      %v799 = vadd.f32 %v778, %v793
      %s800 = scalar_lea.vmem %s785, 8
      %v801 = vld [vmem:[%s800] sm:$0xff]
      %v802 = vsel %vm790, %v801, 0.0
      %v803 = vmul.f32 %v802, %v802
      %v805 = vadd.s32 %v784, 8
      %vm806 = vcmp.eq.s32.totalorder %v805, %v781
      %v807 = vsel %vm806, 0.0, %v803
      %v808 = vadd.f32 %v798, %v807
      %v809 = vadd.f32 %v799, %v803
      %s810 = scalar_lea.vmem %s785, 16
      %v811 = vld [vmem:[%s810] sm:$0xff]
      %v812 = vsel %vm790, %v811, 0.0
      %v813 = vmul.f32 %v812, %v812
      %v815 = vadd.s32 %v784, 16
      %vm816 = vcmp.eq.s32.totalorder %v815, %v781
      %v817 = vsel %vm816, 0.0, %v813
      %v818 = vadd.f32 %v808, %v817
      %v819 = vadd.f32 %v809, %v813
      %s820 = scalar_lea.vmem %s785, 24
      %v821 = vld [vmem:[%s820] sm:$0xff]
      %v822 = vsel %vm790, %v821, 0.0
      %v823 = vmul.f32 %v822, %v822
      %v825 = vadd.s32 %v784, 24
      %vm826 = vcmp.eq.s32.totalorder %v825, %v781
      %v827 = vsel %vm826, 0.0, %v823
      %v828 = vadd.f32 %v818, %v827
      %v829 = vadd.f32 %v819, %v823
      %s830 = scalar_lea.vmem %s785, 32
      %v831 = vld [vmem:[%s830] sm:$0xff]
      %v832 = vsel %vm790, %v831, 0.0
      %v833 = vmul.f32 %v832, %v832
      %v835 = vadd.s32 %v784, 32
      %vm836 = vcmp.eq.s32.totalorder %v835, %v781
      %v837 = vsel %vm836, 0.0, %v833
      %v838 = vadd.f32 %v828, %v837
      %v839 = vadd.f32 %v829, %v833
      %s840 = scalar_lea.vmem %s785, 40
      %v841 = vld [vmem:[%s840] sm:$0xff]
      %v842 = vsel %vm790, %v841, 0.0
      %v843 = vmul.f32 %v842, %v842
      %v845 = vadd.s32 %v784, 40
      %vm846 = vcmp.eq.s32.totalorder %v845, %v781
      %v847 = vsel %vm846, 0.0, %v843
      %v848 = vadd.f32 %v838, %v847
      %v849 = vadd.f32 %v839, %v843
      %s850 = scalar_lea.vmem %s785, 48
      %v851 = vld [vmem:[%s850] sm:$0xff]
      %v852 = vsel %vm790, %v851, 0.0
      %v853 = vmul.f32 %v852, %v852
      %v855 = vadd.s32 %v784, 48
      %vm856 = vcmp.eq.s32.totalorder %v855, %v781
      %v857 = vsel %vm856, 0.0, %v853
      %v858 = vadd.f32 %v848, %v857
      %v859 = vadd.f32 %v849, %v853
      %s860 = scalar_lea.vmem %s785, 56
      %v861 = vld [vmem:[%s860] sm:$0xff]
      %v862 = vsel %vm790, %v861, 0.0
      %v863 = vmul.f32 %v862, %v862
      %v865 = vadd.s32 %v784, 56
      %vm866 = vcmp.eq.s32.totalorder %v865, %v781
      %v867 = vsel %vm866, 0.0, %v863
      %v868 = vadd.f32 %v858, %v867
      %v869 = vadd.f32 %v859, %v863
      %870 = vadd.xlane.f32.xlu0 %v869
      %v871 = vpop.xlane.xlu0 %870
      %v872 = vrot.slane %v871, 4
      %v873 = vadd.f32 %v871, %v872
      %v874 = vrot.slane %v873, 2
      %v875 = vadd.f32 %v873, %v874
      %v876 = vrot.slane %v875, 1
      %v877 = vadd.f32 %v875, %v876
      %878 = vadd.xlane.f32.xlu0 %v868
      %v879 = vpop.xlane.xlu0 %878
      %v880 = vrot.slane %v879, 4
      %v881 = vadd.f32 %v879, %v880
      %v882 = vrot.slane %v881, 2
      %v883 = vadd.f32 %v881, %v882
      %v884 = vrot.slane %v883, 1
      %v885 = vadd.f32 %v883, %v884
      %s886 = vtos %v885
      %s887 = vtos %v877
      %s888 = smul.f32 1e-10, %s887
      %p889 = scmp.le.f32.partialorder %s886, %s888
      %p890 = scmp.ge.s32.totalorder %s571, 15
      %p891 = por %p889, %p890
    $region92: #{custom-call.3} parent=1 // loop_header_branch
      %3607 = sbr.rel (%p891) target = $region96
    $region93: #{custom-call.3} parent=1 // loop_body
      loop: start=0, step=1, limit=127
      $region97: #{custom-call.3} parent=93 // loop_pre_header
        _
      $region98: #{custom-call.3} parent=93 // loop_header
        %s893 = sphi 0, %s897
        %p894 = scmp.ge.s32.totalorder %s893, 127
      $region99: #{custom-call.3} parent=93 // loop_header_branch
        %896 = sbr.rel (%p894) target = $region103
      $region100: #{custom-call.3} parent=93 // loop_body
        #allocation19 [shape = 'f32[1024]{0}', space=vmem, size = 0x1000, scoped, tag = 'a_tl_diag vmem']
        #allocation20 [shape = 'f32[1024]{0}', space=vmem, size = 0x1000, scoped, tag = 'a_tr_diag vmem']
        #allocation21 [shape = 'f32[1024]{0}', space=vmem, size = 0x1000, scoped, tag = 'a_br_diag vmem']
        #allocation22 [shape = 'f32[1024]{0}', space=vmem, size = 0x1000, scoped, tag = 'rt1 vmem']
        #allocation23 [shape = 'f32[1024]{0}', space=vmem, size = 0x1000, scoped, tag = 'rt2 vmem']
        #allocation24 [shape = 'f32[1024]{0}', space=vmem, size = 0x1000, scoped, tag = 'c vmem']
        #allocation25 [shape = 'f32[1024]{0}', space=vmem, size = 0x1000, scoped, tag = 's vmem']
        #allocation26 [shape = 'f32[32768]{0}', space=vmem, size = 0x20000, scoped, tag = 'c broadcast']
        #allocation27 [shape = 'f32[32768]{0}', space=vmem, size = 0x20000, scoped, tag = 's broadcast']
        %s898 = smov [#allocation15]
        %s899 = smov [#allocation19]
        %v900 = vlaneseq
        %v901 = vand.u32 %v900, 127
        %v902 = vmov %v901
        %v903 = vlaneseq
        %v904 = vshrl.u32 %v903, 7
        %v905 = vmov %v904
        %v906 = vld [vmem:[%s898] sm:$0xff]
        %vm909 = vcmp.eq.s32.totalorder %v905, %v902
        %v910 = vsel %vm909, %v906, 0.0
        %s911 = scalar_lea.vmem %s898, 8
        %v912 = vld [vmem:[%s911] sm:$0xff]
        %v914 = vadd.s32 %v905, 8
        %vm915 = vcmp.eq.s32.totalorder %v914, %v902
        %v916 = vsel %vm915, %v912, %v910
        %s917 = scalar_lea.vmem %s898, 16
        %v918 = vld [vmem:[%s917] sm:$0xff]
        %v920 = vadd.s32 %v905, 16
        %vm921 = vcmp.eq.s32.totalorder %v920, %v902
        %v922 = vsel %vm921, %v918, %v916
        %s923 = scalar_lea.vmem %s898, 24
        %v924 = vld [vmem:[%s923] sm:$0xff]
        %v926 = vadd.s32 %v905, 24
        %vm927 = vcmp.eq.s32.totalorder %v926, %v902
        %v928 = vsel %vm927, %v924, %v922
        %s929 = scalar_lea.vmem %s898, 32
        %v930 = vld [vmem:[%s929] sm:$0xff]
        %v932 = vadd.s32 %v905, 32
        %vm933 = vcmp.eq.s32.totalorder %v932, %v902
        %v934 = vsel %vm933, %v930, %v928
        %s935 = scalar_lea.vmem %s898, 40
        %v936 = vld [vmem:[%s935] sm:$0xff]
        %v938 = vadd.s32 %v905, 40
        %vm939 = vcmp.eq.s32.totalorder %v938, %v902
        %v940 = vsel %vm939, %v936, %v934
        %s941 = scalar_lea.vmem %s898, 48
        %v942 = vld [vmem:[%s941] sm:$0xff]
        %v944 = vadd.s32 %v905, 48
        %vm945 = vcmp.eq.s32.totalorder %v944, %v902
        %v946 = vsel %vm945, %v942, %v940
        %s947 = scalar_lea.vmem %s898, 56
        %v948 = vld [vmem:[%s947] sm:$0xff]
        %v950 = vadd.s32 %v905, 56
        %vm951 = vcmp.eq.s32.totalorder %v950, %v902
        %v952 = vsel %vm951, %v948, %v946
        %v953 = vrot.slane %v952, 4
        %v954 = vadd.f32 %v952, %v953
        %v955 = vrot.slane %v954, 2
        %v956 = vadd.f32 %v954, %v955
        %v957 = vrot.slane %v956, 1
        %v958 = vadd.f32 %v956, %v957
        %959 = vst [vmem:[%s899] sm:$0x1] %v958
        %s960 = smov [#allocation16]
        %s961 = smov [#allocation20]
        %v962 = vlaneseq
        %v963 = vand.u32 %v962, 127
        %v964 = vmov %v963
        %v965 = vlaneseq
        %v966 = vshrl.u32 %v965, 7
        %v967 = vmov %v966
        %v968 = vld [vmem:[%s960] sm:$0xff]
        %vm971 = vcmp.eq.s32.totalorder %v967, %v964
        %v972 = vsel %vm971, %v968, 0.0
        %s973 = scalar_lea.vmem %s960, 8
        %v974 = vld [vmem:[%s973] sm:$0xff]
        %v976 = vadd.s32 %v967, 8
        %vm977 = vcmp.eq.s32.totalorder %v976, %v964
        %v978 = vsel %vm977, %v974, %v972
        %s979 = scalar_lea.vmem %s960, 16
        %v980 = vld [vmem:[%s979] sm:$0xff]
        %v982 = vadd.s32 %v967, 16
        %vm983 = vcmp.eq.s32.totalorder %v982, %v964
        %v984 = vsel %vm983, %v980, %v978
        %s985 = scalar_lea.vmem %s960, 24
        %v986 = vld [vmem:[%s985] sm:$0xff]
        %v988 = vadd.s32 %v967, 24
        %vm989 = vcmp.eq.s32.totalorder %v988, %v964
        %v990 = vsel %vm989, %v986, %v984
        %s991 = scalar_lea.vmem %s960, 32
        %v992 = vld [vmem:[%s991] sm:$0xff]
        %v994 = vadd.s32 %v967, 32
        %vm995 = vcmp.eq.s32.totalorder %v994, %v964
        %v996 = vsel %vm995, %v992, %v990
        %s997 = scalar_lea.vmem %s960, 40
        %v998 = vld [vmem:[%s997] sm:$0xff]
        %v1000 = vadd.s32 %v967, 40
        %vm1001 = vcmp.eq.s32.totalorder %v1000, %v964
        %v1002 = vsel %vm1001, %v998, %v996
        %s1003 = scalar_lea.vmem %s960, 48
        %v1004 = vld [vmem:[%s1003] sm:$0xff]
        %v1006 = vadd.s32 %v967, 48
        %vm1007 = vcmp.eq.s32.totalorder %v1006, %v964
        %v1008 = vsel %vm1007, %v1004, %v1002
        %s1009 = scalar_lea.vmem %s960, 56
        %v1010 = vld [vmem:[%s1009] sm:$0xff]
        %v1012 = vadd.s32 %v967, 56
        %vm1013 = vcmp.eq.s32.totalorder %v1012, %v964
        %v1014 = vsel %vm1013, %v1010, %v1008
        %v1015 = vrot.slane %v1014, 4
        %v1016 = vadd.f32 %v1014, %v1015
        %v1017 = vrot.slane %v1016, 2
        %v1018 = vadd.f32 %v1016, %v1017
        %v1019 = vrot.slane %v1018, 1
        %v1020 = vadd.f32 %v1018, %v1019
        %1021 = vst [vmem:[%s961] sm:$0x1] %v1020
        %s1022 = smov [#allocation18]
        %s1023 = smov [#allocation21]
        %v1024 = vlaneseq
        %v1025 = vand.u32 %v1024, 127
        %v1026 = vmov %v1025
        %v1027 = vlaneseq
        %v1028 = vshrl.u32 %v1027, 7
        %v1029 = vmov %v1028
        %v1030 = vld [vmem:[%s1022] sm:$0xff]
        %vm1033 = vcmp.eq.s32.totalorder %v1029, %v1026
        %v1034 = vsel %vm1033, %v1030, 0.0
        %s1035 = scalar_lea.vmem %s1022, 8
        %v1036 = vld [vmem:[%s1035] sm:$0xff]
        %v1038 = vadd.s32 %v1029, 8
        %vm1039 = vcmp.eq.s32.totalorder %v1038, %v1026
        %v1040 = vsel %vm1039, %v1036, %v1034
        %s1041 = scalar_lea.vmem %s1022, 16
        %v1042 = vld [vmem:[%s1041] sm:$0xff]
        %v1044 = vadd.s32 %v1029, 16
        %vm1045 = vcmp.eq.s32.totalorder %v1044, %v1026
        %v1046 = vsel %vm1045, %v1042, %v1040
        %s1047 = scalar_lea.vmem %s1022, 24
        %v1048 = vld [vmem:[%s1047] sm:$0xff]
        %v1050 = vadd.s32 %v1029, 24
        %vm1051 = vcmp.eq.s32.totalorder %v1050, %v1026
        %v1052 = vsel %vm1051, %v1048, %v1046
        %s1053 = scalar_lea.vmem %s1022, 32
        %v1054 = vld [vmem:[%s1053] sm:$0xff]
        %v1056 = vadd.s32 %v1029, 32
        %vm1057 = vcmp.eq.s32.totalorder %v1056, %v1026
        %v1058 = vsel %vm1057, %v1054, %v1052
        %s1059 = scalar_lea.vmem %s1022, 40
        %v1060 = vld [vmem:[%s1059] sm:$0xff]
        %v1062 = vadd.s32 %v1029, 40
        %vm1063 = vcmp.eq.s32.totalorder %v1062, %v1026
        %v1064 = vsel %vm1063, %v1060, %v1058
        %s1065 = scalar_lea.vmem %s1022, 48
        %v1066 = vld [vmem:[%s1065] sm:$0xff]
        %v1068 = vadd.s32 %v1029, 48
        %vm1069 = vcmp.eq.s32.totalorder %v1068, %v1026
        %v1070 = vsel %vm1069, %v1066, %v1064
        %s1071 = scalar_lea.vmem %s1022, 56
        %v1072 = vld [vmem:[%s1071] sm:$0xff]
        %v1074 = vadd.s32 %v1029, 56
        %vm1075 = vcmp.eq.s32.totalorder %v1074, %v1026
        %v1076 = vsel %vm1075, %v1072, %v1070
        %v1077 = vrot.slane %v1076, 4
        %v1078 = vadd.f32 %v1076, %v1077
        %v1079 = vrot.slane %v1078, 2
        %v1080 = vadd.f32 %v1078, %v1079
        %v1081 = vrot.slane %v1080, 1
        %v1082 = vadd.f32 %v1080, %v1081
        %1083 = vst [vmem:[%s1023] sm:$0x1] %v1082
        %s1084 = smov [#allocation24]
        %s1085 = smov [#allocation25]
        %s1086 = smov [#allocation19]
        %v1087 = vld [vmem:[%s1086] sm:$0xff]
        %s1088 = smov [#allocation20]
        %v1089 = vld [vmem:[%s1088] sm:$0xff]
        %s1090 = smov [#allocation21]
        %v1091 = vld [vmem:[%s1090] sm:$0xff]
        %v1092 = vsub.f32 %v1091, %v1087
        %v1093 = vmul.f32 2.0, %v1089
        %v1094 = vrcp.pop %v1093
        %v1095 = vmul.f32 %v1092, %v1094
        %vm1096 = vcmp.ge.f32.partialorder %v1095, 0.0
        %v1097 = vmul.f32 %v1095, %v1095
        %v1098 = vadd.f32 1.0, %v1097
        %v1099 = vrsqrt.pop %v1098
        %v1100 = vmul.f32 %v1098, %v1099
        %vm1101 = vcmp.eq.f32.partialorder %v1098, inf
        %v1102 = vsel %vm1101, %v1098, %v1100
        %vm1103 = vcmp.eq.f32.partialorder %v1098, 0.0
        %v1104 = vand.u32 %v1098, 2147483648
        %v1105 = vsel %vm1103, %v1104, %v1102
        %v1106 = vxor.u32 %v1105, 2147483648
        %v1107 = vsel %vm1096, %v1105, %v1106
        %v1108 = vadd.f32 %v1095, %v1107
        %v1109 = vrcp.pop %v1108
        %v1110 = vand.u32 2147483647, %v1087
        %v1111 = vand.u32 2147483647, %v1089
        %v1112 = vand.u32 2147483647, %v1091
        %v1113 = vmin.f32 %v1110, %v1112
        %v1114 = vmul.f32 1.1920929e-08, %v1113
        %vm1115 = vcmp.le.f32.partialorder %v1111, %v1114
        %v1116 = vsel %vm1115, 0.0, %v1109
        %v1117 = vmul.f32 %v1116, %v1116
        %v1118 = vadd.f32 1.0, %v1117
        %v1119 = vrsqrt.pop %v1118
        %v1120 = vmul.f32 %v1116, %v1119
        %v1121 = vmul.f32 %v1116, %v1089
        %v1122 = vsub.f32 %v1087, %v1121
        %v1123 = vmul.f32 %v1116, %v1089
        %v1124 = vadd.f32 %v1091, %v1123
        %s1125 = smov [#allocation22]
        %1126 = vst [vmem:[%s1125] sm:$0xff] %v1122
        %s1127 = smov [#allocation23]
        %1128 = vst [vmem:[%s1127] sm:$0xff] %v1124
        %s1129 = smov %s1084
        %1130 = vst [vmem:[%s1129] sm:$0xff] %v1119
        %s1131 = smov %s1085
        %1132 = vst [vmem:[%s1131] sm:$0xff] %v1120
        %s1133 = smov [#allocation24]
        %v1134 = vld [vmem:[%s1133] ss:$0 sm:$0xff]
        %v1135 = vlaneseq
        %v1136 = vand.u32 %v1135, 127
        %v1137 = vmov %v1136
        %v1138 = vlaneseq
        %v1139 = vshrl.u32 %v1138, 7
        %v1140 = vmov %v1139
        %vm1142 = vcmp.eq.s32.totalorder %v1140, %v1137
        %v1143 = vsel %vm1142, %v1134, 0.0
        %1144 = vadd.xlane.f32.xlu0 %v1143
        %v1145 = vpop.xlane.xlu0 %1144
        %s1146 = smov [#allocation26]
        %1147 = vst [vmem:[%s1146] sm:$0xff] %v1145
        %s1148 = smov [#allocation24]
        %v1149 = vld [vmem:[%s1148] ss:$0 sm:$0xff]
        %v1150 = vlaneseq
        %v1151 = vand.u32 %v1150, 127
        %v1152 = vmov %v1151
        %v1153 = vlaneseq
        %v1154 = vshrl.u32 %v1153, 7
        %v1155 = vmov %v1154
        %v1156 = vadd.s32 %v1155, 8
        %vm1157 = vcmp.eq.s32.totalorder %v1156, %v1152
        %v1158 = vsel %vm1157, %v1149, 0.0
        %1159 = vadd.xlane.f32.xlu0 %v1158
        %v1160 = vpop.xlane.xlu0 %1159
        %s1161 = smov [#allocation26]
        %s1162 = scalar_lea.vmem %s1161, 8
        %1163 = vst [vmem:[%s1162] sm:$0xff] %v1160
        %s1164 = smov [#allocation24]
        %v1165 = vld [vmem:[%s1164] ss:$0 sm:$0xff]
        %v1166 = vlaneseq
        %v1167 = vand.u32 %v1166, 127
        %v1168 = vmov %v1167
        %v1169 = vlaneseq
        %v1170 = vshrl.u32 %v1169, 7
        %v1171 = vmov %v1170
        %v1172 = vadd.s32 %v1171, 16
        %vm1173 = vcmp.eq.s32.totalorder %v1172, %v1168
        %v1174 = vsel %vm1173, %v1165, 0.0
        %1175 = vadd.xlane.f32.xlu0 %v1174
        %v1176 = vpop.xlane.xlu0 %1175
        %s1177 = smov [#allocation26]
        %s1178 = scalar_lea.vmem %s1177, 16
        %1179 = vst [vmem:[%s1178] sm:$0xff] %v1176
        %s1180 = smov [#allocation24]
        %v1181 = vld [vmem:[%s1180] ss:$0 sm:$0xff]
        %v1182 = vlaneseq
        %v1183 = vand.u32 %v1182, 127
        %v1184 = vmov %v1183
        %v1185 = vlaneseq
        %v1186 = vshrl.u32 %v1185, 7
        %v1187 = vmov %v1186
        %v1188 = vadd.s32 %v1187, 24
        %vm1189 = vcmp.eq.s32.totalorder %v1188, %v1184
        %v1190 = vsel %vm1189, %v1181, 0.0
        %1191 = vadd.xlane.f32.xlu0 %v1190
        %v1192 = vpop.xlane.xlu0 %1191
        %s1193 = smov [#allocation26]
        %s1194 = scalar_lea.vmem %s1193, 24
        %1195 = vst [vmem:[%s1194] sm:$0xff] %v1192
        %s1196 = smov [#allocation24]
        %v1197 = vld [vmem:[%s1196] ss:$0 sm:$0xff]
        %v1198 = vlaneseq
        %v1199 = vand.u32 %v1198, 127
        %v1200 = vmov %v1199
        %v1201 = vlaneseq
        %v1202 = vshrl.u32 %v1201, 7
        %v1203 = vmov %v1202
        %v1204 = vadd.s32 %v1203, 32
        %vm1205 = vcmp.eq.s32.totalorder %v1204, %v1200
        %v1206 = vsel %vm1205, %v1197, 0.0
        %1207 = vadd.xlane.f32.xlu0 %v1206
        %v1208 = vpop.xlane.xlu0 %1207
        %s1209 = smov [#allocation26]
        %s1210 = scalar_lea.vmem %s1209, 32
        %1211 = vst [vmem:[%s1210] sm:$0xff] %v1208
        %s1212 = smov [#allocation24]
        %v1213 = vld [vmem:[%s1212] ss:$0 sm:$0xff]
        %v1214 = vlaneseq
        %v1215 = vand.u32 %v1214, 127
        %v1216 = vmov %v1215
        %v1217 = vlaneseq
        %v1218 = vshrl.u32 %v1217, 7
        %v1219 = vmov %v1218
        %v1220 = vadd.s32 %v1219, 40
        %vm1221 = vcmp.eq.s32.totalorder %v1220, %v1216
        %v1222 = vsel %vm1221, %v1213, 0.0
        %1223 = vadd.xlane.f32.xlu0 %v1222
        %v1224 = vpop.xlane.xlu0 %1223
        %s1225 = smov [#allocation26]
        %s1226 = scalar_lea.vmem %s1225, 40
        %1227 = vst [vmem:[%s1226] sm:$0xff] %v1224
        %s1228 = smov [#allocation24]
        %v1229 = vld [vmem:[%s1228] ss:$0 sm:$0xff]
        %v1230 = vlaneseq
        %v1231 = vand.u32 %v1230, 127
        %v1232 = vmov %v1231
        %v1233 = vlaneseq
        %v1234 = vshrl.u32 %v1233, 7
        %v1235 = vmov %v1234
        %v1236 = vadd.s32 %v1235, 48
        %vm1237 = vcmp.eq.s32.totalorder %v1236, %v1232
        %v1238 = vsel %vm1237, %v1229, 0.0
        %1239 = vadd.xlane.f32.xlu0 %v1238
        %v1240 = vpop.xlane.xlu0 %1239
        %s1241 = smov [#allocation26]
        %s1242 = scalar_lea.vmem %s1241, 48
        %1243 = vst [vmem:[%s1242] sm:$0xff] %v1240
        %s1244 = smov [#allocation24]
        %v1245 = vld [vmem:[%s1244] ss:$0 sm:$0xff]
        %v1246 = vlaneseq
        %v1247 = vand.u32 %v1246, 127
        %v1248 = vmov %v1247
        %v1249 = vlaneseq
        %v1250 = vshrl.u32 %v1249, 7
        %v1251 = vmov %v1250
        %v1252 = vadd.s32 %v1251, 56
        %vm1253 = vcmp.eq.s32.totalorder %v1252, %v1248
        %v1254 = vsel %vm1253, %v1245, 0.0
        %1255 = vadd.xlane.f32.xlu0 %v1254
        %v1256 = vpop.xlane.xlu0 %1255
        %s1257 = smov [#allocation26]
        %s1258 = scalar_lea.vmem %s1257, 56
        %1259 = vst [vmem:[%s1258] sm:$0xff] %v1256
        %s1260 = smov [#allocation25]
        %v1261 = vld [vmem:[%s1260] ss:$0 sm:$0xff]
        %v1262 = vlaneseq
        %v1263 = vand.u32 %v1262, 127
        %v1264 = vmov %v1263
        %v1265 = vlaneseq
        %v1266 = vshrl.u32 %v1265, 7
        %v1267 = vmov %v1266
        %vm1269 = vcmp.eq.s32.totalorder %v1267, %v1264
        %v1270 = vsel %vm1269, %v1261, 0.0
        %1271 = vadd.xlane.f32.xlu0 %v1270
        %v1272 = vpop.xlane.xlu0 %1271
        %s1273 = smov [#allocation27]
        %1274 = vst [vmem:[%s1273] sm:$0xff] %v1272
        %s1275 = smov [#allocation25]
        %v1276 = vld [vmem:[%s1275] ss:$0 sm:$0xff]
        %v1277 = vlaneseq
        %v1278 = vand.u32 %v1277, 127
        %v1279 = vmov %v1278
        %v1280 = vlaneseq
        %v1281 = vshrl.u32 %v1280, 7
        %v1282 = vmov %v1281
        %v1283 = vadd.s32 %v1282, 8
        %vm1284 = vcmp.eq.s32.totalorder %v1283, %v1279
        %v1285 = vsel %vm1284, %v1276, 0.0
        %1286 = vadd.xlane.f32.xlu0 %v1285
        %v1287 = vpop.xlane.xlu0 %1286
        %s1288 = smov [#allocation27]
        %s1289 = scalar_lea.vmem %s1288, 8
        %1290 = vst [vmem:[%s1289] sm:$0xff] %v1287
        %s1291 = smov [#allocation25]
        %v1292 = vld [vmem:[%s1291] ss:$0 sm:$0xff]
        %v1293 = vlaneseq
        %v1294 = vand.u32 %v1293, 127
        %v1295 = vmov %v1294
        %v1296 = vlaneseq
        %v1297 = vshrl.u32 %v1296, 7
        %v1298 = vmov %v1297
        %v1299 = vadd.s32 %v1298, 16
        %vm1300 = vcmp.eq.s32.totalorder %v1299, %v1295
        %v1301 = vsel %vm1300, %v1292, 0.0
        %1302 = vadd.xlane.f32.xlu0 %v1301
        %v1303 = vpop.xlane.xlu0 %1302
        %s1304 = smov [#allocation27]
        %s1305 = scalar_lea.vmem %s1304, 16
        %1306 = vst [vmem:[%s1305] sm:$0xff] %v1303
        %s1307 = smov [#allocation25]
        %v1308 = vld [vmem:[%s1307] ss:$0 sm:$0xff]
        %v1309 = vlaneseq
        %v1310 = vand.u32 %v1309, 127
        %v1311 = vmov %v1310
        %v1312 = vlaneseq
        %v1313 = vshrl.u32 %v1312, 7
        %v1314 = vmov %v1313
        %v1315 = vadd.s32 %v1314, 24
        %vm1316 = vcmp.eq.s32.totalorder %v1315, %v1311
        %v1317 = vsel %vm1316, %v1308, 0.0
        %1318 = vadd.xlane.f32.xlu0 %v1317
        %v1319 = vpop.xlane.xlu0 %1318
        %s1320 = smov [#allocation27]
        %s1321 = scalar_lea.vmem %s1320, 24
        %1322 = vst [vmem:[%s1321] sm:$0xff] %v1319
        %s1323 = smov [#allocation25]
        %v1324 = vld [vmem:[%s1323] ss:$0 sm:$0xff]
        %v1325 = vlaneseq
        %v1326 = vand.u32 %v1325, 127
        %v1327 = vmov %v1326
        %v1328 = vlaneseq
        %v1329 = vshrl.u32 %v1328, 7
        %v1330 = vmov %v1329
        %v1331 = vadd.s32 %v1330, 32
        %vm1332 = vcmp.eq.s32.totalorder %v1331, %v1327
        %v1333 = vsel %vm1332, %v1324, 0.0
        %1334 = vadd.xlane.f32.xlu0 %v1333
        %v1335 = vpop.xlane.xlu0 %1334
        %s1336 = smov [#allocation27]
        %s1337 = scalar_lea.vmem %s1336, 32
        %1338 = vst [vmem:[%s1337] sm:$0xff] %v1335
        %s1339 = smov [#allocation25]
        %v1340 = vld [vmem:[%s1339] ss:$0 sm:$0xff]
        %v1341 = vlaneseq
        %v1342 = vand.u32 %v1341, 127
        %v1343 = vmov %v1342
        %v1344 = vlaneseq
        %v1345 = vshrl.u32 %v1344, 7
        %v1346 = vmov %v1345
        %v1347 = vadd.s32 %v1346, 40
        %vm1348 = vcmp.eq.s32.totalorder %v1347, %v1343
        %v1349 = vsel %vm1348, %v1340, 0.0
        %1350 = vadd.xlane.f32.xlu0 %v1349
        %v1351 = vpop.xlane.xlu0 %1350
        %s1352 = smov [#allocation27]
        %s1353 = scalar_lea.vmem %s1352, 40
        %1354 = vst [vmem:[%s1353] sm:$0xff] %v1351
        %s1355 = smov [#allocation25]
        %v1356 = vld [vmem:[%s1355] ss:$0 sm:$0xff]
        %v1357 = vlaneseq
        %v1358 = vand.u32 %v1357, 127
        %v1359 = vmov %v1358
        %v1360 = vlaneseq
        %v1361 = vshrl.u32 %v1360, 7
        %v1362 = vmov %v1361
        %v1363 = vadd.s32 %v1362, 48
        %vm1364 = vcmp.eq.s32.totalorder %v1363, %v1359
        %v1365 = vsel %vm1364, %v1356, 0.0
        %1366 = vadd.xlane.f32.xlu0 %v1365
        %v1367 = vpop.xlane.xlu0 %1366
        %s1368 = smov [#allocation27]
        %s1369 = scalar_lea.vmem %s1368, 48
        %1370 = vst [vmem:[%s1369] sm:$0xff] %v1367
        %s1371 = smov [#allocation25]
        %v1372 = vld [vmem:[%s1371] ss:$0 sm:$0xff]
        %v1373 = vlaneseq
        %v1374 = vand.u32 %v1373, 127
        %v1375 = vmov %v1374
        %v1376 = vlaneseq
        %v1377 = vshrl.u32 %v1376, 7
        %v1378 = vmov %v1377
        %v1379 = vadd.s32 %v1378, 56
        %vm1380 = vcmp.eq.s32.totalorder %v1379, %v1375
        %v1381 = vsel %vm1380, %v1372, 0.0
        %1382 = vadd.xlane.f32.xlu0 %v1381
        %v1383 = vpop.xlane.xlu0 %1382
        %s1384 = smov [#allocation27]
        %s1385 = scalar_lea.vmem %s1384, 56
        %1386 = vst [vmem:[%s1385] sm:$0xff] %v1383
        %s1387 = smov [#allocation26]
        %v1388 = vld [vmem:[%s1387] sm:$0xff]
        %s1389 = smov [#allocation27]
        %v1390 = vld [vmem:[%s1389] sm:$0xff]
        %s1391 = smov [#allocation15]
        %s1392 = smov [#allocation16]
        %s1393 = smov [#allocation17]
        %s1394 = smov [#allocation18]
        %v1395 = vld [vmem:[%s1391] sm:$0xff]
        %v1396 = vld [vmem:[%s1392] sm:$0xff]
        %v1397 = vld [vmem:[%s1393] sm:$0xff]
        %v1398 = vld [vmem:[%s1394] sm:$0xff]
        %v1399 = vmul.f32 %v1388, %v1395
        %v1400 = vmul.f32 %v1390, %v1397
        %v1401 = vsub.f32 %v1399, %v1400
        %v1402 = vmul.f32 %v1388, %v1396
        %v1403 = vmul.f32 %v1390, %v1398
        %v1404 = vsub.f32 %v1402, %v1403
        %v1405 = vmul.f32 %v1390, %v1395
        %v1406 = vmul.f32 %v1388, %v1397
        %v1407 = vadd.f32 %v1405, %v1406
        %v1408 = vmul.f32 %v1390, %v1396
        %v1409 = vmul.f32 %v1388, %v1398
        %v1410 = vadd.f32 %v1408, %v1409
        %1411 = vst [vmem:[%s1391] sm:$0xff] %v1401
        %1412 = vst [vmem:[%s1392] sm:$0xff] %v1404
        %1413 = vst [vmem:[%s1393] sm:$0xff] %v1407
        %1414 = vst [vmem:[%s1394] sm:$0xff] %v1410
        %s1415 = smov [#allocation26]
        %s1416 = scalar_lea.vmem %s1415, 8
        %v1417 = vld [vmem:[%s1416] sm:$0xff]
        %s1418 = smov [#allocation27]
        %s1419 = scalar_lea.vmem %s1418, 8
        %v1420 = vld [vmem:[%s1419] sm:$0xff]
        %s1421 = smov [#allocation15]
        %s1422 = scalar_lea.vmem %s1421, 8
        %s1423 = smov [#allocation16]
        %s1424 = scalar_lea.vmem %s1423, 8
        %s1425 = smov [#allocation17]
        %s1426 = scalar_lea.vmem %s1425, 8
        %s1427 = smov [#allocation18]
        %s1428 = scalar_lea.vmem %s1427, 8
        %v1429 = vld [vmem:[%s1422] sm:$0xff]
        %v1430 = vld [vmem:[%s1424] sm:$0xff]
        %v1431 = vld [vmem:[%s1426] sm:$0xff]
        %v1432 = vld [vmem:[%s1428] sm:$0xff]
        %v1433 = vmul.f32 %v1417, %v1429
        %v1434 = vmul.f32 %v1420, %v1431
        %v1435 = vsub.f32 %v1433, %v1434
        %v1436 = vmul.f32 %v1417, %v1430
        %v1437 = vmul.f32 %v1420, %v1432
        %v1438 = vsub.f32 %v1436, %v1437
        %v1439 = vmul.f32 %v1420, %v1429
        %v1440 = vmul.f32 %v1417, %v1431
        %v1441 = vadd.f32 %v1439, %v1440
        %v1442 = vmul.f32 %v1420, %v1430
        %v1443 = vmul.f32 %v1417, %v1432
        %v1444 = vadd.f32 %v1442, %v1443
        %1445 = vst [vmem:[%s1422] sm:$0xff] %v1435
        %1446 = vst [vmem:[%s1424] sm:$0xff] %v1438
        %1447 = vst [vmem:[%s1426] sm:$0xff] %v1441
        %1448 = vst [vmem:[%s1428] sm:$0xff] %v1444
        %s1449 = smov [#allocation26]
        %s1450 = scalar_lea.vmem %s1449, 16
        %v1451 = vld [vmem:[%s1450] sm:$0xff]
        %s1452 = smov [#allocation27]
        %s1453 = scalar_lea.vmem %s1452, 16
        %v1454 = vld [vmem:[%s1453] sm:$0xff]
        %s1455 = smov [#allocation15]
        %s1456 = scalar_lea.vmem %s1455, 16
        %s1457 = smov [#allocation16]
        %s1458 = scalar_lea.vmem %s1457, 16
        %s1459 = smov [#allocation17]
        %s1460 = scalar_lea.vmem %s1459, 16
        %s1461 = smov [#allocation18]
        %s1462 = scalar_lea.vmem %s1461, 16
        %v1463 = vld [vmem:[%s1456] sm:$0xff]
        %v1464 = vld [vmem:[%s1458] sm:$0xff]
        %v1465 = vld [vmem:[%s1460] sm:$0xff]
        %v1466 = vld [vmem:[%s1462] sm:$0xff]
        %v1467 = vmul.f32 %v1451, %v1463
        %v1468 = vmul.f32 %v1454, %v1465
        %v1469 = vsub.f32 %v1467, %v1468
        %v1470 = vmul.f32 %v1451, %v1464
        %v1471 = vmul.f32 %v1454, %v1466
        %v1472 = vsub.f32 %v1470, %v1471
        %v1473 = vmul.f32 %v1454, %v1463
        %v1474 = vmul.f32 %v1451, %v1465
        %v1475 = vadd.f32 %v1473, %v1474
        %v1476 = vmul.f32 %v1454, %v1464
        %v1477 = vmul.f32 %v1451, %v1466
        %v1478 = vadd.f32 %v1476, %v1477
        %1479 = vst [vmem:[%s1456] sm:$0xff] %v1469
        %1480 = vst [vmem:[%s1458] sm:$0xff] %v1472
        %1481 = vst [vmem:[%s1460] sm:$0xff] %v1475
        %1482 = vst [vmem:[%s1462] sm:$0xff] %v1478
        %s1483 = smov [#allocation26]
        %s1484 = scalar_lea.vmem %s1483, 24
        %v1485 = vld [vmem:[%s1484] sm:$0xff]
        %s1486 = smov [#allocation27]
        %s1487 = scalar_lea.vmem %s1486, 24
        %v1488 = vld [vmem:[%s1487] sm:$0xff]
        %s1489 = smov [#allocation15]
        %s1490 = scalar_lea.vmem %s1489, 24
        %s1491 = smov [#allocation16]
        %s1492 = scalar_lea.vmem %s1491, 24
        %s1493 = smov [#allocation17]
        %s1494 = scalar_lea.vmem %s1493, 24
        %s1495 = smov [#allocation18]
        %s1496 = scalar_lea.vmem %s1495, 24
        %v1497 = vld [vmem:[%s1490] sm:$0xff]
        %v1498 = vld [vmem:[%s1492] sm:$0xff]
        %v1499 = vld [vmem:[%s1494] sm:$0xff]
        %v1500 = vld [vmem:[%s1496] sm:$0xff]
        %v1501 = vmul.f32 %v1485, %v1497
        %v1502 = vmul.f32 %v1488, %v1499
        %v1503 = vsub.f32 %v1501, %v1502
        %v1504 = vmul.f32 %v1485, %v1498
        %v1505 = vmul.f32 %v1488, %v1500
        %v1506 = vsub.f32 %v1504, %v1505
        %v1507 = vmul.f32 %v1488, %v1497
        %v1508 = vmul.f32 %v1485, %v1499
        %v1509 = vadd.f32 %v1507, %v1508
        %v1510 = vmul.f32 %v1488, %v1498
        %v1511 = vmul.f32 %v1485, %v1500
        %v1512 = vadd.f32 %v1510, %v1511
        %1513 = vst [vmem:[%s1490] sm:$0xff] %v1503
        %1514 = vst [vmem:[%s1492] sm:$0xff] %v1506
        %1515 = vst [vmem:[%s1494] sm:$0xff] %v1509
        %1516 = vst [vmem:[%s1496] sm:$0xff] %v1512
        %s1517 = smov [#allocation26]
        %s1518 = scalar_lea.vmem %s1517, 32
        %v1519 = vld [vmem:[%s1518] sm:$0xff]
        %s1520 = smov [#allocation27]
        %s1521 = scalar_lea.vmem %s1520, 32
        %v1522 = vld [vmem:[%s1521] sm:$0xff]
        %s1523 = smov [#allocation15]
        %s1524 = scalar_lea.vmem %s1523, 32
        %s1525 = smov [#allocation16]
        %s1526 = scalar_lea.vmem %s1525, 32
        %s1527 = smov [#allocation17]
        %s1528 = scalar_lea.vmem %s1527, 32
        %s1529 = smov [#allocation18]
        %s1530 = scalar_lea.vmem %s1529, 32
        %v1531 = vld [vmem:[%s1524] sm:$0xff]
        %v1532 = vld [vmem:[%s1526] sm:$0xff]
        %v1533 = vld [vmem:[%s1528] sm:$0xff]
        %v1534 = vld [vmem:[%s1530] sm:$0xff]
        %v1535 = vmul.f32 %v1519, %v1531
        %v1536 = vmul.f32 %v1522, %v1533
        %v1537 = vsub.f32 %v1535, %v1536
        %v1538 = vmul.f32 %v1519, %v1532
        %v1539 = vmul.f32 %v1522, %v1534
        %v1540 = vsub.f32 %v1538, %v1539
        %v1541 = vmul.f32 %v1522, %v1531
        %v1542 = vmul.f32 %v1519, %v1533
        %v1543 = vadd.f32 %v1541, %v1542
        %v1544 = vmul.f32 %v1522, %v1532
        %v1545 = vmul.f32 %v1519, %v1534
        %v1546 = vadd.f32 %v1544, %v1545
        %1547 = vst [vmem:[%s1524] sm:$0xff] %v1537
        %1548 = vst [vmem:[%s1526] sm:$0xff] %v1540
        %1549 = vst [vmem:[%s1528] sm:$0xff] %v1543
        %1550 = vst [vmem:[%s1530] sm:$0xff] %v1546
        %s1551 = smov [#allocation26]
        %s1552 = scalar_lea.vmem %s1551, 40
        %v1553 = vld [vmem:[%s1552] sm:$0xff]
        %s1554 = smov [#allocation27]
        %s1555 = scalar_lea.vmem %s1554, 40
        %v1556 = vld [vmem:[%s1555] sm:$0xff]
        %s1557 = smov [#allocation15]
        %s1558 = scalar_lea.vmem %s1557, 40
        %s1559 = smov [#allocation16]
        %s1560 = scalar_lea.vmem %s1559, 40
        %s1561 = smov [#allocation17]
        %s1562 = scalar_lea.vmem %s1561, 40
        %s1563 = smov [#allocation18]
        %s1564 = scalar_lea.vmem %s1563, 40
        %v1565 = vld [vmem:[%s1558] sm:$0xff]
        %v1566 = vld [vmem:[%s1560] sm:$0xff]
        %v1567 = vld [vmem:[%s1562] sm:$0xff]
        %v1568 = vld [vmem:[%s1564] sm:$0xff]
        %v1569 = vmul.f32 %v1553, %v1565
        %v1570 = vmul.f32 %v1556, %v1567
        %v1571 = vsub.f32 %v1569, %v1570
        %v1572 = vmul.f32 %v1553, %v1566
        %v1573 = vmul.f32 %v1556, %v1568
        %v1574 = vsub.f32 %v1572, %v1573
        %v1575 = vmul.f32 %v1556, %v1565
        %v1576 = vmul.f32 %v1553, %v1567
        %v1577 = vadd.f32 %v1575, %v1576
        %v1578 = vmul.f32 %v1556, %v1566
        %v1579 = vmul.f32 %v1553, %v1568
        %v1580 = vadd.f32 %v1578, %v1579
        %1581 = vst [vmem:[%s1558] sm:$0xff] %v1571
        %1582 = vst [vmem:[%s1560] sm:$0xff] %v1574
        %1583 = vst [vmem:[%s1562] sm:$0xff] %v1577
        %1584 = vst [vmem:[%s1564] sm:$0xff] %v1580
        %s1585 = smov [#allocation26]
        %s1586 = scalar_lea.vmem %s1585, 48
        %v1587 = vld [vmem:[%s1586] sm:$0xff]
        %s1588 = smov [#allocation27]
        %s1589 = scalar_lea.vmem %s1588, 48
        %v1590 = vld [vmem:[%s1589] sm:$0xff]
        %s1591 = smov [#allocation15]
        %s1592 = scalar_lea.vmem %s1591, 48
        %s1593 = smov [#allocation16]
        %s1594 = scalar_lea.vmem %s1593, 48
        %s1595 = smov [#allocation17]
        %s1596 = scalar_lea.vmem %s1595, 48
        %s1597 = smov [#allocation18]
        %s1598 = scalar_lea.vmem %s1597, 48
        %v1599 = vld [vmem:[%s1592] sm:$0xff]
        %v1600 = vld [vmem:[%s1594] sm:$0xff]
        %v1601 = vld [vmem:[%s1596] sm:$0xff]
        %v1602 = vld [vmem:[%s1598] sm:$0xff]
        %v1603 = vmul.f32 %v1587, %v1599
        %v1604 = vmul.f32 %v1590, %v1601
        %v1605 = vsub.f32 %v1603, %v1604
        %v1606 = vmul.f32 %v1587, %v1600
        %v1607 = vmul.f32 %v1590, %v1602
        %v1608 = vsub.f32 %v1606, %v1607
        %v1609 = vmul.f32 %v1590, %v1599
        %v1610 = vmul.f32 %v1587, %v1601
        %v1611 = vadd.f32 %v1609, %v1610
        %v1612 = vmul.f32 %v1590, %v1600
        %v1613 = vmul.f32 %v1587, %v1602
        %v1614 = vadd.f32 %v1612, %v1613
        %1615 = vst [vmem:[%s1592] sm:$0xff] %v1605
        %1616 = vst [vmem:[%s1594] sm:$0xff] %v1608
        %1617 = vst [vmem:[%s1596] sm:$0xff] %v1611
        %1618 = vst [vmem:[%s1598] sm:$0xff] %v1614
        %s1619 = smov [#allocation26]
        %s1620 = scalar_lea.vmem %s1619, 56
        %v1621 = vld [vmem:[%s1620] sm:$0xff]
        %s1622 = smov [#allocation27]
        %s1623 = scalar_lea.vmem %s1622, 56
        %v1624 = vld [vmem:[%s1623] sm:$0xff]
        %s1625 = smov [#allocation15]
        %s1626 = scalar_lea.vmem %s1625, 56
        %s1627 = smov [#allocation16]
        %s1628 = scalar_lea.vmem %s1627, 56
        %s1629 = smov [#allocation17]
        %s1630 = scalar_lea.vmem %s1629, 56
        %s1631 = smov [#allocation18]
        %s1632 = scalar_lea.vmem %s1631, 56
        %v1633 = vld [vmem:[%s1626] sm:$0xff]
        %v1634 = vld [vmem:[%s1628] sm:$0xff]
        %v1635 = vld [vmem:[%s1630] sm:$0xff]
        %v1636 = vld [vmem:[%s1632] sm:$0xff]
        %v1637 = vmul.f32 %v1621, %v1633
        %v1638 = vmul.f32 %v1624, %v1635
        %v1639 = vsub.f32 %v1637, %v1638
        %v1640 = vmul.f32 %v1621, %v1634
        %v1641 = vmul.f32 %v1624, %v1636
        %v1642 = vsub.f32 %v1640, %v1641
        %v1643 = vmul.f32 %v1624, %v1633
        %v1644 = vmul.f32 %v1621, %v1635
        %v1645 = vadd.f32 %v1643, %v1644
        %v1646 = vmul.f32 %v1624, %v1634
        %v1647 = vmul.f32 %v1621, %v1636
        %v1648 = vadd.f32 %v1646, %v1647
        %1649 = vst [vmem:[%s1626] sm:$0xff] %v1639
        %1650 = vst [vmem:[%s1628] sm:$0xff] %v1642
        %1651 = vst [vmem:[%s1630] sm:$0xff] %v1645
        %1652 = vst [vmem:[%s1632] sm:$0xff] %v1648
        %s1653 = smov [#allocation24]
        %v1654 = vld [vmem:[%s1653] ss:$0 sm:$0xff]
        %s1655 = smov [#allocation25]
        %v1656 = vld [vmem:[%s1655] ss:$0 sm:$0xff]
        %s1657 = smov [#allocation15]
        %s1658 = smov [#allocation16]
        %s1659 = smov [#allocation17]
        %s1660 = smov [#allocation18]
        %v1661 = vld [vmem:[%s1657] sm:$0xff]
        %v1662 = vld [vmem:[%s1658] sm:$0xff]
        %v1663 = vld [vmem:[%s1659] sm:$0xff]
        %v1664 = vld [vmem:[%s1660] sm:$0xff]
        %v1665 = vmul.f32 %v1654, %v1661
        %v1666 = vmul.f32 %v1656, %v1662
        %v1667 = vsub.f32 %v1665, %v1666
        %v1668 = vmul.f32 %v1656, %v1661
        %v1669 = vmul.f32 %v1654, %v1662
        %v1670 = vadd.f32 %v1668, %v1669
        %v1671 = vmul.f32 %v1654, %v1663
        %v1672 = vmul.f32 %v1656, %v1664
        %v1673 = vsub.f32 %v1671, %v1672
        %v1674 = vmul.f32 %v1656, %v1663
        %v1675 = vmul.f32 %v1654, %v1664
        %v1676 = vadd.f32 %v1674, %v1675
        %1677 = vst [vmem:[%s1657] sm:$0xff] %v1667
        %1678 = vst [vmem:[%s1658] sm:$0xff] %v1670
        %1679 = vst [vmem:[%s1659] sm:$0xff] %v1673
        %1680 = vst [vmem:[%s1660] sm:$0xff] %v1676
        %s1681 = smov [#allocation15]
        %s1682 = scalar_lea.vmem %s1681, 8
        %s1683 = smov [#allocation16]
        %s1684 = scalar_lea.vmem %s1683, 8
        %s1685 = smov [#allocation17]
        %s1686 = scalar_lea.vmem %s1685, 8
        %s1687 = smov [#allocation18]
        %s1688 = scalar_lea.vmem %s1687, 8
        %v1689 = vld [vmem:[%s1682] sm:$0xff]
        %v1690 = vld [vmem:[%s1684] sm:$0xff]
        %v1691 = vld [vmem:[%s1686] sm:$0xff]
        %v1692 = vld [vmem:[%s1688] sm:$0xff]
        %v1693 = vmul.f32 %v1654, %v1689
        %v1694 = vmul.f32 %v1656, %v1690
        %v1695 = vsub.f32 %v1693, %v1694
        %v1696 = vmul.f32 %v1656, %v1689
        %v1697 = vmul.f32 %v1654, %v1690
        %v1698 = vadd.f32 %v1696, %v1697
        %v1699 = vmul.f32 %v1654, %v1691
        %v1700 = vmul.f32 %v1656, %v1692
        %v1701 = vsub.f32 %v1699, %v1700
        %v1702 = vmul.f32 %v1656, %v1691
        %v1703 = vmul.f32 %v1654, %v1692
        %v1704 = vadd.f32 %v1702, %v1703
        %1705 = vst [vmem:[%s1682] sm:$0xff] %v1695
        %1706 = vst [vmem:[%s1684] sm:$0xff] %v1698
        %1707 = vst [vmem:[%s1686] sm:$0xff] %v1701
        %1708 = vst [vmem:[%s1688] sm:$0xff] %v1704
        %s1709 = smov [#allocation15]
        %s1710 = scalar_lea.vmem %s1709, 16
        %s1711 = smov [#allocation16]
        %s1712 = scalar_lea.vmem %s1711, 16
        %s1713 = smov [#allocation17]
        %s1714 = scalar_lea.vmem %s1713, 16
        %s1715 = smov [#allocation18]
        %s1716 = scalar_lea.vmem %s1715, 16
        %v1717 = vld [vmem:[%s1710] sm:$0xff]
        %v1718 = vld [vmem:[%s1712] sm:$0xff]
        %v1719 = vld [vmem:[%s1714] sm:$0xff]
        %v1720 = vld [vmem:[%s1716] sm:$0xff]
        %v1721 = vmul.f32 %v1654, %v1717
        %v1722 = vmul.f32 %v1656, %v1718
        %v1723 = vsub.f32 %v1721, %v1722
        %v1724 = vmul.f32 %v1656, %v1717
        %v1725 = vmul.f32 %v1654, %v1718
        %v1726 = vadd.f32 %v1724, %v1725
        %v1727 = vmul.f32 %v1654, %v1719
        %v1728 = vmul.f32 %v1656, %v1720
        %v1729 = vsub.f32 %v1727, %v1728
        %v1730 = vmul.f32 %v1656, %v1719
        %v1731 = vmul.f32 %v1654, %v1720
        %v1732 = vadd.f32 %v1730, %v1731
        %1733 = vst [vmem:[%s1710] sm:$0xff] %v1723
        %1734 = vst [vmem:[%s1712] sm:$0xff] %v1726
        %1735 = vst [vmem:[%s1714] sm:$0xff] %v1729
        %1736 = vst [vmem:[%s1716] sm:$0xff] %v1732
        %s1737 = smov [#allocation15]
        %s1738 = scalar_lea.vmem %s1737, 24
        %s1739 = smov [#allocation16]
        %s1740 = scalar_lea.vmem %s1739, 24
        %s1741 = smov [#allocation17]
        %s1742 = scalar_lea.vmem %s1741, 24
        %s1743 = smov [#allocation18]
        %s1744 = scalar_lea.vmem %s1743, 24
        %v1745 = vld [vmem:[%s1738] sm:$0xff]
        %v1746 = vld [vmem:[%s1740] sm:$0xff]
        %v1747 = vld [vmem:[%s1742] sm:$0xff]
        %v1748 = vld [vmem:[%s1744] sm:$0xff]
        %v1749 = vmul.f32 %v1654, %v1745
        %v1750 = vmul.f32 %v1656, %v1746
        %v1751 = vsub.f32 %v1749, %v1750
        %v1752 = vmul.f32 %v1656, %v1745
        %v1753 = vmul.f32 %v1654, %v1746
        %v1754 = vadd.f32 %v1752, %v1753
        %v1755 = vmul.f32 %v1654, %v1747
        %v1756 = vmul.f32 %v1656, %v1748
        %v1757 = vsub.f32 %v1755, %v1756
        %v1758 = vmul.f32 %v1656, %v1747
        %v1759 = vmul.f32 %v1654, %v1748
        %v1760 = vadd.f32 %v1758, %v1759
        %1761 = vst [vmem:[%s1738] sm:$0xff] %v1751
        %1762 = vst [vmem:[%s1740] sm:$0xff] %v1754
        %1763 = vst [vmem:[%s1742] sm:$0xff] %v1757
        %1764 = vst [vmem:[%s1744] sm:$0xff] %v1760
        %s1765 = smov [#allocation15]
        %s1766 = scalar_lea.vmem %s1765, 32
        %s1767 = smov [#allocation16]
        %s1768 = scalar_lea.vmem %s1767, 32
        %s1769 = smov [#allocation17]
        %s1770 = scalar_lea.vmem %s1769, 32
        %s1771 = smov [#allocation18]
        %s1772 = scalar_lea.vmem %s1771, 32
        %v1773 = vld [vmem:[%s1766] sm:$0xff]
        %v1774 = vld [vmem:[%s1768] sm:$0xff]
        %v1775 = vld [vmem:[%s1770] sm:$0xff]
        %v1776 = vld [vmem:[%s1772] sm:$0xff]
        %v1777 = vmul.f32 %v1654, %v1773
        %v1778 = vmul.f32 %v1656, %v1774
        %v1779 = vsub.f32 %v1777, %v1778
        %v1780 = vmul.f32 %v1656, %v1773
        %v1781 = vmul.f32 %v1654, %v1774
        %v1782 = vadd.f32 %v1780, %v1781
        %v1783 = vmul.f32 %v1654, %v1775
        %v1784 = vmul.f32 %v1656, %v1776
        %v1785 = vsub.f32 %v1783, %v1784
        %v1786 = vmul.f32 %v1656, %v1775
        %v1787 = vmul.f32 %v1654, %v1776
        %v1788 = vadd.f32 %v1786, %v1787
        %1789 = vst [vmem:[%s1766] sm:$0xff] %v1779
        %1790 = vst [vmem:[%s1768] sm:$0xff] %v1782
        %1791 = vst [vmem:[%s1770] sm:$0xff] %v1785
        %1792 = vst [vmem:[%s1772] sm:$0xff] %v1788
        %s1793 = smov [#allocation15]
        %s1794 = scalar_lea.vmem %s1793, 40
        %s1795 = smov [#allocation16]
        %s1796 = scalar_lea.vmem %s1795, 40
        %s1797 = smov [#allocation17]
        %s1798 = scalar_lea.vmem %s1797, 40
        %s1799 = smov [#allocation18]
        %s1800 = scalar_lea.vmem %s1799, 40
        %v1801 = vld [vmem:[%s1794] sm:$0xff]
        %v1802 = vld [vmem:[%s1796] sm:$0xff]
        %v1803 = vld [vmem:[%s1798] sm:$0xff]
        %v1804 = vld [vmem:[%s1800] sm:$0xff]
        %v1805 = vmul.f32 %v1654, %v1801
        %v1806 = vmul.f32 %v1656, %v1802
        %v1807 = vsub.f32 %v1805, %v1806
        %v1808 = vmul.f32 %v1656, %v1801
        %v1809 = vmul.f32 %v1654, %v1802
        %v1810 = vadd.f32 %v1808, %v1809
        %v1811 = vmul.f32 %v1654, %v1803
        %v1812 = vmul.f32 %v1656, %v1804
        %v1813 = vsub.f32 %v1811, %v1812
        %v1814 = vmul.f32 %v1656, %v1803
        %v1815 = vmul.f32 %v1654, %v1804
        %v1816 = vadd.f32 %v1814, %v1815
        %1817 = vst [vmem:[%s1794] sm:$0xff] %v1807
        %1818 = vst [vmem:[%s1796] sm:$0xff] %v1810
        %1819 = vst [vmem:[%s1798] sm:$0xff] %v1813
        %1820 = vst [vmem:[%s1800] sm:$0xff] %v1816
        %s1821 = smov [#allocation15]
        %s1822 = scalar_lea.vmem %s1821, 48
        %s1823 = smov [#allocation16]
        %s1824 = scalar_lea.vmem %s1823, 48
        %s1825 = smov [#allocation17]
        %s1826 = scalar_lea.vmem %s1825, 48
        %s1827 = smov [#allocation18]
        %s1828 = scalar_lea.vmem %s1827, 48
        %v1829 = vld [vmem:[%s1822] sm:$0xff]
        %v1830 = vld [vmem:[%s1824] sm:$0xff]
        %v1831 = vld [vmem:[%s1826] sm:$0xff]
        %v1832 = vld [vmem:[%s1828] sm:$0xff]
        %v1833 = vmul.f32 %v1654, %v1829
        %v1834 = vmul.f32 %v1656, %v1830
        %v1835 = vsub.f32 %v1833, %v1834
        %v1836 = vmul.f32 %v1656, %v1829
        %v1837 = vmul.f32 %v1654, %v1830
        %v1838 = vadd.f32 %v1836, %v1837
        %v1839 = vmul.f32 %v1654, %v1831
        %v1840 = vmul.f32 %v1656, %v1832
        %v1841 = vsub.f32 %v1839, %v1840
        %v1842 = vmul.f32 %v1656, %v1831
        %v1843 = vmul.f32 %v1654, %v1832
        %v1844 = vadd.f32 %v1842, %v1843
        %1845 = vst [vmem:[%s1822] sm:$0xff] %v1835
        %1846 = vst [vmem:[%s1824] sm:$0xff] %v1838
        %1847 = vst [vmem:[%s1826] sm:$0xff] %v1841
        %1848 = vst [vmem:[%s1828] sm:$0xff] %v1844
        %s1849 = smov [#allocation15]
        %s1850 = scalar_lea.vmem %s1849, 56
        %s1851 = smov [#allocation16]
        %s1852 = scalar_lea.vmem %s1851, 56
        %s1853 = smov [#allocation17]
        %s1854 = scalar_lea.vmem %s1853, 56
        %s1855 = smov [#allocation18]
        %s1856 = scalar_lea.vmem %s1855, 56
        %v1857 = vld [vmem:[%s1850] sm:$0xff]
        %v1858 = vld [vmem:[%s1852] sm:$0xff]
        %v1859 = vld [vmem:[%s1854] sm:$0xff]
        %v1860 = vld [vmem:[%s1856] sm:$0xff]
        %v1861 = vmul.f32 %v1654, %v1857
        %v1862 = vmul.f32 %v1656, %v1858
        %v1863 = vsub.f32 %v1861, %v1862
        %v1864 = vmul.f32 %v1656, %v1857
        %v1865 = vmul.f32 %v1654, %v1858
        %v1866 = vadd.f32 %v1864, %v1865
        %v1867 = vmul.f32 %v1654, %v1859
        %v1868 = vmul.f32 %v1656, %v1860
        %v1869 = vsub.f32 %v1867, %v1868
        %v1870 = vmul.f32 %v1656, %v1859
        %v1871 = vmul.f32 %v1654, %v1860
        %v1872 = vadd.f32 %v1870, %v1871
        %1873 = vst [vmem:[%s1850] sm:$0xff] %v1863
        %1874 = vst [vmem:[%s1852] sm:$0xff] %v1866
        %1875 = vst [vmem:[%s1854] sm:$0xff] %v1869
        %1876 = vst [vmem:[%s1856] sm:$0xff] %v1872
        %s1877 = smov [#allocation15]
        %s1878 = smov [#allocation22]
        %v1879 = vlaneseq
        %v1880 = vand.u32 %v1879, 127
        %v1881 = vmov %v1880
        %v1882 = vlaneseq
        %v1883 = vshrl.u32 %v1882, 7
        %v1884 = vmov %v1883
        %v1885 = vld [vmem:[%s1878] ss:$0 sm:$0xff]
        %v1886 = vld [vmem:[%s1877] sm:$0xff]
        %vm1889 = vcmp.eq.s32.totalorder %v1884, %v1881
        %v1890 = vsel %vm1889, %v1885, %v1886
        %1891 = vst [vmem:[%s1877] sm:$0xff] %v1890
        %v1892 = vld [vmem:[%s1878] ss:$0 sm:$0xff]
        %s1893 = scalar_lea.vmem %s1877, 8
        %v1894 = vld [vmem:[%s1893] sm:$0xff]
        %v1896 = vadd.s32 %v1884, 8
        %vm1897 = vcmp.eq.s32.totalorder %v1896, %v1881
        %v1898 = vsel %vm1897, %v1892, %v1894
        %1899 = vst [vmem:[%s1893] sm:$0xff] %v1898
        %v1900 = vld [vmem:[%s1878] ss:$0 sm:$0xff]
        %s1901 = scalar_lea.vmem %s1877, 16
        %v1902 = vld [vmem:[%s1901] sm:$0xff]
        %v1904 = vadd.s32 %v1884, 16
        %vm1905 = vcmp.eq.s32.totalorder %v1904, %v1881
        %v1906 = vsel %vm1905, %v1900, %v1902
        %1907 = vst [vmem:[%s1901] sm:$0xff] %v1906
        %v1908 = vld [vmem:[%s1878] ss:$0 sm:$0xff]
        %s1909 = scalar_lea.vmem %s1877, 24
        %v1910 = vld [vmem:[%s1909] sm:$0xff]
        %v1912 = vadd.s32 %v1884, 24
        %vm1913 = vcmp.eq.s32.totalorder %v1912, %v1881
        %v1914 = vsel %vm1913, %v1908, %v1910
        %1915 = vst [vmem:[%s1909] sm:$0xff] %v1914
        %v1916 = vld [vmem:[%s1878] ss:$0 sm:$0xff]
        %s1917 = scalar_lea.vmem %s1877, 32
        %v1918 = vld [vmem:[%s1917] sm:$0xff]
        %v1920 = vadd.s32 %v1884, 32
        %vm1921 = vcmp.eq.s32.totalorder %v1920, %v1881
        %v1922 = vsel %vm1921, %v1916, %v1918
        %1923 = vst [vmem:[%s1917] sm:$0xff] %v1922
        %v1924 = vld [vmem:[%s1878] ss:$0 sm:$0xff]
        %s1925 = scalar_lea.vmem %s1877, 40
        %v1926 = vld [vmem:[%s1925] sm:$0xff]
        %v1928 = vadd.s32 %v1884, 40
        %vm1929 = vcmp.eq.s32.totalorder %v1928, %v1881
        %v1930 = vsel %vm1929, %v1924, %v1926
        %1931 = vst [vmem:[%s1925] sm:$0xff] %v1930
        %v1932 = vld [vmem:[%s1878] ss:$0 sm:$0xff]
        %s1933 = scalar_lea.vmem %s1877, 48
        %v1934 = vld [vmem:[%s1933] sm:$0xff]
        %v1936 = vadd.s32 %v1884, 48
        %vm1937 = vcmp.eq.s32.totalorder %v1936, %v1881
        %v1938 = vsel %vm1937, %v1932, %v1934
        %1939 = vst [vmem:[%s1933] sm:$0xff] %v1938
        %v1940 = vld [vmem:[%s1878] ss:$0 sm:$0xff]
        %s1941 = scalar_lea.vmem %s1877, 56
        %v1942 = vld [vmem:[%s1941] sm:$0xff]
        %v1944 = vadd.s32 %v1884, 56
        %vm1945 = vcmp.eq.s32.totalorder %v1944, %v1881
        %v1946 = vsel %vm1945, %v1940, %v1942
        %1947 = vst [vmem:[%s1941] sm:$0xff] %v1946
        %s1948 = smov [#allocation16]
        %v1949 = vlaneseq
        %v1950 = vand.u32 %v1949, 127
        %v1951 = vmov %v1950
        %v1952 = vlaneseq
        %v1953 = vshrl.u32 %v1952, 7
        %v1954 = vmov %v1953
        %v1955 = vld [vmem:[%s1948] sm:$0xff]
        %vm1958 = vcmp.eq.s32.totalorder %v1954, %v1951
        %v1959 = vsel %vm1958, 0.0, %v1955
        %1960 = vst [vmem:[%s1948] sm:$0xff] %v1959
        %s1961 = scalar_lea.vmem %s1948, 8
        %v1962 = vld [vmem:[%s1961] sm:$0xff]
        %v1964 = vadd.s32 %v1954, 8
        %vm1965 = vcmp.eq.s32.totalorder %v1964, %v1951
        %v1966 = vsel %vm1965, 0.0, %v1962
        %1967 = vst [vmem:[%s1961] sm:$0xff] %v1966
        %s1968 = scalar_lea.vmem %s1948, 16
        %v1969 = vld [vmem:[%s1968] sm:$0xff]
        %v1971 = vadd.s32 %v1954, 16
        %vm1972 = vcmp.eq.s32.totalorder %v1971, %v1951
        %v1973 = vsel %vm1972, 0.0, %v1969
        %1974 = vst [vmem:[%s1968] sm:$0xff] %v1973
        %s1975 = scalar_lea.vmem %s1948, 24
        %v1976 = vld [vmem:[%s1975] sm:$0xff]
        %v1978 = vadd.s32 %v1954, 24
        %vm1979 = vcmp.eq.s32.totalorder %v1978, %v1951
        %v1980 = vsel %vm1979, 0.0, %v1976
        %1981 = vst [vmem:[%s1975] sm:$0xff] %v1980
        %s1982 = scalar_lea.vmem %s1948, 32
        %v1983 = vld [vmem:[%s1982] sm:$0xff]
        %v1985 = vadd.s32 %v1954, 32
        %vm1986 = vcmp.eq.s32.totalorder %v1985, %v1951
        %v1987 = vsel %vm1986, 0.0, %v1983
        %1988 = vst [vmem:[%s1982] sm:$0xff] %v1987
        %s1989 = scalar_lea.vmem %s1948, 40
        %v1990 = vld [vmem:[%s1989] sm:$0xff]
        %v1992 = vadd.s32 %v1954, 40
        %vm1993 = vcmp.eq.s32.totalorder %v1992, %v1951
        %v1994 = vsel %vm1993, 0.0, %v1990
        %1995 = vst [vmem:[%s1989] sm:$0xff] %v1994
        %s1996 = scalar_lea.vmem %s1948, 48
        %v1997 = vld [vmem:[%s1996] sm:$0xff]
        %v1999 = vadd.s32 %v1954, 48
        %vm2000 = vcmp.eq.s32.totalorder %v1999, %v1951
        %v2001 = vsel %vm2000, 0.0, %v1997
        %2002 = vst [vmem:[%s1996] sm:$0xff] %v2001
        %s2003 = scalar_lea.vmem %s1948, 56
        %v2004 = vld [vmem:[%s2003] sm:$0xff]
        %v2006 = vadd.s32 %v1954, 56
        %vm2007 = vcmp.eq.s32.totalorder %v2006, %v1951
        %v2008 = vsel %vm2007, 0.0, %v2004
        %2009 = vst [vmem:[%s2003] sm:$0xff] %v2008
        %s2010 = smov [#allocation17]
        %v2011 = vlaneseq
        %v2012 = vand.u32 %v2011, 127
        %v2013 = vmov %v2012
        %v2014 = vlaneseq
        %v2015 = vshrl.u32 %v2014, 7
        %v2016 = vmov %v2015
        %v2017 = vld [vmem:[%s2010] sm:$0xff]
        %vm2020 = vcmp.eq.s32.totalorder %v2016, %v2013
        %v2021 = vsel %vm2020, 0.0, %v2017
        %2022 = vst [vmem:[%s2010] sm:$0xff] %v2021
        %s2023 = scalar_lea.vmem %s2010, 8
        %v2024 = vld [vmem:[%s2023] sm:$0xff]
        %v2026 = vadd.s32 %v2016, 8
        %vm2027 = vcmp.eq.s32.totalorder %v2026, %v2013
        %v2028 = vsel %vm2027, 0.0, %v2024
        %2029 = vst [vmem:[%s2023] sm:$0xff] %v2028
        %s2030 = scalar_lea.vmem %s2010, 16
        %v2031 = vld [vmem:[%s2030] sm:$0xff]
        %v2033 = vadd.s32 %v2016, 16
        %vm2034 = vcmp.eq.s32.totalorder %v2033, %v2013
        %v2035 = vsel %vm2034, 0.0, %v2031
        %2036 = vst [vmem:[%s2030] sm:$0xff] %v2035
        %s2037 = scalar_lea.vmem %s2010, 24
        %v2038 = vld [vmem:[%s2037] sm:$0xff]
        %v2040 = vadd.s32 %v2016, 24
        %vm2041 = vcmp.eq.s32.totalorder %v2040, %v2013
        %v2042 = vsel %vm2041, 0.0, %v2038
        %2043 = vst [vmem:[%s2037] sm:$0xff] %v2042
        %s2044 = scalar_lea.vmem %s2010, 32
        %v2045 = vld [vmem:[%s2044] sm:$0xff]
        %v2047 = vadd.s32 %v2016, 32
        %vm2048 = vcmp.eq.s32.totalorder %v2047, %v2013
        %v2049 = vsel %vm2048, 0.0, %v2045
        %2050 = vst [vmem:[%s2044] sm:$0xff] %v2049
        %s2051 = scalar_lea.vmem %s2010, 40
        %v2052 = vld [vmem:[%s2051] sm:$0xff]
        %v2054 = vadd.s32 %v2016, 40
        %vm2055 = vcmp.eq.s32.totalorder %v2054, %v2013
        %v2056 = vsel %vm2055, 0.0, %v2052
        %2057 = vst [vmem:[%s2051] sm:$0xff] %v2056
        %s2058 = scalar_lea.vmem %s2010, 48
        %v2059 = vld [vmem:[%s2058] sm:$0xff]
        %v2061 = vadd.s32 %v2016, 48
        %vm2062 = vcmp.eq.s32.totalorder %v2061, %v2013
        %v2063 = vsel %vm2062, 0.0, %v2059
        %2064 = vst [vmem:[%s2058] sm:$0xff] %v2063
        %s2065 = scalar_lea.vmem %s2010, 56
        %v2066 = vld [vmem:[%s2065] sm:$0xff]
        %v2068 = vadd.s32 %v2016, 56
        %vm2069 = vcmp.eq.s32.totalorder %v2068, %v2013
        %v2070 = vsel %vm2069, 0.0, %v2066
        %2071 = vst [vmem:[%s2065] sm:$0xff] %v2070
        %s2072 = smov [#allocation18]
        %s2073 = smov [#allocation23]
        %v2074 = vlaneseq
        %v2075 = vand.u32 %v2074, 127
        %v2076 = vmov %v2075
        %v2077 = vlaneseq
        %v2078 = vshrl.u32 %v2077, 7
        %v2079 = vmov %v2078
        %v2080 = vld [vmem:[%s2073] ss:$0 sm:$0xff]
        %v2081 = vld [vmem:[%s2072] sm:$0xff]
        %vm2084 = vcmp.eq.s32.totalorder %v2079, %v2076
        %v2085 = vsel %vm2084, %v2080, %v2081
        %2086 = vst [vmem:[%s2072] sm:$0xff] %v2085
        %v2087 = vld [vmem:[%s2073] ss:$0 sm:$0xff]
        %s2088 = scalar_lea.vmem %s2072, 8
        %v2089 = vld [vmem:[%s2088] sm:$0xff]
        %v2091 = vadd.s32 %v2079, 8
        %vm2092 = vcmp.eq.s32.totalorder %v2091, %v2076
        %v2093 = vsel %vm2092, %v2087, %v2089
        %2094 = vst [vmem:[%s2088] sm:$0xff] %v2093
        %v2095 = vld [vmem:[%s2073] ss:$0 sm:$0xff]
        %s2096 = scalar_lea.vmem %s2072, 16
        %v2097 = vld [vmem:[%s2096] sm:$0xff]
        %v2099 = vadd.s32 %v2079, 16
        %vm2100 = vcmp.eq.s32.totalorder %v2099, %v2076
        %v2101 = vsel %vm2100, %v2095, %v2097
        %2102 = vst [vmem:[%s2096] sm:$0xff] %v2101
        %v2103 = vld [vmem:[%s2073] ss:$0 sm:$0xff]
        %s2104 = scalar_lea.vmem %s2072, 24
        %v2105 = vld [vmem:[%s2104] sm:$0xff]
        %v2107 = vadd.s32 %v2079, 24
        %vm2108 = vcmp.eq.s32.totalorder %v2107, %v2076
        %v2109 = vsel %vm2108, %v2103, %v2105
        %2110 = vst [vmem:[%s2104] sm:$0xff] %v2109
        %v2111 = vld [vmem:[%s2073] ss:$0 sm:$0xff]
        %s2112 = scalar_lea.vmem %s2072, 32
        %v2113 = vld [vmem:[%s2112] sm:$0xff]
        %v2115 = vadd.s32 %v2079, 32
        %vm2116 = vcmp.eq.s32.totalorder %v2115, %v2076
        %v2117 = vsel %vm2116, %v2111, %v2113
        %2118 = vst [vmem:[%s2112] sm:$0xff] %v2117
        %v2119 = vld [vmem:[%s2073] ss:$0 sm:$0xff]
        %s2120 = scalar_lea.vmem %s2072, 40
        %v2121 = vld [vmem:[%s2120] sm:$0xff]
        %v2123 = vadd.s32 %v2079, 40
        %vm2124 = vcmp.eq.s32.totalorder %v2123, %v2076
        %v2125 = vsel %vm2124, %v2119, %v2121
        %2126 = vst [vmem:[%s2120] sm:$0xff] %v2125
        %v2127 = vld [vmem:[%s2073] ss:$0 sm:$0xff]
        %s2128 = scalar_lea.vmem %s2072, 48
        %v2129 = vld [vmem:[%s2128] sm:$0xff]
        %v2131 = vadd.s32 %v2079, 48
        %vm2132 = vcmp.eq.s32.totalorder %v2131, %v2076
        %v2133 = vsel %vm2132, %v2127, %v2129
        %2134 = vst [vmem:[%s2128] sm:$0xff] %v2133
        %v2135 = vld [vmem:[%s2073] ss:$0 sm:$0xff]
        %s2136 = scalar_lea.vmem %s2072, 56
        %v2137 = vld [vmem:[%s2136] sm:$0xff]
        %v2139 = vadd.s32 %v2079, 56
        %vm2140 = vcmp.eq.s32.totalorder %v2139, %v2076
        %v2141 = vsel %vm2140, %v2135, %v2137
        %2142 = vst [vmem:[%s2136] sm:$0xff] %v2141
        %s2143 = smov [#allocation15]
        %s2144 = smov [#allocation16]
        %v2145 = vld [vmem:[%s2144] sm:$0xff]
        %2146 = vrot.lane.b32.xlu0 %v2145, 1
        %v2147 = vpop.permute.xlu0 %2146
        %v2148 = vld [vmem:[%s2143] sm:$0xff]
        %v2149 = vld [vmem:[%s2143] sm:$0xff]
        %2150 = vrot.lane.b32.xlu0 %v2149, 1
        %v2151 = vpop.permute.xlu0 %2150
        %v2152 = vlaneseq
        %v2153 = vand.u32 %v2152, 127
        %vm2154 = vcmp.eq.s32.totalorder %v2153, 0
        %v2155 = vsel %vm2154, %v2149, %v2151
        %v2156 = vlaneseq
        %v2157 = vand.u32 %v2156, 127
        %vm2158 = vcmp.eq.s32.totalorder %v2157, 1
        %v2159 = vsel %vm2158, %v2147, %v2155
        %v2160 = vlaneseq
        %v2161 = vand.u32 %v2160, 127
        %vm2162 = vcmp.ge.s32.totalorder %v2161, 0
        %vm2163 = vcmp.lt.s32.totalorder %v2161, 64
        %vm2164 = vmand %vm2162, %vm2163
        %v2165 = vsel %vm2164, %v2159, 0.0
        %v2166 = vld [vmem:[%s2144] sm:$0xff]
        %2167 = vrot.lane.b32.xlu0 %v2166, 127
        %v2168 = vpop.permute.xlu0 %2167
        %v2169 = vlaneseq
        %v2170 = vand.u32 %v2169, 127
        %vm2171 = vcmp.eq.s32.totalorder %v2170, 63
        %v2172 = vsel %vm2171, %v2148, %v2168
        %s2173 = smov [#allocation15]
        %s2174 = scalar_lea.vmem %s2173, 8
        %s2175 = smov [#allocation16]
        %s2176 = scalar_lea.vmem %s2175, 8
        %v2177 = vld [vmem:[%s2176] sm:$0xff]
        %2178 = vrot.lane.b32.xlu0 %v2177, 1
        %v2179 = vpop.permute.xlu0 %2178
        %v2180 = vld [vmem:[%s2174] sm:$0xff]
        %v2181 = vld [vmem:[%s2174] sm:$0xff]
        %2182 = vrot.lane.b32.xlu0 %v2181, 1
        %v2183 = vpop.permute.xlu0 %2182
        %v2184 = vlaneseq
        %v2185 = vand.u32 %v2184, 127
        %vm2186 = vcmp.eq.s32.totalorder %v2185, 0
        %v2187 = vsel %vm2186, %v2181, %v2183
        %v2188 = vlaneseq
        %v2189 = vand.u32 %v2188, 127
        %vm2190 = vcmp.eq.s32.totalorder %v2189, 1
        %v2191 = vsel %vm2190, %v2179, %v2187
        %v2192 = vlaneseq
        %v2193 = vand.u32 %v2192, 127
        %vm2194 = vcmp.ge.s32.totalorder %v2193, 0
        %vm2195 = vcmp.lt.s32.totalorder %v2193, 64
        %vm2196 = vmand %vm2194, %vm2195
        %v2197 = vsel %vm2196, %v2191, 0.0
        %v2198 = vld [vmem:[%s2176] sm:$0xff]
        %2199 = vrot.lane.b32.xlu0 %v2198, 127
        %v2200 = vpop.permute.xlu0 %2199
        %v2201 = vlaneseq
        %v2202 = vand.u32 %v2201, 127
        %vm2203 = vcmp.eq.s32.totalorder %v2202, 63
        %v2204 = vsel %vm2203, %v2180, %v2200
        %s2205 = smov [#allocation15]
        %s2206 = scalar_lea.vmem %s2205, 16
        %s2207 = smov [#allocation16]
        %s2208 = scalar_lea.vmem %s2207, 16
        %v2209 = vld [vmem:[%s2208] sm:$0xff]
        %2210 = vrot.lane.b32.xlu0 %v2209, 1
        %v2211 = vpop.permute.xlu0 %2210
        %v2212 = vld [vmem:[%s2206] sm:$0xff]
        %v2213 = vld [vmem:[%s2206] sm:$0xff]
        %2214 = vrot.lane.b32.xlu0 %v2213, 1
        %v2215 = vpop.permute.xlu0 %2214
        %v2216 = vlaneseq
        %v2217 = vand.u32 %v2216, 127
        %vm2218 = vcmp.eq.s32.totalorder %v2217, 0
        %v2219 = vsel %vm2218, %v2213, %v2215
        %v2220 = vlaneseq
        %v2221 = vand.u32 %v2220, 127
        %vm2222 = vcmp.eq.s32.totalorder %v2221, 1
        %v2223 = vsel %vm2222, %v2211, %v2219
        %v2224 = vlaneseq
        %v2225 = vand.u32 %v2224, 127
        %vm2226 = vcmp.ge.s32.totalorder %v2225, 0
        %vm2227 = vcmp.lt.s32.totalorder %v2225, 64
        %vm2228 = vmand %vm2226, %vm2227
        %v2229 = vsel %vm2228, %v2223, 0.0
        %v2230 = vld [vmem:[%s2208] sm:$0xff]
        %2231 = vrot.lane.b32.xlu0 %v2230, 127
        %v2232 = vpop.permute.xlu0 %2231
        %v2233 = vlaneseq
        %v2234 = vand.u32 %v2233, 127
        %vm2235 = vcmp.eq.s32.totalorder %v2234, 63
        %v2236 = vsel %vm2235, %v2212, %v2232
        %s2237 = smov [#allocation15]
        %s2238 = scalar_lea.vmem %s2237, 24
        %s2239 = smov [#allocation16]
        %s2240 = scalar_lea.vmem %s2239, 24
        %v2241 = vld [vmem:[%s2240] sm:$0xff]
        %2242 = vrot.lane.b32.xlu0 %v2241, 1
        %v2243 = vpop.permute.xlu0 %2242
        %v2244 = vld [vmem:[%s2238] sm:$0xff]
        %v2245 = vld [vmem:[%s2238] sm:$0xff]
        %2246 = vrot.lane.b32.xlu0 %v2245, 1
        %v2247 = vpop.permute.xlu0 %2246
        %v2248 = vlaneseq
        %v2249 = vand.u32 %v2248, 127
        %vm2250 = vcmp.eq.s32.totalorder %v2249, 0
        %v2251 = vsel %vm2250, %v2245, %v2247
        %v2252 = vlaneseq
        %v2253 = vand.u32 %v2252, 127
        %vm2254 = vcmp.eq.s32.totalorder %v2253, 1
        %v2255 = vsel %vm2254, %v2243, %v2251
        %v2256 = vlaneseq
        %v2257 = vand.u32 %v2256, 127
        %vm2258 = vcmp.ge.s32.totalorder %v2257, 0
        %vm2259 = vcmp.lt.s32.totalorder %v2257, 64
        %vm2260 = vmand %vm2258, %vm2259
        %v2261 = vsel %vm2260, %v2255, 0.0
        %v2262 = vld [vmem:[%s2240] sm:$0xff]
        %2263 = vrot.lane.b32.xlu0 %v2262, 127
        %v2264 = vpop.permute.xlu0 %2263
        %v2265 = vlaneseq
        %v2266 = vand.u32 %v2265, 127
        %vm2267 = vcmp.eq.s32.totalorder %v2266, 63
        %v2268 = vsel %vm2267, %v2244, %v2264
        %s2269 = smov [#allocation15]
        %s2270 = scalar_lea.vmem %s2269, 32
        %s2271 = smov [#allocation16]
        %s2272 = scalar_lea.vmem %s2271, 32
        %v2273 = vld [vmem:[%s2272] sm:$0xff]
        %2274 = vrot.lane.b32.xlu0 %v2273, 1
        %v2275 = vpop.permute.xlu0 %2274
        %v2276 = vld [vmem:[%s2270] sm:$0xff]
        %v2277 = vld [vmem:[%s2270] sm:$0xff]
        %2278 = vrot.lane.b32.xlu0 %v2277, 1
        %v2279 = vpop.permute.xlu0 %2278
        %v2280 = vlaneseq
        %v2281 = vand.u32 %v2280, 127
        %vm2282 = vcmp.eq.s32.totalorder %v2281, 0
        %v2283 = vsel %vm2282, %v2277, %v2279
        %v2284 = vlaneseq
        %v2285 = vand.u32 %v2284, 127
        %vm2286 = vcmp.eq.s32.totalorder %v2285, 1
        %v2287 = vsel %vm2286, %v2275, %v2283
        %v2288 = vlaneseq
        %v2289 = vand.u32 %v2288, 127
        %vm2290 = vcmp.ge.s32.totalorder %v2289, 0
        %vm2291 = vcmp.lt.s32.totalorder %v2289, 64
        %vm2292 = vmand %vm2290, %vm2291
        %v2293 = vsel %vm2292, %v2287, 0.0
        %v2294 = vld [vmem:[%s2272] sm:$0xff]
        %2295 = vrot.lane.b32.xlu0 %v2294, 127
        %v2296 = vpop.permute.xlu0 %2295
        %v2297 = vlaneseq
        %v2298 = vand.u32 %v2297, 127
        %vm2299 = vcmp.eq.s32.totalorder %v2298, 63
        %v2300 = vsel %vm2299, %v2276, %v2296
        %s2301 = smov [#allocation15]
        %s2302 = scalar_lea.vmem %s2301, 40
        %s2303 = smov [#allocation16]
        %s2304 = scalar_lea.vmem %s2303, 40
        %v2305 = vld [vmem:[%s2304] sm:$0xff]
        %2306 = vrot.lane.b32.xlu0 %v2305, 1
        %v2307 = vpop.permute.xlu0 %2306
        %v2308 = vld [vmem:[%s2302] sm:$0xff]
        %v2309 = vld [vmem:[%s2302] sm:$0xff]
        %2310 = vrot.lane.b32.xlu0 %v2309, 1
        %v2311 = vpop.permute.xlu0 %2310
        %v2312 = vlaneseq
        %v2313 = vand.u32 %v2312, 127
        %vm2314 = vcmp.eq.s32.totalorder %v2313, 0
        %v2315 = vsel %vm2314, %v2309, %v2311
        %v2316 = vlaneseq
        %v2317 = vand.u32 %v2316, 127
        %vm2318 = vcmp.eq.s32.totalorder %v2317, 1
        %v2319 = vsel %vm2318, %v2307, %v2315
        %v2320 = vlaneseq
        %v2321 = vand.u32 %v2320, 127
        %vm2322 = vcmp.ge.s32.totalorder %v2321, 0
        %vm2323 = vcmp.lt.s32.totalorder %v2321, 64
        %vm2324 = vmand %vm2322, %vm2323
        %v2325 = vsel %vm2324, %v2319, 0.0
        %v2326 = vld [vmem:[%s2304] sm:$0xff]
        %2327 = vrot.lane.b32.xlu0 %v2326, 127
        %v2328 = vpop.permute.xlu0 %2327
        %v2329 = vlaneseq
        %v2330 = vand.u32 %v2329, 127
        %vm2331 = vcmp.eq.s32.totalorder %v2330, 63
        %v2332 = vsel %vm2331, %v2308, %v2328
        %s2333 = smov [#allocation15]
        %s2334 = scalar_lea.vmem %s2333, 48
        %s2335 = smov [#allocation16]
        %s2336 = scalar_lea.vmem %s2335, 48
        %v2337 = vld [vmem:[%s2336] sm:$0xff]
        %2338 = vrot.lane.b32.xlu0 %v2337, 1
        %v2339 = vpop.permute.xlu0 %2338
        %v2340 = vld [vmem:[%s2334] sm:$0xff]
        %v2341 = vld [vmem:[%s2334] sm:$0xff]
        %2342 = vrot.lane.b32.xlu0 %v2341, 1
        %v2343 = vpop.permute.xlu0 %2342
        %v2344 = vlaneseq
        %v2345 = vand.u32 %v2344, 127
        %vm2346 = vcmp.eq.s32.totalorder %v2345, 0
        %v2347 = vsel %vm2346, %v2341, %v2343
        %v2348 = vlaneseq
        %v2349 = vand.u32 %v2348, 127
        %vm2350 = vcmp.eq.s32.totalorder %v2349, 1
        %v2351 = vsel %vm2350, %v2339, %v2347
        %v2352 = vlaneseq
        %v2353 = vand.u32 %v2352, 127
        %vm2354 = vcmp.ge.s32.totalorder %v2353, 0
        %vm2355 = vcmp.lt.s32.totalorder %v2353, 64
        %vm2356 = vmand %vm2354, %vm2355
        %v2357 = vsel %vm2356, %v2351, 0.0
        %v2358 = vld [vmem:[%s2336] sm:$0xff]
        %2359 = vrot.lane.b32.xlu0 %v2358, 127
        %v2360 = vpop.permute.xlu0 %2359
        %v2361 = vlaneseq
        %v2362 = vand.u32 %v2361, 127
        %vm2363 = vcmp.eq.s32.totalorder %v2362, 63
        %v2364 = vsel %vm2363, %v2340, %v2360
        %s2365 = smov [#allocation15]
        %s2366 = scalar_lea.vmem %s2365, 56
        %s2367 = smov [#allocation16]
        %s2368 = scalar_lea.vmem %s2367, 56
        %v2369 = vld [vmem:[%s2368] sm:$0xff]
        %2370 = vrot.lane.b32.xlu0 %v2369, 1
        %v2371 = vpop.permute.xlu0 %2370
        %v2372 = vld [vmem:[%s2366] sm:$0xff]
        %v2373 = vld [vmem:[%s2366] sm:$0xff]
        %2374 = vrot.lane.b32.xlu0 %v2373, 1
        %v2375 = vpop.permute.xlu0 %2374
        %v2376 = vlaneseq
        %v2377 = vand.u32 %v2376, 127
        %vm2378 = vcmp.eq.s32.totalorder %v2377, 0
        %v2379 = vsel %vm2378, %v2373, %v2375
        %v2380 = vlaneseq
        %v2381 = vand.u32 %v2380, 127
        %vm2382 = vcmp.eq.s32.totalorder %v2381, 1
        %v2383 = vsel %vm2382, %v2371, %v2379
        %v2384 = vlaneseq
        %v2385 = vand.u32 %v2384, 127
        %vm2386 = vcmp.ge.s32.totalorder %v2385, 0
        %vm2387 = vcmp.lt.s32.totalorder %v2385, 64
        %vm2388 = vmand %vm2386, %vm2387
        %v2389 = vsel %vm2388, %v2383, 0.0
        %v2390 = vld [vmem:[%s2368] sm:$0xff]
        %2391 = vrot.lane.b32.xlu0 %v2390, 127
        %v2392 = vpop.permute.xlu0 %2391
        %v2393 = vlaneseq
        %v2394 = vand.u32 %v2393, 127
        %vm2395 = vcmp.eq.s32.totalorder %v2394, 63
        %v2396 = vsel %vm2395, %v2372, %v2392
        %2397 = vst [vmem:[%s2143] sm:$0xff] %v2165
        %2398 = vst [vmem:[%s2144] sm:$0xff] %v2172
        %2399 = vst [vmem:[%s2174] sm:$0xff] %v2197
        %2400 = vst [vmem:[%s2176] sm:$0xff] %v2204
        %2401 = vst [vmem:[%s2206] sm:$0xff] %v2229
        %2402 = vst [vmem:[%s2208] sm:$0xff] %v2236
        %2403 = vst [vmem:[%s2238] sm:$0xff] %v2261
        %2404 = vst [vmem:[%s2240] sm:$0xff] %v2268
        %2405 = vst [vmem:[%s2270] sm:$0xff] %v2293
        %2406 = vst [vmem:[%s2272] sm:$0xff] %v2300
        %2407 = vst [vmem:[%s2302] sm:$0xff] %v2325
        %2408 = vst [vmem:[%s2304] sm:$0xff] %v2332
        %2409 = vst [vmem:[%s2334] sm:$0xff] %v2357
        %2410 = vst [vmem:[%s2336] sm:$0xff] %v2364
        %2411 = vst [vmem:[%s2366] sm:$0xff] %v2389
        %2412 = vst [vmem:[%s2368] sm:$0xff] %v2396
        %s2413 = smov [#allocation17]
        %s2414 = smov [#allocation18]
        %v2415 = vld [vmem:[%s2414] sm:$0xff]
        %2416 = vrot.lane.b32.xlu0 %v2415, 1
        %v2417 = vpop.permute.xlu0 %2416
        %v2418 = vld [vmem:[%s2413] sm:$0xff]
        %v2419 = vld [vmem:[%s2413] sm:$0xff]
        %2420 = vrot.lane.b32.xlu0 %v2419, 1
        %v2421 = vpop.permute.xlu0 %2420
        %v2422 = vlaneseq
        %v2423 = vand.u32 %v2422, 127
        %vm2424 = vcmp.eq.s32.totalorder %v2423, 0
        %v2425 = vsel %vm2424, %v2419, %v2421
        %v2426 = vlaneseq
        %v2427 = vand.u32 %v2426, 127
        %vm2428 = vcmp.eq.s32.totalorder %v2427, 1
        %v2429 = vsel %vm2428, %v2417, %v2425
        %v2430 = vlaneseq
        %v2431 = vand.u32 %v2430, 127
        %vm2432 = vcmp.ge.s32.totalorder %v2431, 0
        %vm2433 = vcmp.lt.s32.totalorder %v2431, 64
        %vm2434 = vmand %vm2432, %vm2433
        %v2435 = vsel %vm2434, %v2429, 0.0
        %v2436 = vld [vmem:[%s2414] sm:$0xff]
        %2437 = vrot.lane.b32.xlu0 %v2436, 127
        %v2438 = vpop.permute.xlu0 %2437
        %v2439 = vlaneseq
        %v2440 = vand.u32 %v2439, 127
        %vm2441 = vcmp.eq.s32.totalorder %v2440, 63
        %v2442 = vsel %vm2441, %v2418, %v2438
        %s2443 = smov [#allocation17]
        %s2444 = scalar_lea.vmem %s2443, 8
        %s2445 = smov [#allocation18]
        %s2446 = scalar_lea.vmem %s2445, 8
        %v2447 = vld [vmem:[%s2446] sm:$0xff]
        %2448 = vrot.lane.b32.xlu0 %v2447, 1
        %v2449 = vpop.permute.xlu0 %2448
        %v2450 = vld [vmem:[%s2444] sm:$0xff]
        %v2451 = vld [vmem:[%s2444] sm:$0xff]
        %2452 = vrot.lane.b32.xlu0 %v2451, 1
        %v2453 = vpop.permute.xlu0 %2452
        %v2454 = vlaneseq
        %v2455 = vand.u32 %v2454, 127
        %vm2456 = vcmp.eq.s32.totalorder %v2455, 0
        %v2457 = vsel %vm2456, %v2451, %v2453
        %v2458 = vlaneseq
        %v2459 = vand.u32 %v2458, 127
        %vm2460 = vcmp.eq.s32.totalorder %v2459, 1
        %v2461 = vsel %vm2460, %v2449, %v2457
        %v2462 = vlaneseq
        %v2463 = vand.u32 %v2462, 127
        %vm2464 = vcmp.ge.s32.totalorder %v2463, 0
        %vm2465 = vcmp.lt.s32.totalorder %v2463, 64
        %vm2466 = vmand %vm2464, %vm2465
        %v2467 = vsel %vm2466, %v2461, 0.0
        %v2468 = vld [vmem:[%s2446] sm:$0xff]
        %2469 = vrot.lane.b32.xlu0 %v2468, 127
        %v2470 = vpop.permute.xlu0 %2469
        %v2471 = vlaneseq
        %v2472 = vand.u32 %v2471, 127
        %vm2473 = vcmp.eq.s32.totalorder %v2472, 63
        %v2474 = vsel %vm2473, %v2450, %v2470
        %s2475 = smov [#allocation17]
        %s2476 = scalar_lea.vmem %s2475, 16
        %s2477 = smov [#allocation18]
        %s2478 = scalar_lea.vmem %s2477, 16
        %v2479 = vld [vmem:[%s2478] sm:$0xff]
        %2480 = vrot.lane.b32.xlu0 %v2479, 1
        %v2481 = vpop.permute.xlu0 %2480
        %v2482 = vld [vmem:[%s2476] sm:$0xff]
        %v2483 = vld [vmem:[%s2476] sm:$0xff]
        %2484 = vrot.lane.b32.xlu0 %v2483, 1
        %v2485 = vpop.permute.xlu0 %2484
        %v2486 = vlaneseq
        %v2487 = vand.u32 %v2486, 127
        %vm2488 = vcmp.eq.s32.totalorder %v2487, 0
        %v2489 = vsel %vm2488, %v2483, %v2485
        %v2490 = vlaneseq
        %v2491 = vand.u32 %v2490, 127
        %vm2492 = vcmp.eq.s32.totalorder %v2491, 1
        %v2493 = vsel %vm2492, %v2481, %v2489
        %v2494 = vlaneseq
        %v2495 = vand.u32 %v2494, 127
        %vm2496 = vcmp.ge.s32.totalorder %v2495, 0
        %vm2497 = vcmp.lt.s32.totalorder %v2495, 64
        %vm2498 = vmand %vm2496, %vm2497
        %v2499 = vsel %vm2498, %v2493, 0.0
        %v2500 = vld [vmem:[%s2478] sm:$0xff]
        %2501 = vrot.lane.b32.xlu0 %v2500, 127
        %v2502 = vpop.permute.xlu0 %2501
        %v2503 = vlaneseq
        %v2504 = vand.u32 %v2503, 127
        %vm2505 = vcmp.eq.s32.totalorder %v2504, 63
        %v2506 = vsel %vm2505, %v2482, %v2502
        %s2507 = smov [#allocation17]
        %s2508 = scalar_lea.vmem %s2507, 24
        %s2509 = smov [#allocation18]
        %s2510 = scalar_lea.vmem %s2509, 24
        %v2511 = vld [vmem:[%s2510] sm:$0xff]
        %2512 = vrot.lane.b32.xlu0 %v2511, 1
        %v2513 = vpop.permute.xlu0 %2512
        %v2514 = vld [vmem:[%s2508] sm:$0xff]
        %v2515 = vld [vmem:[%s2508] sm:$0xff]
        %2516 = vrot.lane.b32.xlu0 %v2515, 1
        %v2517 = vpop.permute.xlu0 %2516
        %v2518 = vlaneseq
        %v2519 = vand.u32 %v2518, 127
        %vm2520 = vcmp.eq.s32.totalorder %v2519, 0
        %v2521 = vsel %vm2520, %v2515, %v2517
        %v2522 = vlaneseq
        %v2523 = vand.u32 %v2522, 127
        %vm2524 = vcmp.eq.s32.totalorder %v2523, 1
        %v2525 = vsel %vm2524, %v2513, %v2521
        %v2526 = vlaneseq
        %v2527 = vand.u32 %v2526, 127
        %vm2528 = vcmp.ge.s32.totalorder %v2527, 0
        %vm2529 = vcmp.lt.s32.totalorder %v2527, 64
        %vm2530 = vmand %vm2528, %vm2529
        %v2531 = vsel %vm2530, %v2525, 0.0
        %v2532 = vld [vmem:[%s2510] sm:$0xff]
        %2533 = vrot.lane.b32.xlu0 %v2532, 127
        %v2534 = vpop.permute.xlu0 %2533
        %v2535 = vlaneseq
        %v2536 = vand.u32 %v2535, 127
        %vm2537 = vcmp.eq.s32.totalorder %v2536, 63
        %v2538 = vsel %vm2537, %v2514, %v2534
        %s2539 = smov [#allocation17]
        %s2540 = scalar_lea.vmem %s2539, 32
        %s2541 = smov [#allocation18]
        %s2542 = scalar_lea.vmem %s2541, 32
        %v2543 = vld [vmem:[%s2542] sm:$0xff]
        %2544 = vrot.lane.b32.xlu0 %v2543, 1
        %v2545 = vpop.permute.xlu0 %2544
        %v2546 = vld [vmem:[%s2540] sm:$0xff]
        %v2547 = vld [vmem:[%s2540] sm:$0xff]
        %2548 = vrot.lane.b32.xlu0 %v2547, 1
        %v2549 = vpop.permute.xlu0 %2548
        %v2550 = vlaneseq
        %v2551 = vand.u32 %v2550, 127
        %vm2552 = vcmp.eq.s32.totalorder %v2551, 0
        %v2553 = vsel %vm2552, %v2547, %v2549
        %v2554 = vlaneseq
        %v2555 = vand.u32 %v2554, 127
        %vm2556 = vcmp.eq.s32.totalorder %v2555, 1
        %v2557 = vsel %vm2556, %v2545, %v2553
        %v2558 = vlaneseq
        %v2559 = vand.u32 %v2558, 127
        %vm2560 = vcmp.ge.s32.totalorder %v2559, 0
        %vm2561 = vcmp.lt.s32.totalorder %v2559, 64
        %vm2562 = vmand %vm2560, %vm2561
        %v2563 = vsel %vm2562, %v2557, 0.0
        %v2564 = vld [vmem:[%s2542] sm:$0xff]
        %2565 = vrot.lane.b32.xlu0 %v2564, 127
        %v2566 = vpop.permute.xlu0 %2565
        %v2567 = vlaneseq
        %v2568 = vand.u32 %v2567, 127
        %vm2569 = vcmp.eq.s32.totalorder %v2568, 63
        %v2570 = vsel %vm2569, %v2546, %v2566
        %s2571 = smov [#allocation17]
        %s2572 = scalar_lea.vmem %s2571, 40
        %s2573 = smov [#allocation18]
        %s2574 = scalar_lea.vmem %s2573, 40
        %v2575 = vld [vmem:[%s2574] sm:$0xff]
        %2576 = vrot.lane.b32.xlu0 %v2575, 1
        %v2577 = vpop.permute.xlu0 %2576
        %v2578 = vld [vmem:[%s2572] sm:$0xff]
        %v2579 = vld [vmem:[%s2572] sm:$0xff]
        %2580 = vrot.lane.b32.xlu0 %v2579, 1
        %v2581 = vpop.permute.xlu0 %2580
        %v2582 = vlaneseq
        %v2583 = vand.u32 %v2582, 127
        %vm2584 = vcmp.eq.s32.totalorder %v2583, 0
        %v2585 = vsel %vm2584, %v2579, %v2581
        %v2586 = vlaneseq
        %v2587 = vand.u32 %v2586, 127
        %vm2588 = vcmp.eq.s32.totalorder %v2587, 1
        %v2589 = vsel %vm2588, %v2577, %v2585
        %v2590 = vlaneseq
        %v2591 = vand.u32 %v2590, 127
        %vm2592 = vcmp.ge.s32.totalorder %v2591, 0
        %vm2593 = vcmp.lt.s32.totalorder %v2591, 64
        %vm2594 = vmand %vm2592, %vm2593
        %v2595 = vsel %vm2594, %v2589, 0.0
        %v2596 = vld [vmem:[%s2574] sm:$0xff]
        %2597 = vrot.lane.b32.xlu0 %v2596, 127
        %v2598 = vpop.permute.xlu0 %2597
        %v2599 = vlaneseq
        %v2600 = vand.u32 %v2599, 127
        %vm2601 = vcmp.eq.s32.totalorder %v2600, 63
        %v2602 = vsel %vm2601, %v2578, %v2598
        %s2603 = smov [#allocation17]
        %s2604 = scalar_lea.vmem %s2603, 48
        %s2605 = smov [#allocation18]
        %s2606 = scalar_lea.vmem %s2605, 48
        %v2607 = vld [vmem:[%s2606] sm:$0xff]
        %2608 = vrot.lane.b32.xlu0 %v2607, 1
        %v2609 = vpop.permute.xlu0 %2608
        %v2610 = vld [vmem:[%s2604] sm:$0xff]
        %v2611 = vld [vmem:[%s2604] sm:$0xff]
        %2612 = vrot.lane.b32.xlu0 %v2611, 1
        %v2613 = vpop.permute.xlu0 %2612
        %v2614 = vlaneseq
        %v2615 = vand.u32 %v2614, 127
        %vm2616 = vcmp.eq.s32.totalorder %v2615, 0
        %v2617 = vsel %vm2616, %v2611, %v2613
        %v2618 = vlaneseq
        %v2619 = vand.u32 %v2618, 127
        %vm2620 = vcmp.eq.s32.totalorder %v2619, 1
        %v2621 = vsel %vm2620, %v2609, %v2617
        %v2622 = vlaneseq
        %v2623 = vand.u32 %v2622, 127
        %vm2624 = vcmp.ge.s32.totalorder %v2623, 0
        %vm2625 = vcmp.lt.s32.totalorder %v2623, 64
        %vm2626 = vmand %vm2624, %vm2625
        %v2627 = vsel %vm2626, %v2621, 0.0
        %v2628 = vld [vmem:[%s2606] sm:$0xff]
        %2629 = vrot.lane.b32.xlu0 %v2628, 127
        %v2630 = vpop.permute.xlu0 %2629
        %v2631 = vlaneseq
        %v2632 = vand.u32 %v2631, 127
        %vm2633 = vcmp.eq.s32.totalorder %v2632, 63
        %v2634 = vsel %vm2633, %v2610, %v2630
        %s2635 = smov [#allocation17]
        %s2636 = scalar_lea.vmem %s2635, 56
        %s2637 = smov [#allocation18]
        %s2638 = scalar_lea.vmem %s2637, 56
        %v2639 = vld [vmem:[%s2638] sm:$0xff]
        %2640 = vrot.lane.b32.xlu0 %v2639, 1
        %v2641 = vpop.permute.xlu0 %2640
        %v2642 = vld [vmem:[%s2636] sm:$0xff]
        %v2643 = vld [vmem:[%s2636] sm:$0xff]
        %2644 = vrot.lane.b32.xlu0 %v2643, 1
        %v2645 = vpop.permute.xlu0 %2644
        %v2646 = vlaneseq
        %v2647 = vand.u32 %v2646, 127
        %vm2648 = vcmp.eq.s32.totalorder %v2647, 0
        %v2649 = vsel %vm2648, %v2643, %v2645
        %v2650 = vlaneseq
        %v2651 = vand.u32 %v2650, 127
        %vm2652 = vcmp.eq.s32.totalorder %v2651, 1
        %v2653 = vsel %vm2652, %v2641, %v2649
        %v2654 = vlaneseq
        %v2655 = vand.u32 %v2654, 127
        %vm2656 = vcmp.ge.s32.totalorder %v2655, 0
        %vm2657 = vcmp.lt.s32.totalorder %v2655, 64
        %vm2658 = vmand %vm2656, %vm2657
        %v2659 = vsel %vm2658, %v2653, 0.0
        %v2660 = vld [vmem:[%s2638] sm:$0xff]
        %2661 = vrot.lane.b32.xlu0 %v2660, 127
        %v2662 = vpop.permute.xlu0 %2661
        %v2663 = vlaneseq
        %v2664 = vand.u32 %v2663, 127
        %vm2665 = vcmp.eq.s32.totalorder %v2664, 63
        %v2666 = vsel %vm2665, %v2642, %v2662
        %2667 = vst [vmem:[%s2413] sm:$0xff] %v2435
        %2668 = vst [vmem:[%s2414] sm:$0xff] %v2442
        %2669 = vst [vmem:[%s2444] sm:$0xff] %v2467
        %2670 = vst [vmem:[%s2446] sm:$0xff] %v2474
        %2671 = vst [vmem:[%s2476] sm:$0xff] %v2499
        %2672 = vst [vmem:[%s2478] sm:$0xff] %v2506
        %2673 = vst [vmem:[%s2508] sm:$0xff] %v2531
        %2674 = vst [vmem:[%s2510] sm:$0xff] %v2538
        %2675 = vst [vmem:[%s2540] sm:$0xff] %v2563
        %2676 = vst [vmem:[%s2542] sm:$0xff] %v2570
        %2677 = vst [vmem:[%s2572] sm:$0xff] %v2595
        %2678 = vst [vmem:[%s2574] sm:$0xff] %v2602
        %2679 = vst [vmem:[%s2604] sm:$0xff] %v2627
        %2680 = vst [vmem:[%s2606] sm:$0xff] %v2634
        %2681 = vst [vmem:[%s2636] sm:$0xff] %v2659
        %2682 = vst [vmem:[%s2638] sm:$0xff] %v2666
        %s2683 = smov [#allocation15]
        %s2684 = smov [#allocation17]
        %v2685 = vld [vmem:[%s2683] ss:$0 sm:$0xff]
        %s2687 = scalar_lea.vmem %s2683, 4294967295
        %v2688 = vld [vmem:[%s2687] sm:$0xfe]
        %v2689 = vlaneseq
        %v2690 = vshrl.u32 %v2689, 7
        %vm2691 = vcmp.eq.s32.totalorder %v2690, 0
        %v2692 = vsel %vm2691, %v2685, %v2688
        %s2693 = scalar_lea.vmem %s2683, 7
        %v2694 = vld [vmem:[%s2693] ss:$0 sm:$0xff]
        %2695 = vst [vmem:[%s2683] sm:$0xff] %v2692
        %s2696 = scalar_lea.vmem %s2683, 8
        %s2698 = scalar_lea.vmem %s2696, 4294967295
        %v2699 = vld [vmem:[%s2698] sm:$0xfe]
        %v2700 = vlaneseq
        %v2701 = vshrl.u32 %v2700, 7
        %vm2702 = vcmp.eq.s32.totalorder %v2701, 0
        %v2703 = vsel %vm2702, %v2694, %v2699
        %s2704 = scalar_lea.vmem %s2696, 7
        %v2705 = vld [vmem:[%s2704] ss:$0 sm:$0xff]
        %2706 = vst [vmem:[%s2696] sm:$0xff] %v2703
        %s2707 = scalar_lea.vmem %s2683, 16
        %s2709 = scalar_lea.vmem %s2707, 4294967295
        %v2710 = vld [vmem:[%s2709] sm:$0xfe]
        %v2711 = vlaneseq
        %v2712 = vshrl.u32 %v2711, 7
        %vm2713 = vcmp.eq.s32.totalorder %v2712, 0
        %v2714 = vsel %vm2713, %v2705, %v2710
        %s2715 = scalar_lea.vmem %s2707, 7
        %v2716 = vld [vmem:[%s2715] ss:$0 sm:$0xff]
        %2717 = vst [vmem:[%s2707] sm:$0xff] %v2714
        %s2718 = scalar_lea.vmem %s2683, 24
        %s2720 = scalar_lea.vmem %s2718, 4294967295
        %v2721 = vld [vmem:[%s2720] sm:$0xfe]
        %v2722 = vlaneseq
        %v2723 = vshrl.u32 %v2722, 7
        %vm2724 = vcmp.eq.s32.totalorder %v2723, 0
        %v2725 = vsel %vm2724, %v2716, %v2721
        %s2726 = scalar_lea.vmem %s2718, 7
        %v2727 = vld [vmem:[%s2726] ss:$0 sm:$0xff]
        %2728 = vst [vmem:[%s2718] sm:$0xff] %v2725
        %s2729 = scalar_lea.vmem %s2683, 32
        %s2731 = scalar_lea.vmem %s2729, 4294967295
        %v2732 = vld [vmem:[%s2731] sm:$0xfe]
        %v2733 = vlaneseq
        %v2734 = vshrl.u32 %v2733, 7
        %vm2735 = vcmp.eq.s32.totalorder %v2734, 0
        %v2736 = vsel %vm2735, %v2727, %v2732
        %s2737 = scalar_lea.vmem %s2729, 7
        %v2738 = vld [vmem:[%s2737] ss:$0 sm:$0xff]
        %2739 = vst [vmem:[%s2729] sm:$0xff] %v2736
        %s2740 = scalar_lea.vmem %s2683, 40
        %s2742 = scalar_lea.vmem %s2740, 4294967295
        %v2743 = vld [vmem:[%s2742] sm:$0xfe]
        %v2744 = vlaneseq
        %v2745 = vshrl.u32 %v2744, 7
        %vm2746 = vcmp.eq.s32.totalorder %v2745, 0
        %v2747 = vsel %vm2746, %v2738, %v2743
        %s2748 = scalar_lea.vmem %s2740, 7
        %v2749 = vld [vmem:[%s2748] ss:$0 sm:$0xff]
        %2750 = vst [vmem:[%s2740] sm:$0xff] %v2747
        %s2751 = scalar_lea.vmem %s2683, 48
        %s2753 = scalar_lea.vmem %s2751, 4294967295
        %v2754 = vld [vmem:[%s2753] sm:$0xfe]
        %v2755 = vlaneseq
        %v2756 = vshrl.u32 %v2755, 7
        %vm2757 = vcmp.eq.s32.totalorder %v2756, 0
        %v2758 = vsel %vm2757, %v2749, %v2754
        %s2759 = scalar_lea.vmem %s2751, 7
        %v2760 = vld [vmem:[%s2759] ss:$0 sm:$0xff]
        %2761 = vst [vmem:[%s2751] sm:$0xff] %v2758
        %s2762 = scalar_lea.vmem %s2683, 56
        %s2764 = scalar_lea.vmem %s2762, 4294967295
        %v2765 = vld [vmem:[%s2764] sm:$0xfe]
        %v2766 = vlaneseq
        %v2767 = vshrl.u32 %v2766, 7
        %vm2768 = vcmp.eq.s32.totalorder %v2767, 0
        %v2769 = vsel %vm2768, %v2760, %v2765
        %s2770 = scalar_lea.vmem %s2762, 7
        %v2771 = vld [vmem:[%s2770] ss:$0 sm:$0xff]
        %2772 = vst [vmem:[%s2762] sm:$0xff] %v2769
        %v2773 = vld [vmem:[%s2684] ss:$0 sm:$0xff]
        %s2774 = scalar_lea.vmem %s2683, 1
        %2775 = vst [vmem:[%s2774] sm:$0x1] %v2773
        %s2776 = scalar_lea.vmem %s2684, 56
        %s2777 = scalar_lea.vmem %s2776, 1
        %v2778 = vld [vmem:[%s2777] sm:$0x7f]
        %v2779 = vlaneseq
        %v2780 = vshrl.u32 %v2779, 7
        %vm2781 = vcmp.eq.s32.totalorder %v2780, 7
        %v2782 = vsel %vm2781, %v2771, %v2778
        %v2783 = vld [vmem:[%s2776] ss:$0 sm:$0xff]
        %2784 = vst [vmem:[%s2776] sm:$0xff] %v2782
        %s2785 = scalar_lea.vmem %s2684, 48
        %s2786 = scalar_lea.vmem %s2785, 1
        %v2787 = vld [vmem:[%s2786] sm:$0x7f]
        %v2788 = vlaneseq
        %v2789 = vshrl.u32 %v2788, 7
        %vm2790 = vcmp.eq.s32.totalorder %v2789, 7
        %v2791 = vsel %vm2790, %v2783, %v2787
        %v2792 = vld [vmem:[%s2785] ss:$0 sm:$0xff]
        %2793 = vst [vmem:[%s2785] sm:$0xff] %v2791
        %s2794 = scalar_lea.vmem %s2684, 40
        %s2795 = scalar_lea.vmem %s2794, 1
        %v2796 = vld [vmem:[%s2795] sm:$0x7f]
        %v2797 = vlaneseq
        %v2798 = vshrl.u32 %v2797, 7
        %vm2799 = vcmp.eq.s32.totalorder %v2798, 7
        %v2800 = vsel %vm2799, %v2792, %v2796
        %v2801 = vld [vmem:[%s2794] ss:$0 sm:$0xff]
        %2802 = vst [vmem:[%s2794] sm:$0xff] %v2800
        %s2803 = scalar_lea.vmem %s2684, 32
        %s2804 = scalar_lea.vmem %s2803, 1
        %v2805 = vld [vmem:[%s2804] sm:$0x7f]
        %v2806 = vlaneseq
        %v2807 = vshrl.u32 %v2806, 7
        %vm2808 = vcmp.eq.s32.totalorder %v2807, 7
        %v2809 = vsel %vm2808, %v2801, %v2805
        %v2810 = vld [vmem:[%s2803] ss:$0 sm:$0xff]
        %2811 = vst [vmem:[%s2803] sm:$0xff] %v2809
        %s2812 = scalar_lea.vmem %s2684, 24
        %s2813 = scalar_lea.vmem %s2812, 1
        %v2814 = vld [vmem:[%s2813] sm:$0x7f]
        %v2815 = vlaneseq
        %v2816 = vshrl.u32 %v2815, 7
        %vm2817 = vcmp.eq.s32.totalorder %v2816, 7
        %v2818 = vsel %vm2817, %v2810, %v2814
        %v2819 = vld [vmem:[%s2812] ss:$0 sm:$0xff]
        %2820 = vst [vmem:[%s2812] sm:$0xff] %v2818
        %s2821 = scalar_lea.vmem %s2684, 16
        %s2822 = scalar_lea.vmem %s2821, 1
        %v2823 = vld [vmem:[%s2822] sm:$0x7f]
        %v2824 = vlaneseq
        %v2825 = vshrl.u32 %v2824, 7
        %vm2826 = vcmp.eq.s32.totalorder %v2825, 7
        %v2827 = vsel %vm2826, %v2819, %v2823
        %v2828 = vld [vmem:[%s2821] ss:$0 sm:$0xff]
        %2829 = vst [vmem:[%s2821] sm:$0xff] %v2827
        %s2830 = scalar_lea.vmem %s2684, 8
        %s2831 = scalar_lea.vmem %s2830, 1
        %v2832 = vld [vmem:[%s2831] sm:$0x7f]
        %v2833 = vlaneseq
        %v2834 = vshrl.u32 %v2833, 7
        %vm2835 = vcmp.eq.s32.totalorder %v2834, 7
        %v2836 = vsel %vm2835, %v2828, %v2832
        %v2837 = vld [vmem:[%s2830] ss:$0 sm:$0xff]
        %2838 = vst [vmem:[%s2830] sm:$0xff] %v2836
        %s2839 = scalar_lea.vmem %s2684, 1
        %v2840 = vld [vmem:[%s2839] sm:$0x7f]
        %v2841 = vlaneseq
        %v2842 = vshrl.u32 %v2841, 7
        %vm2843 = vcmp.eq.s32.totalorder %v2842, 7
        %v2844 = vsel %vm2843, %v2837, %v2840
        %v2845 = vld [vmem:[%s2684] ss:$0 sm:$0xff]
        %2846 = vst [vmem:[%s2684] sm:$0xff] %v2844
        %s2847 = smov [#allocation16]
        %s2848 = smov [#allocation18]
        %v2849 = vld [vmem:[%s2847] ss:$0 sm:$0xff]
        %s2851 = scalar_lea.vmem %s2847, 4294967295
        %v2852 = vld [vmem:[%s2851] sm:$0xfe]
        %v2853 = vlaneseq
        %v2854 = vshrl.u32 %v2853, 7
        %vm2855 = vcmp.eq.s32.totalorder %v2854, 0
        %v2856 = vsel %vm2855, %v2849, %v2852
        %s2857 = scalar_lea.vmem %s2847, 7
        %v2858 = vld [vmem:[%s2857] ss:$0 sm:$0xff]
        %2859 = vst [vmem:[%s2847] sm:$0xff] %v2856
        %s2860 = scalar_lea.vmem %s2847, 8
        %s2862 = scalar_lea.vmem %s2860, 4294967295
        %v2863 = vld [vmem:[%s2862] sm:$0xfe]
        %v2864 = vlaneseq
        %v2865 = vshrl.u32 %v2864, 7
        %vm2866 = vcmp.eq.s32.totalorder %v2865, 0
        %v2867 = vsel %vm2866, %v2858, %v2863
        %s2868 = scalar_lea.vmem %s2860, 7
        %v2869 = vld [vmem:[%s2868] ss:$0 sm:$0xff]
        %2870 = vst [vmem:[%s2860] sm:$0xff] %v2867
        %s2871 = scalar_lea.vmem %s2847, 16
        %s2873 = scalar_lea.vmem %s2871, 4294967295
        %v2874 = vld [vmem:[%s2873] sm:$0xfe]
        %v2875 = vlaneseq
        %v2876 = vshrl.u32 %v2875, 7
        %vm2877 = vcmp.eq.s32.totalorder %v2876, 0
        %v2878 = vsel %vm2877, %v2869, %v2874
        %s2879 = scalar_lea.vmem %s2871, 7
        %v2880 = vld [vmem:[%s2879] ss:$0 sm:$0xff]
        %2881 = vst [vmem:[%s2871] sm:$0xff] %v2878
        %s2882 = scalar_lea.vmem %s2847, 24
        %s2884 = scalar_lea.vmem %s2882, 4294967295
        %v2885 = vld [vmem:[%s2884] sm:$0xfe]
        %v2886 = vlaneseq
        %v2887 = vshrl.u32 %v2886, 7
        %vm2888 = vcmp.eq.s32.totalorder %v2887, 0
        %v2889 = vsel %vm2888, %v2880, %v2885
        %s2890 = scalar_lea.vmem %s2882, 7
        %v2891 = vld [vmem:[%s2890] ss:$0 sm:$0xff]
        %2892 = vst [vmem:[%s2882] sm:$0xff] %v2889
        %s2893 = scalar_lea.vmem %s2847, 32
        %s2895 = scalar_lea.vmem %s2893, 4294967295
        %v2896 = vld [vmem:[%s2895] sm:$0xfe]
        %v2897 = vlaneseq
        %v2898 = vshrl.u32 %v2897, 7
        %vm2899 = vcmp.eq.s32.totalorder %v2898, 0
        %v2900 = vsel %vm2899, %v2891, %v2896
        %s2901 = scalar_lea.vmem %s2893, 7
        %v2902 = vld [vmem:[%s2901] ss:$0 sm:$0xff]
        %2903 = vst [vmem:[%s2893] sm:$0xff] %v2900
        %s2904 = scalar_lea.vmem %s2847, 40
        %s2906 = scalar_lea.vmem %s2904, 4294967295
        %v2907 = vld [vmem:[%s2906] sm:$0xfe]
        %v2908 = vlaneseq
        %v2909 = vshrl.u32 %v2908, 7
        %vm2910 = vcmp.eq.s32.totalorder %v2909, 0
        %v2911 = vsel %vm2910, %v2902, %v2907
        %s2912 = scalar_lea.vmem %s2904, 7
        %v2913 = vld [vmem:[%s2912] ss:$0 sm:$0xff]
        %2914 = vst [vmem:[%s2904] sm:$0xff] %v2911
        %s2915 = scalar_lea.vmem %s2847, 48
        %s2917 = scalar_lea.vmem %s2915, 4294967295
        %v2918 = vld [vmem:[%s2917] sm:$0xfe]
        %v2919 = vlaneseq
        %v2920 = vshrl.u32 %v2919, 7
        %vm2921 = vcmp.eq.s32.totalorder %v2920, 0
        %v2922 = vsel %vm2921, %v2913, %v2918
        %s2923 = scalar_lea.vmem %s2915, 7
        %v2924 = vld [vmem:[%s2923] ss:$0 sm:$0xff]
        %2925 = vst [vmem:[%s2915] sm:$0xff] %v2922
        %s2926 = scalar_lea.vmem %s2847, 56
        %s2928 = scalar_lea.vmem %s2926, 4294967295
        %v2929 = vld [vmem:[%s2928] sm:$0xfe]
        %v2930 = vlaneseq
        %v2931 = vshrl.u32 %v2930, 7
        %vm2932 = vcmp.eq.s32.totalorder %v2931, 0
        %v2933 = vsel %vm2932, %v2924, %v2929
        %s2934 = scalar_lea.vmem %s2926, 7
        %v2935 = vld [vmem:[%s2934] ss:$0 sm:$0xff]
        %2936 = vst [vmem:[%s2926] sm:$0xff] %v2933
        %v2937 = vld [vmem:[%s2848] ss:$0 sm:$0xff]
        %s2938 = scalar_lea.vmem %s2847, 1
        %2939 = vst [vmem:[%s2938] sm:$0x1] %v2937
        %s2940 = scalar_lea.vmem %s2848, 56
        %s2941 = scalar_lea.vmem %s2940, 1
        %v2942 = vld [vmem:[%s2941] sm:$0x7f]
        %v2943 = vlaneseq
        %v2944 = vshrl.u32 %v2943, 7
        %vm2945 = vcmp.eq.s32.totalorder %v2944, 7
        %v2946 = vsel %vm2945, %v2935, %v2942
        %v2947 = vld [vmem:[%s2940] ss:$0 sm:$0xff]
        %2948 = vst [vmem:[%s2940] sm:$0xff] %v2946
        %s2949 = scalar_lea.vmem %s2848, 48
        %s2950 = scalar_lea.vmem %s2949, 1
        %v2951 = vld [vmem:[%s2950] sm:$0x7f]
        %v2952 = vlaneseq
        %v2953 = vshrl.u32 %v2952, 7
        %vm2954 = vcmp.eq.s32.totalorder %v2953, 7
        %v2955 = vsel %vm2954, %v2947, %v2951
        %v2956 = vld [vmem:[%s2949] ss:$0 sm:$0xff]
        %2957 = vst [vmem:[%s2949] sm:$0xff] %v2955
        %s2958 = scalar_lea.vmem %s2848, 40
        %s2959 = scalar_lea.vmem %s2958, 1
        %v2960 = vld [vmem:[%s2959] sm:$0x7f]
        %v2961 = vlaneseq
        %v2962 = vshrl.u32 %v2961, 7
        %vm2963 = vcmp.eq.s32.totalorder %v2962, 7
        %v2964 = vsel %vm2963, %v2956, %v2960
        %v2965 = vld [vmem:[%s2958] ss:$0 sm:$0xff]
        %2966 = vst [vmem:[%s2958] sm:$0xff] %v2964
        %s2967 = scalar_lea.vmem %s2848, 32
        %s2968 = scalar_lea.vmem %s2967, 1
        %v2969 = vld [vmem:[%s2968] sm:$0x7f]
        %v2970 = vlaneseq
        %v2971 = vshrl.u32 %v2970, 7
        %vm2972 = vcmp.eq.s32.totalorder %v2971, 7
        %v2973 = vsel %vm2972, %v2965, %v2969
        %v2974 = vld [vmem:[%s2967] ss:$0 sm:$0xff]
        %2975 = vst [vmem:[%s2967] sm:$0xff] %v2973
        %s2976 = scalar_lea.vmem %s2848, 24
        %s2977 = scalar_lea.vmem %s2976, 1
        %v2978 = vld [vmem:[%s2977] sm:$0x7f]
        %v2979 = vlaneseq
        %v2980 = vshrl.u32 %v2979, 7
        %vm2981 = vcmp.eq.s32.totalorder %v2980, 7
        %v2982 = vsel %vm2981, %v2974, %v2978
        %v2983 = vld [vmem:[%s2976] ss:$0 sm:$0xff]
        %2984 = vst [vmem:[%s2976] sm:$0xff] %v2982
        %s2985 = scalar_lea.vmem %s2848, 16
        %s2986 = scalar_lea.vmem %s2985, 1
        %v2987 = vld [vmem:[%s2986] sm:$0x7f]
        %v2988 = vlaneseq
        %v2989 = vshrl.u32 %v2988, 7
        %vm2990 = vcmp.eq.s32.totalorder %v2989, 7
        %v2991 = vsel %vm2990, %v2983, %v2987
        %v2992 = vld [vmem:[%s2985] ss:$0 sm:$0xff]
        %2993 = vst [vmem:[%s2985] sm:$0xff] %v2991
        %s2994 = scalar_lea.vmem %s2848, 8
        %s2995 = scalar_lea.vmem %s2994, 1
        %v2996 = vld [vmem:[%s2995] sm:$0x7f]
        %v2997 = vlaneseq
        %v2998 = vshrl.u32 %v2997, 7
        %vm2999 = vcmp.eq.s32.totalorder %v2998, 7
        %v3000 = vsel %vm2999, %v2992, %v2996
        %v3001 = vld [vmem:[%s2994] ss:$0 sm:$0xff]
        %3002 = vst [vmem:[%s2994] sm:$0xff] %v3000
        %s3003 = scalar_lea.vmem %s2848, 1
        %v3004 = vld [vmem:[%s3003] sm:$0x7f]
        %v3005 = vlaneseq
        %v3006 = vshrl.u32 %v3005, 7
        %vm3007 = vcmp.eq.s32.totalorder %v3006, 7
        %v3008 = vsel %vm3007, %v3001, %v3004
        %v3009 = vld [vmem:[%s2848] ss:$0 sm:$0xff]
        %3010 = vst [vmem:[%s2848] sm:$0xff] %v3008
        %s3011 = smov [#allocation26]
        %v3012 = vld [vmem:[%s3011] sm:$0xff]
        %s3013 = smov [#allocation27]
        %v3014 = vld [vmem:[%s3013] sm:$0xff]
        %s3015 = smov [#allocation8]
        %s3016 = smov [#allocation10]
        %s3017 = smov [#allocation12]
        %s3018 = smov [#allocation13]
        %v3019 = vld [vmem:[%s3015] sm:$0xff]
        %v3020 = vld [vmem:[%s3016] sm:$0xff]
        %v3021 = vld [vmem:[%s3017] sm:$0xff]
        %v3022 = vld [vmem:[%s3018] sm:$0xff]
        %v3023 = vmul.f32 %v3012, %v3019
        %v3024 = vmul.f32 %v3014, %v3021
        %v3025 = vsub.f32 %v3023, %v3024
        %v3026 = vmul.f32 %v3012, %v3020
        %v3027 = vmul.f32 %v3014, %v3022
        %v3028 = vsub.f32 %v3026, %v3027
        %v3029 = vmul.f32 %v3014, %v3019
        %v3030 = vmul.f32 %v3012, %v3021
        %v3031 = vadd.f32 %v3029, %v3030
        %v3032 = vmul.f32 %v3014, %v3020
        %v3033 = vmul.f32 %v3012, %v3022
        %v3034 = vadd.f32 %v3032, %v3033
        %3035 = vst [vmem:[%s3015] sm:$0xff] %v3025
        %3036 = vst [vmem:[%s3016] sm:$0xff] %v3028
        %3037 = vst [vmem:[%s3017] sm:$0xff] %v3031
        %3038 = vst [vmem:[%s3018] sm:$0xff] %v3034
        %s3039 = smov [#allocation26]
        %s3040 = scalar_lea.vmem %s3039, 8
        %v3041 = vld [vmem:[%s3040] sm:$0xff]
        %s3042 = smov [#allocation27]
        %s3043 = scalar_lea.vmem %s3042, 8
        %v3044 = vld [vmem:[%s3043] sm:$0xff]
        %s3045 = smov [#allocation8]
        %s3046 = scalar_lea.vmem %s3045, 8
        %s3047 = smov [#allocation10]
        %s3048 = scalar_lea.vmem %s3047, 8
        %s3049 = smov [#allocation12]
        %s3050 = scalar_lea.vmem %s3049, 8
        %s3051 = smov [#allocation13]
        %s3052 = scalar_lea.vmem %s3051, 8
        %v3053 = vld [vmem:[%s3046] sm:$0xff]
        %v3054 = vld [vmem:[%s3048] sm:$0xff]
        %v3055 = vld [vmem:[%s3050] sm:$0xff]
        %v3056 = vld [vmem:[%s3052] sm:$0xff]
        %v3057 = vmul.f32 %v3041, %v3053
        %v3058 = vmul.f32 %v3044, %v3055
        %v3059 = vsub.f32 %v3057, %v3058
        %v3060 = vmul.f32 %v3041, %v3054
        %v3061 = vmul.f32 %v3044, %v3056
        %v3062 = vsub.f32 %v3060, %v3061
        %v3063 = vmul.f32 %v3044, %v3053
        %v3064 = vmul.f32 %v3041, %v3055
        %v3065 = vadd.f32 %v3063, %v3064
        %v3066 = vmul.f32 %v3044, %v3054
        %v3067 = vmul.f32 %v3041, %v3056
        %v3068 = vadd.f32 %v3066, %v3067
        %3069 = vst [vmem:[%s3046] sm:$0xff] %v3059
        %3070 = vst [vmem:[%s3048] sm:$0xff] %v3062
        %3071 = vst [vmem:[%s3050] sm:$0xff] %v3065
        %3072 = vst [vmem:[%s3052] sm:$0xff] %v3068
        %s3073 = smov [#allocation26]
        %s3074 = scalar_lea.vmem %s3073, 16
        %v3075 = vld [vmem:[%s3074] sm:$0xff]
        %s3076 = smov [#allocation27]
        %s3077 = scalar_lea.vmem %s3076, 16
        %v3078 = vld [vmem:[%s3077] sm:$0xff]
        %s3079 = smov [#allocation8]
        %s3080 = scalar_lea.vmem %s3079, 16
        %s3081 = smov [#allocation10]
        %s3082 = scalar_lea.vmem %s3081, 16
        %s3083 = smov [#allocation12]
        %s3084 = scalar_lea.vmem %s3083, 16
        %s3085 = smov [#allocation13]
        %s3086 = scalar_lea.vmem %s3085, 16
        %v3087 = vld [vmem:[%s3080] sm:$0xff]
        %v3088 = vld [vmem:[%s3082] sm:$0xff]
        %v3089 = vld [vmem:[%s3084] sm:$0xff]
        %v3090 = vld [vmem:[%s3086] sm:$0xff]
        %v3091 = vmul.f32 %v3075, %v3087
        %v3092 = vmul.f32 %v3078, %v3089
        %v3093 = vsub.f32 %v3091, %v3092
        %v3094 = vmul.f32 %v3075, %v3088
        %v3095 = vmul.f32 %v3078, %v3090
        %v3096 = vsub.f32 %v3094, %v3095
        %v3097 = vmul.f32 %v3078, %v3087
        %v3098 = vmul.f32 %v3075, %v3089
        %v3099 = vadd.f32 %v3097, %v3098
        %v3100 = vmul.f32 %v3078, %v3088
        %v3101 = vmul.f32 %v3075, %v3090
        %v3102 = vadd.f32 %v3100, %v3101
        %3103 = vst [vmem:[%s3080] sm:$0xff] %v3093
        %3104 = vst [vmem:[%s3082] sm:$0xff] %v3096
        %3105 = vst [vmem:[%s3084] sm:$0xff] %v3099
        %3106 = vst [vmem:[%s3086] sm:$0xff] %v3102
        %s3107 = smov [#allocation26]
        %s3108 = scalar_lea.vmem %s3107, 24
        %v3109 = vld [vmem:[%s3108] sm:$0xff]
        %s3110 = smov [#allocation27]
        %s3111 = scalar_lea.vmem %s3110, 24
        %v3112 = vld [vmem:[%s3111] sm:$0xff]
        %s3113 = smov [#allocation8]
        %s3114 = scalar_lea.vmem %s3113, 24
        %s3115 = smov [#allocation10]
        %s3116 = scalar_lea.vmem %s3115, 24
        %s3117 = smov [#allocation12]
        %s3118 = scalar_lea.vmem %s3117, 24
        %s3119 = smov [#allocation13]
        %s3120 = scalar_lea.vmem %s3119, 24
        %v3121 = vld [vmem:[%s3114] sm:$0xff]
        %v3122 = vld [vmem:[%s3116] sm:$0xff]
        %v3123 = vld [vmem:[%s3118] sm:$0xff]
        %v3124 = vld [vmem:[%s3120] sm:$0xff]
        %v3125 = vmul.f32 %v3109, %v3121
        %v3126 = vmul.f32 %v3112, %v3123
        %v3127 = vsub.f32 %v3125, %v3126
        %v3128 = vmul.f32 %v3109, %v3122
        %v3129 = vmul.f32 %v3112, %v3124
        %v3130 = vsub.f32 %v3128, %v3129
        %v3131 = vmul.f32 %v3112, %v3121
        %v3132 = vmul.f32 %v3109, %v3123
        %v3133 = vadd.f32 %v3131, %v3132
        %v3134 = vmul.f32 %v3112, %v3122
        %v3135 = vmul.f32 %v3109, %v3124
        %v3136 = vadd.f32 %v3134, %v3135
        %3137 = vst [vmem:[%s3114] sm:$0xff] %v3127
        %3138 = vst [vmem:[%s3116] sm:$0xff] %v3130
        %3139 = vst [vmem:[%s3118] sm:$0xff] %v3133
        %3140 = vst [vmem:[%s3120] sm:$0xff] %v3136
        %s3141 = smov [#allocation26]
        %s3142 = scalar_lea.vmem %s3141, 32
        %v3143 = vld [vmem:[%s3142] sm:$0xff]
        %s3144 = smov [#allocation27]
        %s3145 = scalar_lea.vmem %s3144, 32
        %v3146 = vld [vmem:[%s3145] sm:$0xff]
        %s3147 = smov [#allocation8]
        %s3148 = scalar_lea.vmem %s3147, 32
        %s3149 = smov [#allocation10]
        %s3150 = scalar_lea.vmem %s3149, 32
        %s3151 = smov [#allocation12]
        %s3152 = scalar_lea.vmem %s3151, 32
        %s3153 = smov [#allocation13]
        %s3154 = scalar_lea.vmem %s3153, 32
        %v3155 = vld [vmem:[%s3148] sm:$0xff]
        %v3156 = vld [vmem:[%s3150] sm:$0xff]
        %v3157 = vld [vmem:[%s3152] sm:$0xff]
        %v3158 = vld [vmem:[%s3154] sm:$0xff]
        %v3159 = vmul.f32 %v3143, %v3155
        %v3160 = vmul.f32 %v3146, %v3157
        %v3161 = vsub.f32 %v3159, %v3160
        %v3162 = vmul.f32 %v3143, %v3156
        %v3163 = vmul.f32 %v3146, %v3158
        %v3164 = vsub.f32 %v3162, %v3163
        %v3165 = vmul.f32 %v3146, %v3155
        %v3166 = vmul.f32 %v3143, %v3157
        %v3167 = vadd.f32 %v3165, %v3166
        %v3168 = vmul.f32 %v3146, %v3156
        %v3169 = vmul.f32 %v3143, %v3158
        %v3170 = vadd.f32 %v3168, %v3169
        %3171 = vst [vmem:[%s3148] sm:$0xff] %v3161
        %3172 = vst [vmem:[%s3150] sm:$0xff] %v3164
        %3173 = vst [vmem:[%s3152] sm:$0xff] %v3167
        %3174 = vst [vmem:[%s3154] sm:$0xff] %v3170
        %s3175 = smov [#allocation26]
        %s3176 = scalar_lea.vmem %s3175, 40
        %v3177 = vld [vmem:[%s3176] sm:$0xff]
        %s3178 = smov [#allocation27]
        %s3179 = scalar_lea.vmem %s3178, 40
        %v3180 = vld [vmem:[%s3179] sm:$0xff]
        %s3181 = smov [#allocation8]
        %s3182 = scalar_lea.vmem %s3181, 40
        %s3183 = smov [#allocation10]
        %s3184 = scalar_lea.vmem %s3183, 40
        %s3185 = smov [#allocation12]
        %s3186 = scalar_lea.vmem %s3185, 40
        %s3187 = smov [#allocation13]
        %s3188 = scalar_lea.vmem %s3187, 40
        %v3189 = vld [vmem:[%s3182] sm:$0xff]
        %v3190 = vld [vmem:[%s3184] sm:$0xff]
        %v3191 = vld [vmem:[%s3186] sm:$0xff]
        %v3192 = vld [vmem:[%s3188] sm:$0xff]
        %v3193 = vmul.f32 %v3177, %v3189
        %v3194 = vmul.f32 %v3180, %v3191
        %v3195 = vsub.f32 %v3193, %v3194
        %v3196 = vmul.f32 %v3177, %v3190
        %v3197 = vmul.f32 %v3180, %v3192
        %v3198 = vsub.f32 %v3196, %v3197
        %v3199 = vmul.f32 %v3180, %v3189
        %v3200 = vmul.f32 %v3177, %v3191
        %v3201 = vadd.f32 %v3199, %v3200
        %v3202 = vmul.f32 %v3180, %v3190
        %v3203 = vmul.f32 %v3177, %v3192
        %v3204 = vadd.f32 %v3202, %v3203
        %3205 = vst [vmem:[%s3182] sm:$0xff] %v3195
        %3206 = vst [vmem:[%s3184] sm:$0xff] %v3198
        %3207 = vst [vmem:[%s3186] sm:$0xff] %v3201
        %3208 = vst [vmem:[%s3188] sm:$0xff] %v3204
        %s3209 = smov [#allocation26]
        %s3210 = scalar_lea.vmem %s3209, 48
        %v3211 = vld [vmem:[%s3210] sm:$0xff]
        %s3212 = smov [#allocation27]
        %s3213 = scalar_lea.vmem %s3212, 48
        %v3214 = vld [vmem:[%s3213] sm:$0xff]
        %s3215 = smov [#allocation8]
        %s3216 = scalar_lea.vmem %s3215, 48
        %s3217 = smov [#allocation10]
        %s3218 = scalar_lea.vmem %s3217, 48
        %s3219 = smov [#allocation12]
        %s3220 = scalar_lea.vmem %s3219, 48
        %s3221 = smov [#allocation13]
        %s3222 = scalar_lea.vmem %s3221, 48
        %v3223 = vld [vmem:[%s3216] sm:$0xff]
        %v3224 = vld [vmem:[%s3218] sm:$0xff]
        %v3225 = vld [vmem:[%s3220] sm:$0xff]
        %v3226 = vld [vmem:[%s3222] sm:$0xff]
        %v3227 = vmul.f32 %v3211, %v3223
        %v3228 = vmul.f32 %v3214, %v3225
        %v3229 = vsub.f32 %v3227, %v3228
        %v3230 = vmul.f32 %v3211, %v3224
        %v3231 = vmul.f32 %v3214, %v3226
        %v3232 = vsub.f32 %v3230, %v3231
        %v3233 = vmul.f32 %v3214, %v3223
        %v3234 = vmul.f32 %v3211, %v3225
        %v3235 = vadd.f32 %v3233, %v3234
        %v3236 = vmul.f32 %v3214, %v3224
        %v3237 = vmul.f32 %v3211, %v3226
        %v3238 = vadd.f32 %v3236, %v3237
        %3239 = vst [vmem:[%s3216] sm:$0xff] %v3229
        %3240 = vst [vmem:[%s3218] sm:$0xff] %v3232
        %3241 = vst [vmem:[%s3220] sm:$0xff] %v3235
        %3242 = vst [vmem:[%s3222] sm:$0xff] %v3238
        %s3243 = smov [#allocation26]
        %s3244 = scalar_lea.vmem %s3243, 56
        %v3245 = vld [vmem:[%s3244] sm:$0xff]
        %s3246 = smov [#allocation27]
        %s3247 = scalar_lea.vmem %s3246, 56
        %v3248 = vld [vmem:[%s3247] sm:$0xff]
        %s3249 = smov [#allocation8]
        %s3250 = scalar_lea.vmem %s3249, 56
        %s3251 = smov [#allocation10]
        %s3252 = scalar_lea.vmem %s3251, 56
        %s3253 = smov [#allocation12]
        %s3254 = scalar_lea.vmem %s3253, 56
        %s3255 = smov [#allocation13]
        %s3256 = scalar_lea.vmem %s3255, 56
        %v3257 = vld [vmem:[%s3250] sm:$0xff]
        %v3258 = vld [vmem:[%s3252] sm:$0xff]
        %v3259 = vld [vmem:[%s3254] sm:$0xff]
        %v3260 = vld [vmem:[%s3256] sm:$0xff]
        %v3261 = vmul.f32 %v3245, %v3257
        %v3262 = vmul.f32 %v3248, %v3259
        %v3263 = vsub.f32 %v3261, %v3262
        %v3264 = vmul.f32 %v3245, %v3258
        %v3265 = vmul.f32 %v3248, %v3260
        %v3266 = vsub.f32 %v3264, %v3265
        %v3267 = vmul.f32 %v3248, %v3257
        %v3268 = vmul.f32 %v3245, %v3259
        %v3269 = vadd.f32 %v3267, %v3268
        %v3270 = vmul.f32 %v3248, %v3258
        %v3271 = vmul.f32 %v3245, %v3260
        %v3272 = vadd.f32 %v3270, %v3271
        %3273 = vst [vmem:[%s3250] sm:$0xff] %v3263
        %3274 = vst [vmem:[%s3252] sm:$0xff] %v3266
        %3275 = vst [vmem:[%s3254] sm:$0xff] %v3269
        %3276 = vst [vmem:[%s3256] sm:$0xff] %v3272
        %s3277 = smov [#allocation8]
        %s3278 = smov [#allocation12]
        %v3279 = vld [vmem:[%s3277] ss:$0 sm:$0xff]
        %s3281 = scalar_lea.vmem %s3277, 4294967295
        %v3282 = vld [vmem:[%s3281] sm:$0xfe]
        %v3283 = vlaneseq
        %v3284 = vshrl.u32 %v3283, 7
        %vm3285 = vcmp.eq.s32.totalorder %v3284, 0
        %v3286 = vsel %vm3285, %v3279, %v3282
        %s3287 = scalar_lea.vmem %s3277, 7
        %v3288 = vld [vmem:[%s3287] ss:$0 sm:$0xff]
        %3289 = vst [vmem:[%s3277] sm:$0xff] %v3286
        %s3290 = scalar_lea.vmem %s3277, 8
        %s3292 = scalar_lea.vmem %s3290, 4294967295
        %v3293 = vld [vmem:[%s3292] sm:$0xfe]
        %v3294 = vlaneseq
        %v3295 = vshrl.u32 %v3294, 7
        %vm3296 = vcmp.eq.s32.totalorder %v3295, 0
        %v3297 = vsel %vm3296, %v3288, %v3293
        %s3298 = scalar_lea.vmem %s3290, 7
        %v3299 = vld [vmem:[%s3298] ss:$0 sm:$0xff]
        %3300 = vst [vmem:[%s3290] sm:$0xff] %v3297
        %s3301 = scalar_lea.vmem %s3277, 16
        %s3303 = scalar_lea.vmem %s3301, 4294967295
        %v3304 = vld [vmem:[%s3303] sm:$0xfe]
        %v3305 = vlaneseq
        %v3306 = vshrl.u32 %v3305, 7
        %vm3307 = vcmp.eq.s32.totalorder %v3306, 0
        %v3308 = vsel %vm3307, %v3299, %v3304
        %s3309 = scalar_lea.vmem %s3301, 7
        %v3310 = vld [vmem:[%s3309] ss:$0 sm:$0xff]
        %3311 = vst [vmem:[%s3301] sm:$0xff] %v3308
        %s3312 = scalar_lea.vmem %s3277, 24
        %s3314 = scalar_lea.vmem %s3312, 4294967295
        %v3315 = vld [vmem:[%s3314] sm:$0xfe]
        %v3316 = vlaneseq
        %v3317 = vshrl.u32 %v3316, 7
        %vm3318 = vcmp.eq.s32.totalorder %v3317, 0
        %v3319 = vsel %vm3318, %v3310, %v3315
        %s3320 = scalar_lea.vmem %s3312, 7
        %v3321 = vld [vmem:[%s3320] ss:$0 sm:$0xff]
        %3322 = vst [vmem:[%s3312] sm:$0xff] %v3319
        %s3323 = scalar_lea.vmem %s3277, 32
        %s3325 = scalar_lea.vmem %s3323, 4294967295
        %v3326 = vld [vmem:[%s3325] sm:$0xfe]
        %v3327 = vlaneseq
        %v3328 = vshrl.u32 %v3327, 7
        %vm3329 = vcmp.eq.s32.totalorder %v3328, 0
        %v3330 = vsel %vm3329, %v3321, %v3326
        %s3331 = scalar_lea.vmem %s3323, 7
        %v3332 = vld [vmem:[%s3331] ss:$0 sm:$0xff]
        %3333 = vst [vmem:[%s3323] sm:$0xff] %v3330
        %s3334 = scalar_lea.vmem %s3277, 40
        %s3336 = scalar_lea.vmem %s3334, 4294967295
        %v3337 = vld [vmem:[%s3336] sm:$0xfe]
        %v3338 = vlaneseq
        %v3339 = vshrl.u32 %v3338, 7
        %vm3340 = vcmp.eq.s32.totalorder %v3339, 0
        %v3341 = vsel %vm3340, %v3332, %v3337
        %s3342 = scalar_lea.vmem %s3334, 7
        %v3343 = vld [vmem:[%s3342] ss:$0 sm:$0xff]
        %3344 = vst [vmem:[%s3334] sm:$0xff] %v3341
        %s3345 = scalar_lea.vmem %s3277, 48
        %s3347 = scalar_lea.vmem %s3345, 4294967295
        %v3348 = vld [vmem:[%s3347] sm:$0xfe]
        %v3349 = vlaneseq
        %v3350 = vshrl.u32 %v3349, 7
        %vm3351 = vcmp.eq.s32.totalorder %v3350, 0
        %v3352 = vsel %vm3351, %v3343, %v3348
        %s3353 = scalar_lea.vmem %s3345, 7
        %v3354 = vld [vmem:[%s3353] ss:$0 sm:$0xff]
        %3355 = vst [vmem:[%s3345] sm:$0xff] %v3352
        %s3356 = scalar_lea.vmem %s3277, 56
        %s3358 = scalar_lea.vmem %s3356, 4294967295
        %v3359 = vld [vmem:[%s3358] sm:$0xfe]
        %v3360 = vlaneseq
        %v3361 = vshrl.u32 %v3360, 7
        %vm3362 = vcmp.eq.s32.totalorder %v3361, 0
        %v3363 = vsel %vm3362, %v3354, %v3359
        %s3364 = scalar_lea.vmem %s3356, 7
        %v3365 = vld [vmem:[%s3364] ss:$0 sm:$0xff]
        %3366 = vst [vmem:[%s3356] sm:$0xff] %v3363
        %v3367 = vld [vmem:[%s3278] ss:$0 sm:$0xff]
        %s3368 = scalar_lea.vmem %s3277, 1
        %3369 = vst [vmem:[%s3368] sm:$0x1] %v3367
        %s3370 = scalar_lea.vmem %s3278, 56
        %s3371 = scalar_lea.vmem %s3370, 1
        %v3372 = vld [vmem:[%s3371] sm:$0x7f]
        %v3373 = vlaneseq
        %v3374 = vshrl.u32 %v3373, 7
        %vm3375 = vcmp.eq.s32.totalorder %v3374, 7
        %v3376 = vsel %vm3375, %v3365, %v3372
        %v3377 = vld [vmem:[%s3370] ss:$0 sm:$0xff]
        %3378 = vst [vmem:[%s3370] sm:$0xff] %v3376
        %s3379 = scalar_lea.vmem %s3278, 48
        %s3380 = scalar_lea.vmem %s3379, 1
        %v3381 = vld [vmem:[%s3380] sm:$0x7f]
        %v3382 = vlaneseq
        %v3383 = vshrl.u32 %v3382, 7
        %vm3384 = vcmp.eq.s32.totalorder %v3383, 7
        %v3385 = vsel %vm3384, %v3377, %v3381
        %v3386 = vld [vmem:[%s3379] ss:$0 sm:$0xff]
        %3387 = vst [vmem:[%s3379] sm:$0xff] %v3385
        %s3388 = scalar_lea.vmem %s3278, 40
        %s3389 = scalar_lea.vmem %s3388, 1
        %v3390 = vld [vmem:[%s3389] sm:$0x7f]
        %v3391 = vlaneseq
        %v3392 = vshrl.u32 %v3391, 7
        %vm3393 = vcmp.eq.s32.totalorder %v3392, 7
        %v3394 = vsel %vm3393, %v3386, %v3390
        %v3395 = vld [vmem:[%s3388] ss:$0 sm:$0xff]
        %3396 = vst [vmem:[%s3388] sm:$0xff] %v3394
        %s3397 = scalar_lea.vmem %s3278, 32
        %s3398 = scalar_lea.vmem %s3397, 1
        %v3399 = vld [vmem:[%s3398] sm:$0x7f]
        %v3400 = vlaneseq
        %v3401 = vshrl.u32 %v3400, 7
        %vm3402 = vcmp.eq.s32.totalorder %v3401, 7
        %v3403 = vsel %vm3402, %v3395, %v3399
        %v3404 = vld [vmem:[%s3397] ss:$0 sm:$0xff]
        %3405 = vst [vmem:[%s3397] sm:$0xff] %v3403
        %s3406 = scalar_lea.vmem %s3278, 24
        %s3407 = scalar_lea.vmem %s3406, 1
        %v3408 = vld [vmem:[%s3407] sm:$0x7f]
        %v3409 = vlaneseq
        %v3410 = vshrl.u32 %v3409, 7
        %vm3411 = vcmp.eq.s32.totalorder %v3410, 7
        %v3412 = vsel %vm3411, %v3404, %v3408
        %v3413 = vld [vmem:[%s3406] ss:$0 sm:$0xff]
        %3414 = vst [vmem:[%s3406] sm:$0xff] %v3412
        %s3415 = scalar_lea.vmem %s3278, 16
        %s3416 = scalar_lea.vmem %s3415, 1
        %v3417 = vld [vmem:[%s3416] sm:$0x7f]
        %v3418 = vlaneseq
        %v3419 = vshrl.u32 %v3418, 7
        %vm3420 = vcmp.eq.s32.totalorder %v3419, 7
        %v3421 = vsel %vm3420, %v3413, %v3417
        %v3422 = vld [vmem:[%s3415] ss:$0 sm:$0xff]
        %3423 = vst [vmem:[%s3415] sm:$0xff] %v3421
        %s3424 = scalar_lea.vmem %s3278, 8
        %s3425 = scalar_lea.vmem %s3424, 1
        %v3426 = vld [vmem:[%s3425] sm:$0x7f]
        %v3427 = vlaneseq
        %v3428 = vshrl.u32 %v3427, 7
        %vm3429 = vcmp.eq.s32.totalorder %v3428, 7
        %v3430 = vsel %vm3429, %v3422, %v3426
        %v3431 = vld [vmem:[%s3424] ss:$0 sm:$0xff]
        %3432 = vst [vmem:[%s3424] sm:$0xff] %v3430
        %s3433 = scalar_lea.vmem %s3278, 1
        %v3434 = vld [vmem:[%s3433] sm:$0x7f]
        %v3435 = vlaneseq
        %v3436 = vshrl.u32 %v3435, 7
        %vm3437 = vcmp.eq.s32.totalorder %v3436, 7
        %v3438 = vsel %vm3437, %v3431, %v3434
        %v3439 = vld [vmem:[%s3278] ss:$0 sm:$0xff]
        %3440 = vst [vmem:[%s3278] sm:$0xff] %v3438
        %s3441 = smov [#allocation10]
        %s3442 = smov [#allocation13]
        %v3443 = vld [vmem:[%s3441] ss:$0 sm:$0xff]
        %s3445 = scalar_lea.vmem %s3441, 4294967295
        %v3446 = vld [vmem:[%s3445] sm:$0xfe]
        %v3447 = vlaneseq
        %v3448 = vshrl.u32 %v3447, 7
        %vm3449 = vcmp.eq.s32.totalorder %v3448, 0
        %v3450 = vsel %vm3449, %v3443, %v3446
        %s3451 = scalar_lea.vmem %s3441, 7
        %v3452 = vld [vmem:[%s3451] ss:$0 sm:$0xff]
        %3453 = vst [vmem:[%s3441] sm:$0xff] %v3450
        %s3454 = scalar_lea.vmem %s3441, 8
        %s3456 = scalar_lea.vmem %s3454, 4294967295
        %v3457 = vld [vmem:[%s3456] sm:$0xfe]
        %v3458 = vlaneseq
        %v3459 = vshrl.u32 %v3458, 7
        %vm3460 = vcmp.eq.s32.totalorder %v3459, 0
        %v3461 = vsel %vm3460, %v3452, %v3457
        %s3462 = scalar_lea.vmem %s3454, 7
        %v3463 = vld [vmem:[%s3462] ss:$0 sm:$0xff]
        %3464 = vst [vmem:[%s3454] sm:$0xff] %v3461
        %s3465 = scalar_lea.vmem %s3441, 16
        %s3467 = scalar_lea.vmem %s3465, 4294967295
        %v3468 = vld [vmem:[%s3467] sm:$0xfe]
        %v3469 = vlaneseq
        %v3470 = vshrl.u32 %v3469, 7
        %vm3471 = vcmp.eq.s32.totalorder %v3470, 0
        %v3472 = vsel %vm3471, %v3463, %v3468
        %s3473 = scalar_lea.vmem %s3465, 7
        %v3474 = vld [vmem:[%s3473] ss:$0 sm:$0xff]
        %3475 = vst [vmem:[%s3465] sm:$0xff] %v3472
        %s3476 = scalar_lea.vmem %s3441, 24
        %s3478 = scalar_lea.vmem %s3476, 4294967295
        %v3479 = vld [vmem:[%s3478] sm:$0xfe]
        %v3480 = vlaneseq
        %v3481 = vshrl.u32 %v3480, 7
        %vm3482 = vcmp.eq.s32.totalorder %v3481, 0
        %v3483 = vsel %vm3482, %v3474, %v3479
        %s3484 = scalar_lea.vmem %s3476, 7
        %v3485 = vld [vmem:[%s3484] ss:$0 sm:$0xff]
        %3486 = vst [vmem:[%s3476] sm:$0xff] %v3483
        %s3487 = scalar_lea.vmem %s3441, 32
        %s3489 = scalar_lea.vmem %s3487, 4294967295
        %v3490 = vld [vmem:[%s3489] sm:$0xfe]
        %v3491 = vlaneseq
        %v3492 = vshrl.u32 %v3491, 7
        %vm3493 = vcmp.eq.s32.totalorder %v3492, 0
        %v3494 = vsel %vm3493, %v3485, %v3490
        %s3495 = scalar_lea.vmem %s3487, 7
        %v3496 = vld [vmem:[%s3495] ss:$0 sm:$0xff]
        %3497 = vst [vmem:[%s3487] sm:$0xff] %v3494
        %s3498 = scalar_lea.vmem %s3441, 40
        %s3500 = scalar_lea.vmem %s3498, 4294967295
        %v3501 = vld [vmem:[%s3500] sm:$0xfe]
        %v3502 = vlaneseq
        %v3503 = vshrl.u32 %v3502, 7
        %vm3504 = vcmp.eq.s32.totalorder %v3503, 0
        %v3505 = vsel %vm3504, %v3496, %v3501
        %s3506 = scalar_lea.vmem %s3498, 7
        %v3507 = vld [vmem:[%s3506] ss:$0 sm:$0xff]
        %3508 = vst [vmem:[%s3498] sm:$0xff] %v3505
        %s3509 = scalar_lea.vmem %s3441, 48
        %s3511 = scalar_lea.vmem %s3509, 4294967295
        %v3512 = vld [vmem:[%s3511] sm:$0xfe]
        %v3513 = vlaneseq
        %v3514 = vshrl.u32 %v3513, 7
        %vm3515 = vcmp.eq.s32.totalorder %v3514, 0
        %v3516 = vsel %vm3515, %v3507, %v3512
        %s3517 = scalar_lea.vmem %s3509, 7
        %v3518 = vld [vmem:[%s3517] ss:$0 sm:$0xff]
        %3519 = vst [vmem:[%s3509] sm:$0xff] %v3516
        %s3520 = scalar_lea.vmem %s3441, 56
        %s3522 = scalar_lea.vmem %s3520, 4294967295
        %v3523 = vld [vmem:[%s3522] sm:$0xfe]
        %v3524 = vlaneseq
        %v3525 = vshrl.u32 %v3524, 7
        %vm3526 = vcmp.eq.s32.totalorder %v3525, 0
        %v3527 = vsel %vm3526, %v3518, %v3523
        %s3528 = scalar_lea.vmem %s3520, 7
        %v3529 = vld [vmem:[%s3528] ss:$0 sm:$0xff]
        %3530 = vst [vmem:[%s3520] sm:$0xff] %v3527
        %v3531 = vld [vmem:[%s3442] ss:$0 sm:$0xff]
        %s3532 = scalar_lea.vmem %s3441, 1
        %3533 = vst [vmem:[%s3532] sm:$0x1] %v3531
        %s3534 = scalar_lea.vmem %s3442, 56
        %s3535 = scalar_lea.vmem %s3534, 1
        %v3536 = vld [vmem:[%s3535] sm:$0x7f]
        %v3537 = vlaneseq
        %v3538 = vshrl.u32 %v3537, 7
        %vm3539 = vcmp.eq.s32.totalorder %v3538, 7
        %v3540 = vsel %vm3539, %v3529, %v3536
        %v3541 = vld [vmem:[%s3534] ss:$0 sm:$0xff]
        %3542 = vst [vmem:[%s3534] sm:$0xff] %v3540
        %s3543 = scalar_lea.vmem %s3442, 48
        %s3544 = scalar_lea.vmem %s3543, 1
        %v3545 = vld [vmem:[%s3544] sm:$0x7f]
        %v3546 = vlaneseq
        %v3547 = vshrl.u32 %v3546, 7
        %vm3548 = vcmp.eq.s32.totalorder %v3547, 7
        %v3549 = vsel %vm3548, %v3541, %v3545
        %v3550 = vld [vmem:[%s3543] ss:$0 sm:$0xff]
        %3551 = vst [vmem:[%s3543] sm:$0xff] %v3549
        %s3552 = scalar_lea.vmem %s3442, 40
        %s3553 = scalar_lea.vmem %s3552, 1
        %v3554 = vld [vmem:[%s3553] sm:$0x7f]
        %v3555 = vlaneseq
        %v3556 = vshrl.u32 %v3555, 7
        %vm3557 = vcmp.eq.s32.totalorder %v3556, 7
        %v3558 = vsel %vm3557, %v3550, %v3554
        %v3559 = vld [vmem:[%s3552] ss:$0 sm:$0xff]
        %3560 = vst [vmem:[%s3552] sm:$0xff] %v3558
        %s3561 = scalar_lea.vmem %s3442, 32
        %s3562 = scalar_lea.vmem %s3561, 1
        %v3563 = vld [vmem:[%s3562] sm:$0x7f]
        %v3564 = vlaneseq
        %v3565 = vshrl.u32 %v3564, 7
        %vm3566 = vcmp.eq.s32.totalorder %v3565, 7
        %v3567 = vsel %vm3566, %v3559, %v3563
        %v3568 = vld [vmem:[%s3561] ss:$0 sm:$0xff]
        %3569 = vst [vmem:[%s3561] sm:$0xff] %v3567
        %s3570 = scalar_lea.vmem %s3442, 24
        %s3571 = scalar_lea.vmem %s3570, 1
        %v3572 = vld [vmem:[%s3571] sm:$0x7f]
        %v3573 = vlaneseq
        %v3574 = vshrl.u32 %v3573, 7
        %vm3575 = vcmp.eq.s32.totalorder %v3574, 7
        %v3576 = vsel %vm3575, %v3568, %v3572
        %v3577 = vld [vmem:[%s3570] ss:$0 sm:$0xff]
        %3578 = vst [vmem:[%s3570] sm:$0xff] %v3576
        %s3579 = scalar_lea.vmem %s3442, 16
        %s3580 = scalar_lea.vmem %s3579, 1
        %v3581 = vld [vmem:[%s3580] sm:$0x7f]
        %v3582 = vlaneseq
        %v3583 = vshrl.u32 %v3582, 7
        %vm3584 = vcmp.eq.s32.totalorder %v3583, 7
        %v3585 = vsel %vm3584, %v3577, %v3581
        %v3586 = vld [vmem:[%s3579] ss:$0 sm:$0xff]
        %3587 = vst [vmem:[%s3579] sm:$0xff] %v3585
        %s3588 = scalar_lea.vmem %s3442, 8
        %s3589 = scalar_lea.vmem %s3588, 1
        %v3590 = vld [vmem:[%s3589] sm:$0x7f]
        %v3591 = vlaneseq
        %v3592 = vshrl.u32 %v3591, 7
        %vm3593 = vcmp.eq.s32.totalorder %v3592, 7
        %v3594 = vsel %vm3593, %v3586, %v3590
        %v3595 = vld [vmem:[%s3588] ss:$0 sm:$0xff]
        %3596 = vst [vmem:[%s3588] sm:$0xff] %v3594
        %s3597 = scalar_lea.vmem %s3442, 1
        %v3598 = vld [vmem:[%s3597] sm:$0x7f]
        %v3599 = vlaneseq
        %v3600 = vshrl.u32 %v3599, 7
        %vm3601 = vcmp.eq.s32.totalorder %v3600, 7
        %v3602 = vsel %vm3601, %v3595, %v3598
        %v3603 = vld [vmem:[%s3442] ss:$0 sm:$0xff]
        %3604 = vst [vmem:[%s3442] sm:$0xff] %v3602
      $region101: #{custom-call.3} parent=93 // loop_footer
        %s897 = sadd.s32 1, %s893
      $region102: #{custom-call.3} parent=93 // loop_footer_branch
        %892 = sbr.rel target = $region98
      $region103: #{custom-call.3} parent=93 // loop_exit
        _
      %s3605 = sadd.s32 %s571, 1
    $region94: #{custom-call.3} parent=1 // loop_footer
      _
    $region95: #{custom-call.3} parent=1 // loop_footer_branch
      %570 = sbr.rel target = $region91
    $region96: #{custom-call.3} parent=1 // loop_exit
      _
    %s3608 = smov [#allocation15]
    %s3609 = smov [#allocation4]
    %v3610 = vlaneseq
    %v3611 = vand.u32 %v3610, 127
    %v3612 = vmov %v3611
    %v3613 = vlaneseq
    %v3614 = vshrl.u32 %v3613, 7
    %v3615 = vmov %v3614
    %v3616 = vld [vmem:[%s3608] sm:$0xff]
    %vm3619 = vcmp.eq.s32.totalorder %v3615, %v3612
    %v3620 = vsel %vm3619, %v3616, 0.0
    %s3621 = scalar_lea.vmem %s3608, 8
    %v3622 = vld [vmem:[%s3621] sm:$0xff]
    %v3624 = vadd.s32 %v3615, 8
    %vm3625 = vcmp.eq.s32.totalorder %v3624, %v3612
    %v3626 = vsel %vm3625, %v3622, %v3620
    %s3627 = scalar_lea.vmem %s3608, 16
    %v3628 = vld [vmem:[%s3627] sm:$0xff]
    %v3630 = vadd.s32 %v3615, 16
    %vm3631 = vcmp.eq.s32.totalorder %v3630, %v3612
    %v3632 = vsel %vm3631, %v3628, %v3626
    %s3633 = scalar_lea.vmem %s3608, 24
    %v3634 = vld [vmem:[%s3633] sm:$0xff]
    %v3636 = vadd.s32 %v3615, 24
    %vm3637 = vcmp.eq.s32.totalorder %v3636, %v3612
    %v3638 = vsel %vm3637, %v3634, %v3632
    %s3639 = scalar_lea.vmem %s3608, 32
    %v3640 = vld [vmem:[%s3639] sm:$0xff]
    %v3642 = vadd.s32 %v3615, 32
    %vm3643 = vcmp.eq.s32.totalorder %v3642, %v3612
    %v3644 = vsel %vm3643, %v3640, %v3638
    %s3645 = scalar_lea.vmem %s3608, 40
    %v3646 = vld [vmem:[%s3645] sm:$0xff]
    %v3648 = vadd.s32 %v3615, 40
    %vm3649 = vcmp.eq.s32.totalorder %v3648, %v3612
    %v3650 = vsel %vm3649, %v3646, %v3644
    %s3651 = scalar_lea.vmem %s3608, 48
    %v3652 = vld [vmem:[%s3651] sm:$0xff]
    %v3654 = vadd.s32 %v3615, 48
    %vm3655 = vcmp.eq.s32.totalorder %v3654, %v3612
    %v3656 = vsel %vm3655, %v3652, %v3650
    %s3657 = scalar_lea.vmem %s3608, 56
    %v3658 = vld [vmem:[%s3657] sm:$0xff]
    %v3660 = vadd.s32 %v3615, 56
    %vm3661 = vcmp.eq.s32.totalorder %v3660, %v3612
    %v3662 = vsel %vm3661, %v3658, %v3656
    %v3663 = vrot.slane %v3662, 4
    %v3664 = vadd.f32 %v3662, %v3663
    %v3665 = vrot.slane %v3664, 2
    %v3666 = vadd.f32 %v3664, %v3665
    %v3667 = vrot.slane %v3666, 1
    %v3668 = vadd.f32 %v3666, %v3667
    %3669 = vst [vmem:[%s3609] sm:$0x1] %v3668
    %s3670 = smov [#allocation18]
    %s3671 = smov [#allocation6]
    %v3672 = vlaneseq
    %v3673 = vand.u32 %v3672, 127
    %v3674 = vmov %v3673
    %v3675 = vlaneseq
    %v3676 = vshrl.u32 %v3675, 7
    %v3677 = vmov %v3676
    %v3678 = vld [vmem:[%s3670] sm:$0xff]
    %vm3681 = vcmp.eq.s32.totalorder %v3677, %v3674
    %v3682 = vsel %vm3681, %v3678, 0.0
    %s3683 = scalar_lea.vmem %s3670, 8
    %v3684 = vld [vmem:[%s3683] sm:$0xff]
    %v3686 = vadd.s32 %v3677, 8
    %vm3687 = vcmp.eq.s32.totalorder %v3686, %v3674
    %v3688 = vsel %vm3687, %v3684, %v3682
    %s3689 = scalar_lea.vmem %s3670, 16
    %v3690 = vld [vmem:[%s3689] sm:$0xff]
    %v3692 = vadd.s32 %v3677, 16
    %vm3693 = vcmp.eq.s32.totalorder %v3692, %v3674
    %v3694 = vsel %vm3693, %v3690, %v3688
    %s3695 = scalar_lea.vmem %s3670, 24
    %v3696 = vld [vmem:[%s3695] sm:$0xff]
    %v3698 = vadd.s32 %v3677, 24
    %vm3699 = vcmp.eq.s32.totalorder %v3698, %v3674
    %v3700 = vsel %vm3699, %v3696, %v3694
    %s3701 = scalar_lea.vmem %s3670, 32
    %v3702 = vld [vmem:[%s3701] sm:$0xff]
    %v3704 = vadd.s32 %v3677, 32
    %vm3705 = vcmp.eq.s32.totalorder %v3704, %v3674
    %v3706 = vsel %vm3705, %v3702, %v3700
    %s3707 = scalar_lea.vmem %s3670, 40
    %v3708 = vld [vmem:[%s3707] sm:$0xff]
    %v3710 = vadd.s32 %v3677, 40
    %vm3711 = vcmp.eq.s32.totalorder %v3710, %v3674
    %v3712 = vsel %vm3711, %v3708, %v3706
    %s3713 = scalar_lea.vmem %s3670, 48
    %v3714 = vld [vmem:[%s3713] sm:$0xff]
    %v3716 = vadd.s32 %v3677, 48
    %vm3717 = vcmp.eq.s32.totalorder %v3716, %v3674
    %v3718 = vsel %vm3717, %v3714, %v3712
    %s3719 = scalar_lea.vmem %s3670, 56
    %v3720 = vld [vmem:[%s3719] sm:$0xff]
    %v3722 = vadd.s32 %v3677, 56
    %vm3723 = vcmp.eq.s32.totalorder %v3722, %v3674
    %v3724 = vsel %vm3723, %v3720, %v3718
    %v3725 = vrot.slane %v3724, 4
    %v3726 = vadd.f32 %v3724, %v3725
    %v3727 = vrot.slane %v3726, 2
    %v3728 = vadd.f32 %v3726, %v3727
    %v3729 = vrot.slane %v3728, 1
    %v3730 = vadd.f32 %v3728, %v3729
    %3731 = vst [vmem:[%s3671] sm:$0x1] %v3730
    %s3733 = sshllo.u32 0, 1
    %v3735 = vld [vmem:[#allocation4] sm:%s3733]
    %s3736 = sshllo.u32 0, 1
    %3737 = vst [vmem:[#allocation5] sm:%s3736] %v3735
    %s3739 = sshllo.u32 0, 1
    %v3741 = vld [vmem:[#allocation6] sm:%s3739]
    %s3742 = sshllo.u32 0, 1
    %3743 = vst [vmem:[#allocation7] sm:%s3742] %v3741
    // Predicated region
    $region104: #{custom-call.3} parent=1 // pred_check
      _
    $region105: #{custom-call.3} parent=1 // pred_check_branch
      %3745 = sbr.rel (0) target = $region107
    $region106: #{custom-call.3} parent=1 // pred_region
      %p3747 = scmp.gt.s32.totalorder 1, 0
      // Predicated region
      $region108: #{custom-call.3} parent=106 // pred_check
        %p3748 = pneg %p3747
      $region109: #{custom-call.3} parent=106 // pred_check_branch
        %3750 = sbr.rel (%p3748) target = $region111
      $region110: #{custom-call.3} parent=106 // pred_region
        %s3751 = sshra.s32 1, 3
        %p3752 = scmp.gt.s32.totalorder %s3751, 0
        // Predicated region
        $region112: #{custom-call.3} parent=110 // pred_check
          %p3753 = pneg %p3752
        $region113: #{custom-call.3} parent=110 // pred_check_branch
          %3755 = sbr.rel (%p3753) target = $region115
        $region114: #{custom-call.3} parent=110 // pred_region
          %s3756 = ssub.s32 %s3751, 1
          %s3757 = smul.u32 %s3756, 128
          %s3758 = sshra.s32 %s3757, 4
          %s3759 = scalar_lea.vmem [#allocation5], %s3758
          %v3760 = vld [vmem:[#allocation5] sm:$0xff]
          // While loop
          $region116: #{custom-call.3} parent=114 // loop_pre_header
            _
          $region117: #{custom-call.3} parent=114 // loop_header
            %s3761 = sphi [#allocation5], %s3783
            %s3762 = sphi %s4, %s3784
            %v3763 = vphi %v3760, %v3785
            %s3764 = ssub.s32 %s3759, 64
            %p3765 = scmp.gt.s32.totalorder %s3761, %s3764
          $region118: #{custom-call.3} parent=114 // loop_header_branch
            %3767 = sbr.rel (%p3765) target = $region122
          $region119: #{custom-call.3} parent=114 // loop_body
            %3768 = vst [vmem:[%s3762] sm:$0xff] %v3763
            %v3769 = vld [vmem:[%s3761 + $0x8] sm:$0xff]
            %3770 = vst [vmem:[%s3762 + $0x8] sm:$0xff] %v3769
            %v3771 = vld [vmem:[%s3761 + $0x10] sm:$0xff]
            %3772 = vst [vmem:[%s3762 + $0x10] sm:$0xff] %v3771
            %v3773 = vld [vmem:[%s3761 + $0x18] sm:$0xff]
            %3774 = vst [vmem:[%s3762 + $0x18] sm:$0xff] %v3773
            %v3775 = vld [vmem:[%s3761 + $0x20] sm:$0xff]
            %3776 = vst [vmem:[%s3762 + $0x20] sm:$0xff] %v3775
            %v3777 = vld [vmem:[%s3761 + $0x28] sm:$0xff]
            %3778 = vst [vmem:[%s3762 + $0x28] sm:$0xff] %v3777
            %v3779 = vld [vmem:[%s3761 + $0x30] sm:$0xff]
            %3780 = vst [vmem:[%s3762 + $0x30] sm:$0xff] %v3779
            %v3781 = vld [vmem:[%s3761 + $0x38] sm:$0xff]
            %3782 = vst [vmem:[%s3762 + $0x38] sm:$0xff] %v3781
          $region120: #{custom-call.3} parent=114 // loop_footer
            %s3783 = scalar_lea.vmem %s3761, 64
            %s3784 = scalar_lea.vmem %s3762, 64
            %v3785 = vld [vmem:[%s3761 + $0x40] sm:$0xff]
          $region121: #{custom-call.3} parent=114 // loop_footer_branch
            %3786 = sbr.rel target = $region117
          $region122: #{custom-call.3} parent=114 // loop_exit
            _
          // While loop
          $region123: #{custom-call.3} parent=114 // loop_pre_header
            _
          $region124: #{custom-call.3} parent=114 // loop_header
            %s3787 = sphi %s3761, %s3795
            %s3788 = sphi %s3762, %s3796
            %v3789 = vphi %v3763, %v3789
            %p3790 = scmp.gt.s32.totalorder %s3787, %s3759
          $region125: #{custom-call.3} parent=114 // loop_header_branch
            %3792 = sbr.rel (%p3790) target = $region129
          $region126: #{custom-call.3} parent=114 // loop_body
            %v3793 = vld [vmem:[%s3787] sm:$0xff]
            %3794 = vst [vmem:[%s3788] sm:$0xff] %v3793
          $region127: #{custom-call.3} parent=114 // loop_footer
            %s3795 = scalar_lea.vmem %s3787, 8
            %s3796 = scalar_lea.vmem %s3788, 8
          $region128: #{custom-call.3} parent=114 // loop_footer_branch
            %3797 = sbr.rel target = $region124
          $region129: #{custom-call.3} parent=114 // loop_exit
            _
        $region115: #{custom-call.3} parent=110 // pred_fallthru
          _
        %s3798 = sand.u32 1, 7
        %s3799 = sshllo.u32 0, %s3798
        %s3800 = smul.u32 %s3751, 128
        %s3801 = sshra.s32 %s3800, 4
        %s3802 = scalar_lea.vmem %s4, %s3801
        %s3803 = smul.u32 %s3751, 128
        %s3804 = sshra.s32 %s3803, 4
        %s3805 = scalar_lea.vmem [#allocation5], %s3804
        %v3806 = vld [vmem:[%s3805] sm:%s3799]
        %3807 = vst [vmem:[%s3802] sm:%s3799] %v3806
      $region111: #{custom-call.3} parent=106 // pred_fallthru
        _
    $region107: #{custom-call.3} parent=1 // pred_fallthru
      _
    // Predicated region
    $region130: #{custom-call.3} parent=1 // pred_check
      _
    $region131: #{custom-call.3} parent=1 // pred_check_branch
      %3809 = sbr.rel (0) target = $region133
    $region132: #{custom-call.3} parent=1 // pred_region
      %p3811 = scmp.gt.s32.totalorder 1, 0
      // Predicated region
      $region134: #{custom-call.3} parent=132 // pred_check
        %p3812 = pneg %p3811
      $region135: #{custom-call.3} parent=132 // pred_check_branch
        %3814 = sbr.rel (%p3812) target = $region137
      $region136: #{custom-call.3} parent=132 // pred_region
        %s3815 = sshra.s32 1, 3
        %p3816 = scmp.gt.s32.totalorder %s3815, 0
        // Predicated region
        $region138: #{custom-call.3} parent=136 // pred_check
          %p3817 = pneg %p3816
        $region139: #{custom-call.3} parent=136 // pred_check_branch
          %3819 = sbr.rel (%p3817) target = $region141
        $region140: #{custom-call.3} parent=136 // pred_region
          %s3820 = ssub.s32 %s3815, 1
          %s3821 = smul.u32 %s3820, 128
          %s3822 = sshra.s32 %s3821, 4
          %s3823 = scalar_lea.vmem [#allocation7], %s3822
          %v3824 = vld [vmem:[#allocation7] sm:$0xff]
          // While loop
          $region142: #{custom-call.3} parent=140 // loop_pre_header
            _
          $region143: #{custom-call.3} parent=140 // loop_header
            %s3825 = sphi [#allocation7], %s3847
            %s3826 = sphi %s5, %s3848
            %v3827 = vphi %v3824, %v3849
            %s3828 = ssub.s32 %s3823, 64
            %p3829 = scmp.gt.s32.totalorder %s3825, %s3828
          $region144: #{custom-call.3} parent=140 // loop_header_branch
            %3831 = sbr.rel (%p3829) target = $region148
          $region145: #{custom-call.3} parent=140 // loop_body
            %3832 = vst [vmem:[%s3826] sm:$0xff] %v3827
            %v3833 = vld [vmem:[%s3825 + $0x8] sm:$0xff]
            %3834 = vst [vmem:[%s3826 + $0x8] sm:$0xff] %v3833
            %v3835 = vld [vmem:[%s3825 + $0x10] sm:$0xff]
            %3836 = vst [vmem:[%s3826 + $0x10] sm:$0xff] %v3835
            %v3837 = vld [vmem:[%s3825 + $0x18] sm:$0xff]
            %3838 = vst [vmem:[%s3826 + $0x18] sm:$0xff] %v3837
            %v3839 = vld [vmem:[%s3825 + $0x20] sm:$0xff]
            %3840 = vst [vmem:[%s3826 + $0x20] sm:$0xff] %v3839
            %v3841 = vld [vmem:[%s3825 + $0x28] sm:$0xff]
            %3842 = vst [vmem:[%s3826 + $0x28] sm:$0xff] %v3841
            %v3843 = vld [vmem:[%s3825 + $0x30] sm:$0xff]
            %3844 = vst [vmem:[%s3826 + $0x30] sm:$0xff] %v3843
            %v3845 = vld [vmem:[%s3825 + $0x38] sm:$0xff]
            %3846 = vst [vmem:[%s3826 + $0x38] sm:$0xff] %v3845
          $region146: #{custom-call.3} parent=140 // loop_footer
            %s3847 = scalar_lea.vmem %s3825, 64
            %s3848 = scalar_lea.vmem %s3826, 64
            %v3849 = vld [vmem:[%s3825 + $0x40] sm:$0xff]
          $region147: #{custom-call.3} parent=140 // loop_footer_branch
            %3850 = sbr.rel target = $region143
          $region148: #{custom-call.3} parent=140 // loop_exit
            _
          // While loop
          $region149: #{custom-call.3} parent=140 // loop_pre_header
            _
          $region150: #{custom-call.3} parent=140 // loop_header
            %s3851 = sphi %s3825, %s3859
            %s3852 = sphi %s3826, %s3860
            %v3853 = vphi %v3827, %v3853
            %p3854 = scmp.gt.s32.totalorder %s3851, %s3823
          $region151: #{custom-call.3} parent=140 // loop_header_branch
            %3856 = sbr.rel (%p3854) target = $region155
          $region152: #{custom-call.3} parent=140 // loop_body
            %v3857 = vld [vmem:[%s3851] sm:$0xff]
            %3858 = vst [vmem:[%s3852] sm:$0xff] %v3857
          $region153: #{custom-call.3} parent=140 // loop_footer
            %s3859 = scalar_lea.vmem %s3851, 8
            %s3860 = scalar_lea.vmem %s3852, 8
          $region154: #{custom-call.3} parent=140 // loop_footer_branch
            %3861 = sbr.rel target = $region150
          $region155: #{custom-call.3} parent=140 // loop_exit
            _
        $region141: #{custom-call.3} parent=136 // pred_fallthru
          _
        %s3862 = sand.u32 1, 7
        %s3863 = sshllo.u32 0, %s3862
        %s3864 = smul.u32 %s3815, 128
        %s3865 = sshra.s32 %s3864, 4
        %s3866 = scalar_lea.vmem %s5, %s3865
        %s3867 = smul.u32 %s3815, 128
        %s3868 = sshra.s32 %s3867, 4
        %s3869 = scalar_lea.vmem [#allocation7], %s3868
        %v3870 = vld [vmem:[%s3869] sm:%s3863]
        %3871 = vst [vmem:[%s3866] sm:%s3863] %v3870
      $region137: #{custom-call.3} parent=132 // pred_fallthru
        _
    $region133: #{custom-call.3} parent=1 // pred_fallthru
      _
    %s3873 = ssub.s32 1024, 1024
    %3874 = vsyncadd [#allocation9], %s3873
    %s3875 = sshll.u32 [#allocation8], 4
    %s3876 = int_to_ptr.vmem [resolvable:$true] %s3875
    %3878 = dma.vmem_to_hbm [thread:$0]  %s3876, 1024, %s6, [#allocation9]
    %s3880 = ssub.s32 1024, 1024
    %3881 = vsyncadd [#allocation11], %s3880
    %s3882 = sshll.u32 [#allocation10], 4
    %s3883 = int_to_ptr.vmem [resolvable:$true] %s3882
    %3885 = dma.vmem_to_hbm [thread:$0]  %s3883, 1024, %s7, [#allocation11]
    %s3887 = ssub.s32 1024, 1024
    %3888 = vsyncadd [#allocation11], %s3887
    %s3889 = sshll.u32 [#allocation12], 4
    %s3890 = int_to_ptr.vmem [resolvable:$true] %s3889
    %3892 = dma.vmem_to_hbm [thread:$0]  %s3890, 1024, %s8, [#allocation11]
    %s3894 = ssub.s32 1024, 1024
    %3895 = vsyncadd [#allocation14], %s3894
    %s3896 = sshll.u32 [#allocation13], 4
    %s3897 = int_to_ptr.vmem [resolvable:$true] %s3896
    %3899 = dma.vmem_to_hbm [thread:$0]  %s3897, 1024, %s9, [#allocation14]
    // Predicated region
    $region156: #{custom-call.3} parent=1 // pred_check
      _
    $region157: #{custom-call.3} parent=1 // pred_check_branch
      %3901 = sbr.rel (0) target = $region159
    $region158: #{custom-call.3} parent=1 // pred_region
      _
    $region159: #{custom-call.3} parent=1 // pred_fallthru
      _
    // Predicated region
    $region160: #{custom-call.3} parent=1 // pred_check
      _
    $region161: #{custom-call.3} parent=1 // pred_check_branch
      %3903 = sbr.rel (0) target = $region163
    $region162: #{custom-call.3} parent=1 // pred_region
      _
    $region163: #{custom-call.3} parent=1 // pred_fallthru
      _
    %3904 = dma.done [#allocation9], 1024
    %3905 = dma.done [#allocation11], 1024
    %3906 = dma.done [#allocation11], 1024
    %3907 = dma.done [#allocation14], 1024
    %3908 = vsyncpa [#allocation9], 1
    %3909 = vsyncpa [#allocation11], 1
    %3910 = vsyncpa [#allocation14], 1

</llo_original>
